<compile_context>
chip_gen: v5e
topology: v5e:2x2
jax: 0.10.0
libtpu: 0.0.40
codegen_flags: <defaults>
</compile_context>

<pallas_src>
import functools

import jax
import jax.numpy as jnp
from jax.experimental import pallas as pl
from jax.experimental.pallas import tpu as pltpu


_VMEM_LIMIT_BYTES = 48 * 1024 * 1024   # > 16/32 MiB defaults, < v7x 64 MiB physical


def _round_up(x, m):
    return ((x + m - 1) // m) * m


def _compiler_params(dimension_semantics):
    return pltpu.CompilerParams(dimension_semantics=dimension_semantics,
                                vmem_limit_bytes=_VMEM_LIMIT_BYTES)


# ----------------------- Pallas kernels -----------------------

def _matmul_bias_act_kernel(p_ref, w_ref, b_ref, o_ref, acc_ref, *, activation):
    """Tiled (tm,tk)@(tk,tn) matmul, f32 VMEM accumulator; bias + activation fused."""
    k = pl.program_id(2)

    @pl.when(k == 0)
    def _init():
        acc_ref[...] = jnp.zeros_like(acc_ref)

    acc_ref[...] += jnp.dot(p_ref[...], w_ref[...],
                            preferred_element_type=jnp.float32)

    @pl.when(k == pl.num_programs(2) - 1)
    def _finish():
        acc = acc_ref[...] + b_ref[...]
        if activation == "leaky_relu":
            acc = jnp.maximum(acc, 0.2 * acc)
        elif activation == "sigmoid":
            # exact form keeps the output strictly inside [0, 1]
            acc = 1.0 / (1.0 + jnp.exp(-acc))
        o_ref[...] = acc.astype(o_ref.dtype)


def _conv_in_lrelu_kernel(p_ref, w_ref, o_ref, acc_ref, *, hw_valid):
    """Fused conv-matmul + InstanceNorm2d(affine=False, eps=1e-5) + LeakyReLU(0.2).

    One grid cell handles (one sample, one Cout tile = whole Cout); the K axis is the
    conv reduction. IN stats are taken over the resident spatial block in f32; padded
    HW rows (when HW was rounded up to a multiple of 8) are masked out of the stats.
    The conv bias is intentionally omitted: mean subtraction makes it a no-op.
    """
    k = pl.program_id(2)

    @pl.when(k == 0)
    def _init():
        acc_ref[...] = jnp.zeros_like(acc_ref)

    acc_ref[...] += jnp.dot(p_ref[0], w_ref[...],
                            preferred_element_type=jnp.float32)

    @pl.when(k == pl.num_programs(2) - 1)
    def _finish():
        y = acc_ref[...]                                   # (HWp, tn) f32
        hwp = y.shape[0]
        inv_n = 1.0 / float(hw_valid)
        if hw_valid == hwp:
            mean = jnp.sum(y, axis=0, keepdims=True) * inv_n
            c = y - mean
            var = jnp.sum(c * c, axis=0, keepdims=True) * inv_n   # biased, like PyTorch IN
        else:
            row = jax.lax.broadcasted_iota(jnp.int32, y.shape, 0)
            msk = (row < hw_valid).astype(jnp.float32)
            mean = jnp.sum(y * msk, axis=0, keepdims=True) * inv_n
            c = (y - mean) * msk
            var = jnp.sum(c * c, axis=0, keepdims=True) * inv_n
        z = (y - mean) * jax.lax.rsqrt(var + 1e-5)
        z = jnp.maximum(z, 0.2 * z)                        # LeakyReLU(0.2)
        o_ref[...] = z[None, :, :].astype(o_ref.dtype)


# ----------------------- pallas_call wrappers -----------------------

def conv_bias_act(patches, weight, bias, tm, tk, tn, *, activation, out_dtype):
    """patches (Mp, K) bf16, weight (K, Cp) bf16, bias (1, Cp) f32 -> (Mp, Cp)."""
    Mp, K = patches.shape
    _, Cp = weight.shape
    grid = (Mp // tm, Cp // tn, K // tk)
    return pl.pallas_call(
        functools.partial(_matmul_bias_act_kernel, activation=activation),
        out_shape=jax.ShapeDtypeStruct((Mp, Cp), out_dtype),
        grid=grid,
        in_specs=[
            pl.BlockSpec((tm, tk), lambda i, j, k: (i, k)),
            pl.BlockSpec((tk, tn), lambda i, j, k: (k, j)),
            pl.BlockSpec((1, tn), lambda i, j, k: (0, j)),
        ],
        out_specs=pl.BlockSpec((tm, tn), lambda i, j, k: (i, j)),
        scratch_shapes=[pltpu.VMEM((tm, tn), jnp.float32)],
        compiler_params=_compiler_params(("parallel", "parallel", "arbitrary")),
    )(patches, weight, bias)


def conv_instnorm_lrelu(patches, weight, tk, tn, hw_valid, out_dtype):
    """patches (N, HWp, K) bf16, weight (K, Cp) bf16 -> (N, HWp, Cp) with IN+LeakyReLU."""
    N, HWp, K = patches.shape
    _, Cp = weight.shape
    grid = (N, Cp // tn, K // tk)   # batch axis keeps v7x megacore busy even when Cp//tn == 1
    return pl.pallas_call(
        functools.partial(_conv_in_lrelu_kernel, hw_valid=hw_valid),
        out_shape=jax.ShapeDtypeStruct((N, HWp, Cp), out_dtype),
        grid=grid,
        in_specs=[
            pl.BlockSpec((1, HWp, tk), lambda n, j, k: (n, 0, k)),
            pl.BlockSpec((tk, tn), lambda n, j, k: (k, j)),
        ],
        out_specs=pl.BlockSpec((1, HWp, tn), lambda n, j, k: (n, 0, j)),
        scratch_shapes=[pltpu.VMEM((HWp, tn), jnp.float32)],
        compiler_params=_compiler_params(("parallel", "parallel", "arbitrary")),
    )(patches, weight)


# ----------------------- plain-JAX glue -----------------------

def reflect_pad_nhwc(x, pad):
    return jnp.pad(x, ((0, 0), (pad, pad), (pad, pad), (0, 0)), mode="reflect")


def im2col(x, k, stride):
    """x: (N, H, W, C) already padded. Copy-only: 16 static strided slices
    concatenated on the channel axis (no gather). Returns ((N, Ho*Wo, k*k*C), Ho, Wo)."""
    N, H, W, C = x.shape
    Ho = (H - k) // stride + 1
    Wo = (W - k) // stride + 1
    taps = []
    for dy in range(k):            # K ordering = (kh, kw, cin), cin fastest
        for dx in range(k):
            taps.append(jax.lax.slice(
                x,
                (0, dy, dx, 0),
                (N, dy + (Ho - 1) * stride + 1, dx + (Wo - 1) * stride + 1, C),
                (1, stride, stride, 1)))
    patches = jnp.concatenate(taps, axis=-1)               # (N, Ho, Wo, k*k*C)
    return patches.reshape(N, Ho * Wo, k * k * C), Ho, Wo


LAYER_CFGS = (
    dict(stride=2, use_norm=False, activation="leaky_relu", out_dtype=jnp.bfloat16),  # in -> 64
    dict(stride=2, use_norm=True,  activation="leaky_relu", out_dtype=jnp.bfloat16),  # 64 -> 128
    dict(stride=2, use_norm=True,  activation="leaky_relu", out_dtype=jnp.bfloat16),  # 128 -> 256
    dict(stride=1, use_norm=True,  activation="leaky_relu", out_dtype=jnp.bfloat16),  # 256 -> 512
    dict(stride=1, use_norm=False, activation="sigmoid",    out_dtype=jnp.float32),   # 512 -> 1
)


def _pack_layer(w, b, cfg):
    """Hoisted per-layer packing: cin-pad + reshape + zero-pad + bf16-cast once."""
    kh, kw, cin, cout = w.shape
    cin_pad = _round_up(cin, 8)           # -> K = kh*kw*cin_pad is a multiple of 128
    if cin_pad > cin:
        w = jnp.pad(w, ((0, 0), (0, 0), (0, cin_pad - cin), (0, 0)))
    K = kh * kw * cin_pad
    tk = min(2048, K)                     # K in {128,1024,2048,4096,8192}: divides evenly
    Cp = _round_up(cout, 128)
    if cfg["use_norm"]:
        tn = Cp       # whole Cout resident: patch slab read from HBM once per sample
        b_p = None    # bias is exactly cancelled by the InstanceNorm mean subtraction
    else:
        tn = min(Cp, 128)
        b_p = jnp.zeros((1, Cp), jnp.float32).at[0, :cout].set(b.astype(jnp.float32))
    w_p = jnp.zeros((K, Cp), jnp.bfloat16).at[:, :cout].set(
        w.reshape(K, cout).astype(jnp.bfloat16))
    meta = dict(K=K, cin_pad=cin_pad, cout=cout, Cp=Cp, tk=tk, tn=tn)
    return (w_p, b_p), meta


def conv_block(x, arrs, meta, cfg):
    """ConvBlock: Conv2d(k=4, reflect pad=1) [+ InstanceNorm] [+ LeakyReLU / sigmoid]."""
    w_p, b_p = arrs
    N = x.shape[0]
    cin_pad = meta["cin_pad"]
    if x.shape[-1] < cin_pad:   # pad the small activation, not the 16x patch tensor
        x = jnp.pad(x, ((0, 0), (0, 0), (0, 0), (0, cin_pad - x.shape[-1])))
    xp = reflect_pad_nhwc(x, 1)
    patches, Ho, Wo = im2col(xp, 4, cfg["stride"])            # (N, HW, K) bf16
    HW = Ho * Wo
    cout, tk, tn = meta["cout"], meta["tk"], meta["tn"]

    if cfg["use_norm"]:
        HWp = _round_up(HW, 8)                                # sublane-dense stores
        if HWp > HW:
            patches = jnp.pad(patches, ((0, 0), (0, HWp - HW), (0, 0)))
        y = conv_instnorm_lrelu(patches, w_p, tk, tn, HW, cfg["out_dtype"])
        y = y[:, :HW, :cout]
    else:
        M = N * HW
        tm = min(1024, _round_up(M, 8))
        Mp = _round_up(M, tm)
        p2 = patches.reshape(M, meta["K"])
        if Mp > M:
            p2 = jnp.pad(p2, ((0, Mp - M), (0, 0)))
        y = conv_bias_act(p2, w_p, b_p, tm, tk, tn,
                          activation=cfg["activation"], out_dtype=cfg["out_dtype"])
        y = y[:M, :cout].reshape(N, HW, cout)
    return y.reshape(N, Ho, Wo, cout)


def make_discriminator(raw_params):
    """Packs the raw params once and returns (jitted forward fn, packed param pytree)."""
    packed, metas = [], []
    for (w, b), cfg in zip(raw_params, LAYER_CFGS):
        arrs, meta = _pack_layer(w, b, cfg)
        packed.append(arrs)
        metas.append(meta)
    metas = tuple(metas)

    def fwd(x_nchw, packed_params):
        x = jnp.transpose(x_nchw, (0, 2, 3, 1)).astype(jnp.bfloat16)   # NCHW -> NHWC
        for arrs, meta, cfg in zip(packed_params, metas, LAYER_CFGS):
            x = conv_block(x, arrs, meta, cfg)
        return jnp.transpose(x, (0, 3, 1, 2)).astype(jnp.float32)      # NHWC -> NCHW

    return jax.jit(fwd), packed


def init_params(key, in_channels):
    """Deterministic synthetic weights. Weight layout: (kh, kw, Cin, Cout)."""
    chans = [in_channels, 64, 128, 256, 512, 1]
    params = []
    for i in range(5):
        key, kw_, kb_ = jax.random.split(key, 3)
        cin, cout = chans[i], chans[i + 1]
        w = jax.random.normal(kw_, (4, 4, cin, cout), jnp.float32) * 0.05
        b = jax.random.normal(kb_, (cout,), jnp.float32) * 0.05
        params.append((w, b))
    return params


if __name__ == "__main__":
    key = jax.random.PRNGKey(0)
    kx, kp = jax.random.split(key)
    in_channels = 3
    # Spatial 32 keeps every 4x4 conv valid: 32 -> 16 -> 8 -> 4 -> 3 -> 2.
    x = jax.random.normal(kx, (2, in_channels, 32, 32), jnp.float32)   # NCHW, like PyTorch
    raw_params = init_params(kp, in_channels)

    fwd, packed = make_discriminator(raw_params)
    out = fwd(x, packed)
    out = jax.block_until_ready(out)

    assert out.shape == (2, 1, 2, 2), out.shape
    assert bool(jnp.all(jnp.isfinite(out)))
    assert bool(jnp.all((out >= 0.0) & (out <= 1.0)))   # sigmoid range
    print("KERNEL_OK")
</pallas_src>

<mosaic_0001>
module attributes {stable_mosaic.version = 11 : i64} {
  func.func @_matmul_bias_act_kernel(%arg0: i32, %arg1: i32, %arg2: i32, %arg3: memref<512x128xbf16, #tpu.memory_space<vmem>>, %arg4: memref<128x128xbf16, #tpu.memory_space<vmem>>, %arg5: memref<1x128xf32, #tpu.memory_space<vmem>>, %arg6: memref<512x128xbf16, #tpu.memory_space<vmem>>, %arg7: memref<512x128xf32, #tpu.memory_space<vmem>>) attributes {dimension_semantics = [#tpu.dimension_semantics<parallel>, #tpu.dimension_semantics<parallel>, #tpu.dimension_semantics<arbitrary>], iteration_bounds = array<i64: 1, 1, 1>, scalar_prefetch = 0 : i64, scratch_operands = 1 : i64, tpu.core_type = #tpu.core_type<tc>, window_params = [{transform_indices = @transform_0, window_bounds = array<i64: 512, 128>}, {transform_indices = @transform_1, window_bounds = array<i64: 128, 128>}, {transform_indices = @transform_2, window_bounds = array<i64: 1, 128>}, {transform_indices = @transform_3, window_bounds = array<i64: 512, 128>}]} {
    %c0_i32 = arith.constant 0 : i32
    %0 = arith.cmpi eq, %arg2, %c0_i32 : i32
    %1 = arith.extui %0 : i1 to i32
    %c0_i32_0 = arith.constant 0 : i32
    %2 = arith.cmpi ne, %1, %c0_i32_0 : i32
    scf.if %2 {
      %cst_10 = arith.constant 0.000000e+00 : f32
      %12 = vector.broadcast %cst_10 : f32 to vector<512x128xf32>
      %c0_11 = arith.constant 0 : index
      %c0_12 = arith.constant 0 : index
      %13 = vector.load %arg7[%c0_11, %c0_12] : memref<512x128xf32, #tpu.memory_space<vmem>>, vector<512x128xf32>
      tpu.vector_store %arg7[%c0_11, %c0_12], %12 {strides = array<i32>} : memref<512x128xf32, #tpu.memory_space<vmem>>, vector<512x128xf32>,
    } else {
    }
    %c0 = arith.constant 0 : index
    %c0_1 = arith.constant 0 : index
    %3 = vector.load %arg7[%c0, %c0_1] : memref<512x128xf32, #tpu.memory_space<vmem>>, vector<512x128xf32>
    %c0_2 = arith.constant 0 : index
    %c0_3 = arith.constant 0 : index
    %4 = vector.load %arg3[%c0_2, %c0_3] : memref<512x128xbf16, #tpu.memory_space<vmem>>, vector<512x128xbf16>
    %c0_4 = arith.constant 0 : index
    %c0_5 = arith.constant 0 : index
    %5 = vector.load %arg4[%c0_4, %c0_5] : memref<128x128xbf16, #tpu.memory_space<vmem>>, vector<128x128xbf16>
    %cst = arith.constant dense<0.000000e+00> : vector<512x128xf32>
    %6 = tpu.matmul %4, %5, %cst {dimension_numbers = #tpu.dot_dimension_numbers<[1], [0], [0], [1], [0, 0, 1, 1], [], []>} : vector<512x128xbf16>, vector<128x128xbf16>, vector<512x128xf32> -> vector<512x128xf32>
    %7 = arith.addf %3, %6 : vector<512x128xf32>
    %c0_6 = arith.constant 0 : index
    %c0_7 = arith.constant 0 : index
    %8 = vector.load %arg7[%c0_6, %c0_7] : memref<512x128xf32, #tpu.memory_space<vmem>>, vector<512x128xf32>
    tpu.vector_store %arg7[%c0_6, %c0_7], %7 {strides = array<i32>} : memref<512x128xf32, #tpu.memory_space<vmem>>, vector<512x128xf32>,
    %c0_i32_8 = arith.constant 0 : i32
    %9 = arith.cmpi eq, %arg2, %c0_i32_8 : i32
    %10 = arith.extui %9 : i1 to i32
    %c0_i32_9 = arith.constant 0 : i32
    %11 = arith.cmpi ne, %10, %c0_i32_9 : i32
    scf.if %11 {
      %c0_10 = arith.constant 0 : index
      %c0_11 = arith.constant 0 : index
      %12 = vector.load %arg7[%c0_10, %c0_11] : memref<512x128xf32, #tpu.memory_space<vmem>>, vector<512x128xf32>
      %c0_12 = arith.constant 0 : index
      %c0_13 = arith.constant 0 : index
      %13 = vector.load %arg5[%c0_12, %c0_13] : memref<1x128xf32, #tpu.memory_space<vmem>>, vector<1x128xf32>
      %14 = vector.broadcast %13 : vector<1x128xf32> to vector<512x128xf32>
      %15 = arith.addf %12, %14 : vector<512x128xf32>
      %cst_14 = arith.constant 2.000000e-01 : f32
      %16 = vector.broadcast %cst_14 : f32 to vector<512x128xf32>
      %17 = arith.mulf %16, %15 : vector<512x128xf32>
      %18 = arith.maximumf %15, %17 : vector<512x128xf32>
      %19 = arith.truncf %18 : vector<512x128xf32> to vector<512x128xbf16>
      %c0_15 = arith.constant 0 : index
      %c0_16 = arith.constant 0 : index
      %20 = vector.load %arg6[%c0_15, %c0_16] : memref<512x128xbf16, #tpu.memory_space<vmem>>, vector<512x128xbf16>
      tpu.vector_store %arg6[%c0_15, %c0_16], %19 {strides = array<i32>} : memref<512x128xbf16, #tpu.memory_space<vmem>>, vector<512x128xbf16>,
    } else {
    }
    return
  }
  func.func @transform_0(%arg0: i32, %arg1: i32, %arg2: i32) -> (i32, i32) {
    %c0_i32 = arith.constant 0 : i32
    return %arg0, %arg2 : i32, i32
  }
  func.func @transform_1(%arg0: i32, %arg1: i32, %arg2: i32) -> (i32, i32) {
    %c0_i32 = arith.constant 0 : i32
    return %arg2, %arg1 : i32, i32
  }
  func.func @transform_2(%arg0: i32, %arg1: i32, %arg2: i32) -> (i32, i32) {
    %c0_i32 = arith.constant 0 : i32
    %c0_i32_0 = arith.constant 0 : i32
    return %c0_i32, %arg1 : i32, i32
  }
  func.func @transform_3(%arg0: i32, %arg1: i32, %arg2: i32) -> (i32, i32) {
    %c0_i32 = arith.constant 0 : i32
    return %arg0, %arg1 : i32, i32
  }
}

module attributes {stable_mosaic.version = 11 : i64} {
  func.func @_conv_in_lrelu_kernel(%arg0: i32, %arg1: i32, %arg2: i32, %arg3: memref<1x64x1024xbf16, #tpu.memory_space<vmem>>, %arg4: memref<1024x128xbf16, #tpu.memory_space<vmem>>, %arg5: memref<1x64x128xbf16, #tpu.memory_space<vmem>>, %arg6: memref<64x128xf32, #tpu.memory_space<vmem>>) attributes {dimension_semantics = [#tpu.dimension_semantics<parallel>, #tpu.dimension_semantics<parallel>, #tpu.dimension_semantics<arbitrary>], iteration_bounds = array<i64: 2, 1, 1>, scalar_prefetch = 0 : i64, scratch_operands = 1 : i64, tpu.core_type = #tpu.core_type<tc>, window_params = [{transform_indices = @transform_0, window_bounds = array<i64: 1, 64, 1024>}, {transform_indices = @transform_1, window_bounds = array<i64: 1024, 128>}, {transform_indices = @transform_2, window_bounds = array<i64: 1, 64, 128>}]} {
    %c0_i32 = arith.constant 0 : i32
    %0 = arith.cmpi eq, %arg2, %c0_i32 : i32
    %1 = arith.extui %0 : i1 to i32
    %c0_i32_0 = arith.constant 0 : i32
    %2 = arith.cmpi ne, %1, %c0_i32_0 : i32
    scf.if %2 {
      %cst_11 = arith.constant 0.000000e+00 : f32
      %13 = vector.broadcast %cst_11 : f32 to vector<64x128xf32>
      %c0_12 = arith.constant 0 : index
      %c0_13 = arith.constant 0 : index
      %14 = vector.load %arg6[%c0_12, %c0_13] : memref<64x128xf32, #tpu.memory_space<vmem>>, vector<64x128xf32>
      tpu.vector_store %arg6[%c0_12, %c0_13], %13 {strides = array<i32>} : memref<64x128xf32, #tpu.memory_space<vmem>>, vector<64x128xf32>,
    } else {
    }
    %c0 = arith.constant 0 : index
    %c0_1 = arith.constant 0 : index
    %3 = vector.load %arg6[%c0, %c0_1] : memref<64x128xf32, #tpu.memory_space<vmem>>, vector<64x128xf32>
    %c0_2 = arith.constant 0 : index
    %c0_3 = arith.constant 0 : index
    %c0_4 = arith.constant 0 : index
    %4 = vector.load %arg3[%c0_2, %c0_3, %c0_4] : memref<1x64x1024xbf16, #tpu.memory_space<vmem>>, vector<1x64x1024xbf16>
    %5 = vector.shape_cast %4 : vector<1x64x1024xbf16> to vector<64x1024xbf16>
    %c0_5 = arith.constant 0 : index
    %c0_6 = arith.constant 0 : index
    %6 = vector.load %arg4[%c0_5, %c0_6] : memref<1024x128xbf16, #tpu.memory_space<vmem>>, vector<1024x128xbf16>
    %cst = arith.constant dense<0.000000e+00> : vector<64x128xf32>
    %7 = tpu.matmul %5, %6, %cst {dimension_numbers = #tpu.dot_dimension_numbers<[1], [0], [0], [1], [0, 0, 1, 1], [], []>} : vector<64x1024xbf16>, vector<1024x128xbf16>, vector<64x128xf32> -> vector<64x128xf32>
    %8 = arith.addf %3, %7 : vector<64x128xf32>
    %c0_7 = arith.constant 0 : index
    %c0_8 = arith.constant 0 : index
    %9 = vector.load %arg6[%c0_7, %c0_8] : memref<64x128xf32, #tpu.memory_space<vmem>>, vector<64x128xf32>
    tpu.vector_store %arg6[%c0_7, %c0_8], %8 {strides = array<i32>} : memref<64x128xf32, #tpu.memory_space<vmem>>, vector<64x128xf32>,
    %c0_i32_9 = arith.constant 0 : i32
    %10 = arith.cmpi eq, %arg2, %c0_i32_9 : i32
    %11 = arith.extui %10 : i1 to i32
    %c0_i32_10 = arith.constant 0 : i32
    %12 = arith.cmpi ne, %11, %c0_i32_10 : i32
    scf.if %12 {
      %c0_11 = arith.constant 0 : index
      %c0_12 = arith.constant 0 : index
      %13 = vector.load %arg6[%c0_11, %c0_12] : memref<64x128xf32, #tpu.memory_space<vmem>>, vector<64x128xf32>
      %cst_13 = arith.constant dense<0.000000e+00> : vector<128xf32>
      %14 = vector.multi_reduction <add>, %13, %cst_13 [0] : vector<64x128xf32> to vector<128xf32>
      %15 = vector.shape_cast %14 : vector<128xf32> to vector<1x128xf32>
      %cst_14 = arith.constant 1.562500e-02 : f32
      %16 = vector.broadcast %cst_14 : f32 to vector<1x128xf32>
      %17 = arith.mulf %15, %16 : vector<1x128xf32>
      %18 = vector.broadcast %17 : vector<1x128xf32> to vector<64x128xf32>
      %19 = arith.subf %13, %18 : vector<64x128xf32>
      %20 = arith.mulf %19, %19 : vector<64x128xf32>
      %cst_15 = arith.constant dense<0.000000e+00> : vector<128xf32>
      %21 = vector.multi_reduction <add>, %20, %cst_15 [0] : vector<64x128xf32> to vector<128xf32>
      %22 = vector.shape_cast %21 : vector<128xf32> to vector<1x128xf32>
      %cst_16 = arith.constant 1.562500e-02 : f32
      %23 = vector.broadcast %cst_16 : f32 to vector<1x128xf32>
      %24 = arith.mulf %22, %23 : vector<1x128xf32>
      %25 = vector.broadcast %17 : vector<1x128xf32> to vector<64x128xf32>
      %26 = arith.subf %13, %25 : vector<64x128xf32>
      %cst_17 = arith.constant 9.99999974E-6 : f32
      %27 = vector.broadcast %cst_17 : f32 to vector<1x128xf32>
      %28 = arith.addf %24, %27 : vector<1x128xf32>
      %29 = math.rsqrt %28 : vector<1x128xf32>
      %30 = vector.broadcast %29 : vector<1x128xf32> to vector<64x128xf32>
      %31 = arith.mulf %26, %30 : vector<64x128xf32>
      %cst_18 = arith.constant 2.000000e-01 : f32
      %32 = vector.broadcast %cst_18 : f32 to vector<64x128xf32>
      %33 = arith.mulf %32, %31 : vector<64x128xf32>
      %34 = arith.maximumf %31, %33 : vector<64x128xf32>
      %35 = vector.shape_cast %34 : vector<64x128xf32> to vector<1x64x128xf32>
      %36 = arith.truncf %35 : vector<1x64x128xf32> to vector<1x64x128xbf16>
      %c0_19 = arith.constant 0 : index
      %c0_20 = arith.constant 0 : index
      %c0_21 = arith.constant 0 : index
      %37 = vector.load %arg5[%c0_19, %c0_20, %c0_21] : memref<1x64x128xbf16, #tpu.memory_space<vmem>>, vector<1x64x128xbf16>
      tpu.vector_store %arg5[%c0_19, %c0_20, %c0_21], %36 {strides = array<i32>} : memref<1x64x128xbf16, #tpu.memory_space<vmem>>, vector<1x64x128xbf16>,
    } else {
    }
    return
  }
  func.func @transform_0(%arg0: i32, %arg1: i32, %arg2: i32) -> (i32, i32, i32) {
    %c0_i32 = arith.constant 0 : i32
    %c0_i32_0 = arith.constant 0 : i32
    return %arg0, %c0_i32, %arg2 : i32, i32, i32
  }
  func.func @transform_1(%arg0: i32, %arg1: i32, %arg2: i32) -> (i32, i32) {
    %c0_i32 = arith.constant 0 : i32
    return %arg2, %arg1 : i32, i32
  }
  func.func @transform_2(%arg0: i32, %arg1: i32, %arg2: i32) -> (i32, i32, i32) {
    %c0_i32 = arith.constant 0 : i32
    %c0_i32_0 = arith.constant 0 : i32
    return %arg0, %c0_i32, %arg1 : i32, i32, i32
  }
}

module attributes {stable_mosaic.version = 11 : i64} {
  func.func @_conv_in_lrelu_kernel(%arg0: i32, %arg1: i32, %arg2: i32, %arg3: memref<1x16x2048xbf16, #tpu.memory_space<vmem>>, %arg4: memref<2048x256xbf16, #tpu.memory_space<vmem>>, %arg5: memref<1x16x256xbf16, #tpu.memory_space<vmem>>, %arg6: memref<16x256xf32, #tpu.memory_space<vmem>>) attributes {dimension_semantics = [#tpu.dimension_semantics<parallel>, #tpu.dimension_semantics<parallel>, #tpu.dimension_semantics<arbitrary>], iteration_bounds = array<i64: 2, 1, 1>, scalar_prefetch = 0 : i64, scratch_operands = 1 : i64, tpu.core_type = #tpu.core_type<tc>, window_params = [{transform_indices = @transform_0, window_bounds = array<i64: 1, 16, 2048>}, {transform_indices = @transform_1, window_bounds = array<i64: 2048, 256>}, {transform_indices = @transform_2, window_bounds = array<i64: 1, 16, 256>}]} {
    %c0_i32 = arith.constant 0 : i32
    %0 = arith.cmpi eq, %arg2, %c0_i32 : i32
    %1 = arith.extui %0 : i1 to i32
    %c0_i32_0 = arith.constant 0 : i32
    %2 = arith.cmpi ne, %1, %c0_i32_0 : i32
    scf.if %2 {
      %cst_11 = arith.constant 0.000000e+00 : f32
      %13 = vector.broadcast %cst_11 : f32 to vector<16x256xf32>
      %c0_12 = arith.constant 0 : index
      %c0_13 = arith.constant 0 : index
      %14 = vector.load %arg6[%c0_12, %c0_13] : memref<16x256xf32, #tpu.memory_space<vmem>>, vector<16x256xf32>
      tpu.vector_store %arg6[%c0_12, %c0_13], %13 {strides = array<i32>} : memref<16x256xf32, #tpu.memory_space<vmem>>, vector<16x256xf32>,
    } else {
    }
    %c0 = arith.constant 0 : index
    %c0_1 = arith.constant 0 : index
    %3 = vector.load %arg6[%c0, %c0_1] : memref<16x256xf32, #tpu.memory_space<vmem>>, vector<16x256xf32>
    %c0_2 = arith.constant 0 : index
    %c0_3 = arith.constant 0 : index
    %c0_4 = arith.constant 0 : index
    %4 = vector.load %arg3[%c0_2, %c0_3, %c0_4] : memref<1x16x2048xbf16, #tpu.memory_space<vmem>>, vector<1x16x2048xbf16>
    %5 = vector.shape_cast %4 : vector<1x16x2048xbf16> to vector<16x2048xbf16>
    %c0_5 = arith.constant 0 : index
    %c0_6 = arith.constant 0 : index
    %6 = vector.load %arg4[%c0_5, %c0_6] : memref<2048x256xbf16, #tpu.memory_space<vmem>>, vector<2048x256xbf16>
    %cst = arith.constant dense<0.000000e+00> : vector<16x256xf32>
    %7 = tpu.matmul %5, %6, %cst {dimension_numbers = #tpu.dot_dimension_numbers<[1], [0], [0], [1], [0, 0, 1, 1], [], []>} : vector<16x2048xbf16>, vector<2048x256xbf16>, vector<16x256xf32> -> vector<16x256xf32>
    %8 = arith.addf %3, %7 : vector<16x256xf32>
    %c0_7 = arith.constant 0 : index
    %c0_8 = arith.constant 0 : index
    %9 = vector.load %arg6[%c0_7, %c0_8] : memref<16x256xf32, #tpu.memory_space<vmem>>, vector<16x256xf32>
    tpu.vector_store %arg6[%c0_7, %c0_8], %8 {strides = array<i32>} : memref<16x256xf32, #tpu.memory_space<vmem>>, vector<16x256xf32>,
    %c0_i32_9 = arith.constant 0 : i32
    %10 = arith.cmpi eq, %arg2, %c0_i32_9 : i32
    %11 = arith.extui %10 : i1 to i32
    %c0_i32_10 = arith.constant 0 : i32
    %12 = arith.cmpi ne, %11, %c0_i32_10 : i32
    scf.if %12 {
      %c0_11 = arith.constant 0 : index
      %c0_12 = arith.constant 0 : index
      %13 = vector.load %arg6[%c0_11, %c0_12] : memref<16x256xf32, #tpu.memory_space<vmem>>, vector<16x256xf32>
      %cst_13 = arith.constant dense<0.000000e+00> : vector<256xf32>
      %14 = vector.multi_reduction <add>, %13, %cst_13 [0] : vector<16x256xf32> to vector<256xf32>
      %15 = vector.shape_cast %14 : vector<256xf32> to vector<1x256xf32>
      %cst_14 = arith.constant 6.250000e-02 : f32
      %16 = vector.broadcast %cst_14 : f32 to vector<1x256xf32>
      %17 = arith.mulf %15, %16 : vector<1x256xf32>
      %18 = vector.broadcast %17 : vector<1x256xf32> to vector<16x256xf32>
      %19 = arith.subf %13, %18 : vector<16x256xf32>
      %20 = arith.mulf %19, %19 : vector<16x256xf32>
      %cst_15 = arith.constant dense<0.000000e+00> : vector<256xf32>
      %21 = vector.multi_reduction <add>, %20, %cst_15 [0] : vector<16x256xf32> to vector<256xf32>
      %22 = vector.shape_cast %21 : vector<256xf32> to vector<1x256xf32>
      %cst_16 = arith.constant 6.250000e-02 : f32
      %23 = vector.broadcast %cst_16 : f32 to vector<1x256xf32>
      %24 = arith.mulf %22, %23 : vector<1x256xf32>
      %25 = vector.broadcast %17 : vector<1x256xf32> to vector<16x256xf32>
      %26 = arith.subf %13, %25 : vector<16x256xf32>
      %cst_17 = arith.constant 9.99999974E-6 : f32
      %27 = vector.broadcast %cst_17 : f32 to vector<1x256xf32>
      %28 = arith.addf %24, %27 : vector<1x256xf32>
      %29 = math.rsqrt %28 : vector<1x256xf32>
      %30 = vector.broadcast %29 : vector<1x256xf32> to vector<16x256xf32>
      %31 = arith.mulf %26, %30 : vector<16x256xf32>
      %cst_18 = arith.constant 2.000000e-01 : f32
      %32 = vector.broadcast %cst_18 : f32 to vector<16x256xf32>
      %33 = arith.mulf %32, %31 : vector<16x256xf32>
      %34 = arith.maximumf %31, %33 : vector<16x256xf32>
      %35 = vector.shape_cast %34 : vector<16x256xf32> to vector<1x16x256xf32>
      %36 = arith.truncf %35 : vector<1x16x256xf32> to vector<1x16x256xbf16>
      %c0_19 = arith.constant 0 : index
      %c0_20 = arith.constant 0 : index
      %c0_21 = arith.constant 0 : index
      %37 = vector.load %arg5[%c0_19, %c0_20, %c0_21] : memref<1x16x256xbf16, #tpu.memory_space<vmem>>, vector<1x16x256xbf16>
      tpu.vector_store %arg5[%c0_19, %c0_20, %c0_21], %36 {strides = array<i32>} : memref<1x16x256xbf16, #tpu.memory_space<vmem>>, vector<1x16x256xbf16>,
    } else {
    }
    return
  }
  func.func @transform_0(%arg0: i32, %arg1: i32, %arg2: i32) -> (i32, i32, i32) {
    %c0_i32 = arith.constant 0 : i32
    %c0_i32_0 = arith.constant 0 : i32
    return %arg0, %c0_i32, %arg2 : i32, i32, i32
  }
  func.func @transform_1(%arg0: i32, %arg1: i32, %arg2: i32) -> (i32, i32) {
    %c0_i32 = arith.constant 0 : i32
    return %arg2, %arg1 : i32, i32
  }
  func.func @transform_2(%arg0: i32, %arg1: i32, %arg2: i32) -> (i32, i32, i32) {
    %c0_i32 = arith.constant 0 : i32
    %c0_i32_0 = arith.constant 0 : i32
    return %arg0, %c0_i32, %arg1 : i32, i32, i32
  }
}

module attributes {stable_mosaic.version = 11 : i64} {
  func.func @_conv_in_lrelu_kernel(%arg0: i32, %arg1: i32, %arg2: i32, %arg3: memref<1x16x2048xbf16, #tpu.memory_space<vmem>>, %arg4: memref<2048x512xbf16, #tpu.memory_space<vmem>>, %arg5: memref<1x16x512xbf16, #tpu.memory_space<vmem>>, %arg6: memref<16x512xf32, #tpu.memory_space<vmem>>) attributes {dimension_semantics = [#tpu.dimension_semantics<parallel>, #tpu.dimension_semantics<parallel>, #tpu.dimension_semantics<arbitrary>], iteration_bounds = array<i64: 2, 1, 2>, scalar_prefetch = 0 : i64, scratch_operands = 1 : i64, tpu.core_type = #tpu.core_type<tc>, window_params = [{transform_indices = @transform_0, window_bounds = array<i64: 1, 16, 2048>}, {transform_indices = @transform_1, window_bounds = array<i64: 2048, 512>}, {transform_indices = @transform_2, window_bounds = array<i64: 1, 16, 512>}]} {
    %c0_i32 = arith.constant 0 : i32
    %0 = arith.cmpi eq, %arg2, %c0_i32 : i32
    %1 = arith.extui %0 : i1 to i32
    %c0_i32_0 = arith.constant 0 : i32
    %2 = arith.cmpi ne, %1, %c0_i32_0 : i32
    scf.if %2 {
      %cst_10 = arith.constant 0.000000e+00 : f32
      %13 = vector.broadcast %cst_10 : f32 to vector<16x512xf32>
      %c0_11 = arith.constant 0 : index
      %c0_12 = arith.constant 0 : index
      %14 = vector.load %arg6[%c0_11, %c0_12] : memref<16x512xf32, #tpu.memory_space<vmem>>, vector<16x512xf32>
      tpu.vector_store %arg6[%c0_11, %c0_12], %13 {strides = array<i32>} : memref<16x512xf32, #tpu.memory_space<vmem>>, vector<16x512xf32>,
    } else {
    }
    %c0 = arith.constant 0 : index
    %c0_1 = arith.constant 0 : index
    %3 = vector.load %arg6[%c0, %c0_1] : memref<16x512xf32, #tpu.memory_space<vmem>>, vector<16x512xf32>
    %c0_2 = arith.constant 0 : index
    %c0_3 = arith.constant 0 : index
    %c0_4 = arith.constant 0 : index
    %4 = vector.load %arg3[%c0_2, %c0_3, %c0_4] : memref<1x16x2048xbf16, #tpu.memory_space<vmem>>, vector<1x16x2048xbf16>
    %5 = vector.shape_cast %4 : vector<1x16x2048xbf16> to vector<16x2048xbf16>
    %c0_5 = arith.constant 0 : index
    %c0_6 = arith.constant 0 : index
    %6 = vector.load %arg4[%c0_5, %c0_6] : memref<2048x512xbf16, #tpu.memory_space<vmem>>, vector<2048x512xbf16>
    %cst = arith.constant dense<0.000000e+00> : vector<16x512xf32>
    %7 = tpu.matmul %5, %6, %cst {dimension_numbers = #tpu.dot_dimension_numbers<[1], [0], [0], [1], [0, 0, 1, 1], [], []>} : vector<16x2048xbf16>, vector<2048x512xbf16>, vector<16x512xf32> -> vector<16x512xf32>
    %8 = arith.addf %3, %7 : vector<16x512xf32>
    %c0_7 = arith.constant 0 : index
    %c0_8 = arith.constant 0 : index
    %9 = vector.load %arg6[%c0_7, %c0_8] : memref<16x512xf32, #tpu.memory_space<vmem>>, vector<16x512xf32>
    tpu.vector_store %arg6[%c0_7, %c0_8], %8 {strides = array<i32>} : memref<16x512xf32, #tpu.memory_space<vmem>>, vector<16x512xf32>,
    %c1_i32 = arith.constant 1 : i32
    %10 = arith.cmpi eq, %arg2, %c1_i32 : i32
    %11 = arith.extui %10 : i1 to i32
    %c0_i32_9 = arith.constant 0 : i32
    %12 = arith.cmpi ne, %11, %c0_i32_9 : i32
    scf.if %12 {
      %c0_10 = arith.constant 0 : index
      %c0_11 = arith.constant 0 : index
      %13 = vector.load %arg6[%c0_10, %c0_11] : memref<16x512xf32, #tpu.memory_space<vmem>>, vector<16x512xf32>
      %14 = tpu.iota {dimensions = array<i32: 0>} : vector<16x512xi32>
      %c9_i32 = arith.constant 9 : i32
      %15 = vector.broadcast %c9_i32 : i32 to vector<16x512xi32>
      %16 = arith.cmpi slt, %14, %15 : vector<16x512xi32>
      %17 = arith.extui %16 : vector<16x512xi1> to vector<16x512xi32>
      %18 = arith.sitofp %17 : vector<16x512xi32> to vector<16x512xf32>
      %19 = arith.mulf %13, %18 : vector<16x512xf32>
      %cst_12 = arith.constant dense<0.000000e+00> : vector<512xf32>
      %20 = vector.multi_reduction <add>, %19, %cst_12 [0] : vector<16x512xf32> to vector<512xf32>
      %21 = vector.shape_cast %20 : vector<512xf32> to vector<1x512xf32>
      %cst_13 = arith.constant 0.111111112 : f32
      %22 = vector.broadcast %cst_13 : f32 to vector<1x512xf32>
      %23 = arith.mulf %21, %22 : vector<1x512xf32>
      %24 = vector.broadcast %23 : vector<1x512xf32> to vector<16x512xf32>
      %25 = arith.subf %13, %24 : vector<16x512xf32>
      %26 = arith.mulf %25, %18 : vector<16x512xf32>
      %27 = arith.mulf %26, %26 : vector<16x512xf32>
      %cst_14 = arith.constant dense<0.000000e+00> : vector<512xf32>
      %28 = vector.multi_reduction <add>, %27, %cst_14 [0] : vector<16x512xf32> to vector<512xf32>
      %29 = vector.shape_cast %28 : vector<512xf32> to vector<1x512xf32>
      %cst_15 = arith.constant 0.111111112 : f32
      %30 = vector.broadcast %cst_15 : f32 to vector<1x512xf32>
      %31 = arith.mulf %29, %30 : vector<1x512xf32>
      %32 = vector.broadcast %23 : vector<1x512xf32> to vector<16x512xf32>
      %33 = arith.subf %13, %32 : vector<16x512xf32>
      %cst_16 = arith.constant 9.99999974E-6 : f32
      %34 = vector.broadcast %cst_16 : f32 to vector<1x512xf32>
      %35 = arith.addf %31, %34 : vector<1x512xf32>
      %36 = math.rsqrt %35 : vector<1x512xf32>
      %37 = vector.broadcast %36 : vector<1x512xf32> to vector<16x512xf32>
      %38 = arith.mulf %33, %37 : vector<16x512xf32>
      %cst_17 = arith.constant 2.000000e-01 : f32
      %39 = vector.broadcast %cst_17 : f32 to vector<16x512xf32>
      %40 = arith.mulf %39, %38 : vector<16x512xf32>
      %41 = arith.maximumf %38, %40 : vector<16x512xf32>
      %42 = vector.shape_cast %41 : vector<16x512xf32> to vector<1x16x512xf32>
      %43 = arith.truncf %42 : vector<1x16x512xf32> to vector<1x16x512xbf16>
      %c0_18 = arith.constant 0 : index
      %c0_19 = arith.constant 0 : index
      %c0_20 = arith.constant 0 : index
      %44 = vector.load %arg5[%c0_18, %c0_19, %c0_20] : memref<1x16x512xbf16, #tpu.memory_space<vmem>>, vector<1x16x512xbf16>
      tpu.vector_store %arg5[%c0_18, %c0_19, %c0_20], %43 {strides = array<i32>} : memref<1x16x512xbf16, #tpu.memory_space<vmem>>, vector<1x16x512xbf16>,
    } else {
    }
    return
  }
  func.func @transform_0(%arg0: i32, %arg1: i32, %arg2: i32) -> (i32, i32, i32) {
    %c0_i32 = arith.constant 0 : i32
    %c0_i32_0 = arith.constant 0 : i32
    return %arg0, %c0_i32, %arg2 : i32, i32, i32
  }
  func.func @transform_1(%arg0: i32, %arg1: i32, %arg2: i32) -> (i32, i32) {
    %c0_i32 = arith.constant 0 : i32
    return %arg2, %arg1 : i32, i32
  }
  func.func @transform_2(%arg0: i32, %arg1: i32, %arg2: i32) -> (i32, i32, i32) {
    %c0_i32 = arith.constant 0 : i32
    %c0_i32_0 = arith.constant 0 : i32
    return %arg0, %c0_i32, %arg1 : i32, i32, i32
  }
}

module attributes {stable_mosaic.version = 11 : i64} {
  func.func @_matmul_bias_act_kernel(%arg0: i32, %arg1: i32, %arg2: i32, %arg3: memref<8x2048xbf16, #tpu.memory_space<vmem>>, %arg4: memref<2048x128xbf16, #tpu.memory_space<vmem>>, %arg5: memref<1x128xf32, #tpu.memory_space<vmem>>, %arg6: memref<8x128xf32, #tpu.memory_space<vmem>>, %arg7: memref<8x128xf32, #tpu.memory_space<vmem>>) attributes {dimension_semantics = [#tpu.dimension_semantics<parallel>, #tpu.dimension_semantics<parallel>, #tpu.dimension_semantics<arbitrary>], iteration_bounds = array<i64: 1, 1, 4>, scalar_prefetch = 0 : i64, scratch_operands = 1 : i64, tpu.core_type = #tpu.core_type<tc>, window_params = [{transform_indices = @transform_0, window_bounds = array<i64: 8, 2048>}, {transform_indices = @transform_1, window_bounds = array<i64: 2048, 128>}, {transform_indices = @transform_2, window_bounds = array<i64: 1, 128>}, {transform_indices = @transform_3, window_bounds = array<i64: 8, 128>}]} {
    %c0_i32 = arith.constant 0 : i32
    %0 = arith.cmpi eq, %arg2, %c0_i32 : i32
    %1 = arith.extui %0 : i1 to i32
    %c0_i32_0 = arith.constant 0 : i32
    %2 = arith.cmpi ne, %1, %c0_i32_0 : i32
    scf.if %2 {
      %cst_9 = arith.constant 0.000000e+00 : f32
      %12 = vector.broadcast %cst_9 : f32 to vector<8x128xf32>
      %c0_10 = arith.constant 0 : index
      %c0_11 = arith.constant 0 : index
      %13 = vector.load %arg7[%c0_10, %c0_11] : memref<8x128xf32, #tpu.memory_space<vmem>>, vector<8x128xf32>
      tpu.vector_store %arg7[%c0_10, %c0_11], %12 {strides = array<i32>} : memref<8x128xf32, #tpu.memory_space<vmem>>, vector<8x128xf32>,
    } else {
    }
    %c0 = arith.constant 0 : index
    %c0_1 = arith.constant 0 : index
    %3 = vector.load %arg7[%c0, %c0_1] : memref<8x128xf32, #tpu.memory_space<vmem>>, vector<8x128xf32>
    %c0_2 = arith.constant 0 : index
    %c0_3 = arith.constant 0 : index
    %4 = vector.load %arg3[%c0_2, %c0_3] : memref<8x2048xbf16, #tpu.memory_space<vmem>>, vector<8x2048xbf16>
    %c0_4 = arith.constant 0 : index
    %c0_5 = arith.constant 0 : index
    %5 = vector.load %arg4[%c0_4, %c0_5] : memref<2048x128xbf16, #tpu.memory_space<vmem>>, vector<2048x128xbf16>
    %cst = arith.constant dense<0.000000e+00> : vector<8x128xf32>
    %6 = tpu.matmul %4, %5, %cst {dimension_numbers = #tpu.dot_dimension_numbers<[1], [0], [0], [1], [0, 0, 1, 1], [], []>} : vector<8x2048xbf16>, vector<2048x128xbf16>, vector<8x128xf32> -> vector<8x128xf32>
    %7 = arith.addf %3, %6 : vector<8x128xf32>
    %c0_6 = arith.constant 0 : index
    %c0_7 = arith.constant 0 : index
    %8 = vector.load %arg7[%c0_6, %c0_7] : memref<8x128xf32, #tpu.memory_space<vmem>>, vector<8x128xf32>
    tpu.vector_store %arg7[%c0_6, %c0_7], %7 {strides = array<i32>} : memref<8x128xf32, #tpu.memory_space<vmem>>, vector<8x128xf32>,
    %c3_i32 = arith.constant 3 : i32
    %9 = arith.cmpi eq, %arg2, %c3_i32 : i32
    %10 = arith.extui %9 : i1 to i32
    %c0_i32_8 = arith.constant 0 : i32
    %11 = arith.cmpi ne, %10, %c0_i32_8 : i32
    scf.if %11 {
      %c0_9 = arith.constant 0 : index
      %c0_10 = arith.constant 0 : index
      %12 = vector.load %arg7[%c0_9, %c0_10] : memref<8x128xf32, #tpu.memory_space<vmem>>, vector<8x128xf32>
      %c0_11 = arith.constant 0 : index
      %c0_12 = arith.constant 0 : index
      %13 = vector.load %arg5[%c0_11, %c0_12] : memref<1x128xf32, #tpu.memory_space<vmem>>, vector<1x128xf32>
      %14 = vector.broadcast %13 : vector<1x128xf32> to vector<8x128xf32>
      %15 = arith.addf %12, %14 : vector<8x128xf32>
      %cst_13 = arith.constant 0.000000e+00 : f32
      %16 = vector.broadcast %cst_13 : f32 to vector<8x128xf32>
      %17 = arith.subf %16, %15 : vector<8x128xf32>
      %18 = math.exp %17 : vector<8x128xf32>
      %cst_14 = arith.constant 1.000000e+00 : f32
      %19 = vector.broadcast %cst_14 : f32 to vector<8x128xf32>
      %20 = arith.addf %19, %18 : vector<8x128xf32>
      %cst_15 = arith.constant 1.000000e+00 : f32
      %21 = vector.broadcast %cst_15 : f32 to vector<8x128xf32>
      %22 = arith.divf %21, %20 : vector<8x128xf32>
      %c0_16 = arith.constant 0 : index
      %c0_17 = arith.constant 0 : index
      %23 = vector.load %arg6[%c0_16, %c0_17] : memref<8x128xf32, #tpu.memory_space<vmem>>, vector<8x128xf32>
      tpu.vector_store %arg6[%c0_16, %c0_17], %22 {strides = array<i32>} : memref<8x128xf32, #tpu.memory_space<vmem>>, vector<8x128xf32>,
    } else {
    }
    return
  }
  func.func @transform_0(%arg0: i32, %arg1: i32, %arg2: i32) -> (i32, i32) {
    %c0_i32 = arith.constant 0 : i32
    return %arg0, %arg2 : i32, i32
  }
  func.func @transform_1(%arg0: i32, %arg1: i32, %arg2: i32) -> (i32, i32) {
    %c0_i32 = arith.constant 0 : i32
    return %arg2, %arg1 : i32, i32
  }
  func.func @transform_2(%arg0: i32, %arg1: i32, %arg2: i32) -> (i32, i32) {
    %c0_i32 = arith.constant 0 : i32
    %c0_i32_0 = arith.constant 0 : i32
    return %c0_i32, %arg1 : i32, i32
  }
  func.func @transform_3(%arg0: i32, %arg1: i32, %arg2: i32) -> (i32, i32) {
    %c0_i32 = arith.constant 0 : i32
    return %arg0, %arg1 : i32, i32
  }
}

</mosaic_0001>

<llo_original>
// kernel: fwd.5
$region0: #{fwd.5}
  #allocation0 [shape = 'u32[]', space=smem, size = 0x4, offset = 0x4, fixed_abs, tag = 'smem constant byte address 0x4 - core index']
  #allocation1 [shape = 'u32[72,128]{1,0:T(1,128)}', space=vmem, size = 0x9000, scoped, tag = 'internal scratch']
  #allocation2 [shape = 'f32[512,128]{1,0:T(8,128)}', space=vmem, size = 0x40000, scoped, tag = 'scratch operand']
  %s0 = inlined_call_operand.vmem [shape: bf16[512,128], index: 0, kind: input, shape index: {}]
  %s1 = inlined_call_operand.vmem [shape: bf16[128,128], index: 1, kind: input, shape index: {}]
  %s2 = inlined_call_operand.vmem [shape: f32[1,128], index: 2, kind: input, shape index: {}]
  %s3 = inlined_call_operand.vmem [shape: bf16[512,128], index: 3, kind: output, shape index: {}]
  %s4 = sld [smem:[#allocation0]]
  $region30: #{fwd.5} parent=0
    _
  %s6 = ssub.s32 1, %s4
  %s7 = scalar_select 0, %s6, %s4
  // Predicated region
  $region2: #{fwd.5} parent=0 // pred_check
    _
  $region3: #{fwd.5} parent=0 // pred_check_branch
    %9 = sbr.rel (0) target = $region5
  $region4: #{fwd.5} parent=0 // pred_region
    _
  $region5: #{fwd.5} parent=0 // pred_fallthru
    _
  // Predicated region
  $region6: #{fwd.5} parent=0 // pred_check
    _
  $region7: #{fwd.5} parent=0 // pred_check_branch
    %11 = sbr.rel (0) target = $region9
  $region8: #{fwd.5} parent=0 // pred_region
    _
  $region9: #{fwd.5} parent=0 // pred_fallthru
    _
  // Predicated region
  $region10: #{fwd.5} parent=0 // pred_check
    _
  $region11: #{fwd.5} parent=0 // pred_check_branch
    %13 = sbr.rel (0) target = $region13
  $region12: #{fwd.5} parent=0 // pred_region
    _
  $region13: #{fwd.5} parent=0 // pred_fallthru
    _
  %p14 = scmp.eq.s32.totalorder 0, 0
  // Predicated region
  $region14: #{fwd.5} parent=0 // pred_check
    %p15 = pneg %p14
  $region15: #{fwd.5} parent=0 // pred_check_branch
    %17 = sbr.rel (%p15) target = $region17
  $region16: #{fwd.5} parent=0 // pred_region
    %18 = vst [vmem:[#allocation2] sm:$0xff] 0.0
    %19 = vst [vmem:[#allocation2 + $0x8] sm:$0xff] 0.0
    %20 = vst [vmem:[#allocation2 + $0x10] sm:$0xff] 0.0
    %21 = vst [vmem:[#allocation2 + $0x18] sm:$0xff] 0.0
    %22 = vst [vmem:[#allocation2 + $0x20] sm:$0xff] 0.0
    %23 = vst [vmem:[#allocation2 + $0x28] sm:$0xff] 0.0
    %24 = vst [vmem:[#allocation2 + $0x30] sm:$0xff] 0.0
    %25 = vst [vmem:[#allocation2 + $0x38] sm:$0xff] 0.0
    %26 = vst [vmem:[#allocation2 + $0x40] sm:$0xff] 0.0
    %27 = vst [vmem:[#allocation2 + $0x48] sm:$0xff] 0.0
    %28 = vst [vmem:[#allocation2 + $0x50] sm:$0xff] 0.0
    %29 = vst [vmem:[#allocation2 + $0x58] sm:$0xff] 0.0
    %30 = vst [vmem:[#allocation2 + $0x60] sm:$0xff] 0.0
    %31 = vst [vmem:[#allocation2 + $0x68] sm:$0xff] 0.0
    %32 = vst [vmem:[#allocation2 + $0x70] sm:$0xff] 0.0
    %33 = vst [vmem:[#allocation2 + $0x78] sm:$0xff] 0.0
    %34 = vst [vmem:[#allocation2 + $0x80] sm:$0xff] 0.0
    %35 = vst [vmem:[#allocation2 + $0x88] sm:$0xff] 0.0
    %36 = vst [vmem:[#allocation2 + $0x90] sm:$0xff] 0.0
    %37 = vst [vmem:[#allocation2 + $0x98] sm:$0xff] 0.0
    %38 = vst [vmem:[#allocation2 + $0xa0] sm:$0xff] 0.0
    %39 = vst [vmem:[#allocation2 + $0xa8] sm:$0xff] 0.0
    %40 = vst [vmem:[#allocation2 + $0xb0] sm:$0xff] 0.0
    %41 = vst [vmem:[#allocation2 + $0xb8] sm:$0xff] 0.0
    %42 = vst [vmem:[#allocation2 + $0xc0] sm:$0xff] 0.0
    %43 = vst [vmem:[#allocation2 + $0xc8] sm:$0xff] 0.0
    %44 = vst [vmem:[#allocation2 + $0xd0] sm:$0xff] 0.0
    %45 = vst [vmem:[#allocation2 + $0xd8] sm:$0xff] 0.0
    %46 = vst [vmem:[#allocation2 + $0xe0] sm:$0xff] 0.0
    %47 = vst [vmem:[#allocation2 + $0xe8] sm:$0xff] 0.0
    %48 = vst [vmem:[#allocation2 + $0xf0] sm:$0xff] 0.0
    %49 = vst [vmem:[#allocation2 + $0xf8] sm:$0xff] 0.0
    %50 = vst [vmem:[#allocation2 + $0x100] sm:$0xff] 0.0
    %51 = vst [vmem:[#allocation2 + $0x108] sm:$0xff] 0.0
    %52 = vst [vmem:[#allocation2 + $0x110] sm:$0xff] 0.0
    %53 = vst [vmem:[#allocation2 + $0x118] sm:$0xff] 0.0
    %54 = vst [vmem:[#allocation2 + $0x120] sm:$0xff] 0.0
    %55 = vst [vmem:[#allocation2 + $0x128] sm:$0xff] 0.0
    %56 = vst [vmem:[#allocation2 + $0x130] sm:$0xff] 0.0
    %57 = vst [vmem:[#allocation2 + $0x138] sm:$0xff] 0.0
    %58 = vst [vmem:[#allocation2 + $0x140] sm:$0xff] 0.0
    %59 = vst [vmem:[#allocation2 + $0x148] sm:$0xff] 0.0
    %60 = vst [vmem:[#allocation2 + $0x150] sm:$0xff] 0.0
    %61 = vst [vmem:[#allocation2 + $0x158] sm:$0xff] 0.0
    %62 = vst [vmem:[#allocation2 + $0x160] sm:$0xff] 0.0
    %63 = vst [vmem:[#allocation2 + $0x168] sm:$0xff] 0.0
    %64 = vst [vmem:[#allocation2 + $0x170] sm:$0xff] 0.0
    %65 = vst [vmem:[#allocation2 + $0x178] sm:$0xff] 0.0
    %66 = vst [vmem:[#allocation2 + $0x180] sm:$0xff] 0.0
    %67 = vst [vmem:[#allocation2 + $0x188] sm:$0xff] 0.0
    %68 = vst [vmem:[#allocation2 + $0x190] sm:$0xff] 0.0
    %69 = vst [vmem:[#allocation2 + $0x198] sm:$0xff] 0.0
    %70 = vst [vmem:[#allocation2 + $0x1a0] sm:$0xff] 0.0
    %71 = vst [vmem:[#allocation2 + $0x1a8] sm:$0xff] 0.0
    %72 = vst [vmem:[#allocation2 + $0x1b0] sm:$0xff] 0.0
    %73 = vst [vmem:[#allocation2 + $0x1b8] sm:$0xff] 0.0
    %74 = vst [vmem:[#allocation2 + $0x1c0] sm:$0xff] 0.0
    %75 = vst [vmem:[#allocation2 + $0x1c8] sm:$0xff] 0.0
    %76 = vst [vmem:[#allocation2 + $0x1d0] sm:$0xff] 0.0
    %77 = vst [vmem:[#allocation2 + $0x1d8] sm:$0xff] 0.0
    %78 = vst [vmem:[#allocation2 + $0x1e0] sm:$0xff] 0.0
    %79 = vst [vmem:[#allocation2 + $0x1e8] sm:$0xff] 0.0
    %80 = vst [vmem:[#allocation2 + $0x1f0] sm:$0xff] 0.0
    %81 = vst [vmem:[#allocation2 + $0x1f8] sm:$0xff] 0.0
  $region17: #{fwd.5} parent=0 // pred_fallthru
    _
  %v82 = vld [vmem:[#allocation2] sm:$0xff]
  %v83 = vld [vmem:[#allocation2 + $0x8] sm:$0xff]
  %v84 = vld [vmem:[#allocation2 + $0x10] sm:$0xff]
  %v85 = vld [vmem:[#allocation2 + $0x18] sm:$0xff]
  %v86 = vld [vmem:[#allocation2 + $0x20] sm:$0xff]
  %v87 = vld [vmem:[#allocation2 + $0x28] sm:$0xff]
  %v88 = vld [vmem:[#allocation2 + $0x30] sm:$0xff]
  %v89 = vld [vmem:[#allocation2 + $0x38] sm:$0xff]
  %v90 = vld [vmem:[#allocation2 + $0x40] sm:$0xff]
  %v91 = vld [vmem:[#allocation2 + $0x48] sm:$0xff]
  %v92 = vld [vmem:[#allocation2 + $0x50] sm:$0xff]
  %v93 = vld [vmem:[#allocation2 + $0x58] sm:$0xff]
  %v94 = vld [vmem:[#allocation2 + $0x60] sm:$0xff]
  %v95 = vld [vmem:[#allocation2 + $0x68] sm:$0xff]
  %v96 = vld [vmem:[#allocation2 + $0x70] sm:$0xff]
  %v97 = vld [vmem:[#allocation2 + $0x78] sm:$0xff]
  %v98 = vld [vmem:[#allocation2 + $0x80] sm:$0xff]
  %v99 = vld [vmem:[#allocation2 + $0x88] sm:$0xff]
  %v100 = vld [vmem:[#allocation2 + $0x90] sm:$0xff]
  %v101 = vld [vmem:[#allocation2 + $0x98] sm:$0xff]
  %v102 = vld [vmem:[#allocation2 + $0xa0] sm:$0xff]
  %v103 = vld [vmem:[#allocation2 + $0xa8] sm:$0xff]
  %v104 = vld [vmem:[#allocation2 + $0xb0] sm:$0xff]
  %v105 = vld [vmem:[#allocation2 + $0xb8] sm:$0xff]
  %v106 = vld [vmem:[#allocation2 + $0xc0] sm:$0xff]
  %v107 = vld [vmem:[#allocation2 + $0xc8] sm:$0xff]
  %v108 = vld [vmem:[#allocation2 + $0xd0] sm:$0xff]
  %v109 = vld [vmem:[#allocation2 + $0xd8] sm:$0xff]
  %v110 = vld [vmem:[#allocation2 + $0xe0] sm:$0xff]
  %v111 = vld [vmem:[#allocation2 + $0xe8] sm:$0xff]
  %v112 = vld [vmem:[#allocation2 + $0xf0] sm:$0xff]
  %v113 = vld [vmem:[#allocation2 + $0xf8] sm:$0xff]
  %v114 = vld [vmem:[#allocation2 + $0x100] sm:$0xff]
  %v115 = vld [vmem:[#allocation2 + $0x108] sm:$0xff]
  %v116 = vld [vmem:[#allocation2 + $0x110] sm:$0xff]
  %v117 = vld [vmem:[#allocation2 + $0x118] sm:$0xff]
  %v118 = vld [vmem:[#allocation2 + $0x120] sm:$0xff]
  %v119 = vld [vmem:[#allocation2 + $0x128] sm:$0xff]
  %v120 = vld [vmem:[#allocation2 + $0x130] sm:$0xff]
  %v121 = vld [vmem:[#allocation2 + $0x138] sm:$0xff]
  %v122 = vld [vmem:[#allocation2 + $0x140] sm:$0xff]
  %v123 = vld [vmem:[#allocation2 + $0x148] sm:$0xff]
  %v124 = vld [vmem:[#allocation2 + $0x150] sm:$0xff]
  %v125 = vld [vmem:[#allocation2 + $0x158] sm:$0xff]
  %v126 = vld [vmem:[#allocation2 + $0x160] sm:$0xff]
  %v127 = vld [vmem:[#allocation2 + $0x168] sm:$0xff]
  %v128 = vld [vmem:[#allocation2 + $0x170] sm:$0xff]
  %v129 = vld [vmem:[#allocation2 + $0x178] sm:$0xff]
  %v130 = vld [vmem:[#allocation2 + $0x180] sm:$0xff]
  %v131 = vld [vmem:[#allocation2 + $0x188] sm:$0xff]
  %v132 = vld [vmem:[#allocation2 + $0x190] sm:$0xff]
  %v133 = vld [vmem:[#allocation2 + $0x198] sm:$0xff]
  %v134 = vld [vmem:[#allocation2 + $0x1a0] sm:$0xff]
  %v135 = vld [vmem:[#allocation2 + $0x1a8] sm:$0xff]
  %v136 = vld [vmem:[#allocation2 + $0x1b0] sm:$0xff]
  %v137 = vld [vmem:[#allocation2 + $0x1b8] sm:$0xff]
  %v138 = vld [vmem:[#allocation2 + $0x1c0] sm:$0xff]
  %v139 = vld [vmem:[#allocation2 + $0x1c8] sm:$0xff]
  %v140 = vld [vmem:[#allocation2 + $0x1d0] sm:$0xff]
  %v141 = vld [vmem:[#allocation2 + $0x1d8] sm:$0xff]
  %v142 = vld [vmem:[#allocation2 + $0x1e0] sm:$0xff]
  %v143 = vld [vmem:[#allocation2 + $0x1e8] sm:$0xff]
  %v144 = vld [vmem:[#allocation2 + $0x1f0] sm:$0xff]
  %v145 = vld [vmem:[#allocation2 + $0x1f8] sm:$0xff]
  %v146 = vld [vmem:[%s0] sm:$0xf]
  %v147 = vld [vmem:[%s0 + $0x4] sm:$0xf]
  %v148 = vld [vmem:[%s0 + $0x8] sm:$0xf]
  %v149 = vld [vmem:[%s0 + $0xc] sm:$0xf]
  %v150 = vld [vmem:[%s0 + $0x10] sm:$0xf]
  %v151 = vld [vmem:[%s0 + $0x14] sm:$0xf]
  %v152 = vld [vmem:[%s0 + $0x18] sm:$0xf]
  %v153 = vld [vmem:[%s0 + $0x1c] sm:$0xf]
  %v154 = vld [vmem:[%s0 + $0x20] sm:$0xf]
  %v155 = vld [vmem:[%s0 + $0x24] sm:$0xf]
  %v156 = vld [vmem:[%s0 + $0x28] sm:$0xf]
  %v157 = vld [vmem:[%s0 + $0x2c] sm:$0xf]
  %v158 = vld [vmem:[%s0 + $0x30] sm:$0xf]
  %v159 = vld [vmem:[%s0 + $0x34] sm:$0xf]
  %v160 = vld [vmem:[%s0 + $0x38] sm:$0xf]
  %v161 = vld [vmem:[%s0 + $0x3c] sm:$0xf]
  %v162 = vld [vmem:[%s0 + $0x40] sm:$0xf]
  %v163 = vld [vmem:[%s0 + $0x44] sm:$0xf]
  %v164 = vld [vmem:[%s0 + $0x48] sm:$0xf]
  %v165 = vld [vmem:[%s0 + $0x4c] sm:$0xf]
  %v166 = vld [vmem:[%s0 + $0x50] sm:$0xf]
  %v167 = vld [vmem:[%s0 + $0x54] sm:$0xf]
  %v168 = vld [vmem:[%s0 + $0x58] sm:$0xf]
  %v169 = vld [vmem:[%s0 + $0x5c] sm:$0xf]
  %v170 = vld [vmem:[%s0 + $0x60] sm:$0xf]
  %v171 = vld [vmem:[%s0 + $0x64] sm:$0xf]
  %v172 = vld [vmem:[%s0 + $0x68] sm:$0xf]
  %v173 = vld [vmem:[%s0 + $0x6c] sm:$0xf]
  %v174 = vld [vmem:[%s0 + $0x70] sm:$0xf]
  %v175 = vld [vmem:[%s0 + $0x74] sm:$0xf]
  %v176 = vld [vmem:[%s0 + $0x78] sm:$0xf]
  %v177 = vld [vmem:[%s0 + $0x7c] sm:$0xf]
  %v178 = vld [vmem:[%s0 + $0x80] sm:$0xf]
  %v179 = vld [vmem:[%s0 + $0x84] sm:$0xf]
  %v180 = vld [vmem:[%s0 + $0x88] sm:$0xf]
  %v181 = vld [vmem:[%s0 + $0x8c] sm:$0xf]
  %v182 = vld [vmem:[%s0 + $0x90] sm:$0xf]
  %v183 = vld [vmem:[%s0 + $0x94] sm:$0xf]
  %v184 = vld [vmem:[%s0 + $0x98] sm:$0xf]
  %v185 = vld [vmem:[%s0 + $0x9c] sm:$0xf]
  %v186 = vld [vmem:[%s0 + $0xa0] sm:$0xf]
  %v187 = vld [vmem:[%s0 + $0xa4] sm:$0xf]
  %v188 = vld [vmem:[%s0 + $0xa8] sm:$0xf]
  %v189 = vld [vmem:[%s0 + $0xac] sm:$0xf]
  %v190 = vld [vmem:[%s0 + $0xb0] sm:$0xf]
  %v191 = vld [vmem:[%s0 + $0xb4] sm:$0xf]
  %v192 = vld [vmem:[%s0 + $0xb8] sm:$0xf]
  %v193 = vld [vmem:[%s0 + $0xbc] sm:$0xf]
  %v194 = vld [vmem:[%s0 + $0xc0] sm:$0xf]
  %v195 = vld [vmem:[%s0 + $0xc4] sm:$0xf]
  %v196 = vld [vmem:[%s0 + $0xc8] sm:$0xf]
  %v197 = vld [vmem:[%s0 + $0xcc] sm:$0xf]
  %v198 = vld [vmem:[%s0 + $0xd0] sm:$0xf]
  %v199 = vld [vmem:[%s0 + $0xd4] sm:$0xf]
  %v200 = vld [vmem:[%s0 + $0xd8] sm:$0xf]
  %v201 = vld [vmem:[%s0 + $0xdc] sm:$0xf]
  %v202 = vld [vmem:[%s0 + $0xe0] sm:$0xf]
  %v203 = vld [vmem:[%s0 + $0xe4] sm:$0xf]
  %v204 = vld [vmem:[%s0 + $0xe8] sm:$0xf]
  %v205 = vld [vmem:[%s0 + $0xec] sm:$0xf]
  %v206 = vld [vmem:[%s0 + $0xf0] sm:$0xf]
  %v207 = vld [vmem:[%s0 + $0xf4] sm:$0xf]
  %v208 = vld [vmem:[%s0 + $0xf8] sm:$0xf]
  %v209 = vld [vmem:[%s0 + $0xfc] sm:$0xf]
  %v210 = vld [vmem:[%s1] sm:$0xf]
  %v211 = vld [vmem:[%s1 + $0x4] sm:$0xf]
  %v212 = vld [vmem:[%s1 + $0x8] sm:$0xf]
  %v213 = vld [vmem:[%s1 + $0xc] sm:$0xf]
  %v214 = vld [vmem:[%s1 + $0x10] sm:$0xf]
  %v215 = vld [vmem:[%s1 + $0x14] sm:$0xf]
  %v216 = vld [vmem:[%s1 + $0x18] sm:$0xf]
  %v217 = vld [vmem:[%s1 + $0x1c] sm:$0xf]
  %v218 = vld [vmem:[%s1 + $0x20] sm:$0xf]
  %v219 = vld [vmem:[%s1 + $0x24] sm:$0xf]
  %v220 = vld [vmem:[%s1 + $0x28] sm:$0xf]
  %v221 = vld [vmem:[%s1 + $0x2c] sm:$0xf]
  %v222 = vld [vmem:[%s1 + $0x30] sm:$0xf]
  %v223 = vld [vmem:[%s1 + $0x34] sm:$0xf]
  %v224 = vld [vmem:[%s1 + $0x38] sm:$0xf]
  %v225 = vld [vmem:[%s1 + $0x3c] sm:$0xf]
  %v290 = vunpack.c.l.b16 %v146
  %v291 = vunpack.c.l.b16 %v147
  %v292 = vunpack.c.l.b16 %v148
  %v293 = vunpack.c.l.b16 %v149
  %v294 = vunpack.c.l.b16 %v150
  %v295 = vunpack.c.l.b16 %v151
  %v296 = vunpack.c.l.b16 %v152
  %v297 = vunpack.c.l.b16 %v153
  %v298 = vunpack.c.l.b16 %v154
  %v299 = vunpack.c.l.b16 %v155
  %v300 = vunpack.c.l.b16 %v156
  %v301 = vunpack.c.l.b16 %v157
  %v302 = vunpack.c.l.b16 %v158
  %v303 = vunpack.c.l.b16 %v159
  %v304 = vunpack.c.l.b16 %v160
  %v305 = vunpack.c.l.b16 %v161
  %v306 = vunpack.c.l.b16 %v162
  %v307 = vunpack.c.l.b16 %v163
  %v308 = vunpack.c.l.b16 %v164
  %v309 = vunpack.c.l.b16 %v165
  %v310 = vunpack.c.l.b16 %v166
  %v311 = vunpack.c.l.b16 %v167
  %v312 = vunpack.c.l.b16 %v168
  %v313 = vunpack.c.l.b16 %v169
  %v314 = vunpack.c.l.b16 %v170
  %v315 = vunpack.c.l.b16 %v171
  %v316 = vunpack.c.l.b16 %v172
  %v317 = vunpack.c.l.b16 %v173
  %v318 = vunpack.c.l.b16 %v174
  %v319 = vunpack.c.l.b16 %v175
  %v320 = vunpack.c.l.b16 %v176
  %v321 = vunpack.c.l.b16 %v177
  %v322 = vunpack.c.l.b16 %v178
  %v323 = vunpack.c.l.b16 %v179
  %v324 = vunpack.c.l.b16 %v180
  %v325 = vunpack.c.l.b16 %v181
  %v326 = vunpack.c.l.b16 %v182
  %v327 = vunpack.c.l.b16 %v183
  %v328 = vunpack.c.l.b16 %v184
  %v329 = vunpack.c.l.b16 %v185
  %v330 = vunpack.c.l.b16 %v186
  %v331 = vunpack.c.l.b16 %v187
  %v332 = vunpack.c.l.b16 %v188
  %v333 = vunpack.c.l.b16 %v189
  %v334 = vunpack.c.l.b16 %v190
  %v335 = vunpack.c.l.b16 %v191
  %v336 = vunpack.c.l.b16 %v192
  %v337 = vunpack.c.l.b16 %v193
  %v338 = vunpack.c.l.b16 %v194
  %v339 = vunpack.c.l.b16 %v195
  %v340 = vunpack.c.l.b16 %v196
  %v341 = vunpack.c.l.b16 %v197
  %v342 = vunpack.c.l.b16 %v198
  %v343 = vunpack.c.l.b16 %v199
  %v344 = vunpack.c.l.b16 %v200
  %v345 = vunpack.c.l.b16 %v201
  %v346 = vunpack.c.l.b16 %v202
  %v347 = vunpack.c.l.b16 %v203
  %v348 = vunpack.c.l.b16 %v204
  %v349 = vunpack.c.l.b16 %v205
  %v350 = vunpack.c.l.b16 %v206
  %v351 = vunpack.c.l.b16 %v207
  %v352 = vunpack.c.l.b16 %v208
  %v353 = vunpack.c.l.b16 %v209
  %v354 = vpack.c.b16 %v291, %v290
  %v355 = vpack.c.b16 %v293, %v292
  %v356 = vpack.c.b16 %v295, %v294
  %v357 = vpack.c.b16 %v297, %v296
  %v358 = vpack.c.b16 %v299, %v298
  %v359 = vpack.c.b16 %v301, %v300
  %v360 = vpack.c.b16 %v303, %v302
  %v361 = vpack.c.b16 %v305, %v304
  %v362 = vpack.c.b16 %v307, %v306
  %v363 = vpack.c.b16 %v309, %v308
  %v364 = vpack.c.b16 %v311, %v310
  %v365 = vpack.c.b16 %v313, %v312
  %v366 = vpack.c.b16 %v315, %v314
  %v367 = vpack.c.b16 %v317, %v316
  %v368 = vpack.c.b16 %v319, %v318
  %v369 = vpack.c.b16 %v321, %v320
  %v370 = vpack.c.b16 %v323, %v322
  %v371 = vpack.c.b16 %v325, %v324
  %v372 = vpack.c.b16 %v327, %v326
  %v373 = vpack.c.b16 %v329, %v328
  %v374 = vpack.c.b16 %v331, %v330
  %v375 = vpack.c.b16 %v333, %v332
  %v376 = vpack.c.b16 %v335, %v334
  %v377 = vpack.c.b16 %v337, %v336
  %v378 = vpack.c.b16 %v339, %v338
  %v379 = vpack.c.b16 %v341, %v340
  %v380 = vpack.c.b16 %v343, %v342
  %v381 = vpack.c.b16 %v345, %v344
  %v382 = vpack.c.b16 %v347, %v346
  %v383 = vpack.c.b16 %v349, %v348
  %v384 = vpack.c.b16 %v351, %v350
  %v385 = vpack.c.b16 %v353, %v352
  %v434 = vunpack.c.l.b16 %v210
  %v435 = vunpack.c.l.b16 %v211
  %v436 = vunpack.c.l.b16 %v212
  %v437 = vunpack.c.l.b16 %v213
  %v438 = vunpack.c.l.b16 %v214
  %v439 = vunpack.c.l.b16 %v215
  %v440 = vunpack.c.l.b16 %v216
  %v441 = vunpack.c.l.b16 %v217
  %v442 = vunpack.c.l.b16 %v218
  %v443 = vunpack.c.l.b16 %v219
  %v444 = vunpack.c.l.b16 %v220
  %v445 = vunpack.c.l.b16 %v221
  %v446 = vunpack.c.l.b16 %v222
  %v447 = vunpack.c.l.b16 %v223
  %v448 = vunpack.c.l.b16 %v224
  %v449 = vunpack.c.l.b16 %v225
  %v450 = vpack.c.b16 %v435, %v434
  %v451 = vpack.c.b16 %v437, %v436
  %v452 = vpack.c.b16 %v439, %v438
  %v453 = vpack.c.b16 %v441, %v440
  %v454 = vpack.c.b16 %v443, %v442
  %v455 = vpack.c.b16 %v445, %v444
  %v456 = vpack.c.b16 %v447, %v446
  %v457 = vpack.c.b16 %v449, %v448
  %466 = vmatpush.bf16.msra.mxu0 %v457
  %467 = vmatpush.bf16.msra.mxu0 %v456
  %468 = vmatpush.bf16.msra.mxu0 %v455
  %469 = vmatpush.bf16.msra.mxu0 %v454
  %470 = vmatpush.bf16.msra.mxu0 %v453
  %471 = vmatpush.bf16.msra.mxu0 %v452
  %472 = vmatpush.bf16.msra.mxu0 %v451
  %473 = vmatpush.bf16.msra.mxu0 %v450
  %474 = vmatmul.bf16.gmra.mxu0 %v354
  %v475 = vpop.f32.mrf.mxu0
  %v476 = vadd.f32 0.0, %v475
  %v477 = vpop.f32.mrf.mxu0
  %v478 = vadd.f32 0.0, %v477
  %479 = vmatmul.bf16.gmra.mxu0 %v355
  %v480 = vpop.f32.mrf.mxu0
  %v481 = vadd.f32 0.0, %v480
  %v482 = vpop.f32.mrf.mxu0
  %v483 = vadd.f32 0.0, %v482
  %484 = vmatmul.bf16.gmra.mxu0 %v356
  %v485 = vpop.f32.mrf.mxu0
  %v486 = vadd.f32 0.0, %v485
  %v487 = vpop.f32.mrf.mxu0
  %v488 = vadd.f32 0.0, %v487
  %489 = vmatmul.bf16.gmra.mxu0 %v357
  %v490 = vpop.f32.mrf.mxu0
  %v491 = vadd.f32 0.0, %v490
  %v492 = vpop.f32.mrf.mxu0
  %v493 = vadd.f32 0.0, %v492
  %494 = vmatmul.bf16.gmra.mxu0 %v358
  %v495 = vpop.f32.mrf.mxu0
  %v496 = vadd.f32 0.0, %v495
  %v497 = vpop.f32.mrf.mxu0
  %v498 = vadd.f32 0.0, %v497
  %499 = vmatmul.bf16.gmra.mxu0 %v359
  %v500 = vpop.f32.mrf.mxu0
  %v501 = vadd.f32 0.0, %v500
  %v502 = vpop.f32.mrf.mxu0
  %v503 = vadd.f32 0.0, %v502
  %504 = vmatmul.bf16.gmra.mxu0 %v360
  %v505 = vpop.f32.mrf.mxu0
  %v506 = vadd.f32 0.0, %v505
  %v507 = vpop.f32.mrf.mxu0
  %v508 = vadd.f32 0.0, %v507
  %509 = vmatmul.bf16.gmra.mxu0 %v361
  %v510 = vpop.f32.mrf.mxu0
  %v511 = vadd.f32 0.0, %v510
  %v512 = vpop.f32.mrf.mxu0
  %v513 = vadd.f32 0.0, %v512
  %514 = vmatmul.bf16.gmra.mxu0 %v362
  %v515 = vpop.f32.mrf.mxu0
  %v516 = vadd.f32 0.0, %v515
  %v517 = vpop.f32.mrf.mxu0
  %v518 = vadd.f32 0.0, %v517
  %519 = vmatmul.bf16.gmra.mxu0 %v363
  %v520 = vpop.f32.mrf.mxu0
  %v521 = vadd.f32 0.0, %v520
  %v522 = vpop.f32.mrf.mxu0
  %v523 = vadd.f32 0.0, %v522
  %524 = vmatmul.bf16.gmra.mxu0 %v364
  %v525 = vpop.f32.mrf.mxu0
  %v526 = vadd.f32 0.0, %v525
  %v527 = vpop.f32.mrf.mxu0
  %v528 = vadd.f32 0.0, %v527
  %529 = vmatmul.bf16.gmra.mxu0 %v365
  %v530 = vpop.f32.mrf.mxu0
  %v531 = vadd.f32 0.0, %v530
  %v532 = vpop.f32.mrf.mxu0
  %v533 = vadd.f32 0.0, %v532
  %534 = vmatmul.bf16.gmra.mxu0 %v366
  %v535 = vpop.f32.mrf.mxu0
  %v536 = vadd.f32 0.0, %v535
  %v537 = vpop.f32.mrf.mxu0
  %v538 = vadd.f32 0.0, %v537
  %539 = vmatmul.bf16.gmra.mxu0 %v367
  %v540 = vpop.f32.mrf.mxu0
  %v541 = vadd.f32 0.0, %v540
  %v542 = vpop.f32.mrf.mxu0
  %v543 = vadd.f32 0.0, %v542
  %544 = vmatmul.bf16.gmra.mxu0 %v368
  %v545 = vpop.f32.mrf.mxu0
  %v546 = vadd.f32 0.0, %v545
  %v547 = vpop.f32.mrf.mxu0
  %v548 = vadd.f32 0.0, %v547
  %549 = vmatmul.bf16.gmra.mxu0 %v369
  %v550 = vpop.f32.mrf.mxu0
  %v551 = vadd.f32 0.0, %v550
  %v552 = vpop.f32.mrf.mxu0
  %v553 = vadd.f32 0.0, %v552
  %554 = vmatmul.bf16.gmra.mxu0 %v370
  %v555 = vpop.f32.mrf.mxu0
  %v556 = vadd.f32 0.0, %v555
  %v557 = vpop.f32.mrf.mxu0
  %v558 = vadd.f32 0.0, %v557
  %559 = vmatmul.bf16.gmra.mxu0 %v371
  %v560 = vpop.f32.mrf.mxu0
  %v561 = vadd.f32 0.0, %v560
  %v562 = vpop.f32.mrf.mxu0
  %v563 = vadd.f32 0.0, %v562
  %564 = vmatmul.bf16.gmra.mxu0 %v372
  %v565 = vpop.f32.mrf.mxu0
  %v566 = vadd.f32 0.0, %v565
  %v567 = vpop.f32.mrf.mxu0
  %v568 = vadd.f32 0.0, %v567
  %569 = vmatmul.bf16.gmra.mxu0 %v373
  %v570 = vpop.f32.mrf.mxu0
  %v571 = vadd.f32 0.0, %v570
  %v572 = vpop.f32.mrf.mxu0
  %v573 = vadd.f32 0.0, %v572
  %574 = vmatmul.bf16.gmra.mxu0 %v374
  %v575 = vpop.f32.mrf.mxu0
  %v576 = vadd.f32 0.0, %v575
  %v577 = vpop.f32.mrf.mxu0
  %v578 = vadd.f32 0.0, %v577
  %579 = vmatmul.bf16.gmra.mxu0 %v375
  %v580 = vpop.f32.mrf.mxu0
  %v581 = vadd.f32 0.0, %v580
  %v582 = vpop.f32.mrf.mxu0
  %v583 = vadd.f32 0.0, %v582
  %584 = vmatmul.bf16.gmra.mxu0 %v376
  %v585 = vpop.f32.mrf.mxu0
  %v586 = vadd.f32 0.0, %v585
  %v587 = vpop.f32.mrf.mxu0
  %v588 = vadd.f32 0.0, %v587
  %589 = vmatmul.bf16.gmra.mxu0 %v377
  %v590 = vpop.f32.mrf.mxu0
  %v591 = vadd.f32 0.0, %v590
  %v592 = vpop.f32.mrf.mxu0
  %v593 = vadd.f32 0.0, %v592
  %594 = vmatmul.bf16.gmra.mxu0 %v378
  %v595 = vpop.f32.mrf.mxu0
  %v596 = vadd.f32 0.0, %v595
  %v597 = vpop.f32.mrf.mxu0
  %v598 = vadd.f32 0.0, %v597
  %599 = vmatmul.bf16.gmra.mxu0 %v379
  %v600 = vpop.f32.mrf.mxu0
  %v601 = vadd.f32 0.0, %v600
  %v602 = vpop.f32.mrf.mxu0
  %v603 = vadd.f32 0.0, %v602
  %604 = vmatmul.bf16.gmra.mxu0 %v380
  %v605 = vpop.f32.mrf.mxu0
  %v606 = vadd.f32 0.0, %v605
  %v607 = vpop.f32.mrf.mxu0
  %v608 = vadd.f32 0.0, %v607
  %609 = vmatmul.bf16.gmra.mxu0 %v381
  %v610 = vpop.f32.mrf.mxu0
  %v611 = vadd.f32 0.0, %v610
  %v612 = vpop.f32.mrf.mxu0
  %v613 = vadd.f32 0.0, %v612
  %614 = vmatmul.bf16.gmra.mxu0 %v382
  %v615 = vpop.f32.mrf.mxu0
  %v616 = vadd.f32 0.0, %v615
  %v617 = vpop.f32.mrf.mxu0
  %v618 = vadd.f32 0.0, %v617
  %619 = vmatmul.bf16.gmra.mxu0 %v383
  %v620 = vpop.f32.mrf.mxu0
  %v621 = vadd.f32 0.0, %v620
  %v622 = vpop.f32.mrf.mxu0
  %v623 = vadd.f32 0.0, %v622
  %624 = vmatmul.bf16.gmra.mxu0 %v384
  %v625 = vpop.f32.mrf.mxu0
  %v626 = vadd.f32 0.0, %v625
  %v627 = vpop.f32.mrf.mxu0
  %v628 = vadd.f32 0.0, %v627
  %629 = vmatmul.bf16.gmra.mxu0 %v385
  %v630 = vpop.f32.mrf.mxu0
  %v631 = vadd.f32 0.0, %v630
  %v632 = vpop.f32.mrf.mxu0
  %v633 = vadd.f32 0.0, %v632
  %634 = vdwg.mxu0
  %v635 = vadd.f32 %v82, %v476
  %v636 = vadd.f32 %v83, %v478
  %v637 = vadd.f32 %v84, %v481
  %v638 = vadd.f32 %v85, %v483
  %v639 = vadd.f32 %v86, %v486
  %v640 = vadd.f32 %v87, %v488
  %v641 = vadd.f32 %v88, %v491
  %v642 = vadd.f32 %v89, %v493
  %v643 = vadd.f32 %v90, %v496
  %v644 = vadd.f32 %v91, %v498
  %v645 = vadd.f32 %v92, %v501
  %v646 = vadd.f32 %v93, %v503
  %v647 = vadd.f32 %v94, %v506
  %v648 = vadd.f32 %v95, %v508
  %v649 = vadd.f32 %v96, %v511
  %v650 = vadd.f32 %v97, %v513
  %v651 = vadd.f32 %v98, %v516
  %v652 = vadd.f32 %v99, %v518
  %v653 = vadd.f32 %v100, %v521
  %v654 = vadd.f32 %v101, %v523
  %v655 = vadd.f32 %v102, %v526
  %v656 = vadd.f32 %v103, %v528
  %v657 = vadd.f32 %v104, %v531
  %v658 = vadd.f32 %v105, %v533
  %v659 = vadd.f32 %v106, %v536
  %v660 = vadd.f32 %v107, %v538
  %v661 = vadd.f32 %v108, %v541
  %v662 = vadd.f32 %v109, %v543
  %v663 = vadd.f32 %v110, %v546
  %v664 = vadd.f32 %v111, %v548
  %v665 = vadd.f32 %v112, %v551
  %v666 = vadd.f32 %v113, %v553
  %v667 = vadd.f32 %v114, %v556
  %v668 = vadd.f32 %v115, %v558
  %v669 = vadd.f32 %v116, %v561
  %v670 = vadd.f32 %v117, %v563
  %v671 = vadd.f32 %v118, %v566
  %v672 = vadd.f32 %v119, %v568
  %v673 = vadd.f32 %v120, %v571
  %v674 = vadd.f32 %v121, %v573
  %v675 = vadd.f32 %v122, %v576
  %v676 = vadd.f32 %v123, %v578
  %v677 = vadd.f32 %v124, %v581
  %v678 = vadd.f32 %v125, %v583
  %v679 = vadd.f32 %v126, %v586
  %v680 = vadd.f32 %v127, %v588
  %v681 = vadd.f32 %v128, %v591
  %v682 = vadd.f32 %v129, %v593
  %v683 = vadd.f32 %v130, %v596
  %v684 = vadd.f32 %v131, %v598
  %v685 = vadd.f32 %v132, %v601
  %v686 = vadd.f32 %v133, %v603
  %v687 = vadd.f32 %v134, %v606
  %v688 = vadd.f32 %v135, %v608
  %v689 = vadd.f32 %v136, %v611
  %v690 = vadd.f32 %v137, %v613
  %v691 = vadd.f32 %v138, %v616
  %v692 = vadd.f32 %v139, %v618
  %v693 = vadd.f32 %v140, %v621
  %v694 = vadd.f32 %v141, %v623
  %v695 = vadd.f32 %v142, %v626
  %v696 = vadd.f32 %v143, %v628
  %v697 = vadd.f32 %v144, %v631
  %v698 = vadd.f32 %v145, %v633
  %699 = vst [vmem:[#allocation2] sm:$0xff] %v635
  %700 = vst [vmem:[#allocation2 + $0x8] sm:$0xff] %v636
  %701 = vst [vmem:[#allocation2 + $0x10] sm:$0xff] %v637
  %702 = vst [vmem:[#allocation2 + $0x18] sm:$0xff] %v638
  %703 = vst [vmem:[#allocation2 + $0x20] sm:$0xff] %v639
  %704 = vst [vmem:[#allocation2 + $0x28] sm:$0xff] %v640
  %705 = vst [vmem:[#allocation2 + $0x30] sm:$0xff] %v641
  %706 = vst [vmem:[#allocation2 + $0x38] sm:$0xff] %v642
  %707 = vst [vmem:[#allocation2 + $0x40] sm:$0xff] %v643
  %708 = vst [vmem:[#allocation2 + $0x48] sm:$0xff] %v644
  %709 = vst [vmem:[#allocation2 + $0x50] sm:$0xff] %v645
  %710 = vst [vmem:[#allocation2 + $0x58] sm:$0xff] %v646
  %711 = vst [vmem:[#allocation2 + $0x60] sm:$0xff] %v647
  %712 = vst [vmem:[#allocation2 + $0x68] sm:$0xff] %v648
  %713 = vst [vmem:[#allocation2 + $0x70] sm:$0xff] %v649
  %714 = vst [vmem:[#allocation2 + $0x78] sm:$0xff] %v650
  %715 = vst [vmem:[#allocation2 + $0x80] sm:$0xff] %v651
  %716 = vst [vmem:[#allocation2 + $0x88] sm:$0xff] %v652
  %717 = vst [vmem:[#allocation2 + $0x90] sm:$0xff] %v653
  %718 = vst [vmem:[#allocation2 + $0x98] sm:$0xff] %v654
  %719 = vst [vmem:[#allocation2 + $0xa0] sm:$0xff] %v655
  %720 = vst [vmem:[#allocation2 + $0xa8] sm:$0xff] %v656
  %721 = vst [vmem:[#allocation2 + $0xb0] sm:$0xff] %v657
  %722 = vst [vmem:[#allocation2 + $0xb8] sm:$0xff] %v658
  %723 = vst [vmem:[#allocation2 + $0xc0] sm:$0xff] %v659
  %724 = vst [vmem:[#allocation2 + $0xc8] sm:$0xff] %v660
  %725 = vst [vmem:[#allocation2 + $0xd0] sm:$0xff] %v661
  %726 = vst [vmem:[#allocation2 + $0xd8] sm:$0xff] %v662
  %727 = vst [vmem:[#allocation2 + $0xe0] sm:$0xff] %v663
  %728 = vst [vmem:[#allocation2 + $0xe8] sm:$0xff] %v664
  %729 = vst [vmem:[#allocation2 + $0xf0] sm:$0xff] %v665
  %730 = vst [vmem:[#allocation2 + $0xf8] sm:$0xff] %v666
  %731 = vst [vmem:[#allocation2 + $0x100] sm:$0xff] %v667
  %732 = vst [vmem:[#allocation2 + $0x108] sm:$0xff] %v668
  %733 = vst [vmem:[#allocation2 + $0x110] sm:$0xff] %v669
  %734 = vst [vmem:[#allocation2 + $0x118] sm:$0xff] %v670
  %735 = vst [vmem:[#allocation2 + $0x120] sm:$0xff] %v671
  %736 = vst [vmem:[#allocation2 + $0x128] sm:$0xff] %v672
  %737 = vst [vmem:[#allocation2 + $0x130] sm:$0xff] %v673
  %738 = vst [vmem:[#allocation2 + $0x138] sm:$0xff] %v674
  %739 = vst [vmem:[#allocation2 + $0x140] sm:$0xff] %v675
  %740 = vst [vmem:[#allocation2 + $0x148] sm:$0xff] %v676
  %741 = vst [vmem:[#allocation2 + $0x150] sm:$0xff] %v677
  %742 = vst [vmem:[#allocation2 + $0x158] sm:$0xff] %v678
  %743 = vst [vmem:[#allocation2 + $0x160] sm:$0xff] %v679
  %744 = vst [vmem:[#allocation2 + $0x168] sm:$0xff] %v680
  %745 = vst [vmem:[#allocation2 + $0x170] sm:$0xff] %v681
  %746 = vst [vmem:[#allocation2 + $0x178] sm:$0xff] %v682
  %747 = vst [vmem:[#allocation2 + $0x180] sm:$0xff] %v683
  %748 = vst [vmem:[#allocation2 + $0x188] sm:$0xff] %v684
  %749 = vst [vmem:[#allocation2 + $0x190] sm:$0xff] %v685
  %750 = vst [vmem:[#allocation2 + $0x198] sm:$0xff] %v686
  %751 = vst [vmem:[#allocation2 + $0x1a0] sm:$0xff] %v687
  %752 = vst [vmem:[#allocation2 + $0x1a8] sm:$0xff] %v688
  %753 = vst [vmem:[#allocation2 + $0x1b0] sm:$0xff] %v689
  %754 = vst [vmem:[#allocation2 + $0x1b8] sm:$0xff] %v690
  %755 = vst [vmem:[#allocation2 + $0x1c0] sm:$0xff] %v691
  %756 = vst [vmem:[#allocation2 + $0x1c8] sm:$0xff] %v692
  %757 = vst [vmem:[#allocation2 + $0x1d0] sm:$0xff] %v693
  %758 = vst [vmem:[#allocation2 + $0x1d8] sm:$0xff] %v694
  %759 = vst [vmem:[#allocation2 + $0x1e0] sm:$0xff] %v695
  %760 = vst [vmem:[#allocation2 + $0x1e8] sm:$0xff] %v696
  %761 = vst [vmem:[#allocation2 + $0x1f0] sm:$0xff] %v697
  %762 = vst [vmem:[#allocation2 + $0x1f8] sm:$0xff] %v698
  // Predicated region
  $region18: #{fwd.5} parent=0 // pred_check
    %p763 = pneg %p14
  $region19: #{fwd.5} parent=0 // pred_check_branch
    %765 = sbr.rel (%p763) target = $region21
  $region20: #{fwd.5} parent=0 // pred_region
    %v766 = vld [vmem:[#allocation2] sm:$0xff]
    %v767 = vld [vmem:[#allocation2 + $0x8] sm:$0xff]
    %v768 = vld [vmem:[#allocation2 + $0x10] sm:$0xff]
    %v769 = vld [vmem:[#allocation2 + $0x18] sm:$0xff]
    %v770 = vld [vmem:[#allocation2 + $0x20] sm:$0xff]
    %v771 = vld [vmem:[#allocation2 + $0x28] sm:$0xff]
    %v772 = vld [vmem:[#allocation2 + $0x30] sm:$0xff]
    %v773 = vld [vmem:[#allocation2 + $0x38] sm:$0xff]
    %v774 = vld [vmem:[#allocation2 + $0x40] sm:$0xff]
    %v775 = vld [vmem:[#allocation2 + $0x48] sm:$0xff]
    %v776 = vld [vmem:[#allocation2 + $0x50] sm:$0xff]
    %v777 = vld [vmem:[#allocation2 + $0x58] sm:$0xff]
    %v778 = vld [vmem:[#allocation2 + $0x60] sm:$0xff]
    %v779 = vld [vmem:[#allocation2 + $0x68] sm:$0xff]
    %v780 = vld [vmem:[#allocation2 + $0x70] sm:$0xff]
    %v781 = vld [vmem:[#allocation2 + $0x78] sm:$0xff]
    %v782 = vld [vmem:[#allocation2 + $0x80] sm:$0xff]
    %v783 = vld [vmem:[#allocation2 + $0x88] sm:$0xff]
    %v784 = vld [vmem:[#allocation2 + $0x90] sm:$0xff]
    %v785 = vld [vmem:[#allocation2 + $0x98] sm:$0xff]
    %v786 = vld [vmem:[#allocation2 + $0xa0] sm:$0xff]
    %v787 = vld [vmem:[#allocation2 + $0xa8] sm:$0xff]
    %v788 = vld [vmem:[#allocation2 + $0xb0] sm:$0xff]
    %v789 = vld [vmem:[#allocation2 + $0xb8] sm:$0xff]
    %v790 = vld [vmem:[#allocation2 + $0xc0] sm:$0xff]
    %v791 = vld [vmem:[#allocation2 + $0xc8] sm:$0xff]
    %v792 = vld [vmem:[#allocation2 + $0xd0] sm:$0xff]
    %v793 = vld [vmem:[#allocation2 + $0xd8] sm:$0xff]
    %v794 = vld [vmem:[#allocation2 + $0xe0] sm:$0xff]
    %v795 = vld [vmem:[#allocation2 + $0xe8] sm:$0xff]
    %v796 = vld [vmem:[#allocation2 + $0xf0] sm:$0xff]
    %v797 = vld [vmem:[#allocation2 + $0xf8] sm:$0xff]
    %v798 = vld [vmem:[#allocation2 + $0x100] sm:$0xff]
    %v799 = vld [vmem:[#allocation2 + $0x108] sm:$0xff]
    %v800 = vld [vmem:[#allocation2 + $0x110] sm:$0xff]
    %v801 = vld [vmem:[#allocation2 + $0x118] sm:$0xff]
    %v802 = vld [vmem:[#allocation2 + $0x120] sm:$0xff]
    %v803 = vld [vmem:[#allocation2 + $0x128] sm:$0xff]
    %v804 = vld [vmem:[#allocation2 + $0x130] sm:$0xff]
    %v805 = vld [vmem:[#allocation2 + $0x138] sm:$0xff]
    %v806 = vld [vmem:[#allocation2 + $0x140] sm:$0xff]
    %v807 = vld [vmem:[#allocation2 + $0x148] sm:$0xff]
    %v808 = vld [vmem:[#allocation2 + $0x150] sm:$0xff]
    %v809 = vld [vmem:[#allocation2 + $0x158] sm:$0xff]
    %v810 = vld [vmem:[#allocation2 + $0x160] sm:$0xff]
    %v811 = vld [vmem:[#allocation2 + $0x168] sm:$0xff]
    %v812 = vld [vmem:[#allocation2 + $0x170] sm:$0xff]
    %v813 = vld [vmem:[#allocation2 + $0x178] sm:$0xff]
    %v814 = vld [vmem:[#allocation2 + $0x180] sm:$0xff]
    %v815 = vld [vmem:[#allocation2 + $0x188] sm:$0xff]
    %v816 = vld [vmem:[#allocation2 + $0x190] sm:$0xff]
    %v817 = vld [vmem:[#allocation2 + $0x198] sm:$0xff]
    %v818 = vld [vmem:[#allocation2 + $0x1a0] sm:$0xff]
    %v819 = vld [vmem:[#allocation2 + $0x1a8] sm:$0xff]
    %v820 = vld [vmem:[#allocation2 + $0x1b0] sm:$0xff]
    %v821 = vld [vmem:[#allocation2 + $0x1b8] sm:$0xff]
    %v822 = vld [vmem:[#allocation2 + $0x1c0] sm:$0xff]
    %v823 = vld [vmem:[#allocation2 + $0x1c8] sm:$0xff]
    %v824 = vld [vmem:[#allocation2 + $0x1d0] sm:$0xff]
    %v825 = vld [vmem:[#allocation2 + $0x1d8] sm:$0xff]
    %v826 = vld [vmem:[#allocation2 + $0x1e0] sm:$0xff]
    %v827 = vld [vmem:[#allocation2 + $0x1e8] sm:$0xff]
    %v828 = vld [vmem:[#allocation2 + $0x1f0] sm:$0xff]
    %v829 = vld [vmem:[#allocation2 + $0x1f8] sm:$0xff]
    %v830 = vld [vmem:[%s2] sm:$0x1]
    %v832 = vperm.slane %v830, 0
    %v834 = vadd.f32 %v766, %v832
    %v835 = vadd.f32 %v767, %v832
    %v836 = vadd.f32 %v768, %v832
    %v837 = vadd.f32 %v769, %v832
    %v838 = vadd.f32 %v770, %v832
    %v839 = vadd.f32 %v771, %v832
    %v840 = vadd.f32 %v772, %v832
    %v841 = vadd.f32 %v773, %v832
    %v842 = vadd.f32 %v774, %v832
    %v843 = vadd.f32 %v775, %v832
    %v844 = vadd.f32 %v776, %v832
    %v845 = vadd.f32 %v777, %v832
    %v846 = vadd.f32 %v778, %v832
    %v847 = vadd.f32 %v779, %v832
    %v848 = vadd.f32 %v780, %v832
    %v849 = vadd.f32 %v781, %v832
    %v850 = vadd.f32 %v782, %v832
    %v851 = vadd.f32 %v783, %v832
    %v852 = vadd.f32 %v784, %v832
    %v853 = vadd.f32 %v785, %v832
    %v854 = vadd.f32 %v786, %v832
    %v855 = vadd.f32 %v787, %v832
    %v856 = vadd.f32 %v788, %v832
    %v857 = vadd.f32 %v789, %v832
    %v858 = vadd.f32 %v790, %v832
    %v859 = vadd.f32 %v791, %v832
    %v860 = vadd.f32 %v792, %v832
    %v861 = vadd.f32 %v793, %v832
    %v862 = vadd.f32 %v794, %v832
    %v863 = vadd.f32 %v795, %v832
    %v864 = vadd.f32 %v796, %v832
    %v865 = vadd.f32 %v797, %v832
    %v866 = vadd.f32 %v798, %v832
    %v867 = vadd.f32 %v799, %v832
    %v868 = vadd.f32 %v800, %v832
    %v869 = vadd.f32 %v801, %v832
    %v870 = vadd.f32 %v802, %v832
    %v871 = vadd.f32 %v803, %v832
    %v872 = vadd.f32 %v804, %v832
    %v873 = vadd.f32 %v805, %v832
    %v874 = vadd.f32 %v806, %v832
    %v875 = vadd.f32 %v807, %v832
    %v876 = vadd.f32 %v808, %v832
    %v877 = vadd.f32 %v809, %v832
    %v878 = vadd.f32 %v810, %v832
    %v879 = vadd.f32 %v811, %v832
    %v880 = vadd.f32 %v812, %v832
    %v881 = vadd.f32 %v813, %v832
    %v882 = vadd.f32 %v814, %v832
    %v883 = vadd.f32 %v815, %v832
    %v884 = vadd.f32 %v816, %v832
    %v885 = vadd.f32 %v817, %v832
    %v886 = vadd.f32 %v818, %v832
    %v887 = vadd.f32 %v819, %v832
    %v888 = vadd.f32 %v820, %v832
    %v889 = vadd.f32 %v821, %v832
    %v890 = vadd.f32 %v822, %v832
    %v891 = vadd.f32 %v823, %v832
    %v892 = vadd.f32 %v824, %v832
    %v893 = vadd.f32 %v825, %v832
    %v894 = vadd.f32 %v826, %v832
    %v895 = vadd.f32 %v827, %v832
    %v896 = vadd.f32 %v828, %v832
    %v897 = vadd.f32 %v829, %v832
    %v898 = vmul.f32 %v834, 0.2
    %v899 = vmul.f32 %v835, 0.2
    %v900 = vmul.f32 %v836, 0.2
    %v901 = vmul.f32 %v837, 0.2
    %v902 = vmul.f32 %v838, 0.2
    %v903 = vmul.f32 %v839, 0.2
    %v904 = vmul.f32 %v840, 0.2
    %v905 = vmul.f32 %v841, 0.2
    %v906 = vmul.f32 %v842, 0.2
    %v907 = vmul.f32 %v843, 0.2
    %v908 = vmul.f32 %v844, 0.2
    %v909 = vmul.f32 %v845, 0.2
    %v910 = vmul.f32 %v846, 0.2
    %v911 = vmul.f32 %v847, 0.2
    %v912 = vmul.f32 %v848, 0.2
    %v913 = vmul.f32 %v849, 0.2
    %v914 = vmul.f32 %v850, 0.2
    %v915 = vmul.f32 %v851, 0.2
    %v916 = vmul.f32 %v852, 0.2
    %v917 = vmul.f32 %v853, 0.2
    %v918 = vmul.f32 %v854, 0.2
    %v919 = vmul.f32 %v855, 0.2
    %v920 = vmul.f32 %v856, 0.2
    %v921 = vmul.f32 %v857, 0.2
    %v922 = vmul.f32 %v858, 0.2
    %v923 = vmul.f32 %v859, 0.2
    %v924 = vmul.f32 %v860, 0.2
    %v925 = vmul.f32 %v861, 0.2
    %v926 = vmul.f32 %v862, 0.2
    %v927 = vmul.f32 %v863, 0.2
    %v928 = vmul.f32 %v864, 0.2
    %v929 = vmul.f32 %v865, 0.2
    %v930 = vmul.f32 %v866, 0.2
    %v931 = vmul.f32 %v867, 0.2
    %v932 = vmul.f32 %v868, 0.2
    %v933 = vmul.f32 %v869, 0.2
    %v934 = vmul.f32 %v870, 0.2
    %v935 = vmul.f32 %v871, 0.2
    %v936 = vmul.f32 %v872, 0.2
    %v937 = vmul.f32 %v873, 0.2
    %v938 = vmul.f32 %v874, 0.2
    %v939 = vmul.f32 %v875, 0.2
    %v940 = vmul.f32 %v876, 0.2
    %v941 = vmul.f32 %v877, 0.2
    %v942 = vmul.f32 %v878, 0.2
    %v943 = vmul.f32 %v879, 0.2
    %v944 = vmul.f32 %v880, 0.2
    %v945 = vmul.f32 %v881, 0.2
    %v946 = vmul.f32 %v882, 0.2
    %v947 = vmul.f32 %v883, 0.2
    %v948 = vmul.f32 %v884, 0.2
    %v949 = vmul.f32 %v885, 0.2
    %v950 = vmul.f32 %v886, 0.2
    %v951 = vmul.f32 %v887, 0.2
    %v952 = vmul.f32 %v888, 0.2
    %v953 = vmul.f32 %v889, 0.2
    %v954 = vmul.f32 %v890, 0.2
    %v955 = vmul.f32 %v891, 0.2
    %v956 = vmul.f32 %v892, 0.2
    %v957 = vmul.f32 %v893, 0.2
    %v958 = vmul.f32 %v894, 0.2
    %v959 = vmul.f32 %v895, 0.2
    %v960 = vmul.f32 %v896, 0.2
    %v961 = vmul.f32 %v897, 0.2
    %v962 = vmax.f32 %v834, %v898
    %v963 = vmax.f32 %v835, %v899
    %v964 = vmax.f32 %v836, %v900
    %v965 = vmax.f32 %v837, %v901
    %v966 = vmax.f32 %v838, %v902
    %v967 = vmax.f32 %v839, %v903
    %v968 = vmax.f32 %v840, %v904
    %v969 = vmax.f32 %v841, %v905
    %v970 = vmax.f32 %v842, %v906
    %v971 = vmax.f32 %v843, %v907
    %v972 = vmax.f32 %v844, %v908
    %v973 = vmax.f32 %v845, %v909
    %v974 = vmax.f32 %v846, %v910
    %v975 = vmax.f32 %v847, %v911
    %v976 = vmax.f32 %v848, %v912
    %v977 = vmax.f32 %v849, %v913
    %v978 = vmax.f32 %v850, %v914
    %v979 = vmax.f32 %v851, %v915
    %v980 = vmax.f32 %v852, %v916
    %v981 = vmax.f32 %v853, %v917
    %v982 = vmax.f32 %v854, %v918
    %v983 = vmax.f32 %v855, %v919
    %v984 = vmax.f32 %v856, %v920
    %v985 = vmax.f32 %v857, %v921
    %v986 = vmax.f32 %v858, %v922
    %v987 = vmax.f32 %v859, %v923
    %v988 = vmax.f32 %v860, %v924
    %v989 = vmax.f32 %v861, %v925
    %v990 = vmax.f32 %v862, %v926
    %v991 = vmax.f32 %v863, %v927
    %v992 = vmax.f32 %v864, %v928
    %v993 = vmax.f32 %v865, %v929
    %v994 = vmax.f32 %v866, %v930
    %v995 = vmax.f32 %v867, %v931
    %v996 = vmax.f32 %v868, %v932
    %v997 = vmax.f32 %v869, %v933
    %v998 = vmax.f32 %v870, %v934
    %v999 = vmax.f32 %v871, %v935
    %v1000 = vmax.f32 %v872, %v936
    %v1001 = vmax.f32 %v873, %v937
    %v1002 = vmax.f32 %v874, %v938
    %v1003 = vmax.f32 %v875, %v939
    %v1004 = vmax.f32 %v876, %v940
    %v1005 = vmax.f32 %v877, %v941
    %v1006 = vmax.f32 %v878, %v942
    %v1007 = vmax.f32 %v879, %v943
    %v1008 = vmax.f32 %v880, %v944
    %v1009 = vmax.f32 %v881, %v945
    %v1010 = vmax.f32 %v882, %v946
    %v1011 = vmax.f32 %v883, %v947
    %v1012 = vmax.f32 %v884, %v948
    %v1013 = vmax.f32 %v885, %v949
    %v1014 = vmax.f32 %v886, %v950
    %v1015 = vmax.f32 %v887, %v951
    %v1016 = vmax.f32 %v888, %v952
    %v1017 = vmax.f32 %v889, %v953
    %v1018 = vmax.f32 %v890, %v954
    %v1019 = vmax.f32 %v891, %v955
    %v1020 = vmax.f32 %v892, %v956
    %v1021 = vmax.f32 %v893, %v957
    %v1022 = vmax.f32 %v894, %v958
    %v1023 = vmax.f32 %v895, %v959
    %v1024 = vmax.f32 %v896, %v960
    %v1025 = vmax.f32 %v897, %v961
    %v1026 = vpack.c.bf16 %v962, %v962
    %v1027 = vpack.c.bf16 %v963, %v963
    %v1028 = vpack.c.bf16 %v964, %v964
    %v1029 = vpack.c.bf16 %v965, %v965
    %v1030 = vpack.c.bf16 %v966, %v966
    %v1031 = vpack.c.bf16 %v967, %v967
    %v1032 = vpack.c.bf16 %v968, %v968
    %v1033 = vpack.c.bf16 %v969, %v969
    %v1034 = vpack.c.bf16 %v970, %v970
    %v1035 = vpack.c.bf16 %v971, %v971
    %v1036 = vpack.c.bf16 %v972, %v972
    %v1037 = vpack.c.bf16 %v973, %v973
    %v1038 = vpack.c.bf16 %v974, %v974
    %v1039 = vpack.c.bf16 %v975, %v975
    %v1040 = vpack.c.bf16 %v976, %v976
    %v1041 = vpack.c.bf16 %v977, %v977
    %v1042 = vpack.c.bf16 %v978, %v978
    %v1043 = vpack.c.bf16 %v979, %v979
    %v1044 = vpack.c.bf16 %v980, %v980
    %v1045 = vpack.c.bf16 %v981, %v981
    %v1046 = vpack.c.bf16 %v982, %v982
    %v1047 = vpack.c.bf16 %v983, %v983
    %v1048 = vpack.c.bf16 %v984, %v984
    %v1049 = vpack.c.bf16 %v985, %v985
    %v1050 = vpack.c.bf16 %v986, %v986
    %v1051 = vpack.c.bf16 %v987, %v987
    %v1052 = vpack.c.bf16 %v988, %v988
    %v1053 = vpack.c.bf16 %v989, %v989
    %v1054 = vpack.c.bf16 %v990, %v990
    %v1055 = vpack.c.bf16 %v991, %v991
    %v1056 = vpack.c.bf16 %v992, %v992
    %v1057 = vpack.c.bf16 %v993, %v993
    %v1058 = vpack.c.bf16 %v994, %v994
    %v1059 = vpack.c.bf16 %v995, %v995
    %v1060 = vpack.c.bf16 %v996, %v996
    %v1061 = vpack.c.bf16 %v997, %v997
    %v1062 = vpack.c.bf16 %v998, %v998
    %v1063 = vpack.c.bf16 %v999, %v999
    %v1064 = vpack.c.bf16 %v1000, %v1000
    %v1065 = vpack.c.bf16 %v1001, %v1001
    %v1066 = vpack.c.bf16 %v1002, %v1002
    %v1067 = vpack.c.bf16 %v1003, %v1003
    %v1068 = vpack.c.bf16 %v1004, %v1004
    %v1069 = vpack.c.bf16 %v1005, %v1005
    %v1070 = vpack.c.bf16 %v1006, %v1006
    %v1071 = vpack.c.bf16 %v1007, %v1007
    %v1072 = vpack.c.bf16 %v1008, %v1008
    %v1073 = vpack.c.bf16 %v1009, %v1009
    %v1074 = vpack.c.bf16 %v1010, %v1010
    %v1075 = vpack.c.bf16 %v1011, %v1011
    %v1076 = vpack.c.bf16 %v1012, %v1012
    %v1077 = vpack.c.bf16 %v1013, %v1013
    %v1078 = vpack.c.bf16 %v1014, %v1014
    %v1079 = vpack.c.bf16 %v1015, %v1015
    %v1080 = vpack.c.bf16 %v1016, %v1016
    %v1081 = vpack.c.bf16 %v1017, %v1017
    %v1082 = vpack.c.bf16 %v1018, %v1018
    %v1083 = vpack.c.bf16 %v1019, %v1019
    %v1084 = vpack.c.bf16 %v1020, %v1020
    %v1085 = vpack.c.bf16 %v1021, %v1021
    %v1086 = vpack.c.bf16 %v1022, %v1022
    %v1087 = vpack.c.bf16 %v1023, %v1023
    %v1088 = vpack.c.bf16 %v1024, %v1024
    %v1089 = vpack.c.bf16 %v1025, %v1025
    %1090 = vst [vmem:[%s3] sm:$0xf] %v1026
    %1091 = vst [vmem:[%s3 + $0x4] sm:$0xf] %v1027
    %1092 = vst [vmem:[%s3 + $0x8] sm:$0xf] %v1028
    %1093 = vst [vmem:[%s3 + $0xc] sm:$0xf] %v1029
    %1094 = vst [vmem:[%s3 + $0x10] sm:$0xf] %v1030
    %1095 = vst [vmem:[%s3 + $0x14] sm:$0xf] %v1031
    %1096 = vst [vmem:[%s3 + $0x18] sm:$0xf] %v1032
    %1097 = vst [vmem:[%s3 + $0x1c] sm:$0xf] %v1033
    %1098 = vst [vmem:[%s3 + $0x20] sm:$0xf] %v1034
    %1099 = vst [vmem:[%s3 + $0x24] sm:$0xf] %v1035
    %1100 = vst [vmem:[%s3 + $0x28] sm:$0xf] %v1036
    %1101 = vst [vmem:[%s3 + $0x2c] sm:$0xf] %v1037
    %1102 = vst [vmem:[%s3 + $0x30] sm:$0xf] %v1038
    %1103 = vst [vmem:[%s3 + $0x34] sm:$0xf] %v1039
    %1104 = vst [vmem:[%s3 + $0x38] sm:$0xf] %v1040
    %1105 = vst [vmem:[%s3 + $0x3c] sm:$0xf] %v1041
    %1106 = vst [vmem:[%s3 + $0x40] sm:$0xf] %v1042
    %1107 = vst [vmem:[%s3 + $0x44] sm:$0xf] %v1043
    %1108 = vst [vmem:[%s3 + $0x48] sm:$0xf] %v1044
    %1109 = vst [vmem:[%s3 + $0x4c] sm:$0xf] %v1045
    %1110 = vst [vmem:[%s3 + $0x50] sm:$0xf] %v1046
    %1111 = vst [vmem:[%s3 + $0x54] sm:$0xf] %v1047
    %1112 = vst [vmem:[%s3 + $0x58] sm:$0xf] %v1048
    %1113 = vst [vmem:[%s3 + $0x5c] sm:$0xf] %v1049
    %1114 = vst [vmem:[%s3 + $0x60] sm:$0xf] %v1050
    %1115 = vst [vmem:[%s3 + $0x64] sm:$0xf] %v1051
    %1116 = vst [vmem:[%s3 + $0x68] sm:$0xf] %v1052
    %1117 = vst [vmem:[%s3 + $0x6c] sm:$0xf] %v1053
    %1118 = vst [vmem:[%s3 + $0x70] sm:$0xf] %v1054
    %1119 = vst [vmem:[%s3 + $0x74] sm:$0xf] %v1055
    %1120 = vst [vmem:[%s3 + $0x78] sm:$0xf] %v1056
    %1121 = vst [vmem:[%s3 + $0x7c] sm:$0xf] %v1057
    %1122 = vst [vmem:[%s3 + $0x80] sm:$0xf] %v1058
    %1123 = vst [vmem:[%s3 + $0x84] sm:$0xf] %v1059
    %1124 = vst [vmem:[%s3 + $0x88] sm:$0xf] %v1060
    %1125 = vst [vmem:[%s3 + $0x8c] sm:$0xf] %v1061
    %1126 = vst [vmem:[%s3 + $0x90] sm:$0xf] %v1062
    %1127 = vst [vmem:[%s3 + $0x94] sm:$0xf] %v1063
    %1128 = vst [vmem:[%s3 + $0x98] sm:$0xf] %v1064
    %1129 = vst [vmem:[%s3 + $0x9c] sm:$0xf] %v1065
    %1130 = vst [vmem:[%s3 + $0xa0] sm:$0xf] %v1066
    %1131 = vst [vmem:[%s3 + $0xa4] sm:$0xf] %v1067
    %1132 = vst [vmem:[%s3 + $0xa8] sm:$0xf] %v1068
    %1133 = vst [vmem:[%s3 + $0xac] sm:$0xf] %v1069
    %1134 = vst [vmem:[%s3 + $0xb0] sm:$0xf] %v1070
    %1135 = vst [vmem:[%s3 + $0xb4] sm:$0xf] %v1071
    %1136 = vst [vmem:[%s3 + $0xb8] sm:$0xf] %v1072
    %1137 = vst [vmem:[%s3 + $0xbc] sm:$0xf] %v1073
    %1138 = vst [vmem:[%s3 + $0xc0] sm:$0xf] %v1074
    %1139 = vst [vmem:[%s3 + $0xc4] sm:$0xf] %v1075
    %1140 = vst [vmem:[%s3 + $0xc8] sm:$0xf] %v1076
    %1141 = vst [vmem:[%s3 + $0xcc] sm:$0xf] %v1077
    %1142 = vst [vmem:[%s3 + $0xd0] sm:$0xf] %v1078
    %1143 = vst [vmem:[%s3 + $0xd4] sm:$0xf] %v1079
    %1144 = vst [vmem:[%s3 + $0xd8] sm:$0xf] %v1080
    %1145 = vst [vmem:[%s3 + $0xdc] sm:$0xf] %v1081
    %1146 = vst [vmem:[%s3 + $0xe0] sm:$0xf] %v1082
    %1147 = vst [vmem:[%s3 + $0xe4] sm:$0xf] %v1083
    %1148 = vst [vmem:[%s3 + $0xe8] sm:$0xf] %v1084
    %1149 = vst [vmem:[%s3 + $0xec] sm:$0xf] %v1085
    %1150 = vst [vmem:[%s3 + $0xf0] sm:$0xf] %v1086
    %1151 = vst [vmem:[%s3 + $0xf4] sm:$0xf] %v1087
    %1152 = vst [vmem:[%s3 + $0xf8] sm:$0xf] %v1088
    %1153 = vst [vmem:[%s3 + $0xfc] sm:$0xf] %v1089
  $region21: #{fwd.5} parent=0 // pred_fallthru
    _
  // Predicated region
  $region22: #{fwd.5} parent=0 // pred_check
    _
  $region23: #{fwd.5} parent=0 // pred_check_branch
    %1155 = sbr.rel (0) target = $region25
  $region24: #{fwd.5} parent=0 // pred_region
    _
  $region25: #{fwd.5} parent=0 // pred_fallthru
    _
  // Predicated region
  $region26: #{fwd.5} parent=0 // pred_check
    _
  $region27: #{fwd.5} parent=0 // pred_check_branch
    %1157 = sbr.rel (0) target = $region29
  $region28: #{fwd.5} parent=0 // pred_region
    _
  $region29: #{fwd.5} parent=0 // pred_fallthru
    _

// kernel: fwd.6
$region0: #{fwd.6}
  #allocation0 [shape = 'u32[]', space=smem, size = 0x4, offset = 0x4, fixed_abs, tag = 'smem constant byte address 0x4 - core index']
  #allocation1 [shape = 'u32[72,128]{1,0:T(1,128)}', space=vmem, size = 0x9000, scoped, tag = 'internal scratch']
  #allocation2 [shape = 'f32[64,128]{1,0:T(8,128)}', space=vmem, size = 0x8000, scoped, tag = 'scratch operand']
  %s0 = inlined_call_operand.vmem [shape: bf16[2,64,1024], index: 0, kind: input, shape index: {}]
  %s1 = inlined_call_operand.vmem [shape: bf16[1024,128], index: 1, kind: input, shape index: {}]
  %s2 = inlined_call_operand.vmem [shape: bf16[2,64,128], index: 2, kind: output, shape index: {}]
  %s3 = sld [smem:[#allocation0]]
  $region49: #{fwd.6} parent=0
    _
  %s5 = ssub.s32 1, %s3
  %s6 = scalar_select 0, %s5, %s3
  loop: start=0, step=1, limit=4
  $region2: #{fwd.6} parent=0 // loop_pre_header
    _
  $region3: #{fwd.6} parent=0 // loop_header
    %s8 = sphi 0, %s12
    %p9 = scmp.ge.s32.totalorder %s8, 4
    %s15 = sphi 0, %s34
    %s16 = sphi 0, %s30
    %s17 = sphi 0, %s26
    %s18 = sphi 0, %s15
    %s19 = sphi 0, %s16
    %s20 = sphi 0, %s17
    %s21 = sphi 0, %s18
    %s22 = sphi 0, %s19
    %s23 = sphi 0, %s20
    %s39 = sphi 0, %s41
    %s42 = sphi 0, %s39
    %s43 = sphi 0, %s42
    %s59 = sphi 0, %s43
    %s67 = sphi 0, %s69
    %s70 = sphi 0, %s67
    %s71 = sphi 0, %s70
    %s87 = sphi 0, %s71
    %s95 = sphi 0, %s97
    %s98 = sphi 0, %s95
    %s99 = sphi 0, %s98
    %s115 = sphi 0, %s99
  $region4: #{fwd.6} parent=0 // loop_header_branch
    %11 = sbr.rel (%p9) target = $region8
  $region5: #{fwd.6} parent=0 // loop_body
    %s13 = ssub.s32 %s8, 1
    %s14 = ssub.s32 %s8, 2
    %s24 = sadd.s32 1, %s17
    %p25 = scmp.ge.s32.totalorder %s24, 1
    %s26 = scalar_select %p25, 0, %s24
    %s27 = sadd.s32 1, %s16
    %s28 = scalar_select %p25, %s27, %s16
    %p29 = scmp.ge.s32.totalorder %s28, 1
    %s30 = scalar_select %p29, 0, %s28
    %s31 = sadd.s32 1, %s15
    %s32 = scalar_select %p29, %s31, %s15
    %p33 = scmp.ge.s32.totalorder %s32, 2
    %s34 = scalar_select %p33, 0, %s32
    %s35 = ssub.s32 %s15, %s34
    %s36 = ssub.s32 %s17, %s26
    %s37 = sor.u32 %s35, %s36
    %p38 = scmp.eq.s32.totalorder %s37, 0
    %s40 = sadd.s32 %s39, 1
    %s41 = scalar_select %p38, %s39, %s40
    %p44 = pneg %p38
    %p45 = scmp.eq.s32.totalorder %s8, 1
    %p46 = por %p44, %p45
    %p47 = scmp.ne.s32.totalorder %s39, %s42
    %p48 = scmp.eq.s32.totalorder %s8, 0
    %p49 = por %p47, %p48
    %p50 = scmp.ne.s32.totalorder %s39, %s42
    %p51 = scmp.eq.s32.totalorder %s13, 1
    %p52 = por %p50, %p51
    %p53 = scmp.ne.s32.totalorder %s42, %s43
    %p54 = scmp.eq.s32.totalorder %s13, 0
    %p55 = por %p53, %p54
    %p56 = scmp.ne.s32.totalorder %s42, %s43
    %p57 = scmp.eq.s32.totalorder %s14, 1
    %p58 = por %p56, %p57
    %p60 = scmp.ne.s32.totalorder %s43, %s59
    %p61 = scmp.eq.s32.totalorder %s14, 0
    %p62 = por %p60, %p61
    %s63 = ssub.s32 %s17, %s26
    %s64 = ssub.s32 %s16, %s30
    %s65 = sor.u32 %s63, %s64
    %p66 = scmp.eq.s32.totalorder %s65, 0
    %s68 = sadd.s32 %s67, 1
    %s69 = scalar_select %p66, %s67, %s68
    %p72 = pneg %p66
    %p73 = scmp.eq.s32.totalorder %s8, 1
    %p74 = por %p72, %p73
    %p75 = scmp.ne.s32.totalorder %s67, %s70
    %p76 = scmp.eq.s32.totalorder %s8, 0
    %p77 = por %p75, %p76
    %p78 = scmp.ne.s32.totalorder %s67, %s70
    %p79 = scmp.eq.s32.totalorder %s13, 1
    %p80 = por %p78, %p79
    %p81 = scmp.ne.s32.totalorder %s70, %s71
    %p82 = scmp.eq.s32.totalorder %s13, 0
    %p83 = por %p81, %p82
    %p84 = scmp.ne.s32.totalorder %s70, %s71
    %p85 = scmp.eq.s32.totalorder %s14, 1
    %p86 = por %p84, %p85
    %p88 = scmp.ne.s32.totalorder %s71, %s87
    %p89 = scmp.eq.s32.totalorder %s14, 0
    %p90 = por %p88, %p89
    %s91 = ssub.s32 %s15, %s34
    %s92 = ssub.s32 %s16, %s30
    %s93 = sor.u32 %s91, %s92
    %p94 = scmp.eq.s32.totalorder %s93, 0
    %s96 = sadd.s32 %s95, 1
    %s97 = scalar_select %p94, %s95, %s96
    %p100 = pneg %p94
    %p101 = scmp.eq.s32.totalorder %s8, 1
    %p102 = por %p100, %p101
    %p103 = scmp.ne.s32.totalorder %s95, %s98
    %p104 = scmp.eq.s32.totalorder %s8, 0
    %p105 = por %p103, %p104
    %p106 = scmp.ne.s32.totalorder %s95, %s98
    %p107 = scmp.eq.s32.totalorder %s13, 1
    %p108 = por %p106, %p107
    %p109 = scmp.ne.s32.totalorder %s98, %s99
    %p110 = scmp.eq.s32.totalorder %s13, 0
    %p111 = por %p109, %p110
    %p112 = scmp.ne.s32.totalorder %s98, %s99
    %p113 = scmp.eq.s32.totalorder %s14, 1
    %p114 = por %p112, %p113
    %p116 = scmp.ne.s32.totalorder %s99, %s115
    %p117 = scmp.eq.s32.totalorder %s14, 0
    %p118 = por %p116, %p117
    %p119 = scmp.le.s32.totalorder 1, %s8
    %p120 = scmp.lt.s32.totalorder %s8, 3
    %p121 = pnand %p119, %p120
    %p122 = pneg %p121
    // Predicated region
    $region9: #{fwd.6} parent=5 // pred_check
      _
    $region10: #{fwd.6} parent=5 // pred_check_branch
      %124 = sbr.rel (%p121) target = $region12
    $region11: #{fwd.6} parent=5 // pred_region
      %s125 = ssub.s32 %s8, 1
      // Predicated region
      $region13: #{fwd.6} parent=11 // pred_check
        %p126 = pneg %p83
      $region14: #{fwd.6} parent=11 // pred_check_branch
        %128 = sbr.rel (%p126) target = $region16
      $region15: #{fwd.6} parent=11 // pred_region
        %s129 = smul.u32 128, %s20
        %p130 = scmp.lt.s32.totalorder %s129, 127
        %s131 = scalar_select %p130, %s129, 127
        %p132 = scmp.lt.s32.totalorder %s19, 0
        %s133 = scalar_select %p132, %s19, 0
        %s134 = sadd.s32 %s133, %s131
        %s135 = smul.addr %s134, 4
        %s136 = scalar_lea.vmem %s1, %s135
        %s137 = smul.u32 128, %s20
      $region16: #{fwd.6} parent=11 // pred_fallthru
        _
    $region12: #{fwd.6} parent=5 // pred_fallthru
      _
    %p138 = scmp.lt.s32.totalorder %s8, 2
    // Predicated region
    $region17: #{fwd.6} parent=5 // pred_check
      %p139 = pneg %p138
    $region18: #{fwd.6} parent=5 // pred_check_branch
      %141 = sbr.rel (%p139) target = $region20
    $region19: #{fwd.6} parent=5 // pred_region
      // Predicated region
      $region21: #{fwd.6} parent=19 // pred_check
        %p142 = pneg %p49
      $region22: #{fwd.6} parent=19 // pred_check_branch
        %144 = sbr.rel (%p142) target = $region24
      $region23: #{fwd.6} parent=19 // pred_region
        %s145 = smul.u32 8, %s17
        %p146 = scmp.lt.s32.totalorder %s15, 1
        %s147 = scalar_select %p146, %s15, 1
        %p148 = scmp.lt.s32.totalorder %s145, 7
        %s149 = scalar_select %p148, %s145, 7
        %s150 = smul.addr %s147, 64
        %s151 = sadd.s32 %s149, %s150
        %s152 = smul.addr %s151, 4
        %s153 = scalar_lea.vmem %s0, %s152
        %s154 = smul.u32 8, %s17
      $region24: #{fwd.6} parent=19 // pred_fallthru
        _
    $region20: #{fwd.6} parent=5 // pred_fallthru
      _
    %p155 = scmp.le.s32.totalorder 1, %s8
    %p156 = scmp.lt.s32.totalorder %s8, 3
    %p157 = pnand %p155, %p156
    %p158 = pneg %p157
    // Predicated region
    $region25: #{fwd.6} parent=5 // pred_check
      _
    $region26: #{fwd.6} parent=5 // pred_check_branch
      %160 = sbr.rel (%p157) target = $region28
    $region27: #{fwd.6} parent=5 // pred_region
      %s161 = ssub.s32 %s8, 1
      %s162 = smul.u32 8, %s20
      %p163 = scmp.lt.s32.totalorder %s18, 1
      %s164 = scalar_select %p163, %s18, 1
      %p165 = scmp.lt.s32.totalorder %s162, 7
      %s166 = scalar_select %p165, %s162, 7
      %s167 = smul.addr %s164, 64
      %s168 = sadd.s32 %s166, %s167
      %s169 = smul.addr %s168, 4
      %s170 = scalar_lea.vmem %s0, %s169
      %p171 = pneg %p55
      %p172 = pneg %p52
      %s173 = smul.u32 128, %s20
      %p174 = scmp.lt.s32.totalorder %s173, 127
      %s175 = scalar_select %p174, %s173, 127
      %p176 = scmp.lt.s32.totalorder %s19, 0
      %s177 = scalar_select %p176, %s19, 0
      %s178 = sadd.s32 %s177, %s175
      %s179 = smul.addr %s178, 4
      %s180 = scalar_lea.vmem %s1, %s179
      %p181 = pneg %p83
      %p182 = pneg %p80
      %p183 = pneg %p111
      %p184 = pneg %p108
      %p185 = scmp.lt.s32.totalorder %s18, 1
      %s186 = scalar_select %p185, %s18, 1
      %p187 = scmp.lt.s32.totalorder %s19, 0
      %s188 = scalar_select %p187, %s19, 0
      %s189 = smul.addr %s186, 8
      %s190 = sadd.s32 %s188, %s189
      %s191 = smul.addr %s190, 4
      %s192 = scalar_lea.vmem %s2, %s191
      %s193 = smul.u32 8, %s20
      %p194 = scmp.lt.s32.totalorder %s18, 1
      %s195 = scalar_select %p194, %s18, 1
      %p196 = scmp.lt.s32.totalorder %s193, 7
      %s197 = scalar_select %p196, %s193, 7
      %s198 = smul.addr %s195, 64
      %s199 = sadd.s32 %s197, %s198
      %s200 = smul.addr %s199, 4
      %s201 = scalar_lea.vmem %s0, %s200
      %s202 = smul.u32 8, %s20
      %s203 = smul.u32 128, %s20
      %p204 = scmp.lt.s32.totalorder %s203, 127
      %s205 = scalar_select %p204, %s203, 127
      %p206 = scmp.lt.s32.totalorder %s19, 0
      %s207 = scalar_select %p206, %s19, 0
      %s208 = sadd.s32 %s207, %s205
      %s209 = smul.addr %s208, 4
      %s210 = scalar_lea.vmem %s1, %s209
      %s211 = smul.u32 128, %s20
      %p212 = scmp.lt.s32.totalorder %s18, 1
      %s213 = scalar_select %p212, %s18, 1
      %p214 = scmp.lt.s32.totalorder %s19, 0
      %s215 = scalar_select %p214, %s19, 0
      %s216 = smul.addr %s213, 8
      %s217 = sadd.s32 %s215, %s216
      %s218 = smul.addr %s217, 4
      %s219 = scalar_lea.vmem %s2, %s218
      %p220 = scmp.eq.s32.totalorder %s20, 0
      // Predicated region
      $region29: #{fwd.6} parent=27 // pred_check
        %p221 = pneg %p220
      $region30: #{fwd.6} parent=27 // pred_check_branch
        %223 = sbr.rel (%p221) target = $region32
      $region31: #{fwd.6} parent=27 // pred_region
        %224 = vst [vmem:[#allocation2] sm:$0xff] 0.0
        %225 = vst [vmem:[#allocation2 + $0x8] sm:$0xff] 0.0
        %226 = vst [vmem:[#allocation2 + $0x10] sm:$0xff] 0.0
        %227 = vst [vmem:[#allocation2 + $0x18] sm:$0xff] 0.0
        %228 = vst [vmem:[#allocation2 + $0x20] sm:$0xff] 0.0
        %229 = vst [vmem:[#allocation2 + $0x28] sm:$0xff] 0.0
        %230 = vst [vmem:[#allocation2 + $0x30] sm:$0xff] 0.0
        %231 = vst [vmem:[#allocation2 + $0x38] sm:$0xff] 0.0
      $region32: #{fwd.6} parent=27 // pred_fallthru
        _
      %v232 = vld [vmem:[#allocation2] sm:$0xff]
      %v233 = vld [vmem:[#allocation2 + $0x8] sm:$0xff]
      %v234 = vld [vmem:[#allocation2 + $0x10] sm:$0xff]
      %v235 = vld [vmem:[#allocation2 + $0x18] sm:$0xff]
      %v236 = vld [vmem:[#allocation2 + $0x20] sm:$0xff]
      %v237 = vld [vmem:[#allocation2 + $0x28] sm:$0xff]
      %v238 = vld [vmem:[#allocation2 + $0x30] sm:$0xff]
      %v239 = vld [vmem:[#allocation2 + $0x38] sm:$0xff]
      %v240 = vld [vmem:[%s201] sm:$0xff]
      %v241 = vld [vmem:[%s201 + $0x8] sm:$0xff]
      %v242 = vld [vmem:[%s201 + $0x10] sm:$0xff]
      %v243 = vld [vmem:[%s201 + $0x18] sm:$0xff]
      %v244 = vld [vmem:[%s201 + $0x20] sm:$0xff]
      %v245 = vld [vmem:[%s201 + $0x28] sm:$0xff]
      %v246 = vld [vmem:[%s201 + $0x30] sm:$0xff]
      %v247 = vld [vmem:[%s201 + $0x38] sm:$0xff]
      %v248 = vld [vmem:[%s201 + $0x40] sm:$0xff]
      %v249 = vld [vmem:[%s201 + $0x48] sm:$0xff]
      %v250 = vld [vmem:[%s201 + $0x50] sm:$0xff]
      %v251 = vld [vmem:[%s201 + $0x58] sm:$0xff]
      %v252 = vld [vmem:[%s201 + $0x60] sm:$0xff]
      %v253 = vld [vmem:[%s201 + $0x68] sm:$0xff]
      %v254 = vld [vmem:[%s201 + $0x70] sm:$0xff]
      %v255 = vld [vmem:[%s201 + $0x78] sm:$0xff]
      %v256 = vld [vmem:[%s201 + $0x80] sm:$0xff]
      %v257 = vld [vmem:[%s201 + $0x88] sm:$0xff]
      %v258 = vld [vmem:[%s201 + $0x90] sm:$0xff]
      %v259 = vld [vmem:[%s201 + $0x98] sm:$0xff]
      %v260 = vld [vmem:[%s201 + $0xa0] sm:$0xff]
      %v261 = vld [vmem:[%s201 + $0xa8] sm:$0xff]
      %v262 = vld [vmem:[%s201 + $0xb0] sm:$0xff]
      %v263 = vld [vmem:[%s201 + $0xb8] sm:$0xff]
      %v264 = vld [vmem:[%s201 + $0xc0] sm:$0xff]
      %v265 = vld [vmem:[%s201 + $0xc8] sm:$0xff]
      %v266 = vld [vmem:[%s201 + $0xd0] sm:$0xff]
      %v267 = vld [vmem:[%s201 + $0xd8] sm:$0xff]
      %v268 = vld [vmem:[%s201 + $0xe0] sm:$0xff]
      %v269 = vld [vmem:[%s201 + $0xe8] sm:$0xff]
      %v270 = vld [vmem:[%s201 + $0xf0] sm:$0xff]
      %v271 = vld [vmem:[%s201 + $0xf8] sm:$0xff]
      %v272 = vld [vmem:[%s210] sm:$0xf]
      %v273 = vld [vmem:[%s210 + $0x4] sm:$0xf]
      %v274 = vld [vmem:[%s210 + $0x8] sm:$0xf]
      %v275 = vld [vmem:[%s210 + $0xc] sm:$0xf]
      %v276 = vld [vmem:[%s210 + $0x10] sm:$0xf]
      %v277 = vld [vmem:[%s210 + $0x14] sm:$0xf]
      %v278 = vld [vmem:[%s210 + $0x18] sm:$0xf]
      %v279 = vld [vmem:[%s210 + $0x1c] sm:$0xf]
      %v280 = vld [vmem:[%s210 + $0x20] sm:$0xf]
      %v281 = vld [vmem:[%s210 + $0x24] sm:$0xf]
      %v282 = vld [vmem:[%s210 + $0x28] sm:$0xf]
      %v283 = vld [vmem:[%s210 + $0x2c] sm:$0xf]
      %v284 = vld [vmem:[%s210 + $0x30] sm:$0xf]
      %v285 = vld [vmem:[%s210 + $0x34] sm:$0xf]
      %v286 = vld [vmem:[%s210 + $0x38] sm:$0xf]
      %v287 = vld [vmem:[%s210 + $0x3c] sm:$0xf]
      %v288 = vld [vmem:[%s210 + $0x40] sm:$0xf]
      %v289 = vld [vmem:[%s210 + $0x44] sm:$0xf]
      %v290 = vld [vmem:[%s210 + $0x48] sm:$0xf]
      %v291 = vld [vmem:[%s210 + $0x4c] sm:$0xf]
      %v292 = vld [vmem:[%s210 + $0x50] sm:$0xf]
      %v293 = vld [vmem:[%s210 + $0x54] sm:$0xf]
      %v294 = vld [vmem:[%s210 + $0x58] sm:$0xf]
      %v295 = vld [vmem:[%s210 + $0x5c] sm:$0xf]
      %v296 = vld [vmem:[%s210 + $0x60] sm:$0xf]
      %v297 = vld [vmem:[%s210 + $0x64] sm:$0xf]
      %v298 = vld [vmem:[%s210 + $0x68] sm:$0xf]
      %v299 = vld [vmem:[%s210 + $0x6c] sm:$0xf]
      %v300 = vld [vmem:[%s210 + $0x70] sm:$0xf]
      %v301 = vld [vmem:[%s210 + $0x74] sm:$0xf]
      %v302 = vld [vmem:[%s210 + $0x78] sm:$0xf]
      %v303 = vld [vmem:[%s210 + $0x7c] sm:$0xf]
      %v304 = vld [vmem:[%s210 + $0x80] sm:$0xf]
      %v305 = vld [vmem:[%s210 + $0x84] sm:$0xf]
      %v306 = vld [vmem:[%s210 + $0x88] sm:$0xf]
      %v307 = vld [vmem:[%s210 + $0x8c] sm:$0xf]
      %v308 = vld [vmem:[%s210 + $0x90] sm:$0xf]
      %v309 = vld [vmem:[%s210 + $0x94] sm:$0xf]
      %v310 = vld [vmem:[%s210 + $0x98] sm:$0xf]
      %v311 = vld [vmem:[%s210 + $0x9c] sm:$0xf]
      %v312 = vld [vmem:[%s210 + $0xa0] sm:$0xf]
      %v313 = vld [vmem:[%s210 + $0xa4] sm:$0xf]
      %v314 = vld [vmem:[%s210 + $0xa8] sm:$0xf]
      %v315 = vld [vmem:[%s210 + $0xac] sm:$0xf]
      %v316 = vld [vmem:[%s210 + $0xb0] sm:$0xf]
      %v317 = vld [vmem:[%s210 + $0xb4] sm:$0xf]
      %v318 = vld [vmem:[%s210 + $0xb8] sm:$0xf]
      %v319 = vld [vmem:[%s210 + $0xbc] sm:$0xf]
      %v320 = vld [vmem:[%s210 + $0xc0] sm:$0xf]
      %v321 = vld [vmem:[%s210 + $0xc4] sm:$0xf]
      %v322 = vld [vmem:[%s210 + $0xc8] sm:$0xf]
      %v323 = vld [vmem:[%s210 + $0xcc] sm:$0xf]
      %v324 = vld [vmem:[%s210 + $0xd0] sm:$0xf]
      %v325 = vld [vmem:[%s210 + $0xd4] sm:$0xf]
      %v326 = vld [vmem:[%s210 + $0xd8] sm:$0xf]
      %v327 = vld [vmem:[%s210 + $0xdc] sm:$0xf]
      %v328 = vld [vmem:[%s210 + $0xe0] sm:$0xf]
      %v329 = vld [vmem:[%s210 + $0xe4] sm:$0xf]
      %v330 = vld [vmem:[%s210 + $0xe8] sm:$0xf]
      %v331 = vld [vmem:[%s210 + $0xec] sm:$0xf]
      %v332 = vld [vmem:[%s210 + $0xf0] sm:$0xf]
      %v333 = vld [vmem:[%s210 + $0xf4] sm:$0xf]
      %v334 = vld [vmem:[%s210 + $0xf8] sm:$0xf]
      %v335 = vld [vmem:[%s210 + $0xfc] sm:$0xf]
      %v336 = vld [vmem:[%s210 + $0x100] sm:$0xf]
      %v337 = vld [vmem:[%s210 + $0x104] sm:$0xf]
      %v338 = vld [vmem:[%s210 + $0x108] sm:$0xf]
      %v339 = vld [vmem:[%s210 + $0x10c] sm:$0xf]
      %v340 = vld [vmem:[%s210 + $0x110] sm:$0xf]
      %v341 = vld [vmem:[%s210 + $0x114] sm:$0xf]
      %v342 = vld [vmem:[%s210 + $0x118] sm:$0xf]
      %v343 = vld [vmem:[%s210 + $0x11c] sm:$0xf]
      %v344 = vld [vmem:[%s210 + $0x120] sm:$0xf]
      %v345 = vld [vmem:[%s210 + $0x124] sm:$0xf]
      %v346 = vld [vmem:[%s210 + $0x128] sm:$0xf]
      %v347 = vld [vmem:[%s210 + $0x12c] sm:$0xf]
      %v348 = vld [vmem:[%s210 + $0x130] sm:$0xf]
      %v349 = vld [vmem:[%s210 + $0x134] sm:$0xf]
      %v350 = vld [vmem:[%s210 + $0x138] sm:$0xf]
      %v351 = vld [vmem:[%s210 + $0x13c] sm:$0xf]
      %v352 = vld [vmem:[%s210 + $0x140] sm:$0xf]
      %v353 = vld [vmem:[%s210 + $0x144] sm:$0xf]
      %v354 = vld [vmem:[%s210 + $0x148] sm:$0xf]
      %v355 = vld [vmem:[%s210 + $0x14c] sm:$0xf]
      %v356 = vld [vmem:[%s210 + $0x150] sm:$0xf]
      %v357 = vld [vmem:[%s210 + $0x154] sm:$0xf]
      %v358 = vld [vmem:[%s210 + $0x158] sm:$0xf]
      %v359 = vld [vmem:[%s210 + $0x15c] sm:$0xf]
      %v360 = vld [vmem:[%s210 + $0x160] sm:$0xf]
      %v361 = vld [vmem:[%s210 + $0x164] sm:$0xf]
      %v362 = vld [vmem:[%s210 + $0x168] sm:$0xf]
      %v363 = vld [vmem:[%s210 + $0x16c] sm:$0xf]
      %v364 = vld [vmem:[%s210 + $0x170] sm:$0xf]
      %v365 = vld [vmem:[%s210 + $0x174] sm:$0xf]
      %v366 = vld [vmem:[%s210 + $0x178] sm:$0xf]
      %v367 = vld [vmem:[%s210 + $0x17c] sm:$0xf]
      %v368 = vld [vmem:[%s210 + $0x180] sm:$0xf]
      %v369 = vld [vmem:[%s210 + $0x184] sm:$0xf]
      %v370 = vld [vmem:[%s210 + $0x188] sm:$0xf]
      %v371 = vld [vmem:[%s210 + $0x18c] sm:$0xf]
      %v372 = vld [vmem:[%s210 + $0x190] sm:$0xf]
      %v373 = vld [vmem:[%s210 + $0x194] sm:$0xf]
      %v374 = vld [vmem:[%s210 + $0x198] sm:$0xf]
      %v375 = vld [vmem:[%s210 + $0x19c] sm:$0xf]
      %v376 = vld [vmem:[%s210 + $0x1a0] sm:$0xf]
      %v377 = vld [vmem:[%s210 + $0x1a4] sm:$0xf]
      %v378 = vld [vmem:[%s210 + $0x1a8] sm:$0xf]
      %v379 = vld [vmem:[%s210 + $0x1ac] sm:$0xf]
      %v380 = vld [vmem:[%s210 + $0x1b0] sm:$0xf]
      %v381 = vld [vmem:[%s210 + $0x1b4] sm:$0xf]
      %v382 = vld [vmem:[%s210 + $0x1b8] sm:$0xf]
      %v383 = vld [vmem:[%s210 + $0x1bc] sm:$0xf]
      %v384 = vld [vmem:[%s210 + $0x1c0] sm:$0xf]
      %v385 = vld [vmem:[%s210 + $0x1c4] sm:$0xf]
      %v386 = vld [vmem:[%s210 + $0x1c8] sm:$0xf]
      %v387 = vld [vmem:[%s210 + $0x1cc] sm:$0xf]
      %v388 = vld [vmem:[%s210 + $0x1d0] sm:$0xf]
      %v389 = vld [vmem:[%s210 + $0x1d4] sm:$0xf]
      %v390 = vld [vmem:[%s210 + $0x1d8] sm:$0xf]
      %v391 = vld [vmem:[%s210 + $0x1dc] sm:$0xf]
      %v392 = vld [vmem:[%s210 + $0x1e0] sm:$0xf]
      %v393 = vld [vmem:[%s210 + $0x1e4] sm:$0xf]
      %v394 = vld [vmem:[%s210 + $0x1e8] sm:$0xf]
      %v395 = vld [vmem:[%s210 + $0x1ec] sm:$0xf]
      %v396 = vld [vmem:[%s210 + $0x1f0] sm:$0xf]
      %v397 = vld [vmem:[%s210 + $0x1f4] sm:$0xf]
      %v398 = vld [vmem:[%s210 + $0x1f8] sm:$0xf]
      %v399 = vld [vmem:[%s210 + $0x1fc] sm:$0xf]
      %v432 = vunpack.c.l.b16 %v240
      %v433 = vunpack.c.h.b16 %v240
      %v434 = vunpack.c.l.b16 %v241
      %v435 = vunpack.c.h.b16 %v241
      %v436 = vunpack.c.l.b16 %v242
      %v437 = vunpack.c.h.b16 %v242
      %v438 = vunpack.c.l.b16 %v243
      %v439 = vunpack.c.h.b16 %v243
      %v440 = vunpack.c.l.b16 %v244
      %v441 = vunpack.c.h.b16 %v244
      %v442 = vunpack.c.l.b16 %v245
      %v443 = vunpack.c.h.b16 %v245
      %v444 = vunpack.c.l.b16 %v246
      %v445 = vunpack.c.h.b16 %v246
      %v446 = vunpack.c.l.b16 %v247
      %v447 = vunpack.c.h.b16 %v247
      %v448 = vunpack.c.l.b16 %v248
      %v449 = vunpack.c.h.b16 %v248
      %v450 = vunpack.c.l.b16 %v249
      %v451 = vunpack.c.h.b16 %v249
      %v452 = vunpack.c.l.b16 %v250
      %v453 = vunpack.c.h.b16 %v250
      %v454 = vunpack.c.l.b16 %v251
      %v455 = vunpack.c.h.b16 %v251
      %v456 = vunpack.c.l.b16 %v252
      %v457 = vunpack.c.h.b16 %v252
      %v458 = vunpack.c.l.b16 %v253
      %v459 = vunpack.c.h.b16 %v253
      %v460 = vunpack.c.l.b16 %v254
      %v461 = vunpack.c.h.b16 %v254
      %v462 = vunpack.c.l.b16 %v255
      %v463 = vunpack.c.h.b16 %v255
      %v464 = vunpack.c.l.b16 %v256
      %v465 = vunpack.c.h.b16 %v256
      %v466 = vunpack.c.l.b16 %v257
      %v467 = vunpack.c.h.b16 %v257
      %v468 = vunpack.c.l.b16 %v258
      %v469 = vunpack.c.h.b16 %v258
      %v470 = vunpack.c.l.b16 %v259
      %v471 = vunpack.c.h.b16 %v259
      %v472 = vunpack.c.l.b16 %v260
      %v473 = vunpack.c.h.b16 %v260
      %v474 = vunpack.c.l.b16 %v261
      %v475 = vunpack.c.h.b16 %v261
      %v476 = vunpack.c.l.b16 %v262
      %v477 = vunpack.c.h.b16 %v262
      %v478 = vunpack.c.l.b16 %v263
      %v479 = vunpack.c.h.b16 %v263
      %v480 = vunpack.c.l.b16 %v264
      %v481 = vunpack.c.h.b16 %v264
      %v482 = vunpack.c.l.b16 %v265
      %v483 = vunpack.c.h.b16 %v265
      %v484 = vunpack.c.l.b16 %v266
      %v485 = vunpack.c.h.b16 %v266
      %v486 = vunpack.c.l.b16 %v267
      %v487 = vunpack.c.h.b16 %v267
      %v488 = vunpack.c.l.b16 %v268
      %v489 = vunpack.c.h.b16 %v268
      %v490 = vunpack.c.l.b16 %v269
      %v491 = vunpack.c.h.b16 %v269
      %v492 = vunpack.c.l.b16 %v270
      %v493 = vunpack.c.h.b16 %v270
      %v494 = vunpack.c.l.b16 %v271
      %v495 = vunpack.c.h.b16 %v271
      %v496 = vpack.c.b16 %v440, %v432
      %v497 = vpack.c.b16 %v441, %v433
      %v498 = vpack.c.b16 %v442, %v434
      %v499 = vpack.c.b16 %v443, %v435
      %v500 = vpack.c.b16 %v444, %v436
      %v501 = vpack.c.b16 %v445, %v437
      %v502 = vpack.c.b16 %v446, %v438
      %v503 = vpack.c.b16 %v447, %v439
      %v504 = vpack.c.b16 %v456, %v448
      %v505 = vpack.c.b16 %v457, %v449
      %v506 = vpack.c.b16 %v458, %v450
      %v507 = vpack.c.b16 %v459, %v451
      %v508 = vpack.c.b16 %v460, %v452
      %v509 = vpack.c.b16 %v461, %v453
      %v510 = vpack.c.b16 %v462, %v454
      %v511 = vpack.c.b16 %v463, %v455
      %v512 = vpack.c.b16 %v472, %v464
      %v513 = vpack.c.b16 %v473, %v465
      %v514 = vpack.c.b16 %v474, %v466
      %v515 = vpack.c.b16 %v475, %v467
      %v516 = vpack.c.b16 %v476, %v468
      %v517 = vpack.c.b16 %v477, %v469
      %v518 = vpack.c.b16 %v478, %v470
      %v519 = vpack.c.b16 %v479, %v471
      %v520 = vpack.c.b16 %v488, %v480
      %v521 = vpack.c.b16 %v489, %v481
      %v522 = vpack.c.b16 %v490, %v482
      %v523 = vpack.c.b16 %v491, %v483
      %v524 = vpack.c.b16 %v492, %v484
      %v525 = vpack.c.b16 %v493, %v485
      %v526 = vpack.c.b16 %v494, %v486
      %v527 = vpack.c.b16 %v495, %v487
      %v688 = vunpack.c.l.b16 %v272
      %v689 = vunpack.c.l.b16 %v273
      %v690 = vunpack.c.l.b16 %v274
      %v691 = vunpack.c.l.b16 %v275
      %v692 = vunpack.c.l.b16 %v276
      %v693 = vunpack.c.l.b16 %v277
      %v694 = vunpack.c.l.b16 %v278
      %v695 = vunpack.c.l.b16 %v279
      %v696 = vunpack.c.l.b16 %v280
      %v697 = vunpack.c.l.b16 %v281
      %v698 = vunpack.c.l.b16 %v282
      %v699 = vunpack.c.l.b16 %v283
      %v700 = vunpack.c.l.b16 %v284
      %v701 = vunpack.c.l.b16 %v285
      %v702 = vunpack.c.l.b16 %v286
      %v703 = vunpack.c.l.b16 %v287
      %v704 = vunpack.c.l.b16 %v288
      %v705 = vunpack.c.l.b16 %v289
      %v706 = vunpack.c.l.b16 %v290
      %v707 = vunpack.c.l.b16 %v291
      %v708 = vunpack.c.l.b16 %v292
      %v709 = vunpack.c.l.b16 %v293
      %v710 = vunpack.c.l.b16 %v294
      %v711 = vunpack.c.l.b16 %v295
      %v712 = vunpack.c.l.b16 %v296
      %v713 = vunpack.c.l.b16 %v297
      %v714 = vunpack.c.l.b16 %v298
      %v715 = vunpack.c.l.b16 %v299
      %v716 = vunpack.c.l.b16 %v300
      %v717 = vunpack.c.l.b16 %v301
      %v718 = vunpack.c.l.b16 %v302
      %v719 = vunpack.c.l.b16 %v303
      %v720 = vunpack.c.l.b16 %v304
      %v721 = vunpack.c.l.b16 %v305
      %v722 = vunpack.c.l.b16 %v306
      %v723 = vunpack.c.l.b16 %v307
      %v724 = vunpack.c.l.b16 %v308
      %v725 = vunpack.c.l.b16 %v309
      %v726 = vunpack.c.l.b16 %v310
      %v727 = vunpack.c.l.b16 %v311
      %v728 = vunpack.c.l.b16 %v312
      %v729 = vunpack.c.l.b16 %v313
      %v730 = vunpack.c.l.b16 %v314
      %v731 = vunpack.c.l.b16 %v315
      %v732 = vunpack.c.l.b16 %v316
      %v733 = vunpack.c.l.b16 %v317
      %v734 = vunpack.c.l.b16 %v318
      %v735 = vunpack.c.l.b16 %v319
      %v736 = vunpack.c.l.b16 %v320
      %v737 = vunpack.c.l.b16 %v321
      %v738 = vunpack.c.l.b16 %v322
      %v739 = vunpack.c.l.b16 %v323
      %v740 = vunpack.c.l.b16 %v324
      %v741 = vunpack.c.l.b16 %v325
      %v742 = vunpack.c.l.b16 %v326
      %v743 = vunpack.c.l.b16 %v327
      %v744 = vunpack.c.l.b16 %v328
      %v745 = vunpack.c.l.b16 %v329
      %v746 = vunpack.c.l.b16 %v330
      %v747 = vunpack.c.l.b16 %v331
      %v748 = vunpack.c.l.b16 %v332
      %v749 = vunpack.c.l.b16 %v333
      %v750 = vunpack.c.l.b16 %v334
      %v751 = vunpack.c.l.b16 %v335
      %v752 = vunpack.c.l.b16 %v336
      %v753 = vunpack.c.l.b16 %v337
      %v754 = vunpack.c.l.b16 %v338
      %v755 = vunpack.c.l.b16 %v339
      %v756 = vunpack.c.l.b16 %v340
      %v757 = vunpack.c.l.b16 %v341
      %v758 = vunpack.c.l.b16 %v342
      %v759 = vunpack.c.l.b16 %v343
      %v760 = vunpack.c.l.b16 %v344
      %v761 = vunpack.c.l.b16 %v345
      %v762 = vunpack.c.l.b16 %v346
      %v763 = vunpack.c.l.b16 %v347
      %v764 = vunpack.c.l.b16 %v348
      %v765 = vunpack.c.l.b16 %v349
      %v766 = vunpack.c.l.b16 %v350
      %v767 = vunpack.c.l.b16 %v351
      %v768 = vunpack.c.l.b16 %v352
      %v769 = vunpack.c.l.b16 %v353
      %v770 = vunpack.c.l.b16 %v354
      %v771 = vunpack.c.l.b16 %v355
      %v772 = vunpack.c.l.b16 %v356
      %v773 = vunpack.c.l.b16 %v357
      %v774 = vunpack.c.l.b16 %v358
      %v775 = vunpack.c.l.b16 %v359
      %v776 = vunpack.c.l.b16 %v360
      %v777 = vunpack.c.l.b16 %v361
      %v778 = vunpack.c.l.b16 %v362
      %v779 = vunpack.c.l.b16 %v363
      %v780 = vunpack.c.l.b16 %v364
      %v781 = vunpack.c.l.b16 %v365
      %v782 = vunpack.c.l.b16 %v366
      %v783 = vunpack.c.l.b16 %v367
      %v784 = vunpack.c.l.b16 %v368
      %v785 = vunpack.c.l.b16 %v369
      %v786 = vunpack.c.l.b16 %v370
      %v787 = vunpack.c.l.b16 %v371
      %v788 = vunpack.c.l.b16 %v372
      %v789 = vunpack.c.l.b16 %v373
      %v790 = vunpack.c.l.b16 %v374
      %v791 = vunpack.c.l.b16 %v375
      %v792 = vunpack.c.l.b16 %v376
      %v793 = vunpack.c.l.b16 %v377
      %v794 = vunpack.c.l.b16 %v378
      %v795 = vunpack.c.l.b16 %v379
      %v796 = vunpack.c.l.b16 %v380
      %v797 = vunpack.c.l.b16 %v381
      %v798 = vunpack.c.l.b16 %v382
      %v799 = vunpack.c.l.b16 %v383
      %v800 = vunpack.c.l.b16 %v384
      %v801 = vunpack.c.l.b16 %v385
      %v802 = vunpack.c.l.b16 %v386
      %v803 = vunpack.c.l.b16 %v387
      %v804 = vunpack.c.l.b16 %v388
      %v805 = vunpack.c.l.b16 %v389
      %v806 = vunpack.c.l.b16 %v390
      %v807 = vunpack.c.l.b16 %v391
      %v808 = vunpack.c.l.b16 %v392
      %v809 = vunpack.c.l.b16 %v393
      %v810 = vunpack.c.l.b16 %v394
      %v811 = vunpack.c.l.b16 %v395
      %v812 = vunpack.c.l.b16 %v396
      %v813 = vunpack.c.l.b16 %v397
      %v814 = vunpack.c.l.b16 %v398
      %v815 = vunpack.c.l.b16 %v399
      %v816 = vpack.c.b16 %v689, %v688
      %v817 = vpack.c.b16 %v691, %v690
      %v818 = vpack.c.b16 %v693, %v692
      %v819 = vpack.c.b16 %v695, %v694
      %v820 = vpack.c.b16 %v697, %v696
      %v821 = vpack.c.b16 %v699, %v698
      %v822 = vpack.c.b16 %v701, %v700
      %v823 = vpack.c.b16 %v703, %v702
      %v824 = vpack.c.b16 %v705, %v704
      %v825 = vpack.c.b16 %v707, %v706
      %v826 = vpack.c.b16 %v709, %v708
      %v827 = vpack.c.b16 %v711, %v710
      %v828 = vpack.c.b16 %v713, %v712
      %v829 = vpack.c.b16 %v715, %v714
      %v830 = vpack.c.b16 %v717, %v716
      %v831 = vpack.c.b16 %v719, %v718
      %v832 = vpack.c.b16 %v721, %v720
      %v833 = vpack.c.b16 %v723, %v722
      %v834 = vpack.c.b16 %v725, %v724
      %v835 = vpack.c.b16 %v727, %v726
      %v836 = vpack.c.b16 %v729, %v728
      %v837 = vpack.c.b16 %v731, %v730
      %v838 = vpack.c.b16 %v733, %v732
      %v839 = vpack.c.b16 %v735, %v734
      %v840 = vpack.c.b16 %v737, %v736
      %v841 = vpack.c.b16 %v739, %v738
      %v842 = vpack.c.b16 %v741, %v740
      %v843 = vpack.c.b16 %v743, %v742
      %v844 = vpack.c.b16 %v745, %v744
      %v845 = vpack.c.b16 %v747, %v746
      %v846 = vpack.c.b16 %v749, %v748
      %v847 = vpack.c.b16 %v751, %v750
      %v848 = vpack.c.b16 %v753, %v752
      %v849 = vpack.c.b16 %v755, %v754
      %v850 = vpack.c.b16 %v757, %v756
      %v851 = vpack.c.b16 %v759, %v758
      %v852 = vpack.c.b16 %v761, %v760
      %v853 = vpack.c.b16 %v763, %v762
      %v854 = vpack.c.b16 %v765, %v764
      %v855 = vpack.c.b16 %v767, %v766
      %v856 = vpack.c.b16 %v769, %v768
      %v857 = vpack.c.b16 %v771, %v770
      %v858 = vpack.c.b16 %v773, %v772
      %v859 = vpack.c.b16 %v775, %v774
      %v860 = vpack.c.b16 %v777, %v776
      %v861 = vpack.c.b16 %v779, %v778
      %v862 = vpack.c.b16 %v781, %v780
      %v863 = vpack.c.b16 %v783, %v782
      %v864 = vpack.c.b16 %v785, %v784
      %v865 = vpack.c.b16 %v787, %v786
      %v866 = vpack.c.b16 %v789, %v788
      %v867 = vpack.c.b16 %v791, %v790
      %v868 = vpack.c.b16 %v793, %v792
      %v869 = vpack.c.b16 %v795, %v794
      %v870 = vpack.c.b16 %v797, %v796
      %v871 = vpack.c.b16 %v799, %v798
      %v872 = vpack.c.b16 %v801, %v800
      %v873 = vpack.c.b16 %v803, %v802
      %v874 = vpack.c.b16 %v805, %v804
      %v875 = vpack.c.b16 %v807, %v806
      %v876 = vpack.c.b16 %v809, %v808
      %v877 = vpack.c.b16 %v811, %v810
      %v878 = vpack.c.b16 %v813, %v812
      %v879 = vpack.c.b16 %v815, %v814
      %944 = vmatpush.bf16.msra.mxu0 %v823
      %945 = vmatpush.bf16.msra.mxu0 %v822
      %946 = vmatpush.bf16.msra.mxu0 %v821
      %947 = vmatpush.bf16.msra.mxu0 %v820
      %948 = vmatpush.bf16.msra.mxu0 %v819
      %949 = vmatpush.bf16.msra.mxu0 %v818
      %950 = vmatpush.bf16.msra.mxu0 %v817
      %951 = vmatpush.bf16.msra.mxu0 %v816
      %952 = vmatmul.bf16.gmra.mxu0 %v496
      %v953 = vpop.f32.mrf.mxu0
      %v954 = vadd.f32 0.0, %v953
      %v955 = vpop.f32.mrf.mxu0
      %v956 = vadd.f32 0.0, %v955
      %957 = vmatmul.bf16.gmra.mxu0 %v504
      %v958 = vpop.f32.mrf.mxu0
      %v959 = vadd.f32 0.0, %v958
      %v960 = vpop.f32.mrf.mxu0
      %v961 = vadd.f32 0.0, %v960
      %962 = vmatmul.bf16.gmra.mxu0 %v512
      %v963 = vpop.f32.mrf.mxu0
      %v964 = vadd.f32 0.0, %v963
      %v965 = vpop.f32.mrf.mxu0
      %v966 = vadd.f32 0.0, %v965
      %967 = vmatmul.bf16.gmra.mxu0 %v520
      %v968 = vpop.f32.mrf.mxu0
      %v969 = vadd.f32 0.0, %v968
      %v970 = vpop.f32.mrf.mxu0
      %v971 = vadd.f32 0.0, %v970
      %972 = vdwg.mxu0
      %973 = vmatpush.bf16.msra.mxu0 %v831
      %974 = vmatpush.bf16.msra.mxu0 %v830
      %975 = vmatpush.bf16.msra.mxu0 %v829
      %976 = vmatpush.bf16.msra.mxu0 %v828
      %977 = vmatpush.bf16.msra.mxu0 %v827
      %978 = vmatpush.bf16.msra.mxu0 %v826
      %979 = vmatpush.bf16.msra.mxu0 %v825
      %980 = vmatpush.bf16.msra.mxu0 %v824
      %981 = vmatmul.bf16.gmra.mxu0 %v497
      %v982 = vpop.f32.mrf.mxu0
      %v983 = vadd.f32 %v954, %v982
      %v984 = vpop.f32.mrf.mxu0
      %v985 = vadd.f32 %v956, %v984
      %986 = vmatmul.bf16.gmra.mxu0 %v505
      %v987 = vpop.f32.mrf.mxu0
      %v988 = vadd.f32 %v959, %v987
      %v989 = vpop.f32.mrf.mxu0
      %v990 = vadd.f32 %v961, %v989
      %991 = vmatmul.bf16.gmra.mxu0 %v513
      %v992 = vpop.f32.mrf.mxu0
      %v993 = vadd.f32 %v964, %v992
      %v994 = vpop.f32.mrf.mxu0
      %v995 = vadd.f32 %v966, %v994
      %996 = vmatmul.bf16.gmra.mxu0 %v521
      %v997 = vpop.f32.mrf.mxu0
      %v998 = vadd.f32 %v969, %v997
      %v999 = vpop.f32.mrf.mxu0
      %v1000 = vadd.f32 %v971, %v999
      %1001 = vdwg.mxu0
      %1002 = vmatpush.bf16.msra.mxu0 %v839
      %1003 = vmatpush.bf16.msra.mxu0 %v838
      %1004 = vmatpush.bf16.msra.mxu0 %v837
      %1005 = vmatpush.bf16.msra.mxu0 %v836
      %1006 = vmatpush.bf16.msra.mxu0 %v835
      %1007 = vmatpush.bf16.msra.mxu0 %v834
      %1008 = vmatpush.bf16.msra.mxu0 %v833
      %1009 = vmatpush.bf16.msra.mxu0 %v832
      %1010 = vmatmul.bf16.gmra.mxu0 %v498
      %v1011 = vpop.f32.mrf.mxu0
      %v1012 = vadd.f32 %v983, %v1011
      %v1013 = vpop.f32.mrf.mxu0
      %v1014 = vadd.f32 %v985, %v1013
      %1015 = vmatmul.bf16.gmra.mxu0 %v506
      %v1016 = vpop.f32.mrf.mxu0
      %v1017 = vadd.f32 %v988, %v1016
      %v1018 = vpop.f32.mrf.mxu0
      %v1019 = vadd.f32 %v990, %v1018
      %1020 = vmatmul.bf16.gmra.mxu0 %v514
      %v1021 = vpop.f32.mrf.mxu0
      %v1022 = vadd.f32 %v993, %v1021
      %v1023 = vpop.f32.mrf.mxu0
      %v1024 = vadd.f32 %v995, %v1023
      %1025 = vmatmul.bf16.gmra.mxu0 %v522
      %v1026 = vpop.f32.mrf.mxu0
      %v1027 = vadd.f32 %v998, %v1026
      %v1028 = vpop.f32.mrf.mxu0
      %v1029 = vadd.f32 %v1000, %v1028
      %1030 = vdwg.mxu0
      %1031 = vmatpush.bf16.msra.mxu0 %v847
      %1032 = vmatpush.bf16.msra.mxu0 %v846
      %1033 = vmatpush.bf16.msra.mxu0 %v845
      %1034 = vmatpush.bf16.msra.mxu0 %v844
      %1035 = vmatpush.bf16.msra.mxu0 %v843
      %1036 = vmatpush.bf16.msra.mxu0 %v842
      %1037 = vmatpush.bf16.msra.mxu0 %v841
      %1038 = vmatpush.bf16.msra.mxu0 %v840
      %1039 = vmatmul.bf16.gmra.mxu0 %v499
      %v1040 = vpop.f32.mrf.mxu0
      %v1041 = vadd.f32 %v1012, %v1040
      %v1042 = vpop.f32.mrf.mxu0
      %v1043 = vadd.f32 %v1014, %v1042
      %1044 = vmatmul.bf16.gmra.mxu0 %v507
      %v1045 = vpop.f32.mrf.mxu0
      %v1046 = vadd.f32 %v1017, %v1045
      %v1047 = vpop.f32.mrf.mxu0
      %v1048 = vadd.f32 %v1019, %v1047
      %1049 = vmatmul.bf16.gmra.mxu0 %v515
      %v1050 = vpop.f32.mrf.mxu0
      %v1051 = vadd.f32 %v1022, %v1050
      %v1052 = vpop.f32.mrf.mxu0
      %v1053 = vadd.f32 %v1024, %v1052
      %1054 = vmatmul.bf16.gmra.mxu0 %v523
      %v1055 = vpop.f32.mrf.mxu0
      %v1056 = vadd.f32 %v1027, %v1055
      %v1057 = vpop.f32.mrf.mxu0
      %v1058 = vadd.f32 %v1029, %v1057
      %1059 = vdwg.mxu0
      %1060 = vmatpush.bf16.msra.mxu0 %v855
      %1061 = vmatpush.bf16.msra.mxu0 %v854
      %1062 = vmatpush.bf16.msra.mxu0 %v853
      %1063 = vmatpush.bf16.msra.mxu0 %v852
      %1064 = vmatpush.bf16.msra.mxu0 %v851
      %1065 = vmatpush.bf16.msra.mxu0 %v850
      %1066 = vmatpush.bf16.msra.mxu0 %v849
      %1067 = vmatpush.bf16.msra.mxu0 %v848
      %1068 = vmatmul.bf16.gmra.mxu0 %v500
      %v1069 = vpop.f32.mrf.mxu0
      %v1070 = vadd.f32 %v1041, %v1069
      %v1071 = vpop.f32.mrf.mxu0
      %v1072 = vadd.f32 %v1043, %v1071
      %1073 = vmatmul.bf16.gmra.mxu0 %v508
      %v1074 = vpop.f32.mrf.mxu0
      %v1075 = vadd.f32 %v1046, %v1074
      %v1076 = vpop.f32.mrf.mxu0
      %v1077 = vadd.f32 %v1048, %v1076
      %1078 = vmatmul.bf16.gmra.mxu0 %v516
      %v1079 = vpop.f32.mrf.mxu0
      %v1080 = vadd.f32 %v1051, %v1079
      %v1081 = vpop.f32.mrf.mxu0
      %v1082 = vadd.f32 %v1053, %v1081
      %1083 = vmatmul.bf16.gmra.mxu0 %v524
      %v1084 = vpop.f32.mrf.mxu0
      %v1085 = vadd.f32 %v1056, %v1084
      %v1086 = vpop.f32.mrf.mxu0
      %v1087 = vadd.f32 %v1058, %v1086
      %1088 = vdwg.mxu0
      %1089 = vmatpush.bf16.msra.mxu0 %v863
      %1090 = vmatpush.bf16.msra.mxu0 %v862
      %1091 = vmatpush.bf16.msra.mxu0 %v861
      %1092 = vmatpush.bf16.msra.mxu0 %v860
      %1093 = vmatpush.bf16.msra.mxu0 %v859
      %1094 = vmatpush.bf16.msra.mxu0 %v858
      %1095 = vmatpush.bf16.msra.mxu0 %v857
      %1096 = vmatpush.bf16.msra.mxu0 %v856
      %1097 = vmatmul.bf16.gmra.mxu0 %v501
      %v1098 = vpop.f32.mrf.mxu0
      %v1099 = vadd.f32 %v1070, %v1098
      %v1100 = vpop.f32.mrf.mxu0
      %v1101 = vadd.f32 %v1072, %v1100
      %1102 = vmatmul.bf16.gmra.mxu0 %v509
      %v1103 = vpop.f32.mrf.mxu0
      %v1104 = vadd.f32 %v1075, %v1103
      %v1105 = vpop.f32.mrf.mxu0
      %v1106 = vadd.f32 %v1077, %v1105
      %1107 = vmatmul.bf16.gmra.mxu0 %v517
      %v1108 = vpop.f32.mrf.mxu0
      %v1109 = vadd.f32 %v1080, %v1108
      %v1110 = vpop.f32.mrf.mxu0
      %v1111 = vadd.f32 %v1082, %v1110
      %1112 = vmatmul.bf16.gmra.mxu0 %v525
      %v1113 = vpop.f32.mrf.mxu0
      %v1114 = vadd.f32 %v1085, %v1113
      %v1115 = vpop.f32.mrf.mxu0
      %v1116 = vadd.f32 %v1087, %v1115
      %1117 = vdwg.mxu0
      %1118 = vmatpush.bf16.msra.mxu0 %v871
      %1119 = vmatpush.bf16.msra.mxu0 %v870
      %1120 = vmatpush.bf16.msra.mxu0 %v869
      %1121 = vmatpush.bf16.msra.mxu0 %v868
      %1122 = vmatpush.bf16.msra.mxu0 %v867
      %1123 = vmatpush.bf16.msra.mxu0 %v866
      %1124 = vmatpush.bf16.msra.mxu0 %v865
      %1125 = vmatpush.bf16.msra.mxu0 %v864
      %1126 = vmatmul.bf16.gmra.mxu0 %v502
      %v1127 = vpop.f32.mrf.mxu0
      %v1128 = vadd.f32 %v1099, %v1127
      %v1129 = vpop.f32.mrf.mxu0
      %v1130 = vadd.f32 %v1101, %v1129
      %1131 = vmatmul.bf16.gmra.mxu0 %v510
      %v1132 = vpop.f32.mrf.mxu0
      %v1133 = vadd.f32 %v1104, %v1132
      %v1134 = vpop.f32.mrf.mxu0
      %v1135 = vadd.f32 %v1106, %v1134
      %1136 = vmatmul.bf16.gmra.mxu0 %v518
      %v1137 = vpop.f32.mrf.mxu0
      %v1138 = vadd.f32 %v1109, %v1137
      %v1139 = vpop.f32.mrf.mxu0
      %v1140 = vadd.f32 %v1111, %v1139
      %1141 = vmatmul.bf16.gmra.mxu0 %v526
      %v1142 = vpop.f32.mrf.mxu0
      %v1143 = vadd.f32 %v1114, %v1142
      %v1144 = vpop.f32.mrf.mxu0
      %v1145 = vadd.f32 %v1116, %v1144
      %1146 = vdwg.mxu0
      %1147 = vmatpush.bf16.msra.mxu0 %v879
      %1148 = vmatpush.bf16.msra.mxu0 %v878
      %1149 = vmatpush.bf16.msra.mxu0 %v877
      %1150 = vmatpush.bf16.msra.mxu0 %v876
      %1151 = vmatpush.bf16.msra.mxu0 %v875
      %1152 = vmatpush.bf16.msra.mxu0 %v874
      %1153 = vmatpush.bf16.msra.mxu0 %v873
      %1154 = vmatpush.bf16.msra.mxu0 %v872
      %1155 = vmatmul.bf16.gmra.mxu0 %v503
      %v1156 = vpop.f32.mrf.mxu0
      %v1157 = vadd.f32 %v1128, %v1156
      %v1158 = vpop.f32.mrf.mxu0
      %v1159 = vadd.f32 %v1130, %v1158
      %1160 = vmatmul.bf16.gmra.mxu0 %v511
      %v1161 = vpop.f32.mrf.mxu0
      %v1162 = vadd.f32 %v1133, %v1161
      %v1163 = vpop.f32.mrf.mxu0
      %v1164 = vadd.f32 %v1135, %v1163
      %1165 = vmatmul.bf16.gmra.mxu0 %v519
      %v1166 = vpop.f32.mrf.mxu0
      %v1167 = vadd.f32 %v1138, %v1166
      %v1168 = vpop.f32.mrf.mxu0
      %v1169 = vadd.f32 %v1140, %v1168
      %1170 = vmatmul.bf16.gmra.mxu0 %v527
      %v1171 = vpop.f32.mrf.mxu0
      %v1172 = vadd.f32 %v1143, %v1171
      %v1173 = vpop.f32.mrf.mxu0
      %v1174 = vadd.f32 %v1145, %v1173
      %1175 = vdwg.mxu0
      %v1176 = vadd.f32 %v232, %v1157
      %v1177 = vadd.f32 %v233, %v1159
      %v1178 = vadd.f32 %v234, %v1162
      %v1179 = vadd.f32 %v235, %v1164
      %v1180 = vadd.f32 %v236, %v1167
      %v1181 = vadd.f32 %v237, %v1169
      %v1182 = vadd.f32 %v238, %v1172
      %v1183 = vadd.f32 %v239, %v1174
      %1184 = vst [vmem:[#allocation2] sm:$0xff] %v1176
      %1185 = vst [vmem:[#allocation2 + $0x8] sm:$0xff] %v1177
      %1186 = vst [vmem:[#allocation2 + $0x10] sm:$0xff] %v1178
      %1187 = vst [vmem:[#allocation2 + $0x18] sm:$0xff] %v1179
      %1188 = vst [vmem:[#allocation2 + $0x20] sm:$0xff] %v1180
      %1189 = vst [vmem:[#allocation2 + $0x28] sm:$0xff] %v1181
      %1190 = vst [vmem:[#allocation2 + $0x30] sm:$0xff] %v1182
      %1191 = vst [vmem:[#allocation2 + $0x38] sm:$0xff] %v1183
      // Predicated region
      $region33: #{fwd.6} parent=27 // pred_check
        %p1192 = pneg %p220
      $region34: #{fwd.6} parent=27 // pred_check_branch
        %1194 = sbr.rel (%p1192) target = $region36
      $region35: #{fwd.6} parent=27 // pred_region
        %v1195 = vld [vmem:[#allocation2] sm:$0xff]
        %v1196 = vld [vmem:[#allocation2 + $0x8] sm:$0xff]
        %v1197 = vld [vmem:[#allocation2 + $0x10] sm:$0xff]
        %v1198 = vld [vmem:[#allocation2 + $0x18] sm:$0xff]
        %v1199 = vld [vmem:[#allocation2 + $0x20] sm:$0xff]
        %v1200 = vld [vmem:[#allocation2 + $0x28] sm:$0xff]
        %v1201 = vld [vmem:[#allocation2 + $0x30] sm:$0xff]
        %v1202 = vld [vmem:[#allocation2 + $0x38] sm:$0xff]
        %v1203 = vadd.f32 %v1195, %v1196
        %v1204 = vadd.f32 %v1203, %v1197
        %v1205 = vadd.f32 %v1204, %v1198
        %v1206 = vadd.f32 %v1205, %v1199
        %v1207 = vadd.f32 %v1206, %v1200
        %v1208 = vadd.f32 %v1207, %v1201
        %v1209 = vadd.f32 %v1208, %v1202
        %v1210 = vrot.slane %v1209, 4
        %v1211 = vadd.f32 %v1209, %v1210
        %v1212 = vrot.slane %v1211, 2
        %v1213 = vadd.f32 %v1211, %v1212
        %v1214 = vrot.slane %v1213, 1
        %v1215 = vadd.f32 %v1213, %v1214
        %v1216 = vmul.f32 %v1215, 0.015625
        %v1217 = vsub.f32 %v1195, %v1216
        %v1218 = vsub.f32 %v1196, %v1216
        %v1219 = vsub.f32 %v1197, %v1216
        %v1220 = vsub.f32 %v1198, %v1216
        %v1221 = vsub.f32 %v1199, %v1216
        %v1222 = vsub.f32 %v1200, %v1216
        %v1223 = vsub.f32 %v1201, %v1216
        %v1224 = vsub.f32 %v1202, %v1216
        %v1225 = vmul.f32 %v1217, %v1217
        %v1226 = vmul.f32 %v1218, %v1218
        %v1227 = vmul.f32 %v1219, %v1219
        %v1228 = vmul.f32 %v1220, %v1220
        %v1229 = vmul.f32 %v1221, %v1221
        %v1230 = vmul.f32 %v1222, %v1222
        %v1231 = vmul.f32 %v1223, %v1223
        %v1232 = vmul.f32 %v1224, %v1224
        %v1233 = vadd.f32 %v1225, %v1226
        %v1234 = vadd.f32 %v1233, %v1227
        %v1235 = vadd.f32 %v1234, %v1228
        %v1236 = vadd.f32 %v1235, %v1229
        %v1237 = vadd.f32 %v1236, %v1230
        %v1238 = vadd.f32 %v1237, %v1231
        %v1239 = vadd.f32 %v1238, %v1232
        %v1240 = vrot.slane %v1239, 4
        %v1241 = vadd.f32 %v1239, %v1240
        %v1242 = vrot.slane %v1241, 2
        %v1243 = vadd.f32 %v1241, %v1242
        %v1244 = vrot.slane %v1243, 1
        %v1245 = vadd.f32 %v1243, %v1244
        %v1246 = vmul.f32 %v1245, 0.015625
        %v1247 = vadd.f32 %v1246, 1e-05
        %v1248 = vrsqrt.pop %v1247
        %v1249 = vmul.f32 %v1248, %v1247
        %v1250 = vmul.f32 %v1249, %v1248
        %v1251 = vmul.f32 0.5, %v1250
        %v1252 = vsub.f32 1.5, %v1251
        %v1253 = vmul.f32 %v1248, %v1252
        %vm1254 = vweird.f32 %v1247
        %vm1255 = vweird.f32 %v1248
        %vm1256 = vmor %vm1254, %vm1255
        %v1257 = vsel %vm1256, %v1248, %v1253
        %v1258 = vmul.f32 %v1217, %v1257
        %v1259 = vmul.f32 %v1218, %v1257
        %v1260 = vmul.f32 %v1219, %v1257
        %v1261 = vmul.f32 %v1220, %v1257
        %v1262 = vmul.f32 %v1221, %v1257
        %v1263 = vmul.f32 %v1222, %v1257
        %v1264 = vmul.f32 %v1223, %v1257
        %v1265 = vmul.f32 %v1224, %v1257
        %v1266 = vmul.f32 %v1258, 0.2
        %v1267 = vmul.f32 %v1259, 0.2
        %v1268 = vmul.f32 %v1260, 0.2
        %v1269 = vmul.f32 %v1261, 0.2
        %v1270 = vmul.f32 %v1262, 0.2
        %v1271 = vmul.f32 %v1263, 0.2
        %v1272 = vmul.f32 %v1264, 0.2
        %v1273 = vmul.f32 %v1265, 0.2
        %v1274 = vmax.f32 %v1258, %v1266
        %v1275 = vmax.f32 %v1259, %v1267
        %v1276 = vmax.f32 %v1260, %v1268
        %v1277 = vmax.f32 %v1261, %v1269
        %v1278 = vmax.f32 %v1262, %v1270
        %v1279 = vmax.f32 %v1263, %v1271
        %v1280 = vmax.f32 %v1264, %v1272
        %v1281 = vmax.f32 %v1265, %v1273
        %v1282 = vpack.c.bf16 %v1274, %v1274
        %v1283 = vpack.c.bf16 %v1275, %v1275
        %v1284 = vpack.c.bf16 %v1276, %v1276
        %v1285 = vpack.c.bf16 %v1277, %v1277
        %v1286 = vpack.c.bf16 %v1278, %v1278
        %v1287 = vpack.c.bf16 %v1279, %v1279
        %v1288 = vpack.c.bf16 %v1280, %v1280
        %v1289 = vpack.c.bf16 %v1281, %v1281
        %1290 = vst [vmem:[%s219] sm:$0xf] %v1282
        %1291 = vst [vmem:[%s219 + $0x4] sm:$0xf] %v1283
        %1292 = vst [vmem:[%s219 + $0x8] sm:$0xf] %v1284
        %1293 = vst [vmem:[%s219 + $0xc] sm:$0xf] %v1285
        %1294 = vst [vmem:[%s219 + $0x10] sm:$0xf] %v1286
        %1295 = vst [vmem:[%s219 + $0x14] sm:$0xf] %v1287
        %1296 = vst [vmem:[%s219 + $0x18] sm:$0xf] %v1288
        %1297 = vst [vmem:[%s219 + $0x1c] sm:$0xf] %v1289
      $region36: #{fwd.6} parent=27 // pred_fallthru
        _
      %p1298 = scmp.lt.s32.totalorder %s18, 1
      %s1299 = scalar_select %p1298, %s18, 1
      %p1300 = scmp.lt.s32.totalorder %s19, 0
      %s1301 = scalar_select %p1300, %s19, 0
      %s1302 = smul.addr %s1299, 8
      %s1303 = sadd.s32 %s1301, %s1302
      %s1304 = smul.addr %s1303, 4
      %s1305 = scalar_lea.vmem %s2, %s1304
      // Predicated region
      $region37: #{fwd.6} parent=27 // pred_check
        %p1306 = pneg %p108
      $region38: #{fwd.6} parent=27 // pred_check_branch
        %1308 = sbr.rel (%p1306) target = $region40
      $region39: #{fwd.6} parent=27 // pred_region
        _
      $region40: #{fwd.6} parent=27 // pred_fallthru
        _
    $region28: #{fwd.6} parent=5 // pred_fallthru
      _
    %p1309 = scmp.le.s32.totalorder 2, %s8
    // Predicated region
    $region41: #{fwd.6} parent=5 // pred_check
      %p1310 = pneg %p1309
    $region42: #{fwd.6} parent=5 // pred_check_branch
      %1312 = sbr.rel (%p1310) target = $region44
    $region43: #{fwd.6} parent=5 // pred_region
      %s1313 = ssub.s32 %s8, 2
      // Predicated region
      $region45: #{fwd.6} parent=43 // pred_check
        %p1314 = pneg %p114
      $region46: #{fwd.6} parent=43 // pred_check_branch
        %1316 = sbr.rel (%p1314) target = $region48
      $region47: #{fwd.6} parent=43 // pred_region
        %p1317 = scmp.lt.s32.totalorder %s21, 1
        %s1318 = scalar_select %p1317, %s21, 1
        %p1319 = scmp.lt.s32.totalorder %s22, 0
        %s1320 = scalar_select %p1319, %s22, 0
        %s1321 = smul.addr %s1318, 8
        %s1322 = sadd.s32 %s1320, %s1321
        %s1323 = smul.addr %s1322, 4
        %s1324 = scalar_lea.vmem %s2, %s1323
      $region48: #{fwd.6} parent=43 // pred_fallthru
        _
    $region44: #{fwd.6} parent=5 // pred_fallthru
      _
  $region6: #{fwd.6} parent=0 // loop_footer
    %s12 = sadd.s32 1, %s8
  $region7: #{fwd.6} parent=0 // loop_footer_branch
    %7 = sbr.rel target = $region3
  $region8: #{fwd.6} parent=0 // loop_exit
    _

// kernel: fwd.7
$region0: #{fwd.7}
  #allocation0 [shape = 'u32[]', space=smem, size = 0x4, offset = 0x4, fixed_abs, tag = 'smem constant byte address 0x4 - core index']
  #allocation1 [shape = 'u32[72,128]{1,0:T(1,128)}', space=vmem, size = 0x9000, scoped, tag = 'internal scratch']
  #allocation2 [shape = 'f32[16,256]{1,0:T(8,128)}', space=vmem, size = 0x4000, scoped, tag = 'scratch operand']
  %s0 = inlined_call_operand.vmem [shape: bf16[2,16,2048], index: 0, kind: input, shape index: {}]
  %s1 = inlined_call_operand.vmem [shape: bf16[2048,256], index: 1, kind: input, shape index: {}]
  %s2 = inlined_call_operand.vmem [shape: bf16[2,16,256], index: 2, kind: output, shape index: {}]
  %s3 = sld [smem:[#allocation0]]
  $region49: #{fwd.7} parent=0
    _
  %s5 = ssub.s32 1, %s3
  %s6 = scalar_select 0, %s5, %s3
  loop: start=0, step=1, limit=4
  $region2: #{fwd.7} parent=0 // loop_pre_header
    _
  $region3: #{fwd.7} parent=0 // loop_header
    %s8 = sphi 0, %s12
    %p9 = scmp.ge.s32.totalorder %s8, 4
    %s15 = sphi 0, %s34
    %s16 = sphi 0, %s30
    %s17 = sphi 0, %s26
    %s18 = sphi 0, %s15
    %s19 = sphi 0, %s16
    %s20 = sphi 0, %s17
    %s21 = sphi 0, %s18
    %s22 = sphi 0, %s19
    %s23 = sphi 0, %s20
    %s39 = sphi 0, %s41
    %s42 = sphi 0, %s39
    %s43 = sphi 0, %s42
    %s59 = sphi 0, %s43
    %s67 = sphi 0, %s69
    %s70 = sphi 0, %s67
    %s71 = sphi 0, %s70
    %s87 = sphi 0, %s71
    %s95 = sphi 0, %s97
    %s98 = sphi 0, %s95
    %s99 = sphi 0, %s98
    %s115 = sphi 0, %s99
  $region4: #{fwd.7} parent=0 // loop_header_branch
    %11 = sbr.rel (%p9) target = $region8
  $region5: #{fwd.7} parent=0 // loop_body
    %s13 = ssub.s32 %s8, 1
    %s14 = ssub.s32 %s8, 2
    %s24 = sadd.s32 1, %s17
    %p25 = scmp.ge.s32.totalorder %s24, 1
    %s26 = scalar_select %p25, 0, %s24
    %s27 = sadd.s32 1, %s16
    %s28 = scalar_select %p25, %s27, %s16
    %p29 = scmp.ge.s32.totalorder %s28, 1
    %s30 = scalar_select %p29, 0, %s28
    %s31 = sadd.s32 1, %s15
    %s32 = scalar_select %p29, %s31, %s15
    %p33 = scmp.ge.s32.totalorder %s32, 2
    %s34 = scalar_select %p33, 0, %s32
    %s35 = ssub.s32 %s15, %s34
    %s36 = ssub.s32 %s17, %s26
    %s37 = sor.u32 %s35, %s36
    %p38 = scmp.eq.s32.totalorder %s37, 0
    %s40 = sadd.s32 %s39, 1
    %s41 = scalar_select %p38, %s39, %s40
    %p44 = pneg %p38
    %p45 = scmp.eq.s32.totalorder %s8, 1
    %p46 = por %p44, %p45
    %p47 = scmp.ne.s32.totalorder %s39, %s42
    %p48 = scmp.eq.s32.totalorder %s8, 0
    %p49 = por %p47, %p48
    %p50 = scmp.ne.s32.totalorder %s39, %s42
    %p51 = scmp.eq.s32.totalorder %s13, 1
    %p52 = por %p50, %p51
    %p53 = scmp.ne.s32.totalorder %s42, %s43
    %p54 = scmp.eq.s32.totalorder %s13, 0
    %p55 = por %p53, %p54
    %p56 = scmp.ne.s32.totalorder %s42, %s43
    %p57 = scmp.eq.s32.totalorder %s14, 1
    %p58 = por %p56, %p57
    %p60 = scmp.ne.s32.totalorder %s43, %s59
    %p61 = scmp.eq.s32.totalorder %s14, 0
    %p62 = por %p60, %p61
    %s63 = ssub.s32 %s17, %s26
    %s64 = ssub.s32 %s16, %s30
    %s65 = sor.u32 %s63, %s64
    %p66 = scmp.eq.s32.totalorder %s65, 0
    %s68 = sadd.s32 %s67, 1
    %s69 = scalar_select %p66, %s67, %s68
    %p72 = pneg %p66
    %p73 = scmp.eq.s32.totalorder %s8, 1
    %p74 = por %p72, %p73
    %p75 = scmp.ne.s32.totalorder %s67, %s70
    %p76 = scmp.eq.s32.totalorder %s8, 0
    %p77 = por %p75, %p76
    %p78 = scmp.ne.s32.totalorder %s67, %s70
    %p79 = scmp.eq.s32.totalorder %s13, 1
    %p80 = por %p78, %p79
    %p81 = scmp.ne.s32.totalorder %s70, %s71
    %p82 = scmp.eq.s32.totalorder %s13, 0
    %p83 = por %p81, %p82
    %p84 = scmp.ne.s32.totalorder %s70, %s71
    %p85 = scmp.eq.s32.totalorder %s14, 1
    %p86 = por %p84, %p85
    %p88 = scmp.ne.s32.totalorder %s71, %s87
    %p89 = scmp.eq.s32.totalorder %s14, 0
    %p90 = por %p88, %p89
    %s91 = ssub.s32 %s15, %s34
    %s92 = ssub.s32 %s16, %s30
    %s93 = sor.u32 %s91, %s92
    %p94 = scmp.eq.s32.totalorder %s93, 0
    %s96 = sadd.s32 %s95, 1
    %s97 = scalar_select %p94, %s95, %s96
    %p100 = pneg %p94
    %p101 = scmp.eq.s32.totalorder %s8, 1
    %p102 = por %p100, %p101
    %p103 = scmp.ne.s32.totalorder %s95, %s98
    %p104 = scmp.eq.s32.totalorder %s8, 0
    %p105 = por %p103, %p104
    %p106 = scmp.ne.s32.totalorder %s95, %s98
    %p107 = scmp.eq.s32.totalorder %s13, 1
    %p108 = por %p106, %p107
    %p109 = scmp.ne.s32.totalorder %s98, %s99
    %p110 = scmp.eq.s32.totalorder %s13, 0
    %p111 = por %p109, %p110
    %p112 = scmp.ne.s32.totalorder %s98, %s99
    %p113 = scmp.eq.s32.totalorder %s14, 1
    %p114 = por %p112, %p113
    %p116 = scmp.ne.s32.totalorder %s99, %s115
    %p117 = scmp.eq.s32.totalorder %s14, 0
    %p118 = por %p116, %p117
    %p119 = scmp.le.s32.totalorder 1, %s8
    %p120 = scmp.lt.s32.totalorder %s8, 3
    %p121 = pnand %p119, %p120
    %p122 = pneg %p121
    // Predicated region
    $region9: #{fwd.7} parent=5 // pred_check
      _
    $region10: #{fwd.7} parent=5 // pred_check_branch
      %124 = sbr.rel (%p121) target = $region12
    $region11: #{fwd.7} parent=5 // pred_region
      %s125 = ssub.s32 %s8, 1
      // Predicated region
      $region13: #{fwd.7} parent=11 // pred_check
        %p126 = pneg %p83
      $region14: #{fwd.7} parent=11 // pred_check_branch
        %128 = sbr.rel (%p126) target = $region16
      $region15: #{fwd.7} parent=11 // pred_region
        %s129 = smul.u32 256, %s20
        %s130 = smul.u32 2, %s19
        %p131 = scmp.lt.s32.totalorder %s129, 255
        %s132 = scalar_select %p131, %s129, 255
        %p133 = scmp.lt.s32.totalorder %s130, 1
        %s134 = scalar_select %p133, %s130, 1
        %s135 = smul.addr %s132, 2
        %s136 = sadd.s32 %s134, %s135
        %s137 = smul.addr %s136, 4
        %s138 = scalar_lea.vmem %s1, %s137
        %s139 = smul.u32 256, %s20
        %s140 = smul.u32 2, %s19
      $region16: #{fwd.7} parent=11 // pred_fallthru
        _
    $region12: #{fwd.7} parent=5 // pred_fallthru
      _
    %p141 = scmp.lt.s32.totalorder %s8, 2
    // Predicated region
    $region17: #{fwd.7} parent=5 // pred_check
      %p142 = pneg %p141
    $region18: #{fwd.7} parent=5 // pred_check_branch
      %144 = sbr.rel (%p142) target = $region20
    $region19: #{fwd.7} parent=5 // pred_region
      // Predicated region
      $region21: #{fwd.7} parent=19 // pred_check
        %p145 = pneg %p49
      $region22: #{fwd.7} parent=19 // pred_check_branch
        %147 = sbr.rel (%p145) target = $region24
      $region23: #{fwd.7} parent=19 // pred_region
        %s148 = smul.u32 16, %s17
        %p149 = scmp.lt.s32.totalorder %s15, 1
        %s150 = scalar_select %p149, %s15, 1
        %p151 = scmp.lt.s32.totalorder %s148, 15
        %s152 = scalar_select %p151, %s148, 15
        %s153 = smul.addr %s150, 32
        %s154 = sadd.s32 %s152, %s153
        %s155 = smul.addr %s154, 4
        %s156 = scalar_lea.vmem %s0, %s155
        %s157 = smul.u32 16, %s17
      $region24: #{fwd.7} parent=19 // pred_fallthru
        _
    $region20: #{fwd.7} parent=5 // pred_fallthru
      _
    %p158 = scmp.le.s32.totalorder 1, %s8
    %p159 = scmp.lt.s32.totalorder %s8, 3
    %p160 = pnand %p158, %p159
    %p161 = pneg %p160
    // Predicated region
    $region25: #{fwd.7} parent=5 // pred_check
      _
    $region26: #{fwd.7} parent=5 // pred_check_branch
      %163 = sbr.rel (%p160) target = $region28
    $region27: #{fwd.7} parent=5 // pred_region
      %s164 = ssub.s32 %s8, 1
      %s165 = smul.u32 16, %s20
      %p166 = scmp.lt.s32.totalorder %s18, 1
      %s167 = scalar_select %p166, %s18, 1
      %p168 = scmp.lt.s32.totalorder %s165, 15
      %s169 = scalar_select %p168, %s165, 15
      %s170 = smul.addr %s167, 32
      %s171 = sadd.s32 %s169, %s170
      %s172 = smul.addr %s171, 4
      %s173 = scalar_lea.vmem %s0, %s172
      %p174 = pneg %p55
      %p175 = pneg %p52
      %s176 = smul.u32 256, %s20
      %s177 = smul.u32 2, %s19
      %p178 = scmp.lt.s32.totalorder %s176, 255
      %s179 = scalar_select %p178, %s176, 255
      %p180 = scmp.lt.s32.totalorder %s177, 1
      %s181 = scalar_select %p180, %s177, 1
      %s182 = smul.addr %s179, 2
      %s183 = sadd.s32 %s181, %s182
      %s184 = smul.addr %s183, 4
      %s185 = scalar_lea.vmem %s1, %s184
      %p186 = pneg %p83
      %p187 = pneg %p80
      %p188 = pneg %p111
      %p189 = pneg %p108
      %s190 = smul.u32 2, %s19
      %p191 = scmp.lt.s32.totalorder %s18, 1
      %s192 = scalar_select %p191, %s18, 1
      %p193 = scmp.lt.s32.totalorder %s190, 1
      %s194 = scalar_select %p193, %s190, 1
      %s195 = smul.addr %s192, 4
      %s196 = sadd.s32 %s194, %s195
      %s197 = smul.addr %s196, 4
      %s198 = scalar_lea.vmem %s2, %s197
      %s199 = smul.u32 16, %s20
      %p200 = scmp.lt.s32.totalorder %s18, 1
      %s201 = scalar_select %p200, %s18, 1
      %p202 = scmp.lt.s32.totalorder %s199, 15
      %s203 = scalar_select %p202, %s199, 15
      %s204 = smul.addr %s201, 32
      %s205 = sadd.s32 %s203, %s204
      %s206 = smul.addr %s205, 4
      %s207 = scalar_lea.vmem %s0, %s206
      %s208 = smul.u32 16, %s20
      %s209 = smul.u32 256, %s20
      %s210 = smul.u32 2, %s19
      %p211 = scmp.lt.s32.totalorder %s209, 255
      %s212 = scalar_select %p211, %s209, 255
      %p213 = scmp.lt.s32.totalorder %s210, 1
      %s214 = scalar_select %p213, %s210, 1
      %s215 = smul.addr %s212, 2
      %s216 = sadd.s32 %s214, %s215
      %s217 = smul.addr %s216, 4
      %s218 = scalar_lea.vmem %s1, %s217
      %s219 = smul.u32 256, %s20
      %s220 = smul.u32 2, %s19
      %s221 = smul.u32 2, %s19
      %p222 = scmp.lt.s32.totalorder %s18, 1
      %s223 = scalar_select %p222, %s18, 1
      %p224 = scmp.lt.s32.totalorder %s221, 1
      %s225 = scalar_select %p224, %s221, 1
      %s226 = smul.addr %s223, 4
      %s227 = sadd.s32 %s225, %s226
      %s228 = smul.addr %s227, 4
      %s229 = scalar_lea.vmem %s2, %s228
      %s230 = smul.u32 2, %s19
      %p231 = scmp.eq.s32.totalorder %s20, 0
      // Predicated region
      $region29: #{fwd.7} parent=27 // pred_check
        %p232 = pneg %p231
      $region30: #{fwd.7} parent=27 // pred_check_branch
        %234 = sbr.rel (%p232) target = $region32
      $region31: #{fwd.7} parent=27 // pred_region
        %235 = vst [vmem:[#allocation2] sm:$0xff] 0.0
        %236 = vst [vmem:[#allocation2 + $0x8] sm:$0xff] 0.0
        %237 = vst [vmem:[#allocation2 + $0x10] sm:$0xff] 0.0
        %238 = vst [vmem:[#allocation2 + $0x18] sm:$0xff] 0.0
      $region32: #{fwd.7} parent=27 // pred_fallthru
        _
      %v239 = vld [vmem:[#allocation2] sm:$0xff]
      %v240 = vld [vmem:[#allocation2 + $0x8] sm:$0xff]
      %v241 = vld [vmem:[#allocation2 + $0x10] sm:$0xff]
      %v242 = vld [vmem:[#allocation2 + $0x18] sm:$0xff]
      %v243 = vld [vmem:[%s207] sm:$0xff]
      %v244 = vld [vmem:[%s207 + $0x8] sm:$0xff]
      %v245 = vld [vmem:[%s207 + $0x10] sm:$0xff]
      %v246 = vld [vmem:[%s207 + $0x18] sm:$0xff]
      %v247 = vld [vmem:[%s207 + $0x20] sm:$0xff]
      %v248 = vld [vmem:[%s207 + $0x28] sm:$0xff]
      %v249 = vld [vmem:[%s207 + $0x30] sm:$0xff]
      %v250 = vld [vmem:[%s207 + $0x38] sm:$0xff]
      %v251 = vld [vmem:[%s207 + $0x40] sm:$0xff]
      %v252 = vld [vmem:[%s207 + $0x48] sm:$0xff]
      %v253 = vld [vmem:[%s207 + $0x50] sm:$0xff]
      %v254 = vld [vmem:[%s207 + $0x58] sm:$0xff]
      %v255 = vld [vmem:[%s207 + $0x60] sm:$0xff]
      %v256 = vld [vmem:[%s207 + $0x68] sm:$0xff]
      %v257 = vld [vmem:[%s207 + $0x70] sm:$0xff]
      %v258 = vld [vmem:[%s207 + $0x78] sm:$0xff]
      %v259 = vld [vmem:[%s218] sm:$0xff]
      %v260 = vld [vmem:[%s218 + $0x8] sm:$0xff]
      %v261 = vld [vmem:[%s218 + $0x10] sm:$0xff]
      %v262 = vld [vmem:[%s218 + $0x18] sm:$0xff]
      %v263 = vld [vmem:[%s218 + $0x20] sm:$0xff]
      %v264 = vld [vmem:[%s218 + $0x28] sm:$0xff]
      %v265 = vld [vmem:[%s218 + $0x30] sm:$0xff]
      %v266 = vld [vmem:[%s218 + $0x38] sm:$0xff]
      %v267 = vld [vmem:[%s218 + $0x40] sm:$0xff]
      %v268 = vld [vmem:[%s218 + $0x48] sm:$0xff]
      %v269 = vld [vmem:[%s218 + $0x50] sm:$0xff]
      %v270 = vld [vmem:[%s218 + $0x58] sm:$0xff]
      %v271 = vld [vmem:[%s218 + $0x60] sm:$0xff]
      %v272 = vld [vmem:[%s218 + $0x68] sm:$0xff]
      %v273 = vld [vmem:[%s218 + $0x70] sm:$0xff]
      %v274 = vld [vmem:[%s218 + $0x78] sm:$0xff]
      %v275 = vld [vmem:[%s218 + $0x80] sm:$0xff]
      %v276 = vld [vmem:[%s218 + $0x88] sm:$0xff]
      %v277 = vld [vmem:[%s218 + $0x90] sm:$0xff]
      %v278 = vld [vmem:[%s218 + $0x98] sm:$0xff]
      %v279 = vld [vmem:[%s218 + $0xa0] sm:$0xff]
      %v280 = vld [vmem:[%s218 + $0xa8] sm:$0xff]
      %v281 = vld [vmem:[%s218 + $0xb0] sm:$0xff]
      %v282 = vld [vmem:[%s218 + $0xb8] sm:$0xff]
      %v283 = vld [vmem:[%s218 + $0xc0] sm:$0xff]
      %v284 = vld [vmem:[%s218 + $0xc8] sm:$0xff]
      %v285 = vld [vmem:[%s218 + $0xd0] sm:$0xff]
      %v286 = vld [vmem:[%s218 + $0xd8] sm:$0xff]
      %v287 = vld [vmem:[%s218 + $0xe0] sm:$0xff]
      %v288 = vld [vmem:[%s218 + $0xe8] sm:$0xff]
      %v289 = vld [vmem:[%s218 + $0xf0] sm:$0xff]
      %v290 = vld [vmem:[%s218 + $0xf8] sm:$0xff]
      %v291 = vld [vmem:[%s218 + $0x100] sm:$0xff]
      %v292 = vld [vmem:[%s218 + $0x108] sm:$0xff]
      %v293 = vld [vmem:[%s218 + $0x110] sm:$0xff]
      %v294 = vld [vmem:[%s218 + $0x118] sm:$0xff]
      %v295 = vld [vmem:[%s218 + $0x120] sm:$0xff]
      %v296 = vld [vmem:[%s218 + $0x128] sm:$0xff]
      %v297 = vld [vmem:[%s218 + $0x130] sm:$0xff]
      %v298 = vld [vmem:[%s218 + $0x138] sm:$0xff]
      %v299 = vld [vmem:[%s218 + $0x140] sm:$0xff]
      %v300 = vld [vmem:[%s218 + $0x148] sm:$0xff]
      %v301 = vld [vmem:[%s218 + $0x150] sm:$0xff]
      %v302 = vld [vmem:[%s218 + $0x158] sm:$0xff]
      %v303 = vld [vmem:[%s218 + $0x160] sm:$0xff]
      %v304 = vld [vmem:[%s218 + $0x168] sm:$0xff]
      %v305 = vld [vmem:[%s218 + $0x170] sm:$0xff]
      %v306 = vld [vmem:[%s218 + $0x178] sm:$0xff]
      %v307 = vld [vmem:[%s218 + $0x180] sm:$0xff]
      %v308 = vld [vmem:[%s218 + $0x188] sm:$0xff]
      %v309 = vld [vmem:[%s218 + $0x190] sm:$0xff]
      %v310 = vld [vmem:[%s218 + $0x198] sm:$0xff]
      %v311 = vld [vmem:[%s218 + $0x1a0] sm:$0xff]
      %v312 = vld [vmem:[%s218 + $0x1a8] sm:$0xff]
      %v313 = vld [vmem:[%s218 + $0x1b0] sm:$0xff]
      %v314 = vld [vmem:[%s218 + $0x1b8] sm:$0xff]
      %v315 = vld [vmem:[%s218 + $0x1c0] sm:$0xff]
      %v316 = vld [vmem:[%s218 + $0x1c8] sm:$0xff]
      %v317 = vld [vmem:[%s218 + $0x1d0] sm:$0xff]
      %v318 = vld [vmem:[%s218 + $0x1d8] sm:$0xff]
      %v319 = vld [vmem:[%s218 + $0x1e0] sm:$0xff]
      %v320 = vld [vmem:[%s218 + $0x1e8] sm:$0xff]
      %v321 = vld [vmem:[%s218 + $0x1f0] sm:$0xff]
      %v322 = vld [vmem:[%s218 + $0x1f8] sm:$0xff]
      %v323 = vld [vmem:[%s218 + $0x200] sm:$0xff]
      %v324 = vld [vmem:[%s218 + $0x208] sm:$0xff]
      %v325 = vld [vmem:[%s218 + $0x210] sm:$0xff]
      %v326 = vld [vmem:[%s218 + $0x218] sm:$0xff]
      %v327 = vld [vmem:[%s218 + $0x220] sm:$0xff]
      %v328 = vld [vmem:[%s218 + $0x228] sm:$0xff]
      %v329 = vld [vmem:[%s218 + $0x230] sm:$0xff]
      %v330 = vld [vmem:[%s218 + $0x238] sm:$0xff]
      %v331 = vld [vmem:[%s218 + $0x240] sm:$0xff]
      %v332 = vld [vmem:[%s218 + $0x248] sm:$0xff]
      %v333 = vld [vmem:[%s218 + $0x250] sm:$0xff]
      %v334 = vld [vmem:[%s218 + $0x258] sm:$0xff]
      %v335 = vld [vmem:[%s218 + $0x260] sm:$0xff]
      %v336 = vld [vmem:[%s218 + $0x268] sm:$0xff]
      %v337 = vld [vmem:[%s218 + $0x270] sm:$0xff]
      %v338 = vld [vmem:[%s218 + $0x278] sm:$0xff]
      %v339 = vld [vmem:[%s218 + $0x280] sm:$0xff]
      %v340 = vld [vmem:[%s218 + $0x288] sm:$0xff]
      %v341 = vld [vmem:[%s218 + $0x290] sm:$0xff]
      %v342 = vld [vmem:[%s218 + $0x298] sm:$0xff]
      %v343 = vld [vmem:[%s218 + $0x2a0] sm:$0xff]
      %v344 = vld [vmem:[%s218 + $0x2a8] sm:$0xff]
      %v345 = vld [vmem:[%s218 + $0x2b0] sm:$0xff]
      %v346 = vld [vmem:[%s218 + $0x2b8] sm:$0xff]
      %v347 = vld [vmem:[%s218 + $0x2c0] sm:$0xff]
      %v348 = vld [vmem:[%s218 + $0x2c8] sm:$0xff]
      %v349 = vld [vmem:[%s218 + $0x2d0] sm:$0xff]
      %v350 = vld [vmem:[%s218 + $0x2d8] sm:$0xff]
      %v351 = vld [vmem:[%s218 + $0x2e0] sm:$0xff]
      %v352 = vld [vmem:[%s218 + $0x2e8] sm:$0xff]
      %v353 = vld [vmem:[%s218 + $0x2f0] sm:$0xff]
      %v354 = vld [vmem:[%s218 + $0x2f8] sm:$0xff]
      %v355 = vld [vmem:[%s218 + $0x300] sm:$0xff]
      %v356 = vld [vmem:[%s218 + $0x308] sm:$0xff]
      %v357 = vld [vmem:[%s218 + $0x310] sm:$0xff]
      %v358 = vld [vmem:[%s218 + $0x318] sm:$0xff]
      %v359 = vld [vmem:[%s218 + $0x320] sm:$0xff]
      %v360 = vld [vmem:[%s218 + $0x328] sm:$0xff]
      %v361 = vld [vmem:[%s218 + $0x330] sm:$0xff]
      %v362 = vld [vmem:[%s218 + $0x338] sm:$0xff]
      %v363 = vld [vmem:[%s218 + $0x340] sm:$0xff]
      %v364 = vld [vmem:[%s218 + $0x348] sm:$0xff]
      %v365 = vld [vmem:[%s218 + $0x350] sm:$0xff]
      %v366 = vld [vmem:[%s218 + $0x358] sm:$0xff]
      %v367 = vld [vmem:[%s218 + $0x360] sm:$0xff]
      %v368 = vld [vmem:[%s218 + $0x368] sm:$0xff]
      %v369 = vld [vmem:[%s218 + $0x370] sm:$0xff]
      %v370 = vld [vmem:[%s218 + $0x378] sm:$0xff]
      %v371 = vld [vmem:[%s218 + $0x380] sm:$0xff]
      %v372 = vld [vmem:[%s218 + $0x388] sm:$0xff]
      %v373 = vld [vmem:[%s218 + $0x390] sm:$0xff]
      %v374 = vld [vmem:[%s218 + $0x398] sm:$0xff]
      %v375 = vld [vmem:[%s218 + $0x3a0] sm:$0xff]
      %v376 = vld [vmem:[%s218 + $0x3a8] sm:$0xff]
      %v377 = vld [vmem:[%s218 + $0x3b0] sm:$0xff]
      %v378 = vld [vmem:[%s218 + $0x3b8] sm:$0xff]
      %v379 = vld [vmem:[%s218 + $0x3c0] sm:$0xff]
      %v380 = vld [vmem:[%s218 + $0x3c8] sm:$0xff]
      %v381 = vld [vmem:[%s218 + $0x3d0] sm:$0xff]
      %v382 = vld [vmem:[%s218 + $0x3d8] sm:$0xff]
      %v383 = vld [vmem:[%s218 + $0x3e0] sm:$0xff]
      %v384 = vld [vmem:[%s218 + $0x3e8] sm:$0xff]
      %v385 = vld [vmem:[%s218 + $0x3f0] sm:$0xff]
      %v386 = vld [vmem:[%s218 + $0x3f8] sm:$0xff]
      %v387 = vld [vmem:[%s218 + $0x400] sm:$0xff]
      %v388 = vld [vmem:[%s218 + $0x408] sm:$0xff]
      %v389 = vld [vmem:[%s218 + $0x410] sm:$0xff]
      %v390 = vld [vmem:[%s218 + $0x418] sm:$0xff]
      %v391 = vld [vmem:[%s218 + $0x420] sm:$0xff]
      %v392 = vld [vmem:[%s218 + $0x428] sm:$0xff]
      %v393 = vld [vmem:[%s218 + $0x430] sm:$0xff]
      %v394 = vld [vmem:[%s218 + $0x438] sm:$0xff]
      %v395 = vld [vmem:[%s218 + $0x440] sm:$0xff]
      %v396 = vld [vmem:[%s218 + $0x448] sm:$0xff]
      %v397 = vld [vmem:[%s218 + $0x450] sm:$0xff]
      %v398 = vld [vmem:[%s218 + $0x458] sm:$0xff]
      %v399 = vld [vmem:[%s218 + $0x460] sm:$0xff]
      %v400 = vld [vmem:[%s218 + $0x468] sm:$0xff]
      %v401 = vld [vmem:[%s218 + $0x470] sm:$0xff]
      %v402 = vld [vmem:[%s218 + $0x478] sm:$0xff]
      %v403 = vld [vmem:[%s218 + $0x480] sm:$0xff]
      %v404 = vld [vmem:[%s218 + $0x488] sm:$0xff]
      %v405 = vld [vmem:[%s218 + $0x490] sm:$0xff]
      %v406 = vld [vmem:[%s218 + $0x498] sm:$0xff]
      %v407 = vld [vmem:[%s218 + $0x4a0] sm:$0xff]
      %v408 = vld [vmem:[%s218 + $0x4a8] sm:$0xff]
      %v409 = vld [vmem:[%s218 + $0x4b0] sm:$0xff]
      %v410 = vld [vmem:[%s218 + $0x4b8] sm:$0xff]
      %v411 = vld [vmem:[%s218 + $0x4c0] sm:$0xff]
      %v412 = vld [vmem:[%s218 + $0x4c8] sm:$0xff]
      %v413 = vld [vmem:[%s218 + $0x4d0] sm:$0xff]
      %v414 = vld [vmem:[%s218 + $0x4d8] sm:$0xff]
      %v415 = vld [vmem:[%s218 + $0x4e0] sm:$0xff]
      %v416 = vld [vmem:[%s218 + $0x4e8] sm:$0xff]
      %v417 = vld [vmem:[%s218 + $0x4f0] sm:$0xff]
      %v418 = vld [vmem:[%s218 + $0x4f8] sm:$0xff]
      %v419 = vld [vmem:[%s218 + $0x500] sm:$0xff]
      %v420 = vld [vmem:[%s218 + $0x508] sm:$0xff]
      %v421 = vld [vmem:[%s218 + $0x510] sm:$0xff]
      %v422 = vld [vmem:[%s218 + $0x518] sm:$0xff]
      %v423 = vld [vmem:[%s218 + $0x520] sm:$0xff]
      %v424 = vld [vmem:[%s218 + $0x528] sm:$0xff]
      %v425 = vld [vmem:[%s218 + $0x530] sm:$0xff]
      %v426 = vld [vmem:[%s218 + $0x538] sm:$0xff]
      %v427 = vld [vmem:[%s218 + $0x540] sm:$0xff]
      %v428 = vld [vmem:[%s218 + $0x548] sm:$0xff]
      %v429 = vld [vmem:[%s218 + $0x550] sm:$0xff]
      %v430 = vld [vmem:[%s218 + $0x558] sm:$0xff]
      %v431 = vld [vmem:[%s218 + $0x560] sm:$0xff]
      %v432 = vld [vmem:[%s218 + $0x568] sm:$0xff]
      %v433 = vld [vmem:[%s218 + $0x570] sm:$0xff]
      %v434 = vld [vmem:[%s218 + $0x578] sm:$0xff]
      %v435 = vld [vmem:[%s218 + $0x580] sm:$0xff]
      %v436 = vld [vmem:[%s218 + $0x588] sm:$0xff]
      %v437 = vld [vmem:[%s218 + $0x590] sm:$0xff]
      %v438 = vld [vmem:[%s218 + $0x598] sm:$0xff]
      %v439 = vld [vmem:[%s218 + $0x5a0] sm:$0xff]
      %v440 = vld [vmem:[%s218 + $0x5a8] sm:$0xff]
      %v441 = vld [vmem:[%s218 + $0x5b0] sm:$0xff]
      %v442 = vld [vmem:[%s218 + $0x5b8] sm:$0xff]
      %v443 = vld [vmem:[%s218 + $0x5c0] sm:$0xff]
      %v444 = vld [vmem:[%s218 + $0x5c8] sm:$0xff]
      %v445 = vld [vmem:[%s218 + $0x5d0] sm:$0xff]
      %v446 = vld [vmem:[%s218 + $0x5d8] sm:$0xff]
      %v447 = vld [vmem:[%s218 + $0x5e0] sm:$0xff]
      %v448 = vld [vmem:[%s218 + $0x5e8] sm:$0xff]
      %v449 = vld [vmem:[%s218 + $0x5f0] sm:$0xff]
      %v450 = vld [vmem:[%s218 + $0x5f8] sm:$0xff]
      %v451 = vld [vmem:[%s218 + $0x600] sm:$0xff]
      %v452 = vld [vmem:[%s218 + $0x608] sm:$0xff]
      %v453 = vld [vmem:[%s218 + $0x610] sm:$0xff]
      %v454 = vld [vmem:[%s218 + $0x618] sm:$0xff]
      %v455 = vld [vmem:[%s218 + $0x620] sm:$0xff]
      %v456 = vld [vmem:[%s218 + $0x628] sm:$0xff]
      %v457 = vld [vmem:[%s218 + $0x630] sm:$0xff]
      %v458 = vld [vmem:[%s218 + $0x638] sm:$0xff]
      %v459 = vld [vmem:[%s218 + $0x640] sm:$0xff]
      %v460 = vld [vmem:[%s218 + $0x648] sm:$0xff]
      %v461 = vld [vmem:[%s218 + $0x650] sm:$0xff]
      %v462 = vld [vmem:[%s218 + $0x658] sm:$0xff]
      %v463 = vld [vmem:[%s218 + $0x660] sm:$0xff]
      %v464 = vld [vmem:[%s218 + $0x668] sm:$0xff]
      %v465 = vld [vmem:[%s218 + $0x670] sm:$0xff]
      %v466 = vld [vmem:[%s218 + $0x678] sm:$0xff]
      %v467 = vld [vmem:[%s218 + $0x680] sm:$0xff]
      %v468 = vld [vmem:[%s218 + $0x688] sm:$0xff]
      %v469 = vld [vmem:[%s218 + $0x690] sm:$0xff]
      %v470 = vld [vmem:[%s218 + $0x698] sm:$0xff]
      %v471 = vld [vmem:[%s218 + $0x6a0] sm:$0xff]
      %v472 = vld [vmem:[%s218 + $0x6a8] sm:$0xff]
      %v473 = vld [vmem:[%s218 + $0x6b0] sm:$0xff]
      %v474 = vld [vmem:[%s218 + $0x6b8] sm:$0xff]
      %v475 = vld [vmem:[%s218 + $0x6c0] sm:$0xff]
      %v476 = vld [vmem:[%s218 + $0x6c8] sm:$0xff]
      %v477 = vld [vmem:[%s218 + $0x6d0] sm:$0xff]
      %v478 = vld [vmem:[%s218 + $0x6d8] sm:$0xff]
      %v479 = vld [vmem:[%s218 + $0x6e0] sm:$0xff]
      %v480 = vld [vmem:[%s218 + $0x6e8] sm:$0xff]
      %v481 = vld [vmem:[%s218 + $0x6f0] sm:$0xff]
      %v482 = vld [vmem:[%s218 + $0x6f8] sm:$0xff]
      %v483 = vld [vmem:[%s218 + $0x700] sm:$0xff]
      %v484 = vld [vmem:[%s218 + $0x708] sm:$0xff]
      %v485 = vld [vmem:[%s218 + $0x710] sm:$0xff]
      %v486 = vld [vmem:[%s218 + $0x718] sm:$0xff]
      %v487 = vld [vmem:[%s218 + $0x720] sm:$0xff]
      %v488 = vld [vmem:[%s218 + $0x728] sm:$0xff]
      %v489 = vld [vmem:[%s218 + $0x730] sm:$0xff]
      %v490 = vld [vmem:[%s218 + $0x738] sm:$0xff]
      %v491 = vld [vmem:[%s218 + $0x740] sm:$0xff]
      %v492 = vld [vmem:[%s218 + $0x748] sm:$0xff]
      %v493 = vld [vmem:[%s218 + $0x750] sm:$0xff]
      %v494 = vld [vmem:[%s218 + $0x758] sm:$0xff]
      %v495 = vld [vmem:[%s218 + $0x760] sm:$0xff]
      %v496 = vld [vmem:[%s218 + $0x768] sm:$0xff]
      %v497 = vld [vmem:[%s218 + $0x770] sm:$0xff]
      %v498 = vld [vmem:[%s218 + $0x778] sm:$0xff]
      %v499 = vld [vmem:[%s218 + $0x780] sm:$0xff]
      %v500 = vld [vmem:[%s218 + $0x788] sm:$0xff]
      %v501 = vld [vmem:[%s218 + $0x790] sm:$0xff]
      %v502 = vld [vmem:[%s218 + $0x798] sm:$0xff]
      %v503 = vld [vmem:[%s218 + $0x7a0] sm:$0xff]
      %v504 = vld [vmem:[%s218 + $0x7a8] sm:$0xff]
      %v505 = vld [vmem:[%s218 + $0x7b0] sm:$0xff]
      %v506 = vld [vmem:[%s218 + $0x7b8] sm:$0xff]
      %v507 = vld [vmem:[%s218 + $0x7c0] sm:$0xff]
      %v508 = vld [vmem:[%s218 + $0x7c8] sm:$0xff]
      %v509 = vld [vmem:[%s218 + $0x7d0] sm:$0xff]
      %v510 = vld [vmem:[%s218 + $0x7d8] sm:$0xff]
      %v511 = vld [vmem:[%s218 + $0x7e0] sm:$0xff]
      %v512 = vld [vmem:[%s218 + $0x7e8] sm:$0xff]
      %v513 = vld [vmem:[%s218 + $0x7f0] sm:$0xff]
      %v514 = vld [vmem:[%s218 + $0x7f8] sm:$0xff]
      %v531 = vunpack.c.l.b16 %v243
      %v532 = vunpack.c.h.b16 %v243
      %v533 = vunpack.c.l.b16 %v244
      %v534 = vunpack.c.h.b16 %v244
      %v535 = vunpack.c.l.b16 %v245
      %v536 = vunpack.c.h.b16 %v245
      %v537 = vunpack.c.l.b16 %v246
      %v538 = vunpack.c.h.b16 %v246
      %v539 = vunpack.c.l.b16 %v247
      %v540 = vunpack.c.h.b16 %v247
      %v541 = vunpack.c.l.b16 %v248
      %v542 = vunpack.c.h.b16 %v248
      %v543 = vunpack.c.l.b16 %v249
      %v544 = vunpack.c.h.b16 %v249
      %v545 = vunpack.c.l.b16 %v250
      %v546 = vunpack.c.h.b16 %v250
      %v547 = vunpack.c.l.b16 %v251
      %v548 = vunpack.c.h.b16 %v251
      %v549 = vunpack.c.l.b16 %v252
      %v550 = vunpack.c.h.b16 %v252
      %v551 = vunpack.c.l.b16 %v253
      %v552 = vunpack.c.h.b16 %v253
      %v553 = vunpack.c.l.b16 %v254
      %v554 = vunpack.c.h.b16 %v254
      %v555 = vunpack.c.l.b16 %v255
      %v556 = vunpack.c.h.b16 %v255
      %v557 = vunpack.c.l.b16 %v256
      %v558 = vunpack.c.h.b16 %v256
      %v559 = vunpack.c.l.b16 %v257
      %v560 = vunpack.c.h.b16 %v257
      %v561 = vunpack.c.l.b16 %v258
      %v562 = vunpack.c.h.b16 %v258
      %v563 = vpack.c.b16 %v547, %v531
      %v564 = vpack.c.b16 %v548, %v532
      %v565 = vpack.c.b16 %v549, %v533
      %v566 = vpack.c.b16 %v550, %v534
      %v567 = vpack.c.b16 %v551, %v535
      %v568 = vpack.c.b16 %v552, %v536
      %v569 = vpack.c.b16 %v553, %v537
      %v570 = vpack.c.b16 %v554, %v538
      %v571 = vpack.c.b16 %v555, %v539
      %v572 = vpack.c.b16 %v556, %v540
      %v573 = vpack.c.b16 %v557, %v541
      %v574 = vpack.c.b16 %v558, %v542
      %v575 = vpack.c.b16 %v559, %v543
      %v576 = vpack.c.b16 %v560, %v544
      %v577 = vpack.c.b16 %v561, %v545
      %v578 = vpack.c.b16 %v562, %v546
      %v851 = vunpack.c.l.b16 %v259
      %v852 = vunpack.c.h.b16 %v259
      %v853 = vunpack.c.l.b16 %v260
      %v854 = vunpack.c.h.b16 %v260
      %v855 = vunpack.c.l.b16 %v261
      %v856 = vunpack.c.h.b16 %v261
      %v857 = vunpack.c.l.b16 %v262
      %v858 = vunpack.c.h.b16 %v262
      %v859 = vunpack.c.l.b16 %v263
      %v860 = vunpack.c.h.b16 %v263
      %v861 = vunpack.c.l.b16 %v264
      %v862 = vunpack.c.h.b16 %v264
      %v863 = vunpack.c.l.b16 %v265
      %v864 = vunpack.c.h.b16 %v265
      %v865 = vunpack.c.l.b16 %v266
      %v866 = vunpack.c.h.b16 %v266
      %v867 = vunpack.c.l.b16 %v267
      %v868 = vunpack.c.h.b16 %v267
      %v869 = vunpack.c.l.b16 %v268
      %v870 = vunpack.c.h.b16 %v268
      %v871 = vunpack.c.l.b16 %v269
      %v872 = vunpack.c.h.b16 %v269
      %v873 = vunpack.c.l.b16 %v270
      %v874 = vunpack.c.h.b16 %v270
      %v875 = vunpack.c.l.b16 %v271
      %v876 = vunpack.c.h.b16 %v271
      %v877 = vunpack.c.l.b16 %v272
      %v878 = vunpack.c.h.b16 %v272
      %v879 = vunpack.c.l.b16 %v273
      %v880 = vunpack.c.h.b16 %v273
      %v881 = vunpack.c.l.b16 %v274
      %v882 = vunpack.c.h.b16 %v274
      %v883 = vunpack.c.l.b16 %v275
      %v884 = vunpack.c.h.b16 %v275
      %v885 = vunpack.c.l.b16 %v276
      %v886 = vunpack.c.h.b16 %v276
      %v887 = vunpack.c.l.b16 %v277
      %v888 = vunpack.c.h.b16 %v277
      %v889 = vunpack.c.l.b16 %v278
      %v890 = vunpack.c.h.b16 %v278
      %v891 = vunpack.c.l.b16 %v279
      %v892 = vunpack.c.h.b16 %v279
      %v893 = vunpack.c.l.b16 %v280
      %v894 = vunpack.c.h.b16 %v280
      %v895 = vunpack.c.l.b16 %v281
      %v896 = vunpack.c.h.b16 %v281
      %v897 = vunpack.c.l.b16 %v282
      %v898 = vunpack.c.h.b16 %v282
      %v899 = vunpack.c.l.b16 %v283
      %v900 = vunpack.c.h.b16 %v283
      %v901 = vunpack.c.l.b16 %v284
      %v902 = vunpack.c.h.b16 %v284
      %v903 = vunpack.c.l.b16 %v285
      %v904 = vunpack.c.h.b16 %v285
      %v905 = vunpack.c.l.b16 %v286
      %v906 = vunpack.c.h.b16 %v286
      %v907 = vunpack.c.l.b16 %v287
      %v908 = vunpack.c.h.b16 %v287
      %v909 = vunpack.c.l.b16 %v288
      %v910 = vunpack.c.h.b16 %v288
      %v911 = vunpack.c.l.b16 %v289
      %v912 = vunpack.c.h.b16 %v289
      %v913 = vunpack.c.l.b16 %v290
      %v914 = vunpack.c.h.b16 %v290
      %v915 = vunpack.c.l.b16 %v291
      %v916 = vunpack.c.h.b16 %v291
      %v917 = vunpack.c.l.b16 %v292
      %v918 = vunpack.c.h.b16 %v292
      %v919 = vunpack.c.l.b16 %v293
      %v920 = vunpack.c.h.b16 %v293
      %v921 = vunpack.c.l.b16 %v294
      %v922 = vunpack.c.h.b16 %v294
      %v923 = vunpack.c.l.b16 %v295
      %v924 = vunpack.c.h.b16 %v295
      %v925 = vunpack.c.l.b16 %v296
      %v926 = vunpack.c.h.b16 %v296
      %v927 = vunpack.c.l.b16 %v297
      %v928 = vunpack.c.h.b16 %v297
      %v929 = vunpack.c.l.b16 %v298
      %v930 = vunpack.c.h.b16 %v298
      %v931 = vunpack.c.l.b16 %v299
      %v932 = vunpack.c.h.b16 %v299
      %v933 = vunpack.c.l.b16 %v300
      %v934 = vunpack.c.h.b16 %v300
      %v935 = vunpack.c.l.b16 %v301
      %v936 = vunpack.c.h.b16 %v301
      %v937 = vunpack.c.l.b16 %v302
      %v938 = vunpack.c.h.b16 %v302
      %v939 = vunpack.c.l.b16 %v303
      %v940 = vunpack.c.h.b16 %v303
      %v941 = vunpack.c.l.b16 %v304
      %v942 = vunpack.c.h.b16 %v304
      %v943 = vunpack.c.l.b16 %v305
      %v944 = vunpack.c.h.b16 %v305
      %v945 = vunpack.c.l.b16 %v306
      %v946 = vunpack.c.h.b16 %v306
      %v947 = vunpack.c.l.b16 %v307
      %v948 = vunpack.c.h.b16 %v307
      %v949 = vunpack.c.l.b16 %v308
      %v950 = vunpack.c.h.b16 %v308
      %v951 = vunpack.c.l.b16 %v309
      %v952 = vunpack.c.h.b16 %v309
      %v953 = vunpack.c.l.b16 %v310
      %v954 = vunpack.c.h.b16 %v310
      %v955 = vunpack.c.l.b16 %v311
      %v956 = vunpack.c.h.b16 %v311
      %v957 = vunpack.c.l.b16 %v312
      %v958 = vunpack.c.h.b16 %v312
      %v959 = vunpack.c.l.b16 %v313
      %v960 = vunpack.c.h.b16 %v313
      %v961 = vunpack.c.l.b16 %v314
      %v962 = vunpack.c.h.b16 %v314
      %v963 = vunpack.c.l.b16 %v315
      %v964 = vunpack.c.h.b16 %v315
      %v965 = vunpack.c.l.b16 %v316
      %v966 = vunpack.c.h.b16 %v316
      %v967 = vunpack.c.l.b16 %v317
      %v968 = vunpack.c.h.b16 %v317
      %v969 = vunpack.c.l.b16 %v318
      %v970 = vunpack.c.h.b16 %v318
      %v971 = vunpack.c.l.b16 %v319
      %v972 = vunpack.c.h.b16 %v319
      %v973 = vunpack.c.l.b16 %v320
      %v974 = vunpack.c.h.b16 %v320
      %v975 = vunpack.c.l.b16 %v321
      %v976 = vunpack.c.h.b16 %v321
      %v977 = vunpack.c.l.b16 %v322
      %v978 = vunpack.c.h.b16 %v322
      %v979 = vunpack.c.l.b16 %v323
      %v980 = vunpack.c.h.b16 %v323
      %v981 = vunpack.c.l.b16 %v324
      %v982 = vunpack.c.h.b16 %v324
      %v983 = vunpack.c.l.b16 %v325
      %v984 = vunpack.c.h.b16 %v325
      %v985 = vunpack.c.l.b16 %v326
      %v986 = vunpack.c.h.b16 %v326
      %v987 = vunpack.c.l.b16 %v327
      %v988 = vunpack.c.h.b16 %v327
      %v989 = vunpack.c.l.b16 %v328
      %v990 = vunpack.c.h.b16 %v328
      %v991 = vunpack.c.l.b16 %v329
      %v992 = vunpack.c.h.b16 %v329
      %v993 = vunpack.c.l.b16 %v330
      %v994 = vunpack.c.h.b16 %v330
      %v995 = vunpack.c.l.b16 %v331
      %v996 = vunpack.c.h.b16 %v331
      %v997 = vunpack.c.l.b16 %v332
      %v998 = vunpack.c.h.b16 %v332
      %v999 = vunpack.c.l.b16 %v333
      %v1000 = vunpack.c.h.b16 %v333
      %v1001 = vunpack.c.l.b16 %v334
      %v1002 = vunpack.c.h.b16 %v334
      %v1003 = vunpack.c.l.b16 %v335
      %v1004 = vunpack.c.h.b16 %v335
      %v1005 = vunpack.c.l.b16 %v336
      %v1006 = vunpack.c.h.b16 %v336
      %v1007 = vunpack.c.l.b16 %v337
      %v1008 = vunpack.c.h.b16 %v337
      %v1009 = vunpack.c.l.b16 %v338
      %v1010 = vunpack.c.h.b16 %v338
      %v1011 = vunpack.c.l.b16 %v339
      %v1012 = vunpack.c.h.b16 %v339
      %v1013 = vunpack.c.l.b16 %v340
      %v1014 = vunpack.c.h.b16 %v340
      %v1015 = vunpack.c.l.b16 %v341
      %v1016 = vunpack.c.h.b16 %v341
      %v1017 = vunpack.c.l.b16 %v342
      %v1018 = vunpack.c.h.b16 %v342
      %v1019 = vunpack.c.l.b16 %v343
      %v1020 = vunpack.c.h.b16 %v343
      %v1021 = vunpack.c.l.b16 %v344
      %v1022 = vunpack.c.h.b16 %v344
      %v1023 = vunpack.c.l.b16 %v345
      %v1024 = vunpack.c.h.b16 %v345
      %v1025 = vunpack.c.l.b16 %v346
      %v1026 = vunpack.c.h.b16 %v346
      %v1027 = vunpack.c.l.b16 %v347
      %v1028 = vunpack.c.h.b16 %v347
      %v1029 = vunpack.c.l.b16 %v348
      %v1030 = vunpack.c.h.b16 %v348
      %v1031 = vunpack.c.l.b16 %v349
      %v1032 = vunpack.c.h.b16 %v349
      %v1033 = vunpack.c.l.b16 %v350
      %v1034 = vunpack.c.h.b16 %v350
      %v1035 = vunpack.c.l.b16 %v351
      %v1036 = vunpack.c.h.b16 %v351
      %v1037 = vunpack.c.l.b16 %v352
      %v1038 = vunpack.c.h.b16 %v352
      %v1039 = vunpack.c.l.b16 %v353
      %v1040 = vunpack.c.h.b16 %v353
      %v1041 = vunpack.c.l.b16 %v354
      %v1042 = vunpack.c.h.b16 %v354
      %v1043 = vunpack.c.l.b16 %v355
      %v1044 = vunpack.c.h.b16 %v355
      %v1045 = vunpack.c.l.b16 %v356
      %v1046 = vunpack.c.h.b16 %v356
      %v1047 = vunpack.c.l.b16 %v357
      %v1048 = vunpack.c.h.b16 %v357
      %v1049 = vunpack.c.l.b16 %v358
      %v1050 = vunpack.c.h.b16 %v358
      %v1051 = vunpack.c.l.b16 %v359
      %v1052 = vunpack.c.h.b16 %v359
      %v1053 = vunpack.c.l.b16 %v360
      %v1054 = vunpack.c.h.b16 %v360
      %v1055 = vunpack.c.l.b16 %v361
      %v1056 = vunpack.c.h.b16 %v361
      %v1057 = vunpack.c.l.b16 %v362
      %v1058 = vunpack.c.h.b16 %v362
      %v1059 = vunpack.c.l.b16 %v363
      %v1060 = vunpack.c.h.b16 %v363
      %v1061 = vunpack.c.l.b16 %v364
      %v1062 = vunpack.c.h.b16 %v364
      %v1063 = vunpack.c.l.b16 %v365
      %v1064 = vunpack.c.h.b16 %v365
      %v1065 = vunpack.c.l.b16 %v366
      %v1066 = vunpack.c.h.b16 %v366
      %v1067 = vunpack.c.l.b16 %v367
      %v1068 = vunpack.c.h.b16 %v367
      %v1069 = vunpack.c.l.b16 %v368
      %v1070 = vunpack.c.h.b16 %v368
      %v1071 = vunpack.c.l.b16 %v369
      %v1072 = vunpack.c.h.b16 %v369
      %v1073 = vunpack.c.l.b16 %v370
      %v1074 = vunpack.c.h.b16 %v370
      %v1075 = vunpack.c.l.b16 %v371
      %v1076 = vunpack.c.h.b16 %v371
      %v1077 = vunpack.c.l.b16 %v372
      %v1078 = vunpack.c.h.b16 %v372
      %v1079 = vunpack.c.l.b16 %v373
      %v1080 = vunpack.c.h.b16 %v373
      %v1081 = vunpack.c.l.b16 %v374
      %v1082 = vunpack.c.h.b16 %v374
      %v1083 = vunpack.c.l.b16 %v375
      %v1084 = vunpack.c.h.b16 %v375
      %v1085 = vunpack.c.l.b16 %v376
      %v1086 = vunpack.c.h.b16 %v376
      %v1087 = vunpack.c.l.b16 %v377
      %v1088 = vunpack.c.h.b16 %v377
      %v1089 = vunpack.c.l.b16 %v378
      %v1090 = vunpack.c.h.b16 %v378
      %v1091 = vunpack.c.l.b16 %v379
      %v1092 = vunpack.c.h.b16 %v379
      %v1093 = vunpack.c.l.b16 %v380
      %v1094 = vunpack.c.h.b16 %v380
      %v1095 = vunpack.c.l.b16 %v381
      %v1096 = vunpack.c.h.b16 %v381
      %v1097 = vunpack.c.l.b16 %v382
      %v1098 = vunpack.c.h.b16 %v382
      %v1099 = vunpack.c.l.b16 %v383
      %v1100 = vunpack.c.h.b16 %v383
      %v1101 = vunpack.c.l.b16 %v384
      %v1102 = vunpack.c.h.b16 %v384
      %v1103 = vunpack.c.l.b16 %v385
      %v1104 = vunpack.c.h.b16 %v385
      %v1105 = vunpack.c.l.b16 %v386
      %v1106 = vunpack.c.h.b16 %v386
      %v1107 = vunpack.c.l.b16 %v387
      %v1108 = vunpack.c.h.b16 %v387
      %v1109 = vunpack.c.l.b16 %v388
      %v1110 = vunpack.c.h.b16 %v388
      %v1111 = vunpack.c.l.b16 %v389
      %v1112 = vunpack.c.h.b16 %v389
      %v1113 = vunpack.c.l.b16 %v390
      %v1114 = vunpack.c.h.b16 %v390
      %v1115 = vunpack.c.l.b16 %v391
      %v1116 = vunpack.c.h.b16 %v391
      %v1117 = vunpack.c.l.b16 %v392
      %v1118 = vunpack.c.h.b16 %v392
      %v1119 = vunpack.c.l.b16 %v393
      %v1120 = vunpack.c.h.b16 %v393
      %v1121 = vunpack.c.l.b16 %v394
      %v1122 = vunpack.c.h.b16 %v394
      %v1123 = vunpack.c.l.b16 %v395
      %v1124 = vunpack.c.h.b16 %v395
      %v1125 = vunpack.c.l.b16 %v396
      %v1126 = vunpack.c.h.b16 %v396
      %v1127 = vunpack.c.l.b16 %v397
      %v1128 = vunpack.c.h.b16 %v397
      %v1129 = vunpack.c.l.b16 %v398
      %v1130 = vunpack.c.h.b16 %v398
      %v1131 = vunpack.c.l.b16 %v399
      %v1132 = vunpack.c.h.b16 %v399
      %v1133 = vunpack.c.l.b16 %v400
      %v1134 = vunpack.c.h.b16 %v400
      %v1135 = vunpack.c.l.b16 %v401
      %v1136 = vunpack.c.h.b16 %v401
      %v1137 = vunpack.c.l.b16 %v402
      %v1138 = vunpack.c.h.b16 %v402
      %v1139 = vunpack.c.l.b16 %v403
      %v1140 = vunpack.c.h.b16 %v403
      %v1141 = vunpack.c.l.b16 %v404
      %v1142 = vunpack.c.h.b16 %v404
      %v1143 = vunpack.c.l.b16 %v405
      %v1144 = vunpack.c.h.b16 %v405
      %v1145 = vunpack.c.l.b16 %v406
      %v1146 = vunpack.c.h.b16 %v406
      %v1147 = vunpack.c.l.b16 %v407
      %v1148 = vunpack.c.h.b16 %v407
      %v1149 = vunpack.c.l.b16 %v408
      %v1150 = vunpack.c.h.b16 %v408
      %v1151 = vunpack.c.l.b16 %v409
      %v1152 = vunpack.c.h.b16 %v409
      %v1153 = vunpack.c.l.b16 %v410
      %v1154 = vunpack.c.h.b16 %v410
      %v1155 = vunpack.c.l.b16 %v411
      %v1156 = vunpack.c.h.b16 %v411
      %v1157 = vunpack.c.l.b16 %v412
      %v1158 = vunpack.c.h.b16 %v412
      %v1159 = vunpack.c.l.b16 %v413
      %v1160 = vunpack.c.h.b16 %v413
      %v1161 = vunpack.c.l.b16 %v414
      %v1162 = vunpack.c.h.b16 %v414
      %v1163 = vunpack.c.l.b16 %v415
      %v1164 = vunpack.c.h.b16 %v415
      %v1165 = vunpack.c.l.b16 %v416
      %v1166 = vunpack.c.h.b16 %v416
      %v1167 = vunpack.c.l.b16 %v417
      %v1168 = vunpack.c.h.b16 %v417
      %v1169 = vunpack.c.l.b16 %v418
      %v1170 = vunpack.c.h.b16 %v418
      %v1171 = vunpack.c.l.b16 %v419
      %v1172 = vunpack.c.h.b16 %v419
      %v1173 = vunpack.c.l.b16 %v420
      %v1174 = vunpack.c.h.b16 %v420
      %v1175 = vunpack.c.l.b16 %v421
      %v1176 = vunpack.c.h.b16 %v421
      %v1177 = vunpack.c.l.b16 %v422
      %v1178 = vunpack.c.h.b16 %v422
      %v1179 = vunpack.c.l.b16 %v423
      %v1180 = vunpack.c.h.b16 %v423
      %v1181 = vunpack.c.l.b16 %v424
      %v1182 = vunpack.c.h.b16 %v424
      %v1183 = vunpack.c.l.b16 %v425
      %v1184 = vunpack.c.h.b16 %v425
      %v1185 = vunpack.c.l.b16 %v426
      %v1186 = vunpack.c.h.b16 %v426
      %v1187 = vunpack.c.l.b16 %v427
      %v1188 = vunpack.c.h.b16 %v427
      %v1189 = vunpack.c.l.b16 %v428
      %v1190 = vunpack.c.h.b16 %v428
      %v1191 = vunpack.c.l.b16 %v429
      %v1192 = vunpack.c.h.b16 %v429
      %v1193 = vunpack.c.l.b16 %v430
      %v1194 = vunpack.c.h.b16 %v430
      %v1195 = vunpack.c.l.b16 %v431
      %v1196 = vunpack.c.h.b16 %v431
      %v1197 = vunpack.c.l.b16 %v432
      %v1198 = vunpack.c.h.b16 %v432
      %v1199 = vunpack.c.l.b16 %v433
      %v1200 = vunpack.c.h.b16 %v433
      %v1201 = vunpack.c.l.b16 %v434
      %v1202 = vunpack.c.h.b16 %v434
      %v1203 = vunpack.c.l.b16 %v435
      %v1204 = vunpack.c.h.b16 %v435
      %v1205 = vunpack.c.l.b16 %v436
      %v1206 = vunpack.c.h.b16 %v436
      %v1207 = vunpack.c.l.b16 %v437
      %v1208 = vunpack.c.h.b16 %v437
      %v1209 = vunpack.c.l.b16 %v438
      %v1210 = vunpack.c.h.b16 %v438
      %v1211 = vunpack.c.l.b16 %v439
      %v1212 = vunpack.c.h.b16 %v439
      %v1213 = vunpack.c.l.b16 %v440
      %v1214 = vunpack.c.h.b16 %v440
      %v1215 = vunpack.c.l.b16 %v441
      %v1216 = vunpack.c.h.b16 %v441
      %v1217 = vunpack.c.l.b16 %v442
      %v1218 = vunpack.c.h.b16 %v442
      %v1219 = vunpack.c.l.b16 %v443
      %v1220 = vunpack.c.h.b16 %v443
      %v1221 = vunpack.c.l.b16 %v444
      %v1222 = vunpack.c.h.b16 %v444
      %v1223 = vunpack.c.l.b16 %v445
      %v1224 = vunpack.c.h.b16 %v445
      %v1225 = vunpack.c.l.b16 %v446
      %v1226 = vunpack.c.h.b16 %v446
      %v1227 = vunpack.c.l.b16 %v447
      %v1228 = vunpack.c.h.b16 %v447
      %v1229 = vunpack.c.l.b16 %v448
      %v1230 = vunpack.c.h.b16 %v448
      %v1231 = vunpack.c.l.b16 %v449
      %v1232 = vunpack.c.h.b16 %v449
      %v1233 = vunpack.c.l.b16 %v450
      %v1234 = vunpack.c.h.b16 %v450
      %v1235 = vunpack.c.l.b16 %v451
      %v1236 = vunpack.c.h.b16 %v451
      %v1237 = vunpack.c.l.b16 %v452
      %v1238 = vunpack.c.h.b16 %v452
      %v1239 = vunpack.c.l.b16 %v453
      %v1240 = vunpack.c.h.b16 %v453
      %v1241 = vunpack.c.l.b16 %v454
      %v1242 = vunpack.c.h.b16 %v454
      %v1243 = vunpack.c.l.b16 %v455
      %v1244 = vunpack.c.h.b16 %v455
      %v1245 = vunpack.c.l.b16 %v456
      %v1246 = vunpack.c.h.b16 %v456
      %v1247 = vunpack.c.l.b16 %v457
      %v1248 = vunpack.c.h.b16 %v457
      %v1249 = vunpack.c.l.b16 %v458
      %v1250 = vunpack.c.h.b16 %v458
      %v1251 = vunpack.c.l.b16 %v459
      %v1252 = vunpack.c.h.b16 %v459
      %v1253 = vunpack.c.l.b16 %v460
      %v1254 = vunpack.c.h.b16 %v460
      %v1255 = vunpack.c.l.b16 %v461
      %v1256 = vunpack.c.h.b16 %v461
      %v1257 = vunpack.c.l.b16 %v462
      %v1258 = vunpack.c.h.b16 %v462
      %v1259 = vunpack.c.l.b16 %v463
      %v1260 = vunpack.c.h.b16 %v463
      %v1261 = vunpack.c.l.b16 %v464
      %v1262 = vunpack.c.h.b16 %v464
      %v1263 = vunpack.c.l.b16 %v465
      %v1264 = vunpack.c.h.b16 %v465
      %v1265 = vunpack.c.l.b16 %v466
      %v1266 = vunpack.c.h.b16 %v466
      %v1267 = vunpack.c.l.b16 %v467
      %v1268 = vunpack.c.h.b16 %v467
      %v1269 = vunpack.c.l.b16 %v468
      %v1270 = vunpack.c.h.b16 %v468
      %v1271 = vunpack.c.l.b16 %v469
      %v1272 = vunpack.c.h.b16 %v469
      %v1273 = vunpack.c.l.b16 %v470
      %v1274 = vunpack.c.h.b16 %v470
      %v1275 = vunpack.c.l.b16 %v471
      %v1276 = vunpack.c.h.b16 %v471
      %v1277 = vunpack.c.l.b16 %v472
      %v1278 = vunpack.c.h.b16 %v472
      %v1279 = vunpack.c.l.b16 %v473
      %v1280 = vunpack.c.h.b16 %v473
      %v1281 = vunpack.c.l.b16 %v474
      %v1282 = vunpack.c.h.b16 %v474
      %v1283 = vunpack.c.l.b16 %v475
      %v1284 = vunpack.c.h.b16 %v475
      %v1285 = vunpack.c.l.b16 %v476
      %v1286 = vunpack.c.h.b16 %v476
      %v1287 = vunpack.c.l.b16 %v477
      %v1288 = vunpack.c.h.b16 %v477
      %v1289 = vunpack.c.l.b16 %v478
      %v1290 = vunpack.c.h.b16 %v478
      %v1291 = vunpack.c.l.b16 %v479
      %v1292 = vunpack.c.h.b16 %v479
      %v1293 = vunpack.c.l.b16 %v480
      %v1294 = vunpack.c.h.b16 %v480
      %v1295 = vunpack.c.l.b16 %v481
      %v1296 = vunpack.c.h.b16 %v481
      %v1297 = vunpack.c.l.b16 %v482
      %v1298 = vunpack.c.h.b16 %v482
      %v1299 = vunpack.c.l.b16 %v483
      %v1300 = vunpack.c.h.b16 %v483
      %v1301 = vunpack.c.l.b16 %v484
      %v1302 = vunpack.c.h.b16 %v484
      %v1303 = vunpack.c.l.b16 %v485
      %v1304 = vunpack.c.h.b16 %v485
      %v1305 = vunpack.c.l.b16 %v486
      %v1306 = vunpack.c.h.b16 %v486
      %v1307 = vunpack.c.l.b16 %v487
      %v1308 = vunpack.c.h.b16 %v487
      %v1309 = vunpack.c.l.b16 %v488
      %v1310 = vunpack.c.h.b16 %v488
      %v1311 = vunpack.c.l.b16 %v489
      %v1312 = vunpack.c.h.b16 %v489
      %v1313 = vunpack.c.l.b16 %v490
      %v1314 = vunpack.c.h.b16 %v490
      %v1315 = vunpack.c.l.b16 %v491
      %v1316 = vunpack.c.h.b16 %v491
      %v1317 = vunpack.c.l.b16 %v492
      %v1318 = vunpack.c.h.b16 %v492
      %v1319 = vunpack.c.l.b16 %v493
      %v1320 = vunpack.c.h.b16 %v493
      %v1321 = vunpack.c.l.b16 %v494
      %v1322 = vunpack.c.h.b16 %v494
      %v1323 = vunpack.c.l.b16 %v495
      %v1324 = vunpack.c.h.b16 %v495
      %v1325 = vunpack.c.l.b16 %v496
      %v1326 = vunpack.c.h.b16 %v496
      %v1327 = vunpack.c.l.b16 %v497
      %v1328 = vunpack.c.h.b16 %v497
      %v1329 = vunpack.c.l.b16 %v498
      %v1330 = vunpack.c.h.b16 %v498
      %v1331 = vunpack.c.l.b16 %v499
      %v1332 = vunpack.c.h.b16 %v499
      %v1333 = vunpack.c.l.b16 %v500
      %v1334 = vunpack.c.h.b16 %v500
      %v1335 = vunpack.c.l.b16 %v501
      %v1336 = vunpack.c.h.b16 %v501
      %v1337 = vunpack.c.l.b16 %v502
      %v1338 = vunpack.c.h.b16 %v502
      %v1339 = vunpack.c.l.b16 %v503
      %v1340 = vunpack.c.h.b16 %v503
      %v1341 = vunpack.c.l.b16 %v504
      %v1342 = vunpack.c.h.b16 %v504
      %v1343 = vunpack.c.l.b16 %v505
      %v1344 = vunpack.c.h.b16 %v505
      %v1345 = vunpack.c.l.b16 %v506
      %v1346 = vunpack.c.h.b16 %v506
      %v1347 = vunpack.c.l.b16 %v507
      %v1348 = vunpack.c.h.b16 %v507
      %v1349 = vunpack.c.l.b16 %v508
      %v1350 = vunpack.c.h.b16 %v508
      %v1351 = vunpack.c.l.b16 %v509
      %v1352 = vunpack.c.h.b16 %v509
      %v1353 = vunpack.c.l.b16 %v510
      %v1354 = vunpack.c.h.b16 %v510
      %v1355 = vunpack.c.l.b16 %v511
      %v1356 = vunpack.c.h.b16 %v511
      %v1357 = vunpack.c.l.b16 %v512
      %v1358 = vunpack.c.h.b16 %v512
      %v1359 = vunpack.c.l.b16 %v513
      %v1360 = vunpack.c.h.b16 %v513
      %v1361 = vunpack.c.l.b16 %v514
      %v1362 = vunpack.c.h.b16 %v514
      %v1363 = vpack.c.b16 %v853, %v851
      %v1364 = vpack.c.b16 %v854, %v852
      %v1365 = vpack.c.b16 %v857, %v855
      %v1366 = vpack.c.b16 %v858, %v856
      %v1367 = vpack.c.b16 %v861, %v859
      %v1368 = vpack.c.b16 %v862, %v860
      %v1369 = vpack.c.b16 %v865, %v863
      %v1370 = vpack.c.b16 %v866, %v864
      %v1371 = vpack.c.b16 %v869, %v867
      %v1372 = vpack.c.b16 %v870, %v868
      %v1373 = vpack.c.b16 %v873, %v871
      %v1374 = vpack.c.b16 %v874, %v872
      %v1375 = vpack.c.b16 %v877, %v875
      %v1376 = vpack.c.b16 %v878, %v876
      %v1377 = vpack.c.b16 %v881, %v879
      %v1378 = vpack.c.b16 %v882, %v880
      %v1379 = vpack.c.b16 %v885, %v883
      %v1380 = vpack.c.b16 %v886, %v884
      %v1381 = vpack.c.b16 %v889, %v887
      %v1382 = vpack.c.b16 %v890, %v888
      %v1383 = vpack.c.b16 %v893, %v891
      %v1384 = vpack.c.b16 %v894, %v892
      %v1385 = vpack.c.b16 %v897, %v895
      %v1386 = vpack.c.b16 %v898, %v896
      %v1387 = vpack.c.b16 %v901, %v899
      %v1388 = vpack.c.b16 %v902, %v900
      %v1389 = vpack.c.b16 %v905, %v903
      %v1390 = vpack.c.b16 %v906, %v904
      %v1391 = vpack.c.b16 %v909, %v907
      %v1392 = vpack.c.b16 %v910, %v908
      %v1393 = vpack.c.b16 %v913, %v911
      %v1394 = vpack.c.b16 %v914, %v912
      %v1395 = vpack.c.b16 %v917, %v915
      %v1396 = vpack.c.b16 %v918, %v916
      %v1397 = vpack.c.b16 %v921, %v919
      %v1398 = vpack.c.b16 %v922, %v920
      %v1399 = vpack.c.b16 %v925, %v923
      %v1400 = vpack.c.b16 %v926, %v924
      %v1401 = vpack.c.b16 %v929, %v927
      %v1402 = vpack.c.b16 %v930, %v928
      %v1403 = vpack.c.b16 %v933, %v931
      %v1404 = vpack.c.b16 %v934, %v932
      %v1405 = vpack.c.b16 %v937, %v935
      %v1406 = vpack.c.b16 %v938, %v936
      %v1407 = vpack.c.b16 %v941, %v939
      %v1408 = vpack.c.b16 %v942, %v940
      %v1409 = vpack.c.b16 %v945, %v943
      %v1410 = vpack.c.b16 %v946, %v944
      %v1411 = vpack.c.b16 %v949, %v947
      %v1412 = vpack.c.b16 %v950, %v948
      %v1413 = vpack.c.b16 %v953, %v951
      %v1414 = vpack.c.b16 %v954, %v952
      %v1415 = vpack.c.b16 %v957, %v955
      %v1416 = vpack.c.b16 %v958, %v956
      %v1417 = vpack.c.b16 %v961, %v959
      %v1418 = vpack.c.b16 %v962, %v960
      %v1419 = vpack.c.b16 %v965, %v963
      %v1420 = vpack.c.b16 %v966, %v964
      %v1421 = vpack.c.b16 %v969, %v967
      %v1422 = vpack.c.b16 %v970, %v968
      %v1423 = vpack.c.b16 %v973, %v971
      %v1424 = vpack.c.b16 %v974, %v972
      %v1425 = vpack.c.b16 %v977, %v975
      %v1426 = vpack.c.b16 %v978, %v976
      %v1427 = vpack.c.b16 %v981, %v979
      %v1428 = vpack.c.b16 %v982, %v980
      %v1429 = vpack.c.b16 %v985, %v983
      %v1430 = vpack.c.b16 %v986, %v984
      %v1431 = vpack.c.b16 %v989, %v987
      %v1432 = vpack.c.b16 %v990, %v988
      %v1433 = vpack.c.b16 %v993, %v991
      %v1434 = vpack.c.b16 %v994, %v992
      %v1435 = vpack.c.b16 %v997, %v995
      %v1436 = vpack.c.b16 %v998, %v996
      %v1437 = vpack.c.b16 %v1001, %v999
      %v1438 = vpack.c.b16 %v1002, %v1000
      %v1439 = vpack.c.b16 %v1005, %v1003
      %v1440 = vpack.c.b16 %v1006, %v1004
      %v1441 = vpack.c.b16 %v1009, %v1007
      %v1442 = vpack.c.b16 %v1010, %v1008
      %v1443 = vpack.c.b16 %v1013, %v1011
      %v1444 = vpack.c.b16 %v1014, %v1012
      %v1445 = vpack.c.b16 %v1017, %v1015
      %v1446 = vpack.c.b16 %v1018, %v1016
      %v1447 = vpack.c.b16 %v1021, %v1019
      %v1448 = vpack.c.b16 %v1022, %v1020
      %v1449 = vpack.c.b16 %v1025, %v1023
      %v1450 = vpack.c.b16 %v1026, %v1024
      %v1451 = vpack.c.b16 %v1029, %v1027
      %v1452 = vpack.c.b16 %v1030, %v1028
      %v1453 = vpack.c.b16 %v1033, %v1031
      %v1454 = vpack.c.b16 %v1034, %v1032
      %v1455 = vpack.c.b16 %v1037, %v1035
      %v1456 = vpack.c.b16 %v1038, %v1036
      %v1457 = vpack.c.b16 %v1041, %v1039
      %v1458 = vpack.c.b16 %v1042, %v1040
      %v1459 = vpack.c.b16 %v1045, %v1043
      %v1460 = vpack.c.b16 %v1046, %v1044
      %v1461 = vpack.c.b16 %v1049, %v1047
      %v1462 = vpack.c.b16 %v1050, %v1048
      %v1463 = vpack.c.b16 %v1053, %v1051
      %v1464 = vpack.c.b16 %v1054, %v1052
      %v1465 = vpack.c.b16 %v1057, %v1055
      %v1466 = vpack.c.b16 %v1058, %v1056
      %v1467 = vpack.c.b16 %v1061, %v1059
      %v1468 = vpack.c.b16 %v1062, %v1060
      %v1469 = vpack.c.b16 %v1065, %v1063
      %v1470 = vpack.c.b16 %v1066, %v1064
      %v1471 = vpack.c.b16 %v1069, %v1067
      %v1472 = vpack.c.b16 %v1070, %v1068
      %v1473 = vpack.c.b16 %v1073, %v1071
      %v1474 = vpack.c.b16 %v1074, %v1072
      %v1475 = vpack.c.b16 %v1077, %v1075
      %v1476 = vpack.c.b16 %v1078, %v1076
      %v1477 = vpack.c.b16 %v1081, %v1079
      %v1478 = vpack.c.b16 %v1082, %v1080
      %v1479 = vpack.c.b16 %v1085, %v1083
      %v1480 = vpack.c.b16 %v1086, %v1084
      %v1481 = vpack.c.b16 %v1089, %v1087
      %v1482 = vpack.c.b16 %v1090, %v1088
      %v1483 = vpack.c.b16 %v1093, %v1091
      %v1484 = vpack.c.b16 %v1094, %v1092
      %v1485 = vpack.c.b16 %v1097, %v1095
      %v1486 = vpack.c.b16 %v1098, %v1096
      %v1487 = vpack.c.b16 %v1101, %v1099
      %v1488 = vpack.c.b16 %v1102, %v1100
      %v1489 = vpack.c.b16 %v1105, %v1103
      %v1490 = vpack.c.b16 %v1106, %v1104
      %v1491 = vpack.c.b16 %v1109, %v1107
      %v1492 = vpack.c.b16 %v1110, %v1108
      %v1493 = vpack.c.b16 %v1113, %v1111
      %v1494 = vpack.c.b16 %v1114, %v1112
      %v1495 = vpack.c.b16 %v1117, %v1115
      %v1496 = vpack.c.b16 %v1118, %v1116
      %v1497 = vpack.c.b16 %v1121, %v1119
      %v1498 = vpack.c.b16 %v1122, %v1120
      %v1499 = vpack.c.b16 %v1125, %v1123
      %v1500 = vpack.c.b16 %v1126, %v1124
      %v1501 = vpack.c.b16 %v1129, %v1127
      %v1502 = vpack.c.b16 %v1130, %v1128
      %v1503 = vpack.c.b16 %v1133, %v1131
      %v1504 = vpack.c.b16 %v1134, %v1132
      %v1505 = vpack.c.b16 %v1137, %v1135
      %v1506 = vpack.c.b16 %v1138, %v1136
      %v1507 = vpack.c.b16 %v1141, %v1139
      %v1508 = vpack.c.b16 %v1142, %v1140
      %v1509 = vpack.c.b16 %v1145, %v1143
      %v1510 = vpack.c.b16 %v1146, %v1144
      %v1511 = vpack.c.b16 %v1149, %v1147
      %v1512 = vpack.c.b16 %v1150, %v1148
      %v1513 = vpack.c.b16 %v1153, %v1151
      %v1514 = vpack.c.b16 %v1154, %v1152
      %v1515 = vpack.c.b16 %v1157, %v1155
      %v1516 = vpack.c.b16 %v1158, %v1156
      %v1517 = vpack.c.b16 %v1161, %v1159
      %v1518 = vpack.c.b16 %v1162, %v1160
      %v1519 = vpack.c.b16 %v1165, %v1163
      %v1520 = vpack.c.b16 %v1166, %v1164
      %v1521 = vpack.c.b16 %v1169, %v1167
      %v1522 = vpack.c.b16 %v1170, %v1168
      %v1523 = vpack.c.b16 %v1173, %v1171
      %v1524 = vpack.c.b16 %v1174, %v1172
      %v1525 = vpack.c.b16 %v1177, %v1175
      %v1526 = vpack.c.b16 %v1178, %v1176
      %v1527 = vpack.c.b16 %v1181, %v1179
      %v1528 = vpack.c.b16 %v1182, %v1180
      %v1529 = vpack.c.b16 %v1185, %v1183
      %v1530 = vpack.c.b16 %v1186, %v1184
      %v1531 = vpack.c.b16 %v1189, %v1187
      %v1532 = vpack.c.b16 %v1190, %v1188
      %v1533 = vpack.c.b16 %v1193, %v1191
      %v1534 = vpack.c.b16 %v1194, %v1192
      %v1535 = vpack.c.b16 %v1197, %v1195
      %v1536 = vpack.c.b16 %v1198, %v1196
      %v1537 = vpack.c.b16 %v1201, %v1199
      %v1538 = vpack.c.b16 %v1202, %v1200
      %v1539 = vpack.c.b16 %v1205, %v1203
      %v1540 = vpack.c.b16 %v1206, %v1204
      %v1541 = vpack.c.b16 %v1209, %v1207
      %v1542 = vpack.c.b16 %v1210, %v1208
      %v1543 = vpack.c.b16 %v1213, %v1211
      %v1544 = vpack.c.b16 %v1214, %v1212
      %v1545 = vpack.c.b16 %v1217, %v1215
      %v1546 = vpack.c.b16 %v1218, %v1216
      %v1547 = vpack.c.b16 %v1221, %v1219
      %v1548 = vpack.c.b16 %v1222, %v1220
      %v1549 = vpack.c.b16 %v1225, %v1223
      %v1550 = vpack.c.b16 %v1226, %v1224
      %v1551 = vpack.c.b16 %v1229, %v1227
      %v1552 = vpack.c.b16 %v1230, %v1228
      %v1553 = vpack.c.b16 %v1233, %v1231
      %v1554 = vpack.c.b16 %v1234, %v1232
      %v1555 = vpack.c.b16 %v1237, %v1235
      %v1556 = vpack.c.b16 %v1238, %v1236
      %v1557 = vpack.c.b16 %v1241, %v1239
      %v1558 = vpack.c.b16 %v1242, %v1240
      %v1559 = vpack.c.b16 %v1245, %v1243
      %v1560 = vpack.c.b16 %v1246, %v1244
      %v1561 = vpack.c.b16 %v1249, %v1247
      %v1562 = vpack.c.b16 %v1250, %v1248
      %v1563 = vpack.c.b16 %v1253, %v1251
      %v1564 = vpack.c.b16 %v1254, %v1252
      %v1565 = vpack.c.b16 %v1257, %v1255
      %v1566 = vpack.c.b16 %v1258, %v1256
      %v1567 = vpack.c.b16 %v1261, %v1259
      %v1568 = vpack.c.b16 %v1262, %v1260
      %v1569 = vpack.c.b16 %v1265, %v1263
      %v1570 = vpack.c.b16 %v1266, %v1264
      %v1571 = vpack.c.b16 %v1269, %v1267
      %v1572 = vpack.c.b16 %v1270, %v1268
      %v1573 = vpack.c.b16 %v1273, %v1271
      %v1574 = vpack.c.b16 %v1274, %v1272
      %v1575 = vpack.c.b16 %v1277, %v1275
      %v1576 = vpack.c.b16 %v1278, %v1276
      %v1577 = vpack.c.b16 %v1281, %v1279
      %v1578 = vpack.c.b16 %v1282, %v1280
      %v1579 = vpack.c.b16 %v1285, %v1283
      %v1580 = vpack.c.b16 %v1286, %v1284
      %v1581 = vpack.c.b16 %v1289, %v1287
      %v1582 = vpack.c.b16 %v1290, %v1288
      %v1583 = vpack.c.b16 %v1293, %v1291
      %v1584 = vpack.c.b16 %v1294, %v1292
      %v1585 = vpack.c.b16 %v1297, %v1295
      %v1586 = vpack.c.b16 %v1298, %v1296
      %v1587 = vpack.c.b16 %v1301, %v1299
      %v1588 = vpack.c.b16 %v1302, %v1300
      %v1589 = vpack.c.b16 %v1305, %v1303
      %v1590 = vpack.c.b16 %v1306, %v1304
      %v1591 = vpack.c.b16 %v1309, %v1307
      %v1592 = vpack.c.b16 %v1310, %v1308
      %v1593 = vpack.c.b16 %v1313, %v1311
      %v1594 = vpack.c.b16 %v1314, %v1312
      %v1595 = vpack.c.b16 %v1317, %v1315
      %v1596 = vpack.c.b16 %v1318, %v1316
      %v1597 = vpack.c.b16 %v1321, %v1319
      %v1598 = vpack.c.b16 %v1322, %v1320
      %v1599 = vpack.c.b16 %v1325, %v1323
      %v1600 = vpack.c.b16 %v1326, %v1324
      %v1601 = vpack.c.b16 %v1329, %v1327
      %v1602 = vpack.c.b16 %v1330, %v1328
      %v1603 = vpack.c.b16 %v1333, %v1331
      %v1604 = vpack.c.b16 %v1334, %v1332
      %v1605 = vpack.c.b16 %v1337, %v1335
      %v1606 = vpack.c.b16 %v1338, %v1336
      %v1607 = vpack.c.b16 %v1341, %v1339
      %v1608 = vpack.c.b16 %v1342, %v1340
      %v1609 = vpack.c.b16 %v1345, %v1343
      %v1610 = vpack.c.b16 %v1346, %v1344
      %v1611 = vpack.c.b16 %v1349, %v1347
      %v1612 = vpack.c.b16 %v1350, %v1348
      %v1613 = vpack.c.b16 %v1353, %v1351
      %v1614 = vpack.c.b16 %v1354, %v1352
      %v1615 = vpack.c.b16 %v1357, %v1355
      %v1616 = vpack.c.b16 %v1358, %v1356
      %v1617 = vpack.c.b16 %v1361, %v1359
      %v1618 = vpack.c.b16 %v1362, %v1360
      %1875 = vmatpush.bf16.msra.mxu0 %v1377
      %1876 = vmatpush.bf16.msra.mxu0 %v1375
      %1877 = vmatpush.bf16.msra.mxu0 %v1373
      %1878 = vmatpush.bf16.msra.mxu0 %v1371
      %1879 = vmatpush.bf16.msra.mxu0 %v1369
      %1880 = vmatpush.bf16.msra.mxu0 %v1367
      %1881 = vmatpush.bf16.msra.mxu0 %v1365
      %1882 = vmatpush.bf16.msra.mxu0 %v1363
      %1883 = vmatmul.bf16.gmra.mxu0 %v563
      %v1884 = vpop.f32.mrf.mxu0
      %v1885 = vadd.f32 0.0, %v1884
      %v1886 = vpop.f32.mrf.mxu0
      %v1887 = vadd.f32 0.0, %v1886
      %1888 = vdwg.mxu0
      %1889 = vmatpush.bf16.msra.mxu0 %v1393
      %1890 = vmatpush.bf16.msra.mxu0 %v1391
      %1891 = vmatpush.bf16.msra.mxu0 %v1389
      %1892 = vmatpush.bf16.msra.mxu0 %v1387
      %1893 = vmatpush.bf16.msra.mxu0 %v1385
      %1894 = vmatpush.bf16.msra.mxu0 %v1383
      %1895 = vmatpush.bf16.msra.mxu0 %v1381
      %1896 = vmatpush.bf16.msra.mxu0 %v1379
      %1897 = vmatmul.bf16.gmra.mxu0 %v564
      %v1898 = vpop.f32.mrf.mxu0
      %v1899 = vadd.f32 %v1885, %v1898
      %v1900 = vpop.f32.mrf.mxu0
      %v1901 = vadd.f32 %v1887, %v1900
      %1902 = vdwg.mxu0
      %1903 = vmatpush.bf16.msra.mxu0 %v1409
      %1904 = vmatpush.bf16.msra.mxu0 %v1407
      %1905 = vmatpush.bf16.msra.mxu0 %v1405
      %1906 = vmatpush.bf16.msra.mxu0 %v1403
      %1907 = vmatpush.bf16.msra.mxu0 %v1401
      %1908 = vmatpush.bf16.msra.mxu0 %v1399
      %1909 = vmatpush.bf16.msra.mxu0 %v1397
      %1910 = vmatpush.bf16.msra.mxu0 %v1395
      %1911 = vmatmul.bf16.gmra.mxu0 %v565
      %v1912 = vpop.f32.mrf.mxu0
      %v1913 = vadd.f32 %v1899, %v1912
      %v1914 = vpop.f32.mrf.mxu0
      %v1915 = vadd.f32 %v1901, %v1914
      %1916 = vdwg.mxu0
      %1917 = vmatpush.bf16.msra.mxu0 %v1425
      %1918 = vmatpush.bf16.msra.mxu0 %v1423
      %1919 = vmatpush.bf16.msra.mxu0 %v1421
      %1920 = vmatpush.bf16.msra.mxu0 %v1419
      %1921 = vmatpush.bf16.msra.mxu0 %v1417
      %1922 = vmatpush.bf16.msra.mxu0 %v1415
      %1923 = vmatpush.bf16.msra.mxu0 %v1413
      %1924 = vmatpush.bf16.msra.mxu0 %v1411
      %1925 = vmatmul.bf16.gmra.mxu0 %v566
      %v1926 = vpop.f32.mrf.mxu0
      %v1927 = vadd.f32 %v1913, %v1926
      %v1928 = vpop.f32.mrf.mxu0
      %v1929 = vadd.f32 %v1915, %v1928
      %1930 = vdwg.mxu0
      %1931 = vmatpush.bf16.msra.mxu0 %v1441
      %1932 = vmatpush.bf16.msra.mxu0 %v1439
      %1933 = vmatpush.bf16.msra.mxu0 %v1437
      %1934 = vmatpush.bf16.msra.mxu0 %v1435
      %1935 = vmatpush.bf16.msra.mxu0 %v1433
      %1936 = vmatpush.bf16.msra.mxu0 %v1431
      %1937 = vmatpush.bf16.msra.mxu0 %v1429
      %1938 = vmatpush.bf16.msra.mxu0 %v1427
      %1939 = vmatmul.bf16.gmra.mxu0 %v567
      %v1940 = vpop.f32.mrf.mxu0
      %v1941 = vadd.f32 %v1927, %v1940
      %v1942 = vpop.f32.mrf.mxu0
      %v1943 = vadd.f32 %v1929, %v1942
      %1944 = vdwg.mxu0
      %1945 = vmatpush.bf16.msra.mxu0 %v1457
      %1946 = vmatpush.bf16.msra.mxu0 %v1455
      %1947 = vmatpush.bf16.msra.mxu0 %v1453
      %1948 = vmatpush.bf16.msra.mxu0 %v1451
      %1949 = vmatpush.bf16.msra.mxu0 %v1449
      %1950 = vmatpush.bf16.msra.mxu0 %v1447
      %1951 = vmatpush.bf16.msra.mxu0 %v1445
      %1952 = vmatpush.bf16.msra.mxu0 %v1443
      %1953 = vmatmul.bf16.gmra.mxu0 %v568
      %v1954 = vpop.f32.mrf.mxu0
      %v1955 = vadd.f32 %v1941, %v1954
      %v1956 = vpop.f32.mrf.mxu0
      %v1957 = vadd.f32 %v1943, %v1956
      %1958 = vdwg.mxu0
      %1959 = vmatpush.bf16.msra.mxu0 %v1473
      %1960 = vmatpush.bf16.msra.mxu0 %v1471
      %1961 = vmatpush.bf16.msra.mxu0 %v1469
      %1962 = vmatpush.bf16.msra.mxu0 %v1467
      %1963 = vmatpush.bf16.msra.mxu0 %v1465
      %1964 = vmatpush.bf16.msra.mxu0 %v1463
      %1965 = vmatpush.bf16.msra.mxu0 %v1461
      %1966 = vmatpush.bf16.msra.mxu0 %v1459
      %1967 = vmatmul.bf16.gmra.mxu0 %v569
      %v1968 = vpop.f32.mrf.mxu0
      %v1969 = vadd.f32 %v1955, %v1968
      %v1970 = vpop.f32.mrf.mxu0
      %v1971 = vadd.f32 %v1957, %v1970
      %1972 = vdwg.mxu0
      %1973 = vmatpush.bf16.msra.mxu0 %v1489
      %1974 = vmatpush.bf16.msra.mxu0 %v1487
      %1975 = vmatpush.bf16.msra.mxu0 %v1485
      %1976 = vmatpush.bf16.msra.mxu0 %v1483
      %1977 = vmatpush.bf16.msra.mxu0 %v1481
      %1978 = vmatpush.bf16.msra.mxu0 %v1479
      %1979 = vmatpush.bf16.msra.mxu0 %v1477
      %1980 = vmatpush.bf16.msra.mxu0 %v1475
      %1981 = vmatmul.bf16.gmra.mxu0 %v570
      %v1982 = vpop.f32.mrf.mxu0
      %v1983 = vadd.f32 %v1969, %v1982
      %v1984 = vpop.f32.mrf.mxu0
      %v1985 = vadd.f32 %v1971, %v1984
      %1986 = vdwg.mxu0
      %1987 = vmatpush.bf16.msra.mxu0 %v1505
      %1988 = vmatpush.bf16.msra.mxu0 %v1503
      %1989 = vmatpush.bf16.msra.mxu0 %v1501
      %1990 = vmatpush.bf16.msra.mxu0 %v1499
      %1991 = vmatpush.bf16.msra.mxu0 %v1497
      %1992 = vmatpush.bf16.msra.mxu0 %v1495
      %1993 = vmatpush.bf16.msra.mxu0 %v1493
      %1994 = vmatpush.bf16.msra.mxu0 %v1491
      %1995 = vmatmul.bf16.gmra.mxu0 %v571
      %v1996 = vpop.f32.mrf.mxu0
      %v1997 = vadd.f32 %v1983, %v1996
      %v1998 = vpop.f32.mrf.mxu0
      %v1999 = vadd.f32 %v1985, %v1998
      %2000 = vdwg.mxu0
      %2001 = vmatpush.bf16.msra.mxu0 %v1521
      %2002 = vmatpush.bf16.msra.mxu0 %v1519
      %2003 = vmatpush.bf16.msra.mxu0 %v1517
      %2004 = vmatpush.bf16.msra.mxu0 %v1515
      %2005 = vmatpush.bf16.msra.mxu0 %v1513
      %2006 = vmatpush.bf16.msra.mxu0 %v1511
      %2007 = vmatpush.bf16.msra.mxu0 %v1509
      %2008 = vmatpush.bf16.msra.mxu0 %v1507
      %2009 = vmatmul.bf16.gmra.mxu0 %v572
      %v2010 = vpop.f32.mrf.mxu0
      %v2011 = vadd.f32 %v1997, %v2010
      %v2012 = vpop.f32.mrf.mxu0
      %v2013 = vadd.f32 %v1999, %v2012
      %2014 = vdwg.mxu0
      %2015 = vmatpush.bf16.msra.mxu0 %v1537
      %2016 = vmatpush.bf16.msra.mxu0 %v1535
      %2017 = vmatpush.bf16.msra.mxu0 %v1533
      %2018 = vmatpush.bf16.msra.mxu0 %v1531
      %2019 = vmatpush.bf16.msra.mxu0 %v1529
      %2020 = vmatpush.bf16.msra.mxu0 %v1527
      %2021 = vmatpush.bf16.msra.mxu0 %v1525
      %2022 = vmatpush.bf16.msra.mxu0 %v1523
      %2023 = vmatmul.bf16.gmra.mxu0 %v573
      %v2024 = vpop.f32.mrf.mxu0
      %v2025 = vadd.f32 %v2011, %v2024
      %v2026 = vpop.f32.mrf.mxu0
      %v2027 = vadd.f32 %v2013, %v2026
      %2028 = vdwg.mxu0
      %2029 = vmatpush.bf16.msra.mxu0 %v1553
      %2030 = vmatpush.bf16.msra.mxu0 %v1551
      %2031 = vmatpush.bf16.msra.mxu0 %v1549
      %2032 = vmatpush.bf16.msra.mxu0 %v1547
      %2033 = vmatpush.bf16.msra.mxu0 %v1545
      %2034 = vmatpush.bf16.msra.mxu0 %v1543
      %2035 = vmatpush.bf16.msra.mxu0 %v1541
      %2036 = vmatpush.bf16.msra.mxu0 %v1539
      %2037 = vmatmul.bf16.gmra.mxu0 %v574
      %v2038 = vpop.f32.mrf.mxu0
      %v2039 = vadd.f32 %v2025, %v2038
      %v2040 = vpop.f32.mrf.mxu0
      %v2041 = vadd.f32 %v2027, %v2040
      %2042 = vdwg.mxu0
      %2043 = vmatpush.bf16.msra.mxu0 %v1569
      %2044 = vmatpush.bf16.msra.mxu0 %v1567
      %2045 = vmatpush.bf16.msra.mxu0 %v1565
      %2046 = vmatpush.bf16.msra.mxu0 %v1563
      %2047 = vmatpush.bf16.msra.mxu0 %v1561
      %2048 = vmatpush.bf16.msra.mxu0 %v1559
      %2049 = vmatpush.bf16.msra.mxu0 %v1557
      %2050 = vmatpush.bf16.msra.mxu0 %v1555
      %2051 = vmatmul.bf16.gmra.mxu0 %v575
      %v2052 = vpop.f32.mrf.mxu0
      %v2053 = vadd.f32 %v2039, %v2052
      %v2054 = vpop.f32.mrf.mxu0
      %v2055 = vadd.f32 %v2041, %v2054
      %2056 = vdwg.mxu0
      %2057 = vmatpush.bf16.msra.mxu0 %v1585
      %2058 = vmatpush.bf16.msra.mxu0 %v1583
      %2059 = vmatpush.bf16.msra.mxu0 %v1581
      %2060 = vmatpush.bf16.msra.mxu0 %v1579
      %2061 = vmatpush.bf16.msra.mxu0 %v1577
      %2062 = vmatpush.bf16.msra.mxu0 %v1575
      %2063 = vmatpush.bf16.msra.mxu0 %v1573
      %2064 = vmatpush.bf16.msra.mxu0 %v1571
      %2065 = vmatmul.bf16.gmra.mxu0 %v576
      %v2066 = vpop.f32.mrf.mxu0
      %v2067 = vadd.f32 %v2053, %v2066
      %v2068 = vpop.f32.mrf.mxu0
      %v2069 = vadd.f32 %v2055, %v2068
      %2070 = vdwg.mxu0
      %2071 = vmatpush.bf16.msra.mxu0 %v1601
      %2072 = vmatpush.bf16.msra.mxu0 %v1599
      %2073 = vmatpush.bf16.msra.mxu0 %v1597
      %2074 = vmatpush.bf16.msra.mxu0 %v1595
      %2075 = vmatpush.bf16.msra.mxu0 %v1593
      %2076 = vmatpush.bf16.msra.mxu0 %v1591
      %2077 = vmatpush.bf16.msra.mxu0 %v1589
      %2078 = vmatpush.bf16.msra.mxu0 %v1587
      %2079 = vmatmul.bf16.gmra.mxu0 %v577
      %v2080 = vpop.f32.mrf.mxu0
      %v2081 = vadd.f32 %v2067, %v2080
      %v2082 = vpop.f32.mrf.mxu0
      %v2083 = vadd.f32 %v2069, %v2082
      %2084 = vdwg.mxu0
      %2085 = vmatpush.bf16.msra.mxu0 %v1617
      %2086 = vmatpush.bf16.msra.mxu0 %v1615
      %2087 = vmatpush.bf16.msra.mxu0 %v1613
      %2088 = vmatpush.bf16.msra.mxu0 %v1611
      %2089 = vmatpush.bf16.msra.mxu0 %v1609
      %2090 = vmatpush.bf16.msra.mxu0 %v1607
      %2091 = vmatpush.bf16.msra.mxu0 %v1605
      %2092 = vmatpush.bf16.msra.mxu0 %v1603
      %2093 = vmatmul.bf16.gmra.mxu0 %v578
      %v2094 = vpop.f32.mrf.mxu0
      %v2095 = vadd.f32 %v2081, %v2094
      %v2096 = vpop.f32.mrf.mxu0
      %v2097 = vadd.f32 %v2083, %v2096
      %2098 = vdwg.mxu0
      %2099 = vmatpush.bf16.msra.mxu0 %v1378
      %2100 = vmatpush.bf16.msra.mxu0 %v1376
      %2101 = vmatpush.bf16.msra.mxu0 %v1374
      %2102 = vmatpush.bf16.msra.mxu0 %v1372
      %2103 = vmatpush.bf16.msra.mxu0 %v1370
      %2104 = vmatpush.bf16.msra.mxu0 %v1368
      %2105 = vmatpush.bf16.msra.mxu0 %v1366
      %2106 = vmatpush.bf16.msra.mxu0 %v1364
      %2107 = vmatmul.bf16.gmra.mxu0 %v563
      %v2108 = vpop.f32.mrf.mxu0
      %v2109 = vadd.f32 0.0, %v2108
      %v2110 = vpop.f32.mrf.mxu0
      %v2111 = vadd.f32 0.0, %v2110
      %2112 = vdwg.mxu0
      %2113 = vmatpush.bf16.msra.mxu0 %v1394
      %2114 = vmatpush.bf16.msra.mxu0 %v1392
      %2115 = vmatpush.bf16.msra.mxu0 %v1390
      %2116 = vmatpush.bf16.msra.mxu0 %v1388
      %2117 = vmatpush.bf16.msra.mxu0 %v1386
      %2118 = vmatpush.bf16.msra.mxu0 %v1384
      %2119 = vmatpush.bf16.msra.mxu0 %v1382
      %2120 = vmatpush.bf16.msra.mxu0 %v1380
      %2121 = vmatmul.bf16.gmra.mxu0 %v564
      %v2122 = vpop.f32.mrf.mxu0
      %v2123 = vadd.f32 %v2109, %v2122
      %v2124 = vpop.f32.mrf.mxu0
      %v2125 = vadd.f32 %v2111, %v2124
      %2126 = vdwg.mxu0
      %2127 = vmatpush.bf16.msra.mxu0 %v1410
      %2128 = vmatpush.bf16.msra.mxu0 %v1408
      %2129 = vmatpush.bf16.msra.mxu0 %v1406
      %2130 = vmatpush.bf16.msra.mxu0 %v1404
      %2131 = vmatpush.bf16.msra.mxu0 %v1402
      %2132 = vmatpush.bf16.msra.mxu0 %v1400
      %2133 = vmatpush.bf16.msra.mxu0 %v1398
      %2134 = vmatpush.bf16.msra.mxu0 %v1396
      %2135 = vmatmul.bf16.gmra.mxu0 %v565
      %v2136 = vpop.f32.mrf.mxu0
      %v2137 = vadd.f32 %v2123, %v2136
      %v2138 = vpop.f32.mrf.mxu0
      %v2139 = vadd.f32 %v2125, %v2138
      %2140 = vdwg.mxu0
      %2141 = vmatpush.bf16.msra.mxu0 %v1426
      %2142 = vmatpush.bf16.msra.mxu0 %v1424
      %2143 = vmatpush.bf16.msra.mxu0 %v1422
      %2144 = vmatpush.bf16.msra.mxu0 %v1420
      %2145 = vmatpush.bf16.msra.mxu0 %v1418
      %2146 = vmatpush.bf16.msra.mxu0 %v1416
      %2147 = vmatpush.bf16.msra.mxu0 %v1414
      %2148 = vmatpush.bf16.msra.mxu0 %v1412
      %2149 = vmatmul.bf16.gmra.mxu0 %v566
      %v2150 = vpop.f32.mrf.mxu0
      %v2151 = vadd.f32 %v2137, %v2150
      %v2152 = vpop.f32.mrf.mxu0
      %v2153 = vadd.f32 %v2139, %v2152
      %2154 = vdwg.mxu0
      %2155 = vmatpush.bf16.msra.mxu0 %v1442
      %2156 = vmatpush.bf16.msra.mxu0 %v1440
      %2157 = vmatpush.bf16.msra.mxu0 %v1438
      %2158 = vmatpush.bf16.msra.mxu0 %v1436
      %2159 = vmatpush.bf16.msra.mxu0 %v1434
      %2160 = vmatpush.bf16.msra.mxu0 %v1432
      %2161 = vmatpush.bf16.msra.mxu0 %v1430
      %2162 = vmatpush.bf16.msra.mxu0 %v1428
      %2163 = vmatmul.bf16.gmra.mxu0 %v567
      %v2164 = vpop.f32.mrf.mxu0
      %v2165 = vadd.f32 %v2151, %v2164
      %v2166 = vpop.f32.mrf.mxu0
      %v2167 = vadd.f32 %v2153, %v2166
      %2168 = vdwg.mxu0
      %2169 = vmatpush.bf16.msra.mxu0 %v1458
      %2170 = vmatpush.bf16.msra.mxu0 %v1456
      %2171 = vmatpush.bf16.msra.mxu0 %v1454
      %2172 = vmatpush.bf16.msra.mxu0 %v1452
      %2173 = vmatpush.bf16.msra.mxu0 %v1450
      %2174 = vmatpush.bf16.msra.mxu0 %v1448
      %2175 = vmatpush.bf16.msra.mxu0 %v1446
      %2176 = vmatpush.bf16.msra.mxu0 %v1444
      %2177 = vmatmul.bf16.gmra.mxu0 %v568
      %v2178 = vpop.f32.mrf.mxu0
      %v2179 = vadd.f32 %v2165, %v2178
      %v2180 = vpop.f32.mrf.mxu0
      %v2181 = vadd.f32 %v2167, %v2180
      %2182 = vdwg.mxu0
      %2183 = vmatpush.bf16.msra.mxu0 %v1474
      %2184 = vmatpush.bf16.msra.mxu0 %v1472
      %2185 = vmatpush.bf16.msra.mxu0 %v1470
      %2186 = vmatpush.bf16.msra.mxu0 %v1468
      %2187 = vmatpush.bf16.msra.mxu0 %v1466
      %2188 = vmatpush.bf16.msra.mxu0 %v1464
      %2189 = vmatpush.bf16.msra.mxu0 %v1462
      %2190 = vmatpush.bf16.msra.mxu0 %v1460
      %2191 = vmatmul.bf16.gmra.mxu0 %v569
      %v2192 = vpop.f32.mrf.mxu0
      %v2193 = vadd.f32 %v2179, %v2192
      %v2194 = vpop.f32.mrf.mxu0
      %v2195 = vadd.f32 %v2181, %v2194
      %2196 = vdwg.mxu0
      %2197 = vmatpush.bf16.msra.mxu0 %v1490
      %2198 = vmatpush.bf16.msra.mxu0 %v1488
      %2199 = vmatpush.bf16.msra.mxu0 %v1486
      %2200 = vmatpush.bf16.msra.mxu0 %v1484
      %2201 = vmatpush.bf16.msra.mxu0 %v1482
      %2202 = vmatpush.bf16.msra.mxu0 %v1480
      %2203 = vmatpush.bf16.msra.mxu0 %v1478
      %2204 = vmatpush.bf16.msra.mxu0 %v1476
      %2205 = vmatmul.bf16.gmra.mxu0 %v570
      %v2206 = vpop.f32.mrf.mxu0
      %v2207 = vadd.f32 %v2193, %v2206
      %v2208 = vpop.f32.mrf.mxu0
      %v2209 = vadd.f32 %v2195, %v2208
      %2210 = vdwg.mxu0
      %2211 = vmatpush.bf16.msra.mxu0 %v1506
      %2212 = vmatpush.bf16.msra.mxu0 %v1504
      %2213 = vmatpush.bf16.msra.mxu0 %v1502
      %2214 = vmatpush.bf16.msra.mxu0 %v1500
      %2215 = vmatpush.bf16.msra.mxu0 %v1498
      %2216 = vmatpush.bf16.msra.mxu0 %v1496
      %2217 = vmatpush.bf16.msra.mxu0 %v1494
      %2218 = vmatpush.bf16.msra.mxu0 %v1492
      %2219 = vmatmul.bf16.gmra.mxu0 %v571
      %v2220 = vpop.f32.mrf.mxu0
      %v2221 = vadd.f32 %v2207, %v2220
      %v2222 = vpop.f32.mrf.mxu0
      %v2223 = vadd.f32 %v2209, %v2222
      %2224 = vdwg.mxu0
      %2225 = vmatpush.bf16.msra.mxu0 %v1522
      %2226 = vmatpush.bf16.msra.mxu0 %v1520
      %2227 = vmatpush.bf16.msra.mxu0 %v1518
      %2228 = vmatpush.bf16.msra.mxu0 %v1516
      %2229 = vmatpush.bf16.msra.mxu0 %v1514
      %2230 = vmatpush.bf16.msra.mxu0 %v1512
      %2231 = vmatpush.bf16.msra.mxu0 %v1510
      %2232 = vmatpush.bf16.msra.mxu0 %v1508
      %2233 = vmatmul.bf16.gmra.mxu0 %v572
      %v2234 = vpop.f32.mrf.mxu0
      %v2235 = vadd.f32 %v2221, %v2234
      %v2236 = vpop.f32.mrf.mxu0
      %v2237 = vadd.f32 %v2223, %v2236
      %2238 = vdwg.mxu0
      %2239 = vmatpush.bf16.msra.mxu0 %v1538
      %2240 = vmatpush.bf16.msra.mxu0 %v1536
      %2241 = vmatpush.bf16.msra.mxu0 %v1534
      %2242 = vmatpush.bf16.msra.mxu0 %v1532
      %2243 = vmatpush.bf16.msra.mxu0 %v1530
      %2244 = vmatpush.bf16.msra.mxu0 %v1528
      %2245 = vmatpush.bf16.msra.mxu0 %v1526
      %2246 = vmatpush.bf16.msra.mxu0 %v1524
      %2247 = vmatmul.bf16.gmra.mxu0 %v573
      %v2248 = vpop.f32.mrf.mxu0
      %v2249 = vadd.f32 %v2235, %v2248
      %v2250 = vpop.f32.mrf.mxu0
      %v2251 = vadd.f32 %v2237, %v2250
      %2252 = vdwg.mxu0
      %2253 = vmatpush.bf16.msra.mxu0 %v1554
      %2254 = vmatpush.bf16.msra.mxu0 %v1552
      %2255 = vmatpush.bf16.msra.mxu0 %v1550
      %2256 = vmatpush.bf16.msra.mxu0 %v1548
      %2257 = vmatpush.bf16.msra.mxu0 %v1546
      %2258 = vmatpush.bf16.msra.mxu0 %v1544
      %2259 = vmatpush.bf16.msra.mxu0 %v1542
      %2260 = vmatpush.bf16.msra.mxu0 %v1540
      %2261 = vmatmul.bf16.gmra.mxu0 %v574
      %v2262 = vpop.f32.mrf.mxu0
      %v2263 = vadd.f32 %v2249, %v2262
      %v2264 = vpop.f32.mrf.mxu0
      %v2265 = vadd.f32 %v2251, %v2264
      %2266 = vdwg.mxu0
      %2267 = vmatpush.bf16.msra.mxu0 %v1570
      %2268 = vmatpush.bf16.msra.mxu0 %v1568
      %2269 = vmatpush.bf16.msra.mxu0 %v1566
      %2270 = vmatpush.bf16.msra.mxu0 %v1564
      %2271 = vmatpush.bf16.msra.mxu0 %v1562
      %2272 = vmatpush.bf16.msra.mxu0 %v1560
      %2273 = vmatpush.bf16.msra.mxu0 %v1558
      %2274 = vmatpush.bf16.msra.mxu0 %v1556
      %2275 = vmatmul.bf16.gmra.mxu0 %v575
      %v2276 = vpop.f32.mrf.mxu0
      %v2277 = vadd.f32 %v2263, %v2276
      %v2278 = vpop.f32.mrf.mxu0
      %v2279 = vadd.f32 %v2265, %v2278
      %2280 = vdwg.mxu0
      %2281 = vmatpush.bf16.msra.mxu0 %v1586
      %2282 = vmatpush.bf16.msra.mxu0 %v1584
      %2283 = vmatpush.bf16.msra.mxu0 %v1582
      %2284 = vmatpush.bf16.msra.mxu0 %v1580
      %2285 = vmatpush.bf16.msra.mxu0 %v1578
      %2286 = vmatpush.bf16.msra.mxu0 %v1576
      %2287 = vmatpush.bf16.msra.mxu0 %v1574
      %2288 = vmatpush.bf16.msra.mxu0 %v1572
      %2289 = vmatmul.bf16.gmra.mxu0 %v576
      %v2290 = vpop.f32.mrf.mxu0
      %v2291 = vadd.f32 %v2277, %v2290
      %v2292 = vpop.f32.mrf.mxu0
      %v2293 = vadd.f32 %v2279, %v2292
      %2294 = vdwg.mxu0
      %2295 = vmatpush.bf16.msra.mxu0 %v1602
      %2296 = vmatpush.bf16.msra.mxu0 %v1600
      %2297 = vmatpush.bf16.msra.mxu0 %v1598
      %2298 = vmatpush.bf16.msra.mxu0 %v1596
      %2299 = vmatpush.bf16.msra.mxu0 %v1594
      %2300 = vmatpush.bf16.msra.mxu0 %v1592
      %2301 = vmatpush.bf16.msra.mxu0 %v1590
      %2302 = vmatpush.bf16.msra.mxu0 %v1588
      %2303 = vmatmul.bf16.gmra.mxu0 %v577
      %v2304 = vpop.f32.mrf.mxu0
      %v2305 = vadd.f32 %v2291, %v2304
      %v2306 = vpop.f32.mrf.mxu0
      %v2307 = vadd.f32 %v2293, %v2306
      %2308 = vdwg.mxu0
      %2309 = vmatpush.bf16.msra.mxu0 %v1618
      %2310 = vmatpush.bf16.msra.mxu0 %v1616
      %2311 = vmatpush.bf16.msra.mxu0 %v1614
      %2312 = vmatpush.bf16.msra.mxu0 %v1612
      %2313 = vmatpush.bf16.msra.mxu0 %v1610
      %2314 = vmatpush.bf16.msra.mxu0 %v1608
      %2315 = vmatpush.bf16.msra.mxu0 %v1606
      %2316 = vmatpush.bf16.msra.mxu0 %v1604
      %2317 = vmatmul.bf16.gmra.mxu0 %v578
      %v2318 = vpop.f32.mrf.mxu0
      %v2319 = vadd.f32 %v2305, %v2318
      %v2320 = vpop.f32.mrf.mxu0
      %v2321 = vadd.f32 %v2307, %v2320
      %2322 = vdwg.mxu0
      %v2323 = vadd.f32 %v239, %v2095
      %v2324 = vadd.f32 %v240, %v2319
      %v2325 = vadd.f32 %v241, %v2097
      %v2326 = vadd.f32 %v242, %v2321
      %2327 = vst [vmem:[#allocation2] sm:$0xff] %v2323
      %2328 = vst [vmem:[#allocation2 + $0x8] sm:$0xff] %v2324
      %2329 = vst [vmem:[#allocation2 + $0x10] sm:$0xff] %v2325
      %2330 = vst [vmem:[#allocation2 + $0x18] sm:$0xff] %v2326
      // Predicated region
      $region33: #{fwd.7} parent=27 // pred_check
        %p2331 = pneg %p231
      $region34: #{fwd.7} parent=27 // pred_check_branch
        %2333 = sbr.rel (%p2331) target = $region36
      $region35: #{fwd.7} parent=27 // pred_region
        %v2334 = vld [vmem:[#allocation2] sm:$0xff]
        %v2335 = vld [vmem:[#allocation2 + $0x8] sm:$0xff]
        %v2336 = vld [vmem:[#allocation2 + $0x10] sm:$0xff]
        %v2337 = vld [vmem:[#allocation2 + $0x18] sm:$0xff]
        %v2338 = vadd.f32 %v2334, %v2336
        %v2339 = vrot.slane %v2338, 4
        %v2340 = vadd.f32 %v2338, %v2339
        %v2341 = vrot.slane %v2340, 2
        %v2342 = vadd.f32 %v2340, %v2341
        %v2343 = vrot.slane %v2342, 1
        %v2344 = vadd.f32 %v2342, %v2343
        %v2345 = vadd.f32 %v2335, %v2337
        %v2346 = vrot.slane %v2345, 4
        %v2347 = vadd.f32 %v2345, %v2346
        %v2348 = vrot.slane %v2347, 2
        %v2349 = vadd.f32 %v2347, %v2348
        %v2350 = vrot.slane %v2349, 1
        %v2351 = vadd.f32 %v2349, %v2350
        %v2352 = vmul.f32 %v2344, 0.0625
        %v2353 = vmul.f32 %v2351, 0.0625
        %v2354 = vsub.f32 %v2334, %v2352
        %v2355 = vsub.f32 %v2335, %v2353
        %v2356 = vsub.f32 %v2336, %v2352
        %v2357 = vsub.f32 %v2337, %v2353
        %v2358 = vmul.f32 %v2354, %v2354
        %v2359 = vmul.f32 %v2355, %v2355
        %v2360 = vmul.f32 %v2356, %v2356
        %v2361 = vmul.f32 %v2357, %v2357
        %v2362 = vadd.f32 %v2358, %v2360
        %v2363 = vrot.slane %v2362, 4
        %v2364 = vadd.f32 %v2362, %v2363
        %v2365 = vrot.slane %v2364, 2
        %v2366 = vadd.f32 %v2364, %v2365
        %v2367 = vrot.slane %v2366, 1
        %v2368 = vadd.f32 %v2366, %v2367
        %v2369 = vadd.f32 %v2359, %v2361
        %v2370 = vrot.slane %v2369, 4
        %v2371 = vadd.f32 %v2369, %v2370
        %v2372 = vrot.slane %v2371, 2
        %v2373 = vadd.f32 %v2371, %v2372
        %v2374 = vrot.slane %v2373, 1
        %v2375 = vadd.f32 %v2373, %v2374
        %v2376 = vmul.f32 %v2368, 0.0625
        %v2377 = vmul.f32 %v2375, 0.0625
        %v2378 = vadd.f32 %v2376, 1e-05
        %v2379 = vadd.f32 %v2377, 1e-05
        %v2380 = vrsqrt.pop %v2378
        %v2381 = vmul.f32 %v2380, %v2378
        %v2382 = vmul.f32 %v2381, %v2380
        %v2383 = vmul.f32 0.5, %v2382
        %v2384 = vsub.f32 1.5, %v2383
        %v2385 = vmul.f32 %v2380, %v2384
        %vm2386 = vweird.f32 %v2378
        %vm2387 = vweird.f32 %v2380
        %vm2388 = vmor %vm2386, %vm2387
        %v2389 = vsel %vm2388, %v2380, %v2385
        %v2390 = vrsqrt.pop %v2379
        %v2391 = vmul.f32 %v2390, %v2379
        %v2392 = vmul.f32 %v2391, %v2390
        %v2393 = vmul.f32 0.5, %v2392
        %v2394 = vsub.f32 1.5, %v2393
        %v2395 = vmul.f32 %v2390, %v2394
        %vm2396 = vweird.f32 %v2379
        %vm2397 = vweird.f32 %v2390
        %vm2398 = vmor %vm2396, %vm2397
        %v2399 = vsel %vm2398, %v2390, %v2395
        %v2400 = vmul.f32 %v2354, %v2389
        %v2401 = vmul.f32 %v2355, %v2399
        %v2402 = vmul.f32 %v2356, %v2389
        %v2403 = vmul.f32 %v2357, %v2399
        %v2404 = vmul.f32 %v2400, 0.2
        %v2405 = vmul.f32 %v2401, 0.2
        %v2406 = vmul.f32 %v2402, 0.2
        %v2407 = vmul.f32 %v2403, 0.2
        %v2408 = vmax.f32 %v2400, %v2404
        %v2409 = vmax.f32 %v2401, %v2405
        %v2410 = vmax.f32 %v2402, %v2406
        %v2411 = vmax.f32 %v2403, %v2407
        %v2412 = vpack.c.bf16 %v2409, %v2408
        %v2413 = vpack.c.bf16 %v2411, %v2410
        %2414 = vst [vmem:[%s229] sm:$0xff] %v2412
        %2415 = vst [vmem:[%s229 + $0x8] sm:$0xff] %v2413
      $region36: #{fwd.7} parent=27 // pred_fallthru
        _
      %s2416 = smul.u32 2, %s19
      %p2417 = scmp.lt.s32.totalorder %s18, 1
      %s2418 = scalar_select %p2417, %s18, 1
      %p2419 = scmp.lt.s32.totalorder %s2416, 1
      %s2420 = scalar_select %p2419, %s2416, 1
      %s2421 = smul.addr %s2418, 4
      %s2422 = sadd.s32 %s2420, %s2421
      %s2423 = smul.addr %s2422, 4
      %s2424 = scalar_lea.vmem %s2, %s2423
      // Predicated region
      $region37: #{fwd.7} parent=27 // pred_check
        %p2425 = pneg %p108
      $region38: #{fwd.7} parent=27 // pred_check_branch
        %2427 = sbr.rel (%p2425) target = $region40
      $region39: #{fwd.7} parent=27 // pred_region
        %s2428 = smul.u32 2, %s19
      $region40: #{fwd.7} parent=27 // pred_fallthru
        _
    $region28: #{fwd.7} parent=5 // pred_fallthru
      _
    %p2429 = scmp.le.s32.totalorder 2, %s8
    // Predicated region
    $region41: #{fwd.7} parent=5 // pred_check
      %p2430 = pneg %p2429
    $region42: #{fwd.7} parent=5 // pred_check_branch
      %2432 = sbr.rel (%p2430) target = $region44
    $region43: #{fwd.7} parent=5 // pred_region
      %s2433 = ssub.s32 %s8, 2
      // Predicated region
      $region45: #{fwd.7} parent=43 // pred_check
        %p2434 = pneg %p114
      $region46: #{fwd.7} parent=43 // pred_check_branch
        %2436 = sbr.rel (%p2434) target = $region48
      $region47: #{fwd.7} parent=43 // pred_region
        %s2437 = smul.u32 2, %s22
        %p2438 = scmp.lt.s32.totalorder %s21, 1
        %s2439 = scalar_select %p2438, %s21, 1
        %p2440 = scmp.lt.s32.totalorder %s2437, 1
        %s2441 = scalar_select %p2440, %s2437, 1
        %s2442 = smul.addr %s2439, 4
        %s2443 = sadd.s32 %s2441, %s2442
        %s2444 = smul.addr %s2443, 4
        %s2445 = scalar_lea.vmem %s2, %s2444
      $region48: #{fwd.7} parent=43 // pred_fallthru
        _
    $region44: #{fwd.7} parent=5 // pred_fallthru
      _
  $region6: #{fwd.7} parent=0 // loop_footer
    %s12 = sadd.s32 1, %s8
  $region7: #{fwd.7} parent=0 // loop_footer_branch
    %7 = sbr.rel target = $region3
  $region8: #{fwd.7} parent=0 // loop_exit
    _

// kernel: fwd.9
$region0: #{fwd.9}
  #allocation0 [shape = 'u32[]', space=smem, size = 0x4, offset = 0x4, fixed_abs, tag = 'smem constant byte address 0x4 - core index']
  #allocation1 [shape = 'u32[72,128]{1,0:T(1,128)}', space=vmem, size = 0x9000, scoped, tag = 'internal scratch']
  #allocation2 [shape = 'f32[8,128]{1,0:T(8,128)}', space=vmem, size = 0x1000, scoped, tag = 'scratch operand']
  %s0 = inlined_call_operand.vmem [shape: bf16[8,8192], index: 0, kind: input, shape index: {}]
  %s1 = inlined_call_operand.vmem [shape: bf16[8192,128], index: 1, kind: input, shape index: {}]
  %s2 = inlined_call_operand.vmem [shape: f32[1,128], index: 2, kind: input, shape index: {}]
  %s3 = inlined_call_operand.vmem [shape: f32[8,128], index: 3, kind: output, shape index: {}]
  %s4 = sld [smem:[#allocation0]]
  $region53: #{fwd.9} parent=0
    _
  %s6 = ssub.s32 1, %s4
  %s7 = scalar_select 0, %s6, %s4
  loop: start=0, step=1, limit=6
  $region2: #{fwd.9} parent=0 // loop_pre_header
    _
  $region3: #{fwd.9} parent=0 // loop_header
    %s9 = sphi 0, %s13
    %p10 = scmp.ge.s32.totalorder %s9, 6
    %s16 = sphi 0, %s35
    %s17 = sphi 0, %s31
    %s18 = sphi 0, %s27
    %s19 = sphi 0, %s16
    %s20 = sphi 0, %s17
    %s21 = sphi 0, %s18
    %s22 = sphi 0, %s19
    %s23 = sphi 0, %s20
    %s24 = sphi 0, %s21
    %s40 = sphi 0, %s42
    %s43 = sphi 0, %s40
    %s44 = sphi 0, %s43
    %s60 = sphi 0, %s44
    %s68 = sphi 0, %s70
    %s71 = sphi 0, %s68
    %s72 = sphi 0, %s71
    %s88 = sphi 0, %s72
    %s94 = sphi 0, %s96
    %s97 = sphi 0, %s94
    %s98 = sphi 0, %s97
    %s114 = sphi 0, %s98
    %s122 = sphi 0, %s124
    %s125 = sphi 0, %s122
    %s126 = sphi 0, %s125
    %s142 = sphi 0, %s126
  $region4: #{fwd.9} parent=0 // loop_header_branch
    %12 = sbr.rel (%p10) target = $region8
  $region5: #{fwd.9} parent=0 // loop_body
    %s14 = ssub.s32 %s9, 1
    %s15 = ssub.s32 %s9, 2
    %s25 = sadd.s32 1, %s18
    %p26 = scmp.ge.s32.totalorder %s25, 4
    %s27 = scalar_select %p26, 0, %s25
    %s28 = sadd.s32 1, %s17
    %s29 = scalar_select %p26, %s28, %s17
    %p30 = scmp.ge.s32.totalorder %s29, 1
    %s31 = scalar_select %p30, 0, %s29
    %s32 = sadd.s32 1, %s16
    %s33 = scalar_select %p30, %s32, %s16
    %p34 = scmp.ge.s32.totalorder %s33, 1
    %s35 = scalar_select %p34, 0, %s33
    %s36 = ssub.s32 %s16, %s35
    %s37 = ssub.s32 %s18, %s27
    %s38 = sor.u32 %s36, %s37
    %p39 = scmp.eq.s32.totalorder %s38, 0
    %s41 = sadd.s32 %s40, 1
    %s42 = scalar_select %p39, %s40, %s41
    %p45 = pneg %p39
    %p46 = scmp.eq.s32.totalorder %s9, 3
    %p47 = por %p45, %p46
    %p48 = scmp.ne.s32.totalorder %s40, %s43
    %p49 = scmp.eq.s32.totalorder %s9, 0
    %p50 = por %p48, %p49
    %p51 = scmp.ne.s32.totalorder %s40, %s43
    %p52 = scmp.eq.s32.totalorder %s14, 3
    %p53 = por %p51, %p52
    %p54 = scmp.ne.s32.totalorder %s43, %s44
    %p55 = scmp.eq.s32.totalorder %s14, 0
    %p56 = por %p54, %p55
    %p57 = scmp.ne.s32.totalorder %s43, %s44
    %p58 = scmp.eq.s32.totalorder %s15, 3
    %p59 = por %p57, %p58
    %p61 = scmp.ne.s32.totalorder %s44, %s60
    %p62 = scmp.eq.s32.totalorder %s15, 0
    %p63 = por %p61, %p62
    %s64 = ssub.s32 %s18, %s27
    %s65 = ssub.s32 %s17, %s31
    %s66 = sor.u32 %s64, %s65
    %p67 = scmp.eq.s32.totalorder %s66, 0
    %s69 = sadd.s32 %s68, 1
    %s70 = scalar_select %p67, %s68, %s69
    %p73 = pneg %p67
    %p74 = scmp.eq.s32.totalorder %s9, 3
    %p75 = por %p73, %p74
    %p76 = scmp.ne.s32.totalorder %s68, %s71
    %p77 = scmp.eq.s32.totalorder %s9, 0
    %p78 = por %p76, %p77
    %p79 = scmp.ne.s32.totalorder %s68, %s71
    %p80 = scmp.eq.s32.totalorder %s14, 3
    %p81 = por %p79, %p80
    %p82 = scmp.ne.s32.totalorder %s71, %s72
    %p83 = scmp.eq.s32.totalorder %s14, 0
    %p84 = por %p82, %p83
    %p85 = scmp.ne.s32.totalorder %s71, %s72
    %p86 = scmp.eq.s32.totalorder %s15, 3
    %p87 = por %p85, %p86
    %p89 = scmp.ne.s32.totalorder %s72, %s88
    %p90 = scmp.eq.s32.totalorder %s15, 0
    %p91 = por %p89, %p90
    %s92 = ssub.s32 %s17, %s31
    %p93 = scmp.eq.s32.totalorder %s92, 0
    %s95 = sadd.s32 %s94, 1
    %s96 = scalar_select %p93, %s94, %s95
    %p99 = pneg %p93
    %p100 = scmp.eq.s32.totalorder %s9, 3
    %p101 = por %p99, %p100
    %p102 = scmp.ne.s32.totalorder %s94, %s97
    %p103 = scmp.eq.s32.totalorder %s9, 0
    %p104 = por %p102, %p103
    %p105 = scmp.ne.s32.totalorder %s94, %s97
    %p106 = scmp.eq.s32.totalorder %s14, 3
    %p107 = por %p105, %p106
    %p108 = scmp.ne.s32.totalorder %s97, %s98
    %p109 = scmp.eq.s32.totalorder %s14, 0
    %p110 = por %p108, %p109
    %p111 = scmp.ne.s32.totalorder %s97, %s98
    %p112 = scmp.eq.s32.totalorder %s15, 3
    %p113 = por %p111, %p112
    %p115 = scmp.ne.s32.totalorder %s98, %s114
    %p116 = scmp.eq.s32.totalorder %s15, 0
    %p117 = por %p115, %p116
    %s118 = ssub.s32 %s16, %s35
    %s119 = ssub.s32 %s17, %s31
    %s120 = sor.u32 %s118, %s119
    %p121 = scmp.eq.s32.totalorder %s120, 0
    %s123 = sadd.s32 %s122, 1
    %s124 = scalar_select %p121, %s122, %s123
    %p127 = pneg %p121
    %p128 = scmp.eq.s32.totalorder %s9, 3
    %p129 = por %p127, %p128
    %p130 = scmp.ne.s32.totalorder %s122, %s125
    %p131 = scmp.eq.s32.totalorder %s9, 0
    %p132 = por %p130, %p131
    %p133 = scmp.ne.s32.totalorder %s122, %s125
    %p134 = scmp.eq.s32.totalorder %s14, 3
    %p135 = por %p133, %p134
    %p136 = scmp.ne.s32.totalorder %s125, %s126
    %p137 = scmp.eq.s32.totalorder %s14, 0
    %p138 = por %p136, %p137
    %p139 = scmp.ne.s32.totalorder %s125, %s126
    %p140 = scmp.eq.s32.totalorder %s15, 3
    %p141 = por %p139, %p140
    %p143 = scmp.ne.s32.totalorder %s126, %s142
    %p144 = scmp.eq.s32.totalorder %s15, 0
    %p145 = por %p143, %p144
    %p146 = scmp.le.s32.totalorder 1, %s9
    %p147 = scmp.lt.s32.totalorder %s9, 5
    %p148 = pnand %p146, %p147
    %p149 = pneg %p148
    // Predicated region
    $region9: #{fwd.9} parent=5 // pred_check
      _
    $region10: #{fwd.9} parent=5 // pred_check_branch
      %151 = sbr.rel (%p148) target = $region12
    $region11: #{fwd.9} parent=5 // pred_region
      %s152 = ssub.s32 %s9, 1
      // Predicated region
      $region13: #{fwd.9} parent=11 // pred_check
        %p153 = pneg %p110
      $region14: #{fwd.9} parent=11 // pred_check_branch
        %155 = sbr.rel (%p153) target = $region16
      $region15: #{fwd.9} parent=11 // pred_region
        %p156 = scmp.lt.s32.totalorder %s20, 0
        %s157 = scalar_select %p156, %s20, 0
        %s158 = scalar_lea.vmem %s2, %s157
      $region16: #{fwd.9} parent=11 // pred_fallthru
        _
    $region12: #{fwd.9} parent=5 // pred_fallthru
      _
    %p159 = scmp.lt.s32.totalorder %s9, 4
    // Predicated region
    $region17: #{fwd.9} parent=5 // pred_check
      %p160 = pneg %p159
    $region18: #{fwd.9} parent=5 // pred_check_branch
      %162 = sbr.rel (%p160) target = $region20
    $region19: #{fwd.9} parent=5 // pred_region
      // Predicated region
      $region21: #{fwd.9} parent=19 // pred_check
        %p163 = pneg %p50
      $region22: #{fwd.9} parent=19 // pred_check_branch
        %165 = sbr.rel (%p163) target = $region24
      $region23: #{fwd.9} parent=19 // pred_region
        %s166 = smul.u32 16, %s18
        %p167 = scmp.lt.s32.totalorder %s16, 0
        %s168 = scalar_select %p167, %s16, 0
        %p169 = scmp.lt.s32.totalorder %s166, 63
        %s170 = scalar_select %p169, %s166, 63
        %s171 = smul.addr %s168, 64
        %s172 = sadd.s32 %s170, %s171
        %s173 = smul.addr %s172, 4
        %s174 = scalar_lea.vmem %s0, %s173
        %s175 = smul.u32 16, %s18
      $region24: #{fwd.9} parent=19 // pred_fallthru
        _
      // Predicated region
      $region25: #{fwd.9} parent=19 // pred_check
        %p176 = pneg %p78
      $region26: #{fwd.9} parent=19 // pred_check_branch
        %178 = sbr.rel (%p176) target = $region28
      $region27: #{fwd.9} parent=19 // pred_region
        %s179 = smul.u32 256, %s18
        %p180 = scmp.lt.s32.totalorder %s179, 1023
        %s181 = scalar_select %p180, %s179, 1023
        %p182 = scmp.lt.s32.totalorder %s17, 0
        %s183 = scalar_select %p182, %s17, 0
        %s184 = sadd.s32 %s183, %s181
        %s185 = smul.addr %s184, 4
        %s186 = scalar_lea.vmem %s1, %s185
        %s187 = smul.u32 256, %s18
      $region28: #{fwd.9} parent=19 // pred_fallthru
        _
    $region20: #{fwd.9} parent=5 // pred_fallthru
      _
    %p188 = scmp.le.s32.totalorder 1, %s9
    %p189 = scmp.lt.s32.totalorder %s9, 5
    %p190 = pnand %p188, %p189
    %p191 = pneg %p190
    // Predicated region
    $region29: #{fwd.9} parent=5 // pred_check
      _
    $region30: #{fwd.9} parent=5 // pred_check_branch
      %193 = sbr.rel (%p190) target = $region32
    $region31: #{fwd.9} parent=5 // pred_region
      %s194 = ssub.s32 %s9, 1
      %s195 = smul.u32 16, %s21
      %p196 = scmp.lt.s32.totalorder %s19, 0
      %s197 = scalar_select %p196, %s19, 0
      %p198 = scmp.lt.s32.totalorder %s195, 63
      %s199 = scalar_select %p198, %s195, 63
      %s200 = smul.addr %s197, 64
      %s201 = sadd.s32 %s199, %s200
      %s202 = smul.addr %s201, 4
      %s203 = scalar_lea.vmem %s0, %s202
      %p204 = pneg %p56
      %p205 = pneg %p53
      %s206 = smul.u32 256, %s21
      %p207 = scmp.lt.s32.totalorder %s206, 1023
      %s208 = scalar_select %p207, %s206, 1023
      %p209 = scmp.lt.s32.totalorder %s20, 0
      %s210 = scalar_select %p209, %s20, 0
      %s211 = sadd.s32 %s210, %s208
      %s212 = smul.addr %s211, 4
      %s213 = scalar_lea.vmem %s1, %s212
      %p214 = pneg %p84
      %p215 = pneg %p81
      %p216 = scmp.lt.s32.totalorder %s20, 0
      %s217 = scalar_select %p216, %s20, 0
      %s218 = scalar_lea.vmem %s2, %s217
      %p219 = pneg %p110
      %p220 = pneg %p107
      %p221 = pneg %p138
      %p222 = pneg %p135
      %p223 = scmp.lt.s32.totalorder %s19, 0
      %s224 = scalar_select %p223, %s19, 0
      %p225 = scmp.lt.s32.totalorder %s20, 0
      %s226 = scalar_select %p225, %s20, 0
      %s227 = sadd.s32 %s226, %s224
      %s228 = smul.addr %s227, 8
      %s229 = scalar_lea.vmem %s3, %s228
      %s230 = smul.u32 16, %s21
      %p231 = scmp.lt.s32.totalorder %s19, 0
      %s232 = scalar_select %p231, %s19, 0
      %p233 = scmp.lt.s32.totalorder %s230, 63
      %s234 = scalar_select %p233, %s230, 63
      %s235 = smul.addr %s232, 64
      %s236 = sadd.s32 %s234, %s235
      %s237 = smul.addr %s236, 4
      %s238 = scalar_lea.vmem %s0, %s237
      %s239 = smul.u32 16, %s21
      %s240 = smul.u32 256, %s21
      %p241 = scmp.lt.s32.totalorder %s240, 1023
      %s242 = scalar_select %p241, %s240, 1023
      %p243 = scmp.lt.s32.totalorder %s20, 0
      %s244 = scalar_select %p243, %s20, 0
      %s245 = sadd.s32 %s244, %s242
      %s246 = smul.addr %s245, 4
      %s247 = scalar_lea.vmem %s1, %s246
      %s248 = smul.u32 256, %s21
      %p249 = scmp.lt.s32.totalorder %s20, 0
      %s250 = scalar_select %p249, %s20, 0
      %s251 = scalar_lea.vmem %s2, %s250
      %p252 = scmp.lt.s32.totalorder %s19, 0
      %s253 = scalar_select %p252, %s19, 0
      %p254 = scmp.lt.s32.totalorder %s20, 0
      %s255 = scalar_select %p254, %s20, 0
      %s256 = sadd.s32 %s255, %s253
      %s257 = smul.addr %s256, 8
      %s258 = scalar_lea.vmem %s3, %s257
      %p259 = scmp.eq.s32.totalorder %s21, 0
      // Predicated region
      $region33: #{fwd.9} parent=31 // pred_check
        %p260 = pneg %p259
      $region34: #{fwd.9} parent=31 // pred_check_branch
        %262 = sbr.rel (%p260) target = $region36
      $region35: #{fwd.9} parent=31 // pred_region
        %263 = vst [vmem:[#allocation2] sm:$0xff] 0.0
      $region36: #{fwd.9} parent=31 // pred_fallthru
        _
      %v264 = vld [vmem:[#allocation2] sm:$0xff]
      %v265 = vld [vmem:[%s238] sm:$0xff]
      %v266 = vld [vmem:[%s238 + $0x8] sm:$0xff]
      %v267 = vld [vmem:[%s238 + $0x10] sm:$0xff]
      %v268 = vld [vmem:[%s238 + $0x18] sm:$0xff]
      %v269 = vld [vmem:[%s238 + $0x20] sm:$0xff]
      %v270 = vld [vmem:[%s238 + $0x28] sm:$0xff]
      %v271 = vld [vmem:[%s238 + $0x30] sm:$0xff]
      %v272 = vld [vmem:[%s238 + $0x38] sm:$0xff]
      %v273 = vld [vmem:[%s247] sm:$0xf]
      %v274 = vld [vmem:[%s247 + $0x4] sm:$0xf]
      %v275 = vld [vmem:[%s247 + $0x8] sm:$0xf]
      %v276 = vld [vmem:[%s247 + $0xc] sm:$0xf]
      %v277 = vld [vmem:[%s247 + $0x10] sm:$0xf]
      %v278 = vld [vmem:[%s247 + $0x14] sm:$0xf]
      %v279 = vld [vmem:[%s247 + $0x18] sm:$0xf]
      %v280 = vld [vmem:[%s247 + $0x1c] sm:$0xf]
      %v281 = vld [vmem:[%s247 + $0x20] sm:$0xf]
      %v282 = vld [vmem:[%s247 + $0x24] sm:$0xf]
      %v283 = vld [vmem:[%s247 + $0x28] sm:$0xf]
      %v284 = vld [vmem:[%s247 + $0x2c] sm:$0xf]
      %v285 = vld [vmem:[%s247 + $0x30] sm:$0xf]
      %v286 = vld [vmem:[%s247 + $0x34] sm:$0xf]
      %v287 = vld [vmem:[%s247 + $0x38] sm:$0xf]
      %v288 = vld [vmem:[%s247 + $0x3c] sm:$0xf]
      %v289 = vld [vmem:[%s247 + $0x40] sm:$0xf]
      %v290 = vld [vmem:[%s247 + $0x44] sm:$0xf]
      %v291 = vld [vmem:[%s247 + $0x48] sm:$0xf]
      %v292 = vld [vmem:[%s247 + $0x4c] sm:$0xf]
      %v293 = vld [vmem:[%s247 + $0x50] sm:$0xf]
      %v294 = vld [vmem:[%s247 + $0x54] sm:$0xf]
      %v295 = vld [vmem:[%s247 + $0x58] sm:$0xf]
      %v296 = vld [vmem:[%s247 + $0x5c] sm:$0xf]
      %v297 = vld [vmem:[%s247 + $0x60] sm:$0xf]
      %v298 = vld [vmem:[%s247 + $0x64] sm:$0xf]
      %v299 = vld [vmem:[%s247 + $0x68] sm:$0xf]
      %v300 = vld [vmem:[%s247 + $0x6c] sm:$0xf]
      %v301 = vld [vmem:[%s247 + $0x70] sm:$0xf]
      %v302 = vld [vmem:[%s247 + $0x74] sm:$0xf]
      %v303 = vld [vmem:[%s247 + $0x78] sm:$0xf]
      %v304 = vld [vmem:[%s247 + $0x7c] sm:$0xf]
      %v305 = vld [vmem:[%s247 + $0x80] sm:$0xf]
      %v306 = vld [vmem:[%s247 + $0x84] sm:$0xf]
      %v307 = vld [vmem:[%s247 + $0x88] sm:$0xf]
      %v308 = vld [vmem:[%s247 + $0x8c] sm:$0xf]
      %v309 = vld [vmem:[%s247 + $0x90] sm:$0xf]
      %v310 = vld [vmem:[%s247 + $0x94] sm:$0xf]
      %v311 = vld [vmem:[%s247 + $0x98] sm:$0xf]
      %v312 = vld [vmem:[%s247 + $0x9c] sm:$0xf]
      %v313 = vld [vmem:[%s247 + $0xa0] sm:$0xf]
      %v314 = vld [vmem:[%s247 + $0xa4] sm:$0xf]
      %v315 = vld [vmem:[%s247 + $0xa8] sm:$0xf]
      %v316 = vld [vmem:[%s247 + $0xac] sm:$0xf]
      %v317 = vld [vmem:[%s247 + $0xb0] sm:$0xf]
      %v318 = vld [vmem:[%s247 + $0xb4] sm:$0xf]
      %v319 = vld [vmem:[%s247 + $0xb8] sm:$0xf]
      %v320 = vld [vmem:[%s247 + $0xbc] sm:$0xf]
      %v321 = vld [vmem:[%s247 + $0xc0] sm:$0xf]
      %v322 = vld [vmem:[%s247 + $0xc4] sm:$0xf]
      %v323 = vld [vmem:[%s247 + $0xc8] sm:$0xf]
      %v324 = vld [vmem:[%s247 + $0xcc] sm:$0xf]
      %v325 = vld [vmem:[%s247 + $0xd0] sm:$0xf]
      %v326 = vld [vmem:[%s247 + $0xd4] sm:$0xf]
      %v327 = vld [vmem:[%s247 + $0xd8] sm:$0xf]
      %v328 = vld [vmem:[%s247 + $0xdc] sm:$0xf]
      %v329 = vld [vmem:[%s247 + $0xe0] sm:$0xf]
      %v330 = vld [vmem:[%s247 + $0xe4] sm:$0xf]
      %v331 = vld [vmem:[%s247 + $0xe8] sm:$0xf]
      %v332 = vld [vmem:[%s247 + $0xec] sm:$0xf]
      %v333 = vld [vmem:[%s247 + $0xf0] sm:$0xf]
      %v334 = vld [vmem:[%s247 + $0xf4] sm:$0xf]
      %v335 = vld [vmem:[%s247 + $0xf8] sm:$0xf]
      %v336 = vld [vmem:[%s247 + $0xfc] sm:$0xf]
      %v337 = vld [vmem:[%s247 + $0x100] sm:$0xf]
      %v338 = vld [vmem:[%s247 + $0x104] sm:$0xf]
      %v339 = vld [vmem:[%s247 + $0x108] sm:$0xf]
      %v340 = vld [vmem:[%s247 + $0x10c] sm:$0xf]
      %v341 = vld [vmem:[%s247 + $0x110] sm:$0xf]
      %v342 = vld [vmem:[%s247 + $0x114] sm:$0xf]
      %v343 = vld [vmem:[%s247 + $0x118] sm:$0xf]
      %v344 = vld [vmem:[%s247 + $0x11c] sm:$0xf]
      %v345 = vld [vmem:[%s247 + $0x120] sm:$0xf]
      %v346 = vld [vmem:[%s247 + $0x124] sm:$0xf]
      %v347 = vld [vmem:[%s247 + $0x128] sm:$0xf]
      %v348 = vld [vmem:[%s247 + $0x12c] sm:$0xf]
      %v349 = vld [vmem:[%s247 + $0x130] sm:$0xf]
      %v350 = vld [vmem:[%s247 + $0x134] sm:$0xf]
      %v351 = vld [vmem:[%s247 + $0x138] sm:$0xf]
      %v352 = vld [vmem:[%s247 + $0x13c] sm:$0xf]
      %v353 = vld [vmem:[%s247 + $0x140] sm:$0xf]
      %v354 = vld [vmem:[%s247 + $0x144] sm:$0xf]
      %v355 = vld [vmem:[%s247 + $0x148] sm:$0xf]
      %v356 = vld [vmem:[%s247 + $0x14c] sm:$0xf]
      %v357 = vld [vmem:[%s247 + $0x150] sm:$0xf]
      %v358 = vld [vmem:[%s247 + $0x154] sm:$0xf]
      %v359 = vld [vmem:[%s247 + $0x158] sm:$0xf]
      %v360 = vld [vmem:[%s247 + $0x15c] sm:$0xf]
      %v361 = vld [vmem:[%s247 + $0x160] sm:$0xf]
      %v362 = vld [vmem:[%s247 + $0x164] sm:$0xf]
      %v363 = vld [vmem:[%s247 + $0x168] sm:$0xf]
      %v364 = vld [vmem:[%s247 + $0x16c] sm:$0xf]
      %v365 = vld [vmem:[%s247 + $0x170] sm:$0xf]
      %v366 = vld [vmem:[%s247 + $0x174] sm:$0xf]
      %v367 = vld [vmem:[%s247 + $0x178] sm:$0xf]
      %v368 = vld [vmem:[%s247 + $0x17c] sm:$0xf]
      %v369 = vld [vmem:[%s247 + $0x180] sm:$0xf]
      %v370 = vld [vmem:[%s247 + $0x184] sm:$0xf]
      %v371 = vld [vmem:[%s247 + $0x188] sm:$0xf]
      %v372 = vld [vmem:[%s247 + $0x18c] sm:$0xf]
      %v373 = vld [vmem:[%s247 + $0x190] sm:$0xf]
      %v374 = vld [vmem:[%s247 + $0x194] sm:$0xf]
      %v375 = vld [vmem:[%s247 + $0x198] sm:$0xf]
      %v376 = vld [vmem:[%s247 + $0x19c] sm:$0xf]
      %v377 = vld [vmem:[%s247 + $0x1a0] sm:$0xf]
      %v378 = vld [vmem:[%s247 + $0x1a4] sm:$0xf]
      %v379 = vld [vmem:[%s247 + $0x1a8] sm:$0xf]
      %v380 = vld [vmem:[%s247 + $0x1ac] sm:$0xf]
      %v381 = vld [vmem:[%s247 + $0x1b0] sm:$0xf]
      %v382 = vld [vmem:[%s247 + $0x1b4] sm:$0xf]
      %v383 = vld [vmem:[%s247 + $0x1b8] sm:$0xf]
      %v384 = vld [vmem:[%s247 + $0x1bc] sm:$0xf]
      %v385 = vld [vmem:[%s247 + $0x1c0] sm:$0xf]
      %v386 = vld [vmem:[%s247 + $0x1c4] sm:$0xf]
      %v387 = vld [vmem:[%s247 + $0x1c8] sm:$0xf]
      %v388 = vld [vmem:[%s247 + $0x1cc] sm:$0xf]
      %v389 = vld [vmem:[%s247 + $0x1d0] sm:$0xf]
      %v390 = vld [vmem:[%s247 + $0x1d4] sm:$0xf]
      %v391 = vld [vmem:[%s247 + $0x1d8] sm:$0xf]
      %v392 = vld [vmem:[%s247 + $0x1dc] sm:$0xf]
      %v393 = vld [vmem:[%s247 + $0x1e0] sm:$0xf]
      %v394 = vld [vmem:[%s247 + $0x1e4] sm:$0xf]
      %v395 = vld [vmem:[%s247 + $0x1e8] sm:$0xf]
      %v396 = vld [vmem:[%s247 + $0x1ec] sm:$0xf]
      %v397 = vld [vmem:[%s247 + $0x1f0] sm:$0xf]
      %v398 = vld [vmem:[%s247 + $0x1f4] sm:$0xf]
      %v399 = vld [vmem:[%s247 + $0x1f8] sm:$0xf]
      %v400 = vld [vmem:[%s247 + $0x1fc] sm:$0xf]
      %v401 = vld [vmem:[%s247 + $0x200] sm:$0xf]
      %v402 = vld [vmem:[%s247 + $0x204] sm:$0xf]
      %v403 = vld [vmem:[%s247 + $0x208] sm:$0xf]
      %v404 = vld [vmem:[%s247 + $0x20c] sm:$0xf]
      %v405 = vld [vmem:[%s247 + $0x210] sm:$0xf]
      %v406 = vld [vmem:[%s247 + $0x214] sm:$0xf]
      %v407 = vld [vmem:[%s247 + $0x218] sm:$0xf]
      %v408 = vld [vmem:[%s247 + $0x21c] sm:$0xf]
      %v409 = vld [vmem:[%s247 + $0x220] sm:$0xf]
      %v410 = vld [vmem:[%s247 + $0x224] sm:$0xf]
      %v411 = vld [vmem:[%s247 + $0x228] sm:$0xf]
      %v412 = vld [vmem:[%s247 + $0x22c] sm:$0xf]
      %v413 = vld [vmem:[%s247 + $0x230] sm:$0xf]
      %v414 = vld [vmem:[%s247 + $0x234] sm:$0xf]
      %v415 = vld [vmem:[%s247 + $0x238] sm:$0xf]
      %v416 = vld [vmem:[%s247 + $0x23c] sm:$0xf]
      %v417 = vld [vmem:[%s247 + $0x240] sm:$0xf]
      %v418 = vld [vmem:[%s247 + $0x244] sm:$0xf]
      %v419 = vld [vmem:[%s247 + $0x248] sm:$0xf]
      %v420 = vld [vmem:[%s247 + $0x24c] sm:$0xf]
      %v421 = vld [vmem:[%s247 + $0x250] sm:$0xf]
      %v422 = vld [vmem:[%s247 + $0x254] sm:$0xf]
      %v423 = vld [vmem:[%s247 + $0x258] sm:$0xf]
      %v424 = vld [vmem:[%s247 + $0x25c] sm:$0xf]
      %v425 = vld [vmem:[%s247 + $0x260] sm:$0xf]
      %v426 = vld [vmem:[%s247 + $0x264] sm:$0xf]
      %v427 = vld [vmem:[%s247 + $0x268] sm:$0xf]
      %v428 = vld [vmem:[%s247 + $0x26c] sm:$0xf]
      %v429 = vld [vmem:[%s247 + $0x270] sm:$0xf]
      %v430 = vld [vmem:[%s247 + $0x274] sm:$0xf]
      %v431 = vld [vmem:[%s247 + $0x278] sm:$0xf]
      %v432 = vld [vmem:[%s247 + $0x27c] sm:$0xf]
      %v433 = vld [vmem:[%s247 + $0x280] sm:$0xf]
      %v434 = vld [vmem:[%s247 + $0x284] sm:$0xf]
      %v435 = vld [vmem:[%s247 + $0x288] sm:$0xf]
      %v436 = vld [vmem:[%s247 + $0x28c] sm:$0xf]
      %v437 = vld [vmem:[%s247 + $0x290] sm:$0xf]
      %v438 = vld [vmem:[%s247 + $0x294] sm:$0xf]
      %v439 = vld [vmem:[%s247 + $0x298] sm:$0xf]
      %v440 = vld [vmem:[%s247 + $0x29c] sm:$0xf]
      %v441 = vld [vmem:[%s247 + $0x2a0] sm:$0xf]
      %v442 = vld [vmem:[%s247 + $0x2a4] sm:$0xf]
      %v443 = vld [vmem:[%s247 + $0x2a8] sm:$0xf]
      %v444 = vld [vmem:[%s247 + $0x2ac] sm:$0xf]
      %v445 = vld [vmem:[%s247 + $0x2b0] sm:$0xf]
      %v446 = vld [vmem:[%s247 + $0x2b4] sm:$0xf]
      %v447 = vld [vmem:[%s247 + $0x2b8] sm:$0xf]
      %v448 = vld [vmem:[%s247 + $0x2bc] sm:$0xf]
      %v449 = vld [vmem:[%s247 + $0x2c0] sm:$0xf]
      %v450 = vld [vmem:[%s247 + $0x2c4] sm:$0xf]
      %v451 = vld [vmem:[%s247 + $0x2c8] sm:$0xf]
      %v452 = vld [vmem:[%s247 + $0x2cc] sm:$0xf]
      %v453 = vld [vmem:[%s247 + $0x2d0] sm:$0xf]
      %v454 = vld [vmem:[%s247 + $0x2d4] sm:$0xf]
      %v455 = vld [vmem:[%s247 + $0x2d8] sm:$0xf]
      %v456 = vld [vmem:[%s247 + $0x2dc] sm:$0xf]
      %v457 = vld [vmem:[%s247 + $0x2e0] sm:$0xf]
      %v458 = vld [vmem:[%s247 + $0x2e4] sm:$0xf]
      %v459 = vld [vmem:[%s247 + $0x2e8] sm:$0xf]
      %v460 = vld [vmem:[%s247 + $0x2ec] sm:$0xf]
      %v461 = vld [vmem:[%s247 + $0x2f0] sm:$0xf]
      %v462 = vld [vmem:[%s247 + $0x2f4] sm:$0xf]
      %v463 = vld [vmem:[%s247 + $0x2f8] sm:$0xf]
      %v464 = vld [vmem:[%s247 + $0x2fc] sm:$0xf]
      %v465 = vld [vmem:[%s247 + $0x300] sm:$0xf]
      %v466 = vld [vmem:[%s247 + $0x304] sm:$0xf]
      %v467 = vld [vmem:[%s247 + $0x308] sm:$0xf]
      %v468 = vld [vmem:[%s247 + $0x30c] sm:$0xf]
      %v469 = vld [vmem:[%s247 + $0x310] sm:$0xf]
      %v470 = vld [vmem:[%s247 + $0x314] sm:$0xf]
      %v471 = vld [vmem:[%s247 + $0x318] sm:$0xf]
      %v472 = vld [vmem:[%s247 + $0x31c] sm:$0xf]
      %v473 = vld [vmem:[%s247 + $0x320] sm:$0xf]
      %v474 = vld [vmem:[%s247 + $0x324] sm:$0xf]
      %v475 = vld [vmem:[%s247 + $0x328] sm:$0xf]
      %v476 = vld [vmem:[%s247 + $0x32c] sm:$0xf]
      %v477 = vld [vmem:[%s247 + $0x330] sm:$0xf]
      %v478 = vld [vmem:[%s247 + $0x334] sm:$0xf]
      %v479 = vld [vmem:[%s247 + $0x338] sm:$0xf]
      %v480 = vld [vmem:[%s247 + $0x33c] sm:$0xf]
      %v481 = vld [vmem:[%s247 + $0x340] sm:$0xf]
      %v482 = vld [vmem:[%s247 + $0x344] sm:$0xf]
      %v483 = vld [vmem:[%s247 + $0x348] sm:$0xf]
      %v484 = vld [vmem:[%s247 + $0x34c] sm:$0xf]
      %v485 = vld [vmem:[%s247 + $0x350] sm:$0xf]
      %v486 = vld [vmem:[%s247 + $0x354] sm:$0xf]
      %v487 = vld [vmem:[%s247 + $0x358] sm:$0xf]
      %v488 = vld [vmem:[%s247 + $0x35c] sm:$0xf]
      %v489 = vld [vmem:[%s247 + $0x360] sm:$0xf]
      %v490 = vld [vmem:[%s247 + $0x364] sm:$0xf]
      %v491 = vld [vmem:[%s247 + $0x368] sm:$0xf]
      %v492 = vld [vmem:[%s247 + $0x36c] sm:$0xf]
      %v493 = vld [vmem:[%s247 + $0x370] sm:$0xf]
      %v494 = vld [vmem:[%s247 + $0x374] sm:$0xf]
      %v495 = vld [vmem:[%s247 + $0x378] sm:$0xf]
      %v496 = vld [vmem:[%s247 + $0x37c] sm:$0xf]
      %v497 = vld [vmem:[%s247 + $0x380] sm:$0xf]
      %v498 = vld [vmem:[%s247 + $0x384] sm:$0xf]
      %v499 = vld [vmem:[%s247 + $0x388] sm:$0xf]
      %v500 = vld [vmem:[%s247 + $0x38c] sm:$0xf]
      %v501 = vld [vmem:[%s247 + $0x390] sm:$0xf]
      %v502 = vld [vmem:[%s247 + $0x394] sm:$0xf]
      %v503 = vld [vmem:[%s247 + $0x398] sm:$0xf]
      %v504 = vld [vmem:[%s247 + $0x39c] sm:$0xf]
      %v505 = vld [vmem:[%s247 + $0x3a0] sm:$0xf]
      %v506 = vld [vmem:[%s247 + $0x3a4] sm:$0xf]
      %v507 = vld [vmem:[%s247 + $0x3a8] sm:$0xf]
      %v508 = vld [vmem:[%s247 + $0x3ac] sm:$0xf]
      %v509 = vld [vmem:[%s247 + $0x3b0] sm:$0xf]
      %v510 = vld [vmem:[%s247 + $0x3b4] sm:$0xf]
      %v511 = vld [vmem:[%s247 + $0x3b8] sm:$0xf]
      %v512 = vld [vmem:[%s247 + $0x3bc] sm:$0xf]
      %v513 = vld [vmem:[%s247 + $0x3c0] sm:$0xf]
      %v514 = vld [vmem:[%s247 + $0x3c4] sm:$0xf]
      %v515 = vld [vmem:[%s247 + $0x3c8] sm:$0xf]
      %v516 = vld [vmem:[%s247 + $0x3cc] sm:$0xf]
      %v517 = vld [vmem:[%s247 + $0x3d0] sm:$0xf]
      %v518 = vld [vmem:[%s247 + $0x3d4] sm:$0xf]
      %v519 = vld [vmem:[%s247 + $0x3d8] sm:$0xf]
      %v520 = vld [vmem:[%s247 + $0x3dc] sm:$0xf]
      %v521 = vld [vmem:[%s247 + $0x3e0] sm:$0xf]
      %v522 = vld [vmem:[%s247 + $0x3e4] sm:$0xf]
      %v523 = vld [vmem:[%s247 + $0x3e8] sm:$0xf]
      %v524 = vld [vmem:[%s247 + $0x3ec] sm:$0xf]
      %v525 = vld [vmem:[%s247 + $0x3f0] sm:$0xf]
      %v526 = vld [vmem:[%s247 + $0x3f4] sm:$0xf]
      %v527 = vld [vmem:[%s247 + $0x3f8] sm:$0xf]
      %v528 = vld [vmem:[%s247 + $0x3fc] sm:$0xf]
      %v537 = vunpack.c.l.b16 %v265
      %v538 = vunpack.c.h.b16 %v265
      %v539 = vunpack.c.l.b16 %v266
      %v540 = vunpack.c.h.b16 %v266
      %v541 = vunpack.c.l.b16 %v267
      %v542 = vunpack.c.h.b16 %v267
      %v543 = vunpack.c.l.b16 %v268
      %v544 = vunpack.c.h.b16 %v268
      %v545 = vunpack.c.l.b16 %v269
      %v546 = vunpack.c.h.b16 %v269
      %v547 = vunpack.c.l.b16 %v270
      %v548 = vunpack.c.h.b16 %v270
      %v549 = vunpack.c.l.b16 %v271
      %v550 = vunpack.c.h.b16 %v271
      %v551 = vunpack.c.l.b16 %v272
      %v552 = vunpack.c.h.b16 %v272
      %v553 = vpack.c.b16 %v537, %v537
      %v554 = vpack.c.b16 %v538, %v538
      %v555 = vpack.c.b16 %v539, %v539
      %v556 = vpack.c.b16 %v540, %v540
      %v557 = vpack.c.b16 %v541, %v541
      %v558 = vpack.c.b16 %v542, %v542
      %v559 = vpack.c.b16 %v543, %v543
      %v560 = vpack.c.b16 %v544, %v544
      %v561 = vpack.c.b16 %v545, %v545
      %v562 = vpack.c.b16 %v546, %v546
      %v563 = vpack.c.b16 %v547, %v547
      %v564 = vpack.c.b16 %v548, %v548
      %v565 = vpack.c.b16 %v549, %v549
      %v566 = vpack.c.b16 %v550, %v550
      %v567 = vpack.c.b16 %v551, %v551
      %v568 = vpack.c.b16 %v552, %v552
      %v841 = vunpack.c.l.b16 %v273
      %v842 = vunpack.c.l.b16 %v274
      %v843 = vunpack.c.l.b16 %v275
      %v844 = vunpack.c.l.b16 %v276
      %v845 = vunpack.c.l.b16 %v277
      %v846 = vunpack.c.l.b16 %v278
      %v847 = vunpack.c.l.b16 %v279
      %v848 = vunpack.c.l.b16 %v280
      %v849 = vunpack.c.l.b16 %v281
      %v850 = vunpack.c.l.b16 %v282
      %v851 = vunpack.c.l.b16 %v283
      %v852 = vunpack.c.l.b16 %v284
      %v853 = vunpack.c.l.b16 %v285
      %v854 = vunpack.c.l.b16 %v286
      %v855 = vunpack.c.l.b16 %v287
      %v856 = vunpack.c.l.b16 %v288
      %v857 = vunpack.c.l.b16 %v289
      %v858 = vunpack.c.l.b16 %v290
      %v859 = vunpack.c.l.b16 %v291
      %v860 = vunpack.c.l.b16 %v292
      %v861 = vunpack.c.l.b16 %v293
      %v862 = vunpack.c.l.b16 %v294
      %v863 = vunpack.c.l.b16 %v295
      %v864 = vunpack.c.l.b16 %v296
      %v865 = vunpack.c.l.b16 %v297
      %v866 = vunpack.c.l.b16 %v298
      %v867 = vunpack.c.l.b16 %v299
      %v868 = vunpack.c.l.b16 %v300
      %v869 = vunpack.c.l.b16 %v301
      %v870 = vunpack.c.l.b16 %v302
      %v871 = vunpack.c.l.b16 %v303
      %v872 = vunpack.c.l.b16 %v304
      %v873 = vunpack.c.l.b16 %v305
      %v874 = vunpack.c.l.b16 %v306
      %v875 = vunpack.c.l.b16 %v307
      %v876 = vunpack.c.l.b16 %v308
      %v877 = vunpack.c.l.b16 %v309
      %v878 = vunpack.c.l.b16 %v310
      %v879 = vunpack.c.l.b16 %v311
      %v880 = vunpack.c.l.b16 %v312
      %v881 = vunpack.c.l.b16 %v313
      %v882 = vunpack.c.l.b16 %v314
      %v883 = vunpack.c.l.b16 %v315
      %v884 = vunpack.c.l.b16 %v316
      %v885 = vunpack.c.l.b16 %v317
      %v886 = vunpack.c.l.b16 %v318
      %v887 = vunpack.c.l.b16 %v319
      %v888 = vunpack.c.l.b16 %v320
      %v889 = vunpack.c.l.b16 %v321
      %v890 = vunpack.c.l.b16 %v322
      %v891 = vunpack.c.l.b16 %v323
      %v892 = vunpack.c.l.b16 %v324
      %v893 = vunpack.c.l.b16 %v325
      %v894 = vunpack.c.l.b16 %v326
      %v895 = vunpack.c.l.b16 %v327
      %v896 = vunpack.c.l.b16 %v328
      %v897 = vunpack.c.l.b16 %v329
      %v898 = vunpack.c.l.b16 %v330
      %v899 = vunpack.c.l.b16 %v331
      %v900 = vunpack.c.l.b16 %v332
      %v901 = vunpack.c.l.b16 %v333
      %v902 = vunpack.c.l.b16 %v334
      %v903 = vunpack.c.l.b16 %v335
      %v904 = vunpack.c.l.b16 %v336
      %v905 = vunpack.c.l.b16 %v337
      %v906 = vunpack.c.l.b16 %v338
      %v907 = vunpack.c.l.b16 %v339
      %v908 = vunpack.c.l.b16 %v340
      %v909 = vunpack.c.l.b16 %v341
      %v910 = vunpack.c.l.b16 %v342
      %v911 = vunpack.c.l.b16 %v343
      %v912 = vunpack.c.l.b16 %v344
      %v913 = vunpack.c.l.b16 %v345
      %v914 = vunpack.c.l.b16 %v346
      %v915 = vunpack.c.l.b16 %v347
      %v916 = vunpack.c.l.b16 %v348
      %v917 = vunpack.c.l.b16 %v349
      %v918 = vunpack.c.l.b16 %v350
      %v919 = vunpack.c.l.b16 %v351
      %v920 = vunpack.c.l.b16 %v352
      %v921 = vunpack.c.l.b16 %v353
      %v922 = vunpack.c.l.b16 %v354
      %v923 = vunpack.c.l.b16 %v355
      %v924 = vunpack.c.l.b16 %v356
      %v925 = vunpack.c.l.b16 %v357
      %v926 = vunpack.c.l.b16 %v358
      %v927 = vunpack.c.l.b16 %v359
      %v928 = vunpack.c.l.b16 %v360
      %v929 = vunpack.c.l.b16 %v361
      %v930 = vunpack.c.l.b16 %v362
      %v931 = vunpack.c.l.b16 %v363
      %v932 = vunpack.c.l.b16 %v364
      %v933 = vunpack.c.l.b16 %v365
      %v934 = vunpack.c.l.b16 %v366
      %v935 = vunpack.c.l.b16 %v367
      %v936 = vunpack.c.l.b16 %v368
      %v937 = vunpack.c.l.b16 %v369
      %v938 = vunpack.c.l.b16 %v370
      %v939 = vunpack.c.l.b16 %v371
      %v940 = vunpack.c.l.b16 %v372
      %v941 = vunpack.c.l.b16 %v373
      %v942 = vunpack.c.l.b16 %v374
      %v943 = vunpack.c.l.b16 %v375
      %v944 = vunpack.c.l.b16 %v376
      %v945 = vunpack.c.l.b16 %v377
      %v946 = vunpack.c.l.b16 %v378
      %v947 = vunpack.c.l.b16 %v379
      %v948 = vunpack.c.l.b16 %v380
      %v949 = vunpack.c.l.b16 %v381
      %v950 = vunpack.c.l.b16 %v382
      %v951 = vunpack.c.l.b16 %v383
      %v952 = vunpack.c.l.b16 %v384
      %v953 = vunpack.c.l.b16 %v385
      %v954 = vunpack.c.l.b16 %v386
      %v955 = vunpack.c.l.b16 %v387
      %v956 = vunpack.c.l.b16 %v388
      %v957 = vunpack.c.l.b16 %v389
      %v958 = vunpack.c.l.b16 %v390
      %v959 = vunpack.c.l.b16 %v391
      %v960 = vunpack.c.l.b16 %v392
      %v961 = vunpack.c.l.b16 %v393
      %v962 = vunpack.c.l.b16 %v394
      %v963 = vunpack.c.l.b16 %v395
      %v964 = vunpack.c.l.b16 %v396
      %v965 = vunpack.c.l.b16 %v397
      %v966 = vunpack.c.l.b16 %v398
      %v967 = vunpack.c.l.b16 %v399
      %v968 = vunpack.c.l.b16 %v400
      %v969 = vunpack.c.l.b16 %v401
      %v970 = vunpack.c.l.b16 %v402
      %v971 = vunpack.c.l.b16 %v403
      %v972 = vunpack.c.l.b16 %v404
      %v973 = vunpack.c.l.b16 %v405
      %v974 = vunpack.c.l.b16 %v406
      %v975 = vunpack.c.l.b16 %v407
      %v976 = vunpack.c.l.b16 %v408
      %v977 = vunpack.c.l.b16 %v409
      %v978 = vunpack.c.l.b16 %v410
      %v979 = vunpack.c.l.b16 %v411
      %v980 = vunpack.c.l.b16 %v412
      %v981 = vunpack.c.l.b16 %v413
      %v982 = vunpack.c.l.b16 %v414
      %v983 = vunpack.c.l.b16 %v415
      %v984 = vunpack.c.l.b16 %v416
      %v985 = vunpack.c.l.b16 %v417
      %v986 = vunpack.c.l.b16 %v418
      %v987 = vunpack.c.l.b16 %v419
      %v988 = vunpack.c.l.b16 %v420
      %v989 = vunpack.c.l.b16 %v421
      %v990 = vunpack.c.l.b16 %v422
      %v991 = vunpack.c.l.b16 %v423
      %v992 = vunpack.c.l.b16 %v424
      %v993 = vunpack.c.l.b16 %v425
      %v994 = vunpack.c.l.b16 %v426
      %v995 = vunpack.c.l.b16 %v427
      %v996 = vunpack.c.l.b16 %v428
      %v997 = vunpack.c.l.b16 %v429
      %v998 = vunpack.c.l.b16 %v430
      %v999 = vunpack.c.l.b16 %v431
      %v1000 = vunpack.c.l.b16 %v432
      %v1001 = vunpack.c.l.b16 %v433
      %v1002 = vunpack.c.l.b16 %v434
      %v1003 = vunpack.c.l.b16 %v435
      %v1004 = vunpack.c.l.b16 %v436
      %v1005 = vunpack.c.l.b16 %v437
      %v1006 = vunpack.c.l.b16 %v438
      %v1007 = vunpack.c.l.b16 %v439
      %v1008 = vunpack.c.l.b16 %v440
      %v1009 = vunpack.c.l.b16 %v441
      %v1010 = vunpack.c.l.b16 %v442
      %v1011 = vunpack.c.l.b16 %v443
      %v1012 = vunpack.c.l.b16 %v444
      %v1013 = vunpack.c.l.b16 %v445
      %v1014 = vunpack.c.l.b16 %v446
      %v1015 = vunpack.c.l.b16 %v447
      %v1016 = vunpack.c.l.b16 %v448
      %v1017 = vunpack.c.l.b16 %v449
      %v1018 = vunpack.c.l.b16 %v450
      %v1019 = vunpack.c.l.b16 %v451
      %v1020 = vunpack.c.l.b16 %v452
      %v1021 = vunpack.c.l.b16 %v453
      %v1022 = vunpack.c.l.b16 %v454
      %v1023 = vunpack.c.l.b16 %v455
      %v1024 = vunpack.c.l.b16 %v456
      %v1025 = vunpack.c.l.b16 %v457
      %v1026 = vunpack.c.l.b16 %v458
      %v1027 = vunpack.c.l.b16 %v459
      %v1028 = vunpack.c.l.b16 %v460
      %v1029 = vunpack.c.l.b16 %v461
      %v1030 = vunpack.c.l.b16 %v462
      %v1031 = vunpack.c.l.b16 %v463
      %v1032 = vunpack.c.l.b16 %v464
      %v1033 = vunpack.c.l.b16 %v465
      %v1034 = vunpack.c.l.b16 %v466
      %v1035 = vunpack.c.l.b16 %v467
      %v1036 = vunpack.c.l.b16 %v468
      %v1037 = vunpack.c.l.b16 %v469
      %v1038 = vunpack.c.l.b16 %v470
      %v1039 = vunpack.c.l.b16 %v471
      %v1040 = vunpack.c.l.b16 %v472
      %v1041 = vunpack.c.l.b16 %v473
      %v1042 = vunpack.c.l.b16 %v474
      %v1043 = vunpack.c.l.b16 %v475
      %v1044 = vunpack.c.l.b16 %v476
      %v1045 = vunpack.c.l.b16 %v477
      %v1046 = vunpack.c.l.b16 %v478
      %v1047 = vunpack.c.l.b16 %v479
      %v1048 = vunpack.c.l.b16 %v480
      %v1049 = vunpack.c.l.b16 %v481
      %v1050 = vunpack.c.l.b16 %v482
      %v1051 = vunpack.c.l.b16 %v483
      %v1052 = vunpack.c.l.b16 %v484
      %v1053 = vunpack.c.l.b16 %v485
      %v1054 = vunpack.c.l.b16 %v486
      %v1055 = vunpack.c.l.b16 %v487
      %v1056 = vunpack.c.l.b16 %v488
      %v1057 = vunpack.c.l.b16 %v489
      %v1058 = vunpack.c.l.b16 %v490
      %v1059 = vunpack.c.l.b16 %v491
      %v1060 = vunpack.c.l.b16 %v492
      %v1061 = vunpack.c.l.b16 %v493
      %v1062 = vunpack.c.l.b16 %v494
      %v1063 = vunpack.c.l.b16 %v495
      %v1064 = vunpack.c.l.b16 %v496
      %v1065 = vunpack.c.l.b16 %v497
      %v1066 = vunpack.c.l.b16 %v498
      %v1067 = vunpack.c.l.b16 %v499
      %v1068 = vunpack.c.l.b16 %v500
      %v1069 = vunpack.c.l.b16 %v501
      %v1070 = vunpack.c.l.b16 %v502
      %v1071 = vunpack.c.l.b16 %v503
      %v1072 = vunpack.c.l.b16 %v504
      %v1073 = vunpack.c.l.b16 %v505
      %v1074 = vunpack.c.l.b16 %v506
      %v1075 = vunpack.c.l.b16 %v507
      %v1076 = vunpack.c.l.b16 %v508
      %v1077 = vunpack.c.l.b16 %v509
      %v1078 = vunpack.c.l.b16 %v510
      %v1079 = vunpack.c.l.b16 %v511
      %v1080 = vunpack.c.l.b16 %v512
      %v1081 = vunpack.c.l.b16 %v513
      %v1082 = vunpack.c.l.b16 %v514
      %v1083 = vunpack.c.l.b16 %v515
      %v1084 = vunpack.c.l.b16 %v516
      %v1085 = vunpack.c.l.b16 %v517
      %v1086 = vunpack.c.l.b16 %v518
      %v1087 = vunpack.c.l.b16 %v519
      %v1088 = vunpack.c.l.b16 %v520
      %v1089 = vunpack.c.l.b16 %v521
      %v1090 = vunpack.c.l.b16 %v522
      %v1091 = vunpack.c.l.b16 %v523
      %v1092 = vunpack.c.l.b16 %v524
      %v1093 = vunpack.c.l.b16 %v525
      %v1094 = vunpack.c.l.b16 %v526
      %v1095 = vunpack.c.l.b16 %v527
      %v1096 = vunpack.c.l.b16 %v528
      %v1097 = vpack.c.b16 %v842, %v841
      %v1098 = vpack.c.b16 %v844, %v843
      %v1099 = vpack.c.b16 %v846, %v845
      %v1100 = vpack.c.b16 %v848, %v847
      %v1101 = vpack.c.b16 %v850, %v849
      %v1102 = vpack.c.b16 %v852, %v851
      %v1103 = vpack.c.b16 %v854, %v853
      %v1104 = vpack.c.b16 %v856, %v855
      %v1105 = vpack.c.b16 %v858, %v857
      %v1106 = vpack.c.b16 %v860, %v859
      %v1107 = vpack.c.b16 %v862, %v861
      %v1108 = vpack.c.b16 %v864, %v863
      %v1109 = vpack.c.b16 %v866, %v865
      %v1110 = vpack.c.b16 %v868, %v867
      %v1111 = vpack.c.b16 %v870, %v869
      %v1112 = vpack.c.b16 %v872, %v871
      %v1113 = vpack.c.b16 %v874, %v873
      %v1114 = vpack.c.b16 %v876, %v875
      %v1115 = vpack.c.b16 %v878, %v877
      %v1116 = vpack.c.b16 %v880, %v879
      %v1117 = vpack.c.b16 %v882, %v881
      %v1118 = vpack.c.b16 %v884, %v883
      %v1119 = vpack.c.b16 %v886, %v885
      %v1120 = vpack.c.b16 %v888, %v887
      %v1121 = vpack.c.b16 %v890, %v889
      %v1122 = vpack.c.b16 %v892, %v891
      %v1123 = vpack.c.b16 %v894, %v893
      %v1124 = vpack.c.b16 %v896, %v895
      %v1125 = vpack.c.b16 %v898, %v897
      %v1126 = vpack.c.b16 %v900, %v899
      %v1127 = vpack.c.b16 %v902, %v901
      %v1128 = vpack.c.b16 %v904, %v903
      %v1129 = vpack.c.b16 %v906, %v905
      %v1130 = vpack.c.b16 %v908, %v907
      %v1131 = vpack.c.b16 %v910, %v909
      %v1132 = vpack.c.b16 %v912, %v911
      %v1133 = vpack.c.b16 %v914, %v913
      %v1134 = vpack.c.b16 %v916, %v915
      %v1135 = vpack.c.b16 %v918, %v917
      %v1136 = vpack.c.b16 %v920, %v919
      %v1137 = vpack.c.b16 %v922, %v921
      %v1138 = vpack.c.b16 %v924, %v923
      %v1139 = vpack.c.b16 %v926, %v925
      %v1140 = vpack.c.b16 %v928, %v927
      %v1141 = vpack.c.b16 %v930, %v929
      %v1142 = vpack.c.b16 %v932, %v931
      %v1143 = vpack.c.b16 %v934, %v933
      %v1144 = vpack.c.b16 %v936, %v935
      %v1145 = vpack.c.b16 %v938, %v937
      %v1146 = vpack.c.b16 %v940, %v939
      %v1147 = vpack.c.b16 %v942, %v941
      %v1148 = vpack.c.b16 %v944, %v943
      %v1149 = vpack.c.b16 %v946, %v945
      %v1150 = vpack.c.b16 %v948, %v947
      %v1151 = vpack.c.b16 %v950, %v949
      %v1152 = vpack.c.b16 %v952, %v951
      %v1153 = vpack.c.b16 %v954, %v953
      %v1154 = vpack.c.b16 %v956, %v955
      %v1155 = vpack.c.b16 %v958, %v957
      %v1156 = vpack.c.b16 %v960, %v959
      %v1157 = vpack.c.b16 %v962, %v961
      %v1158 = vpack.c.b16 %v964, %v963
      %v1159 = vpack.c.b16 %v966, %v965
      %v1160 = vpack.c.b16 %v968, %v967
      %v1161 = vpack.c.b16 %v970, %v969
      %v1162 = vpack.c.b16 %v972, %v971
      %v1163 = vpack.c.b16 %v974, %v973
      %v1164 = vpack.c.b16 %v976, %v975
      %v1165 = vpack.c.b16 %v978, %v977
      %v1166 = vpack.c.b16 %v980, %v979
      %v1167 = vpack.c.b16 %v982, %v981
      %v1168 = vpack.c.b16 %v984, %v983
      %v1169 = vpack.c.b16 %v986, %v985
      %v1170 = vpack.c.b16 %v988, %v987
      %v1171 = vpack.c.b16 %v990, %v989
      %v1172 = vpack.c.b16 %v992, %v991
      %v1173 = vpack.c.b16 %v994, %v993
      %v1174 = vpack.c.b16 %v996, %v995
      %v1175 = vpack.c.b16 %v998, %v997
      %v1176 = vpack.c.b16 %v1000, %v999
      %v1177 = vpack.c.b16 %v1002, %v1001
      %v1178 = vpack.c.b16 %v1004, %v1003
      %v1179 = vpack.c.b16 %v1006, %v1005
      %v1180 = vpack.c.b16 %v1008, %v1007
      %v1181 = vpack.c.b16 %v1010, %v1009
      %v1182 = vpack.c.b16 %v1012, %v1011
      %v1183 = vpack.c.b16 %v1014, %v1013
      %v1184 = vpack.c.b16 %v1016, %v1015
      %v1185 = vpack.c.b16 %v1018, %v1017
      %v1186 = vpack.c.b16 %v1020, %v1019
      %v1187 = vpack.c.b16 %v1022, %v1021
      %v1188 = vpack.c.b16 %v1024, %v1023
      %v1189 = vpack.c.b16 %v1026, %v1025
      %v1190 = vpack.c.b16 %v1028, %v1027
      %v1191 = vpack.c.b16 %v1030, %v1029
      %v1192 = vpack.c.b16 %v1032, %v1031
      %v1193 = vpack.c.b16 %v1034, %v1033
      %v1194 = vpack.c.b16 %v1036, %v1035
      %v1195 = vpack.c.b16 %v1038, %v1037
      %v1196 = vpack.c.b16 %v1040, %v1039
      %v1197 = vpack.c.b16 %v1042, %v1041
      %v1198 = vpack.c.b16 %v1044, %v1043
      %v1199 = vpack.c.b16 %v1046, %v1045
      %v1200 = vpack.c.b16 %v1048, %v1047
      %v1201 = vpack.c.b16 %v1050, %v1049
      %v1202 = vpack.c.b16 %v1052, %v1051
      %v1203 = vpack.c.b16 %v1054, %v1053
      %v1204 = vpack.c.b16 %v1056, %v1055
      %v1205 = vpack.c.b16 %v1058, %v1057
      %v1206 = vpack.c.b16 %v1060, %v1059
      %v1207 = vpack.c.b16 %v1062, %v1061
      %v1208 = vpack.c.b16 %v1064, %v1063
      %v1209 = vpack.c.b16 %v1066, %v1065
      %v1210 = vpack.c.b16 %v1068, %v1067
      %v1211 = vpack.c.b16 %v1070, %v1069
      %v1212 = vpack.c.b16 %v1072, %v1071
      %v1213 = vpack.c.b16 %v1074, %v1073
      %v1214 = vpack.c.b16 %v1076, %v1075
      %v1215 = vpack.c.b16 %v1078, %v1077
      %v1216 = vpack.c.b16 %v1080, %v1079
      %v1217 = vpack.c.b16 %v1082, %v1081
      %v1218 = vpack.c.b16 %v1084, %v1083
      %v1219 = vpack.c.b16 %v1086, %v1085
      %v1220 = vpack.c.b16 %v1088, %v1087
      %v1221 = vpack.c.b16 %v1090, %v1089
      %v1222 = vpack.c.b16 %v1092, %v1091
      %v1223 = vpack.c.b16 %v1094, %v1093
      %v1224 = vpack.c.b16 %v1096, %v1095
      %1353 = vmatpush.bf16.msra.mxu0 %v1104
      %1354 = vmatpush.bf16.msra.mxu0 %v1103
      %1355 = vmatpush.bf16.msra.mxu0 %v1102
      %1356 = vmatpush.bf16.msra.mxu0 %v1101
      %1357 = vmatpush.bf16.msra.mxu0 %v1100
      %1358 = vmatpush.bf16.msra.mxu0 %v1099
      %1359 = vmatpush.bf16.msra.mxu0 %v1098
      %1360 = vmatpush.bf16.msra.mxu0 %v1097
      %1361 = vmatmul.bf16.gmra.mxu0 %v553
      %v1362 = vpop.f32.mrf.mxu0
      %v1363 = vadd.f32 0.0, %v1362
      %v1364 = vpop.f32.mrf.mxu0
      %1365 = vdwg.mxu0
      %1366 = vmatpush.bf16.msra.mxu0 %v1112
      %1367 = vmatpush.bf16.msra.mxu0 %v1111
      %1368 = vmatpush.bf16.msra.mxu0 %v1110
      %1369 = vmatpush.bf16.msra.mxu0 %v1109
      %1370 = vmatpush.bf16.msra.mxu0 %v1108
      %1371 = vmatpush.bf16.msra.mxu0 %v1107
      %1372 = vmatpush.bf16.msra.mxu0 %v1106
      %1373 = vmatpush.bf16.msra.mxu0 %v1105
      %1374 = vmatmul.bf16.gmra.mxu0 %v554
      %v1375 = vpop.f32.mrf.mxu0
      %v1376 = vadd.f32 %v1363, %v1375
      %v1377 = vpop.f32.mrf.mxu0
      %1378 = vdwg.mxu0
      %1379 = vmatpush.bf16.msra.mxu0 %v1120
      %1380 = vmatpush.bf16.msra.mxu0 %v1119
      %1381 = vmatpush.bf16.msra.mxu0 %v1118
      %1382 = vmatpush.bf16.msra.mxu0 %v1117
      %1383 = vmatpush.bf16.msra.mxu0 %v1116
      %1384 = vmatpush.bf16.msra.mxu0 %v1115
      %1385 = vmatpush.bf16.msra.mxu0 %v1114
      %1386 = vmatpush.bf16.msra.mxu0 %v1113
      %1387 = vmatmul.bf16.gmra.mxu0 %v555
      %v1388 = vpop.f32.mrf.mxu0
      %v1389 = vadd.f32 %v1376, %v1388
      %v1390 = vpop.f32.mrf.mxu0
      %1391 = vdwg.mxu0
      %1392 = vmatpush.bf16.msra.mxu0 %v1128
      %1393 = vmatpush.bf16.msra.mxu0 %v1127
      %1394 = vmatpush.bf16.msra.mxu0 %v1126
      %1395 = vmatpush.bf16.msra.mxu0 %v1125
      %1396 = vmatpush.bf16.msra.mxu0 %v1124
      %1397 = vmatpush.bf16.msra.mxu0 %v1123
      %1398 = vmatpush.bf16.msra.mxu0 %v1122
      %1399 = vmatpush.bf16.msra.mxu0 %v1121
      %1400 = vmatmul.bf16.gmra.mxu0 %v556
      %v1401 = vpop.f32.mrf.mxu0
      %v1402 = vadd.f32 %v1389, %v1401
      %v1403 = vpop.f32.mrf.mxu0
      %1404 = vdwg.mxu0
      %1405 = vmatpush.bf16.msra.mxu0 %v1136
      %1406 = vmatpush.bf16.msra.mxu0 %v1135
      %1407 = vmatpush.bf16.msra.mxu0 %v1134
      %1408 = vmatpush.bf16.msra.mxu0 %v1133
      %1409 = vmatpush.bf16.msra.mxu0 %v1132
      %1410 = vmatpush.bf16.msra.mxu0 %v1131
      %1411 = vmatpush.bf16.msra.mxu0 %v1130
      %1412 = vmatpush.bf16.msra.mxu0 %v1129
      %1413 = vmatmul.bf16.gmra.mxu0 %v557
      %v1414 = vpop.f32.mrf.mxu0
      %v1415 = vadd.f32 %v1402, %v1414
      %v1416 = vpop.f32.mrf.mxu0
      %1417 = vdwg.mxu0
      %1418 = vmatpush.bf16.msra.mxu0 %v1144
      %1419 = vmatpush.bf16.msra.mxu0 %v1143
      %1420 = vmatpush.bf16.msra.mxu0 %v1142
      %1421 = vmatpush.bf16.msra.mxu0 %v1141
      %1422 = vmatpush.bf16.msra.mxu0 %v1140
      %1423 = vmatpush.bf16.msra.mxu0 %v1139
      %1424 = vmatpush.bf16.msra.mxu0 %v1138
      %1425 = vmatpush.bf16.msra.mxu0 %v1137
      %1426 = vmatmul.bf16.gmra.mxu0 %v558
      %v1427 = vpop.f32.mrf.mxu0
      %v1428 = vadd.f32 %v1415, %v1427
      %v1429 = vpop.f32.mrf.mxu0
      %1430 = vdwg.mxu0
      %1431 = vmatpush.bf16.msra.mxu0 %v1152
      %1432 = vmatpush.bf16.msra.mxu0 %v1151
      %1433 = vmatpush.bf16.msra.mxu0 %v1150
      %1434 = vmatpush.bf16.msra.mxu0 %v1149
      %1435 = vmatpush.bf16.msra.mxu0 %v1148
      %1436 = vmatpush.bf16.msra.mxu0 %v1147
      %1437 = vmatpush.bf16.msra.mxu0 %v1146
      %1438 = vmatpush.bf16.msra.mxu0 %v1145
      %1439 = vmatmul.bf16.gmra.mxu0 %v559
      %v1440 = vpop.f32.mrf.mxu0
      %v1441 = vadd.f32 %v1428, %v1440
      %v1442 = vpop.f32.mrf.mxu0
      %1443 = vdwg.mxu0
      %1444 = vmatpush.bf16.msra.mxu0 %v1160
      %1445 = vmatpush.bf16.msra.mxu0 %v1159
      %1446 = vmatpush.bf16.msra.mxu0 %v1158
      %1447 = vmatpush.bf16.msra.mxu0 %v1157
      %1448 = vmatpush.bf16.msra.mxu0 %v1156
      %1449 = vmatpush.bf16.msra.mxu0 %v1155
      %1450 = vmatpush.bf16.msra.mxu0 %v1154
      %1451 = vmatpush.bf16.msra.mxu0 %v1153
      %1452 = vmatmul.bf16.gmra.mxu0 %v560
      %v1453 = vpop.f32.mrf.mxu0
      %v1454 = vadd.f32 %v1441, %v1453
      %v1455 = vpop.f32.mrf.mxu0
      %1456 = vdwg.mxu0
      %1457 = vmatpush.bf16.msra.mxu0 %v1168
      %1458 = vmatpush.bf16.msra.mxu0 %v1167
      %1459 = vmatpush.bf16.msra.mxu0 %v1166
      %1460 = vmatpush.bf16.msra.mxu0 %v1165
      %1461 = vmatpush.bf16.msra.mxu0 %v1164
      %1462 = vmatpush.bf16.msra.mxu0 %v1163
      %1463 = vmatpush.bf16.msra.mxu0 %v1162
      %1464 = vmatpush.bf16.msra.mxu0 %v1161
      %1465 = vmatmul.bf16.gmra.mxu0 %v561
      %v1466 = vpop.f32.mrf.mxu0
      %v1467 = vadd.f32 %v1454, %v1466
      %v1468 = vpop.f32.mrf.mxu0
      %1469 = vdwg.mxu0
      %1470 = vmatpush.bf16.msra.mxu0 %v1176
      %1471 = vmatpush.bf16.msra.mxu0 %v1175
      %1472 = vmatpush.bf16.msra.mxu0 %v1174
      %1473 = vmatpush.bf16.msra.mxu0 %v1173
      %1474 = vmatpush.bf16.msra.mxu0 %v1172
      %1475 = vmatpush.bf16.msra.mxu0 %v1171
      %1476 = vmatpush.bf16.msra.mxu0 %v1170
      %1477 = vmatpush.bf16.msra.mxu0 %v1169
      %1478 = vmatmul.bf16.gmra.mxu0 %v562
      %v1479 = vpop.f32.mrf.mxu0
      %v1480 = vadd.f32 %v1467, %v1479
      %v1481 = vpop.f32.mrf.mxu0
      %1482 = vdwg.mxu0
      %1483 = vmatpush.bf16.msra.mxu0 %v1184
      %1484 = vmatpush.bf16.msra.mxu0 %v1183
      %1485 = vmatpush.bf16.msra.mxu0 %v1182
      %1486 = vmatpush.bf16.msra.mxu0 %v1181
      %1487 = vmatpush.bf16.msra.mxu0 %v1180
      %1488 = vmatpush.bf16.msra.mxu0 %v1179
      %1489 = vmatpush.bf16.msra.mxu0 %v1178
      %1490 = vmatpush.bf16.msra.mxu0 %v1177
      %1491 = vmatmul.bf16.gmra.mxu0 %v563
      %v1492 = vpop.f32.mrf.mxu0
      %v1493 = vadd.f32 %v1480, %v1492
      %v1494 = vpop.f32.mrf.mxu0
      %1495 = vdwg.mxu0
      %1496 = vmatpush.bf16.msra.mxu0 %v1192
      %1497 = vmatpush.bf16.msra.mxu0 %v1191
      %1498 = vmatpush.bf16.msra.mxu0 %v1190
      %1499 = vmatpush.bf16.msra.mxu0 %v1189
      %1500 = vmatpush.bf16.msra.mxu0 %v1188
      %1501 = vmatpush.bf16.msra.mxu0 %v1187
      %1502 = vmatpush.bf16.msra.mxu0 %v1186
      %1503 = vmatpush.bf16.msra.mxu0 %v1185
      %1504 = vmatmul.bf16.gmra.mxu0 %v564
      %v1505 = vpop.f32.mrf.mxu0
      %v1506 = vadd.f32 %v1493, %v1505
      %v1507 = vpop.f32.mrf.mxu0
      %1508 = vdwg.mxu0
      %1509 = vmatpush.bf16.msra.mxu0 %v1200
      %1510 = vmatpush.bf16.msra.mxu0 %v1199
      %1511 = vmatpush.bf16.msra.mxu0 %v1198
      %1512 = vmatpush.bf16.msra.mxu0 %v1197
      %1513 = vmatpush.bf16.msra.mxu0 %v1196
      %1514 = vmatpush.bf16.msra.mxu0 %v1195
      %1515 = vmatpush.bf16.msra.mxu0 %v1194
      %1516 = vmatpush.bf16.msra.mxu0 %v1193
      %1517 = vmatmul.bf16.gmra.mxu0 %v565
      %v1518 = vpop.f32.mrf.mxu0
      %v1519 = vadd.f32 %v1506, %v1518
      %v1520 = vpop.f32.mrf.mxu0
      %1521 = vdwg.mxu0
      %1522 = vmatpush.bf16.msra.mxu0 %v1208
      %1523 = vmatpush.bf16.msra.mxu0 %v1207
      %1524 = vmatpush.bf16.msra.mxu0 %v1206
      %1525 = vmatpush.bf16.msra.mxu0 %v1205
      %1526 = vmatpush.bf16.msra.mxu0 %v1204
      %1527 = vmatpush.bf16.msra.mxu0 %v1203
      %1528 = vmatpush.bf16.msra.mxu0 %v1202
      %1529 = vmatpush.bf16.msra.mxu0 %v1201
      %1530 = vmatmul.bf16.gmra.mxu0 %v566
      %v1531 = vpop.f32.mrf.mxu0
      %v1532 = vadd.f32 %v1519, %v1531
      %v1533 = vpop.f32.mrf.mxu0
      %1534 = vdwg.mxu0
      %1535 = vmatpush.bf16.msra.mxu0 %v1216
      %1536 = vmatpush.bf16.msra.mxu0 %v1215
      %1537 = vmatpush.bf16.msra.mxu0 %v1214
      %1538 = vmatpush.bf16.msra.mxu0 %v1213
      %1539 = vmatpush.bf16.msra.mxu0 %v1212
      %1540 = vmatpush.bf16.msra.mxu0 %v1211
      %1541 = vmatpush.bf16.msra.mxu0 %v1210
      %1542 = vmatpush.bf16.msra.mxu0 %v1209
      %1543 = vmatmul.bf16.gmra.mxu0 %v567
      %v1544 = vpop.f32.mrf.mxu0
      %v1545 = vadd.f32 %v1532, %v1544
      %v1546 = vpop.f32.mrf.mxu0
      %1547 = vdwg.mxu0
      %1548 = vmatpush.bf16.msra.mxu0 %v1224
      %1549 = vmatpush.bf16.msra.mxu0 %v1223
      %1550 = vmatpush.bf16.msra.mxu0 %v1222
      %1551 = vmatpush.bf16.msra.mxu0 %v1221
      %1552 = vmatpush.bf16.msra.mxu0 %v1220
      %1553 = vmatpush.bf16.msra.mxu0 %v1219
      %1554 = vmatpush.bf16.msra.mxu0 %v1218
      %1555 = vmatpush.bf16.msra.mxu0 %v1217
      %1556 = vmatmul.bf16.gmra.mxu0 %v568
      %v1557 = vpop.f32.mrf.mxu0
      %v1558 = vadd.f32 %v1545, %v1557
      %v1559 = vpop.f32.mrf.mxu0
      %1560 = vdwg.mxu0
      %v1561 = vadd.f32 %v264, %v1558
      %1562 = vst [vmem:[#allocation2] sm:$0xff] %v1561
      %p1563 = scmp.eq.s32.totalorder %s21, 3
      // Predicated region
      $region37: #{fwd.9} parent=31 // pred_check
        %p1564 = pneg %p1563
      $region38: #{fwd.9} parent=31 // pred_check_branch
        %1566 = sbr.rel (%p1564) target = $region40
      $region39: #{fwd.9} parent=31 // pred_region
        %v1567 = vld [vmem:[#allocation2] sm:$0xff]
        %v1568 = vld [vmem:[%s251] sm:$0x1]
        %v1570 = vperm.slane %v1568, 0
        %v1572 = vadd.f32 %v1567, %v1570
        %v1573 = vsub.f32 0.0, %v1572
        %v1574 = vmul.f32 %v1573, 1.442695
        %v1575 = vpow.pop %v1574
        %v1576 = vadd.f32 %v1575, 1.0
        %v1577 = vrcp.pop %v1576
        %v1578 = vmul.f32 %v1576, %v1577
        %v1579 = vsub.f32 1.0, %v1578
        %v1580 = vmul.f32 %v1577, %v1579
        %v1581 = vadd.f32 %v1577, %v1580
        %vm1582 = vweird.f32 %v1576
        %vm1583 = vweird.f32 %v1577
        %vm1584 = vmor %vm1582, %vm1583
        %v1585 = vsel %vm1584, %v1577, %v1581
        %v1586 = vand.u32 2147483647, %v1576
        %vm1587 = vcmp.eq.f32.partialorder %v1586, 8.507059e+37
        %v1588 = vand.u32 %v1576, 2147483648
        %v1589 = vor.u32 1.1754944e-38, %v1588
        %v1590 = vsel %vm1587, %v1589, %v1585
        %v1591 = vmul.f32 1.0, %v1590
        %1592 = vst [vmem:[%s258] sm:$0xff] %v1591
      $region40: #{fwd.9} parent=31 // pred_fallthru
        _
      %p1593 = scmp.lt.s32.totalorder %s19, 0
      %s1594 = scalar_select %p1593, %s19, 0
      %p1595 = scmp.lt.s32.totalorder %s20, 0
      %s1596 = scalar_select %p1595, %s20, 0
      %s1597 = sadd.s32 %s1596, %s1594
      %s1598 = smul.addr %s1597, 8
      %s1599 = scalar_lea.vmem %s3, %s1598
      // Predicated region
      $region41: #{fwd.9} parent=31 // pred_check
        %p1600 = pneg %p135
      $region42: #{fwd.9} parent=31 // pred_check_branch
        %1602 = sbr.rel (%p1600) target = $region44
      $region43: #{fwd.9} parent=31 // pred_region
        _
      $region44: #{fwd.9} parent=31 // pred_fallthru
        _
      // Predicated region
      $region45: #{fwd.9} parent=31 // pred_check
        %p1603 = pneg %p135
      $region46: #{fwd.9} parent=31 // pred_check_branch
        %1605 = sbr.rel (%p1603) target = $region48
      $region47: #{fwd.9} parent=31 // pred_region
        %p1606 = scmp.lt.s32.totalorder %s19, 0
        %s1607 = scalar_select %p1606, %s19, 0
        %p1608 = scmp.lt.s32.totalorder %s20, 0
        %s1609 = scalar_select %p1608, %s20, 0
        %s1610 = sadd.s32 %s1609, %s1607
        %s1611 = smul.addr %s1610, 8
        %s1612 = scalar_lea.vmem %s3, %s1611
      $region48: #{fwd.9} parent=31 // pred_fallthru
        _
    $region32: #{fwd.9} parent=5 // pred_fallthru
      _
    %p1613 = scmp.le.s32.totalorder 2, %s9
    // Predicated region
    $region49: #{fwd.9} parent=5 // pred_check
      %p1614 = pneg %p1613
    $region50: #{fwd.9} parent=5 // pred_check_branch
      %1616 = sbr.rel (%p1614) target = $region52
    $region51: #{fwd.9} parent=5 // pred_region
      %s1617 = ssub.s32 %s9, 2
    $region52: #{fwd.9} parent=5 // pred_fallthru
      _
  $region6: #{fwd.9} parent=0 // loop_footer
    %s13 = sadd.s32 1, %s9
  $region7: #{fwd.9} parent=0 // loop_footer_branch
    %8 = sbr.rel target = $region3
  $region8: #{fwd.9} parent=0 // loop_exit
    _

// kernel: fwd.8
$region0: #{fwd.8}
  #allocation0 [shape = 'u32[]', space=smem, size = 0x4, offset = 0x4, fixed_abs, tag = 'smem constant byte address 0x4 - core index']
  #allocation1 [shape = 'u32[72,128]{1,0:T(1,128)}', space=vmem, size = 0x9000, scoped, tag = 'internal scratch']
  #allocation2 [shape = 'f32[16,512]{1,0:T(8,128)}', space=vmem, size = 0x8000, scoped, tag = 'scratch operand']
  %s0 = inlined_call_operand.vmem [shape: bf16[2,16,4096], index: 0, kind: input, shape index: {}]
  %s1 = inlined_call_operand.vmem [shape: bf16[4096,512], index: 1, kind: input, shape index: {}]
  %s2 = inlined_call_operand.vmem [shape: bf16[2,16,512], index: 2, kind: output, shape index: {}]
  %s3 = sld [smem:[#allocation0]]
  $region72: #{fwd.8} parent=0
    _
  %s5 = ssub.s32 1, %s3
  %s6 = scalar_select 0, %s5, %s3
  $region1: #{fwd.8} parent=0
    #allocation3 [shape = 'u8[131072]{0}', space=vmem, size = 0x20000, scoped, tag = 'input window, operand 0']
    loop: start=0, step=1, limit=6
    $region2: #{fwd.8} parent=1 // loop_pre_header
      _
    $region3: #{fwd.8} parent=1 // loop_header
      %s8 = sphi 0, %s12
      %p9 = scmp.ge.s32.totalorder %s8, 6
      %s15 = sphi 0, %s34
      %s16 = sphi 0, %s30
      %s17 = sphi 0, %s26
      %s18 = sphi 0, %s15
      %s19 = sphi 0, %s16
      %s20 = sphi 0, %s17
      %s21 = sphi 0, %s18
      %s22 = sphi 0, %s19
      %s23 = sphi 0, %s20
      %s39 = sphi 0, %s41
      %s42 = sphi 0, %s39
      %s43 = sphi 0, %s42
      %s59 = sphi 0, %s43
      %s67 = sphi 0, %s69
      %s70 = sphi 0, %s67
      %s71 = sphi 0, %s70
      %s87 = sphi 0, %s71
      %s95 = sphi 0, %s97
      %s98 = sphi 0, %s95
      %s99 = sphi 0, %s98
      %s115 = sphi 0, %s99
    $region4: #{fwd.8} parent=1 // loop_header_branch
      %11 = sbr.rel (%p9) target = $region8
    $region5: #{fwd.8} parent=1 // loop_body
      %s13 = ssub.s32 %s8, 1
      %s14 = ssub.s32 %s8, 2
      %s24 = sadd.s32 1, %s17
      %p25 = scmp.ge.s32.totalorder %s24, 2
      %s26 = scalar_select %p25, 0, %s24
      %s27 = sadd.s32 1, %s16
      %s28 = scalar_select %p25, %s27, %s16
      %p29 = scmp.ge.s32.totalorder %s28, 1
      %s30 = scalar_select %p29, 0, %s28
      %s31 = sadd.s32 1, %s15
      %s32 = scalar_select %p29, %s31, %s15
      %p33 = scmp.ge.s32.totalorder %s32, 2
      %s34 = scalar_select %p33, 0, %s32
      %s35 = ssub.s32 %s15, %s34
      %s36 = ssub.s32 %s17, %s26
      %s37 = sor.u32 %s35, %s36
      %p38 = scmp.eq.s32.totalorder %s37, 0
      %s40 = sadd.s32 %s39, 1
      %s41 = scalar_select %p38, %s39, %s40
      %p44 = pneg %p38
      %p45 = scmp.eq.s32.totalorder %s8, 3
      %p46 = por %p44, %p45
      %p47 = scmp.ne.s32.totalorder %s39, %s42
      %p48 = scmp.eq.s32.totalorder %s8, 0
      %p49 = por %p47, %p48
      %p50 = scmp.ne.s32.totalorder %s39, %s42
      %p51 = scmp.eq.s32.totalorder %s13, 3
      %p52 = por %p50, %p51
      %p53 = scmp.ne.s32.totalorder %s42, %s43
      %p54 = scmp.eq.s32.totalorder %s13, 0
      %p55 = por %p53, %p54
      %p56 = scmp.ne.s32.totalorder %s42, %s43
      %p57 = scmp.eq.s32.totalorder %s14, 3
      %p58 = por %p56, %p57
      %p60 = scmp.ne.s32.totalorder %s43, %s59
      %p61 = scmp.eq.s32.totalorder %s14, 0
      %p62 = por %p60, %p61
      %s63 = ssub.s32 %s17, %s26
      %s64 = ssub.s32 %s16, %s30
      %s65 = sor.u32 %s63, %s64
      %p66 = scmp.eq.s32.totalorder %s65, 0
      %s68 = sadd.s32 %s67, 1
      %s69 = scalar_select %p66, %s67, %s68
      %p72 = pneg %p66
      %p73 = scmp.eq.s32.totalorder %s8, 3
      %p74 = por %p72, %p73
      %p75 = scmp.ne.s32.totalorder %s67, %s70
      %p76 = scmp.eq.s32.totalorder %s8, 0
      %p77 = por %p75, %p76
      %p78 = scmp.ne.s32.totalorder %s67, %s70
      %p79 = scmp.eq.s32.totalorder %s13, 3
      %p80 = por %p78, %p79
      %p81 = scmp.ne.s32.totalorder %s70, %s71
      %p82 = scmp.eq.s32.totalorder %s13, 0
      %p83 = por %p81, %p82
      %p84 = scmp.ne.s32.totalorder %s70, %s71
      %p85 = scmp.eq.s32.totalorder %s14, 3
      %p86 = por %p84, %p85
      %p88 = scmp.ne.s32.totalorder %s71, %s87
      %p89 = scmp.eq.s32.totalorder %s14, 0
      %p90 = por %p88, %p89
      %s91 = ssub.s32 %s15, %s34
      %s92 = ssub.s32 %s16, %s30
      %s93 = sor.u32 %s91, %s92
      %p94 = scmp.eq.s32.totalorder %s93, 0
      %s96 = sadd.s32 %s95, 1
      %s97 = scalar_select %p94, %s95, %s96
      %p100 = pneg %p94
      %p101 = scmp.eq.s32.totalorder %s8, 3
      %p102 = por %p100, %p101
      %p103 = scmp.ne.s32.totalorder %s95, %s98
      %p104 = scmp.eq.s32.totalorder %s8, 0
      %p105 = por %p103, %p104
      %p106 = scmp.ne.s32.totalorder %s95, %s98
      %p107 = scmp.eq.s32.totalorder %s13, 3
      %p108 = por %p106, %p107
      %p109 = scmp.ne.s32.totalorder %s98, %s99
      %p110 = scmp.eq.s32.totalorder %s13, 0
      %p111 = por %p109, %p110
      %p112 = scmp.ne.s32.totalorder %s98, %s99
      %p113 = scmp.eq.s32.totalorder %s14, 3
      %p114 = por %p112, %p113
      %p116 = scmp.ne.s32.totalorder %s99, %s115
      %p117 = scmp.eq.s32.totalorder %s14, 0
      %p118 = por %p116, %p117
      %p119 = scmp.le.s32.totalorder 1, %s8
      %p120 = scmp.lt.s32.totalorder %s8, 5
      %p121 = pnand %p119, %p120
      %p122 = pneg %p121
      // Predicated region
      $region9: #{fwd.8} parent=5 // pred_check
        _
      $region10: #{fwd.8} parent=5 // pred_check_branch
        %124 = sbr.rel (%p121) target = $region12
      $region11: #{fwd.8} parent=5 // pred_region
        %s125 = ssub.s32 %s8, 1
      $region12: #{fwd.8} parent=5 // pred_fallthru
        _
      %p126 = scmp.lt.s32.totalorder %s8, 4
      // Predicated region
      $region13: #{fwd.8} parent=5 // pred_check
        %p127 = pneg %p126
      $region14: #{fwd.8} parent=5 // pred_check_branch
        %129 = sbr.rel (%p127) target = $region16
      $region15: #{fwd.8} parent=5 // pred_region
        // Predicated region
        $region17: #{fwd.8} parent=15 // pred_check
          %p130 = pneg %p49
        $region18: #{fwd.8} parent=15 // pred_check_branch
          %132 = sbr.rel (%p130) target = $region20
        $region19: #{fwd.8} parent=15 // pred_region
          %s133 = sand.u32 %s39, 1
          %s134 = sand.u32 %s39, 1
          %s135 = smul.addr %s134, 128
          %s136 = scalar_lea.vmem [#allocation3], %s135
          %s137 = smul.u32 16, %s17
          %s138 = smul.addr %s15, 64
          %s139 = sadd.s32 %s137, %s138
          %s140 = smul.addr %s139, 4
          %s141 = scalar_lea.vmem %s0, %s140
          // Predicated region
          $region21: #{fwd.8} parent=19 // pred_check
            _
          $region22: #{fwd.8} parent=19 // pred_check_branch
            %143 = sbr.rel (0) target = $region24
          $region23: #{fwd.8} parent=19 // pred_region
            // Predicated region
            $region25: #{fwd.8} parent=23 // pred_check
              _
            $region26: #{fwd.8} parent=23 // pred_check_branch
              %145 = sbr.rel (0) target = $region28
            $region27: #{fwd.8} parent=23 // pred_region
              loop: start=0, step=1, limit=1
              $region29: #{fwd.8} parent=27 // loop_pre_header
                _
              $region30: #{fwd.8} parent=27 // loop_header
                %s147 = sphi 0, %s151
                %p148 = scmp.ge.s32.totalorder %s147, 1
                %s152 = sphi %s141, %s141
                %s153 = sphi %s136, %s136
              $region31: #{fwd.8} parent=27 // loop_header_branch
                %150 = sbr.rel (%p148) target = $region35
              $region32: #{fwd.8} parent=27 // loop_body
                %v154 = vld [vmem:[%s152] sm:$0xff]
                %155 = vst [vmem:[%s153] sm:$0xff] %v154
                %v156 = vld [vmem:[%s152 + $0x8] sm:$0xff]
                %157 = vst [vmem:[%s153 + $0x8] sm:$0xff] %v156
                %v158 = vld [vmem:[%s152 + $0x10] sm:$0xff]
                %159 = vst [vmem:[%s153 + $0x10] sm:$0xff] %v158
                %v160 = vld [vmem:[%s152 + $0x18] sm:$0xff]
                %161 = vst [vmem:[%s153 + $0x18] sm:$0xff] %v160
                %v162 = vld [vmem:[%s152 + $0x20] sm:$0xff]
                %163 = vst [vmem:[%s153 + $0x20] sm:$0xff] %v162
                %v164 = vld [vmem:[%s152 + $0x28] sm:$0xff]
                %165 = vst [vmem:[%s153 + $0x28] sm:$0xff] %v164
                %v166 = vld [vmem:[%s152 + $0x30] sm:$0xff]
                %167 = vst [vmem:[%s153 + $0x30] sm:$0xff] %v166
                %v168 = vld [vmem:[%s152 + $0x38] sm:$0xff]
                %169 = vst [vmem:[%s153 + $0x38] sm:$0xff] %v168
                %v170 = vld [vmem:[%s152 + $0x80] sm:$0xff]
                %171 = vst [vmem:[%s153 + $0x40] sm:$0xff] %v170
                %v172 = vld [vmem:[%s152 + $0x88] sm:$0xff]
                %173 = vst [vmem:[%s153 + $0x48] sm:$0xff] %v172
                %v174 = vld [vmem:[%s152 + $0x90] sm:$0xff]
                %175 = vst [vmem:[%s153 + $0x50] sm:$0xff] %v174
                %v176 = vld [vmem:[%s152 + $0x98] sm:$0xff]
                %177 = vst [vmem:[%s153 + $0x58] sm:$0xff] %v176
                %v178 = vld [vmem:[%s152 + $0xa0] sm:$0xff]
                %179 = vst [vmem:[%s153 + $0x60] sm:$0xff] %v178
                %v180 = vld [vmem:[%s152 + $0xa8] sm:$0xff]
                %181 = vst [vmem:[%s153 + $0x68] sm:$0xff] %v180
                %v182 = vld [vmem:[%s152 + $0xb0] sm:$0xff]
                %183 = vst [vmem:[%s153 + $0x70] sm:$0xff] %v182
                %v184 = vld [vmem:[%s152 + $0xb8] sm:$0xff]
                %185 = vst [vmem:[%s153 + $0x78] sm:$0xff] %v184
              $region33: #{fwd.8} parent=27 // loop_footer
                %s151 = sadd.s32 1, %s147
              $region34: #{fwd.8} parent=27 // loop_footer_branch
                %146 = sbr.rel target = $region30
              $region35: #{fwd.8} parent=27 // loop_exit
                _
            $region28: #{fwd.8} parent=23 // pred_fallthru
              _
            // Predicated region
            $region36: #{fwd.8} parent=23 // pred_check
              _
            $region37: #{fwd.8} parent=23 // pred_check_branch
              %187 = sbr.rel target = $region39
            $region38: #{fwd.8} parent=23 // pred_region
              _
            $region39: #{fwd.8} parent=23 // pred_fallthru
              _
          $region24: #{fwd.8} parent=19 // pred_fallthru
            _
          %188 = vnop
        $region20: #{fwd.8} parent=15 // pred_fallthru
          _
        // Predicated region
        $region40: #{fwd.8} parent=15 // pred_check
          %p189 = pneg %p77
        $region41: #{fwd.8} parent=15 // pred_check_branch
          %191 = sbr.rel (%p189) target = $region43
        $region42: #{fwd.8} parent=15 // pred_region
          %s192 = smul.u32 256, %s17
          %s193 = smul.u32 4, %s16
          %p194 = scmp.lt.s32.totalorder %s192, 511
          %s195 = scalar_select %p194, %s192, 511
          %p196 = scmp.lt.s32.totalorder %s193, 3
          %s197 = scalar_select %p196, %s193, 3
          %s198 = smul.addr %s195, 4
          %s199 = sadd.s32 %s197, %s198
          %s200 = smul.addr %s199, 4
          %s201 = scalar_lea.vmem %s1, %s200
          %s202 = smul.u32 256, %s17
          %s203 = smul.u32 4, %s16
        $region43: #{fwd.8} parent=15 // pred_fallthru
          _
      $region16: #{fwd.8} parent=5 // pred_fallthru
        _
      %p204 = scmp.le.s32.totalorder 1, %s8
      %p205 = scmp.lt.s32.totalorder %s8, 5
      %p206 = pnand %p204, %p205
      %p207 = pneg %p206
      // Predicated region
      $region44: #{fwd.8} parent=5 // pred_check
        _
      $region45: #{fwd.8} parent=5 // pred_check_branch
        %209 = sbr.rel (%p206) target = $region47
      $region46: #{fwd.8} parent=5 // pred_region
        %s210 = ssub.s32 %s8, 1
        %s211 = sand.u32 %s42, 1
        %s212 = sand.u32 %s42, 1
        %s213 = smul.addr %s212, 128
        %s214 = scalar_lea.vmem [#allocation3], %s213
        // Predicated region
        $region48: #{fwd.8} parent=46 // pred_check
          %p215 = pneg %p55
        $region49: #{fwd.8} parent=46 // pred_check_branch
          %217 = sbr.rel (%p215) target = $region51
        $region50: #{fwd.8} parent=46 // pred_region
          _
        $region51: #{fwd.8} parent=46 // pred_fallthru
          _
        %s218 = sand.u32 %s42, 1
        %s219 = sand.u32 %s42, 1
        %s220 = smul.addr %s219, 128
        %s221 = scalar_lea.vmem [#allocation3], %s220
        %p222 = pneg %p55
        %p223 = pneg %p52
        %s224 = smul.u32 256, %s20
        %s225 = smul.u32 4, %s19
        %p226 = scmp.lt.s32.totalorder %s224, 511
        %s227 = scalar_select %p226, %s224, 511
        %p228 = scmp.lt.s32.totalorder %s225, 3
        %s229 = scalar_select %p228, %s225, 3
        %s230 = smul.addr %s227, 4
        %s231 = sadd.s32 %s229, %s230
        %s232 = smul.addr %s231, 4
        %s233 = scalar_lea.vmem %s1, %s232
        %p234 = pneg %p83
        %p235 = pneg %p80
        %p236 = pneg %p111
        %p237 = pneg %p108
        %s238 = smul.u32 4, %s19
        %p239 = scmp.lt.s32.totalorder %s18, 1
        %s240 = scalar_select %p239, %s18, 1
        %p241 = scmp.lt.s32.totalorder %s238, 3
        %s242 = scalar_select %p241, %s238, 3
        %s243 = smul.addr %s240, 8
        %s244 = sadd.s32 %s242, %s243
        %s245 = smul.addr %s244, 4
        %s246 = scalar_lea.vmem %s2, %s245
        %s247 = smul.u32 16, %s20
        %s248 = smul.u32 256, %s20
        %s249 = smul.u32 4, %s19
        %p250 = scmp.lt.s32.totalorder %s248, 511
        %s251 = scalar_select %p250, %s248, 511
        %p252 = scmp.lt.s32.totalorder %s249, 3
        %s253 = scalar_select %p252, %s249, 3
        %s254 = smul.addr %s251, 4
        %s255 = sadd.s32 %s253, %s254
        %s256 = smul.addr %s255, 4
        %s257 = scalar_lea.vmem %s1, %s256
        %s258 = smul.u32 256, %s20
        %s259 = smul.u32 4, %s19
        %s260 = smul.u32 4, %s19
        %p261 = scmp.lt.s32.totalorder %s18, 1
        %s262 = scalar_select %p261, %s18, 1
        %p263 = scmp.lt.s32.totalorder %s260, 3
        %s264 = scalar_select %p263, %s260, 3
        %s265 = smul.addr %s262, 8
        %s266 = sadd.s32 %s264, %s265
        %s267 = smul.addr %s266, 4
        %s268 = scalar_lea.vmem %s2, %s267
        %s269 = smul.u32 4, %s19
        %p270 = scmp.eq.s32.totalorder %s20, 0
        // Predicated region
        $region52: #{fwd.8} parent=46 // pred_check
          %p271 = pneg %p270
        $region53: #{fwd.8} parent=46 // pred_check_branch
          %273 = sbr.rel (%p271) target = $region55
        $region54: #{fwd.8} parent=46 // pred_region
          %274 = vst [vmem:[#allocation2] sm:$0xff] 0.0
          %275 = vst [vmem:[#allocation2 + $0x8] sm:$0xff] 0.0
          %276 = vst [vmem:[#allocation2 + $0x10] sm:$0xff] 0.0
          %277 = vst [vmem:[#allocation2 + $0x18] sm:$0xff] 0.0
          %278 = vst [vmem:[#allocation2 + $0x20] sm:$0xff] 0.0
          %279 = vst [vmem:[#allocation2 + $0x28] sm:$0xff] 0.0
          %280 = vst [vmem:[#allocation2 + $0x30] sm:$0xff] 0.0
          %281 = vst [vmem:[#allocation2 + $0x38] sm:$0xff] 0.0
        $region55: #{fwd.8} parent=46 // pred_fallthru
          _
        %v282 = vld [vmem:[#allocation2] sm:$0xff]
        %v283 = vld [vmem:[#allocation2 + $0x8] sm:$0xff]
        %v284 = vld [vmem:[#allocation2 + $0x10] sm:$0xff]
        %v285 = vld [vmem:[#allocation2 + $0x18] sm:$0xff]
        %v286 = vld [vmem:[#allocation2 + $0x20] sm:$0xff]
        %v287 = vld [vmem:[#allocation2 + $0x28] sm:$0xff]
        %v288 = vld [vmem:[#allocation2 + $0x30] sm:$0xff]
        %v289 = vld [vmem:[#allocation2 + $0x38] sm:$0xff]
        %v290 = vld [vmem:[%s214] sm:$0xff]
        %v291 = vld [vmem:[%s214 + $0x8] sm:$0xff]
        %v292 = vld [vmem:[%s214 + $0x10] sm:$0xff]
        %v293 = vld [vmem:[%s214 + $0x18] sm:$0xff]
        %v294 = vld [vmem:[%s214 + $0x20] sm:$0xff]
        %v295 = vld [vmem:[%s214 + $0x28] sm:$0xff]
        %v296 = vld [vmem:[%s214 + $0x30] sm:$0xff]
        %v297 = vld [vmem:[%s214 + $0x38] sm:$0xff]
        %v298 = vld [vmem:[%s214 + $0x40] sm:$0xff]
        %v299 = vld [vmem:[%s214 + $0x48] sm:$0xff]
        %v300 = vld [vmem:[%s214 + $0x50] sm:$0xff]
        %v301 = vld [vmem:[%s214 + $0x58] sm:$0xff]
        %v302 = vld [vmem:[%s214 + $0x60] sm:$0xff]
        %v303 = vld [vmem:[%s214 + $0x68] sm:$0xff]
        %v304 = vld [vmem:[%s214 + $0x70] sm:$0xff]
        %v305 = vld [vmem:[%s214 + $0x78] sm:$0xff]
        %v306 = vld [vmem:[%s257] sm:$0xff]
        %v307 = vld [vmem:[%s257 + $0x8] sm:$0xff]
        %v308 = vld [vmem:[%s257 + $0x10] sm:$0xff]
        %v309 = vld [vmem:[%s257 + $0x18] sm:$0xff]
        %v310 = vld [vmem:[%s257 + $0x20] sm:$0xff]
        %v311 = vld [vmem:[%s257 + $0x28] sm:$0xff]
        %v312 = vld [vmem:[%s257 + $0x30] sm:$0xff]
        %v313 = vld [vmem:[%s257 + $0x38] sm:$0xff]
        %v314 = vld [vmem:[%s257 + $0x40] sm:$0xff]
        %v315 = vld [vmem:[%s257 + $0x48] sm:$0xff]
        %v316 = vld [vmem:[%s257 + $0x50] sm:$0xff]
        %v317 = vld [vmem:[%s257 + $0x58] sm:$0xff]
        %v318 = vld [vmem:[%s257 + $0x60] sm:$0xff]
        %v319 = vld [vmem:[%s257 + $0x68] sm:$0xff]
        %v320 = vld [vmem:[%s257 + $0x70] sm:$0xff]
        %v321 = vld [vmem:[%s257 + $0x78] sm:$0xff]
        %v322 = vld [vmem:[%s257 + $0x80] sm:$0xff]
        %v323 = vld [vmem:[%s257 + $0x88] sm:$0xff]
        %v324 = vld [vmem:[%s257 + $0x90] sm:$0xff]
        %v325 = vld [vmem:[%s257 + $0x98] sm:$0xff]
        %v326 = vld [vmem:[%s257 + $0xa0] sm:$0xff]
        %v327 = vld [vmem:[%s257 + $0xa8] sm:$0xff]
        %v328 = vld [vmem:[%s257 + $0xb0] sm:$0xff]
        %v329 = vld [vmem:[%s257 + $0xb8] sm:$0xff]
        %v330 = vld [vmem:[%s257 + $0xc0] sm:$0xff]
        %v331 = vld [vmem:[%s257 + $0xc8] sm:$0xff]
        %v332 = vld [vmem:[%s257 + $0xd0] sm:$0xff]
        %v333 = vld [vmem:[%s257 + $0xd8] sm:$0xff]
        %v334 = vld [vmem:[%s257 + $0xe0] sm:$0xff]
        %v335 = vld [vmem:[%s257 + $0xe8] sm:$0xff]
        %v336 = vld [vmem:[%s257 + $0xf0] sm:$0xff]
        %v337 = vld [vmem:[%s257 + $0xf8] sm:$0xff]
        %v338 = vld [vmem:[%s257 + $0x100] sm:$0xff]
        %v339 = vld [vmem:[%s257 + $0x108] sm:$0xff]
        %v340 = vld [vmem:[%s257 + $0x110] sm:$0xff]
        %v341 = vld [vmem:[%s257 + $0x118] sm:$0xff]
        %v342 = vld [vmem:[%s257 + $0x120] sm:$0xff]
        %v343 = vld [vmem:[%s257 + $0x128] sm:$0xff]
        %v344 = vld [vmem:[%s257 + $0x130] sm:$0xff]
        %v345 = vld [vmem:[%s257 + $0x138] sm:$0xff]
        %v346 = vld [vmem:[%s257 + $0x140] sm:$0xff]
        %v347 = vld [vmem:[%s257 + $0x148] sm:$0xff]
        %v348 = vld [vmem:[%s257 + $0x150] sm:$0xff]
        %v349 = vld [vmem:[%s257 + $0x158] sm:$0xff]
        %v350 = vld [vmem:[%s257 + $0x160] sm:$0xff]
        %v351 = vld [vmem:[%s257 + $0x168] sm:$0xff]
        %v352 = vld [vmem:[%s257 + $0x170] sm:$0xff]
        %v353 = vld [vmem:[%s257 + $0x178] sm:$0xff]
        %v354 = vld [vmem:[%s257 + $0x180] sm:$0xff]
        %v355 = vld [vmem:[%s257 + $0x188] sm:$0xff]
        %v356 = vld [vmem:[%s257 + $0x190] sm:$0xff]
        %v357 = vld [vmem:[%s257 + $0x198] sm:$0xff]
        %v358 = vld [vmem:[%s257 + $0x1a0] sm:$0xff]
        %v359 = vld [vmem:[%s257 + $0x1a8] sm:$0xff]
        %v360 = vld [vmem:[%s257 + $0x1b0] sm:$0xff]
        %v361 = vld [vmem:[%s257 + $0x1b8] sm:$0xff]
        %v362 = vld [vmem:[%s257 + $0x1c0] sm:$0xff]
        %v363 = vld [vmem:[%s257 + $0x1c8] sm:$0xff]
        %v364 = vld [vmem:[%s257 + $0x1d0] sm:$0xff]
        %v365 = vld [vmem:[%s257 + $0x1d8] sm:$0xff]
        %v366 = vld [vmem:[%s257 + $0x1e0] sm:$0xff]
        %v367 = vld [vmem:[%s257 + $0x1e8] sm:$0xff]
        %v368 = vld [vmem:[%s257 + $0x1f0] sm:$0xff]
        %v369 = vld [vmem:[%s257 + $0x1f8] sm:$0xff]
        %v370 = vld [vmem:[%s257 + $0x200] sm:$0xff]
        %v371 = vld [vmem:[%s257 + $0x208] sm:$0xff]
        %v372 = vld [vmem:[%s257 + $0x210] sm:$0xff]
        %v373 = vld [vmem:[%s257 + $0x218] sm:$0xff]
        %v374 = vld [vmem:[%s257 + $0x220] sm:$0xff]
        %v375 = vld [vmem:[%s257 + $0x228] sm:$0xff]
        %v376 = vld [vmem:[%s257 + $0x230] sm:$0xff]
        %v377 = vld [vmem:[%s257 + $0x238] sm:$0xff]
        %v378 = vld [vmem:[%s257 + $0x240] sm:$0xff]
        %v379 = vld [vmem:[%s257 + $0x248] sm:$0xff]
        %v380 = vld [vmem:[%s257 + $0x250] sm:$0xff]
        %v381 = vld [vmem:[%s257 + $0x258] sm:$0xff]
        %v382 = vld [vmem:[%s257 + $0x260] sm:$0xff]
        %v383 = vld [vmem:[%s257 + $0x268] sm:$0xff]
        %v384 = vld [vmem:[%s257 + $0x270] sm:$0xff]
        %v385 = vld [vmem:[%s257 + $0x278] sm:$0xff]
        %v386 = vld [vmem:[%s257 + $0x280] sm:$0xff]
        %v387 = vld [vmem:[%s257 + $0x288] sm:$0xff]
        %v388 = vld [vmem:[%s257 + $0x290] sm:$0xff]
        %v389 = vld [vmem:[%s257 + $0x298] sm:$0xff]
        %v390 = vld [vmem:[%s257 + $0x2a0] sm:$0xff]
        %v391 = vld [vmem:[%s257 + $0x2a8] sm:$0xff]
        %v392 = vld [vmem:[%s257 + $0x2b0] sm:$0xff]
        %v393 = vld [vmem:[%s257 + $0x2b8] sm:$0xff]
        %v394 = vld [vmem:[%s257 + $0x2c0] sm:$0xff]
        %v395 = vld [vmem:[%s257 + $0x2c8] sm:$0xff]
        %v396 = vld [vmem:[%s257 + $0x2d0] sm:$0xff]
        %v397 = vld [vmem:[%s257 + $0x2d8] sm:$0xff]
        %v398 = vld [vmem:[%s257 + $0x2e0] sm:$0xff]
        %v399 = vld [vmem:[%s257 + $0x2e8] sm:$0xff]
        %v400 = vld [vmem:[%s257 + $0x2f0] sm:$0xff]
        %v401 = vld [vmem:[%s257 + $0x2f8] sm:$0xff]
        %v402 = vld [vmem:[%s257 + $0x300] sm:$0xff]
        %v403 = vld [vmem:[%s257 + $0x308] sm:$0xff]
        %v404 = vld [vmem:[%s257 + $0x310] sm:$0xff]
        %v405 = vld [vmem:[%s257 + $0x318] sm:$0xff]
        %v406 = vld [vmem:[%s257 + $0x320] sm:$0xff]
        %v407 = vld [vmem:[%s257 + $0x328] sm:$0xff]
        %v408 = vld [vmem:[%s257 + $0x330] sm:$0xff]
        %v409 = vld [vmem:[%s257 + $0x338] sm:$0xff]
        %v410 = vld [vmem:[%s257 + $0x340] sm:$0xff]
        %v411 = vld [vmem:[%s257 + $0x348] sm:$0xff]
        %v412 = vld [vmem:[%s257 + $0x350] sm:$0xff]
        %v413 = vld [vmem:[%s257 + $0x358] sm:$0xff]
        %v414 = vld [vmem:[%s257 + $0x360] sm:$0xff]
        %v415 = vld [vmem:[%s257 + $0x368] sm:$0xff]
        %v416 = vld [vmem:[%s257 + $0x370] sm:$0xff]
        %v417 = vld [vmem:[%s257 + $0x378] sm:$0xff]
        %v418 = vld [vmem:[%s257 + $0x380] sm:$0xff]
        %v419 = vld [vmem:[%s257 + $0x388] sm:$0xff]
        %v420 = vld [vmem:[%s257 + $0x390] sm:$0xff]
        %v421 = vld [vmem:[%s257 + $0x398] sm:$0xff]
        %v422 = vld [vmem:[%s257 + $0x3a0] sm:$0xff]
        %v423 = vld [vmem:[%s257 + $0x3a8] sm:$0xff]
        %v424 = vld [vmem:[%s257 + $0x3b0] sm:$0xff]
        %v425 = vld [vmem:[%s257 + $0x3b8] sm:$0xff]
        %v426 = vld [vmem:[%s257 + $0x3c0] sm:$0xff]
        %v427 = vld [vmem:[%s257 + $0x3c8] sm:$0xff]
        %v428 = vld [vmem:[%s257 + $0x3d0] sm:$0xff]
        %v429 = vld [vmem:[%s257 + $0x3d8] sm:$0xff]
        %v430 = vld [vmem:[%s257 + $0x3e0] sm:$0xff]
        %v431 = vld [vmem:[%s257 + $0x3e8] sm:$0xff]
        %v432 = vld [vmem:[%s257 + $0x3f0] sm:$0xff]
        %v433 = vld [vmem:[%s257 + $0x3f8] sm:$0xff]
        %v434 = vld [vmem:[%s257 + $0x400] sm:$0xff]
        %v435 = vld [vmem:[%s257 + $0x408] sm:$0xff]
        %v436 = vld [vmem:[%s257 + $0x410] sm:$0xff]
        %v437 = vld [vmem:[%s257 + $0x418] sm:$0xff]
        %v438 = vld [vmem:[%s257 + $0x420] sm:$0xff]
        %v439 = vld [vmem:[%s257 + $0x428] sm:$0xff]
        %v440 = vld [vmem:[%s257 + $0x430] sm:$0xff]
        %v441 = vld [vmem:[%s257 + $0x438] sm:$0xff]
        %v442 = vld [vmem:[%s257 + $0x440] sm:$0xff]
        %v443 = vld [vmem:[%s257 + $0x448] sm:$0xff]
        %v444 = vld [vmem:[%s257 + $0x450] sm:$0xff]
        %v445 = vld [vmem:[%s257 + $0x458] sm:$0xff]
        %v446 = vld [vmem:[%s257 + $0x460] sm:$0xff]
        %v447 = vld [vmem:[%s257 + $0x468] sm:$0xff]
        %v448 = vld [vmem:[%s257 + $0x470] sm:$0xff]
        %v449 = vld [vmem:[%s257 + $0x478] sm:$0xff]
        %v450 = vld [vmem:[%s257 + $0x480] sm:$0xff]
        %v451 = vld [vmem:[%s257 + $0x488] sm:$0xff]
        %v452 = vld [vmem:[%s257 + $0x490] sm:$0xff]
        %v453 = vld [vmem:[%s257 + $0x498] sm:$0xff]
        %v454 = vld [vmem:[%s257 + $0x4a0] sm:$0xff]
        %v455 = vld [vmem:[%s257 + $0x4a8] sm:$0xff]
        %v456 = vld [vmem:[%s257 + $0x4b0] sm:$0xff]
        %v457 = vld [vmem:[%s257 + $0x4b8] sm:$0xff]
        %v458 = vld [vmem:[%s257 + $0x4c0] sm:$0xff]
        %v459 = vld [vmem:[%s257 + $0x4c8] sm:$0xff]
        %v460 = vld [vmem:[%s257 + $0x4d0] sm:$0xff]
        %v461 = vld [vmem:[%s257 + $0x4d8] sm:$0xff]
        %v462 = vld [vmem:[%s257 + $0x4e0] sm:$0xff]
        %v463 = vld [vmem:[%s257 + $0x4e8] sm:$0xff]
        %v464 = vld [vmem:[%s257 + $0x4f0] sm:$0xff]
        %v465 = vld [vmem:[%s257 + $0x4f8] sm:$0xff]
        %v466 = vld [vmem:[%s257 + $0x500] sm:$0xff]
        %v467 = vld [vmem:[%s257 + $0x508] sm:$0xff]
        %v468 = vld [vmem:[%s257 + $0x510] sm:$0xff]
        %v469 = vld [vmem:[%s257 + $0x518] sm:$0xff]
        %v470 = vld [vmem:[%s257 + $0x520] sm:$0xff]
        %v471 = vld [vmem:[%s257 + $0x528] sm:$0xff]
        %v472 = vld [vmem:[%s257 + $0x530] sm:$0xff]
        %v473 = vld [vmem:[%s257 + $0x538] sm:$0xff]
        %v474 = vld [vmem:[%s257 + $0x540] sm:$0xff]
        %v475 = vld [vmem:[%s257 + $0x548] sm:$0xff]
        %v476 = vld [vmem:[%s257 + $0x550] sm:$0xff]
        %v477 = vld [vmem:[%s257 + $0x558] sm:$0xff]
        %v478 = vld [vmem:[%s257 + $0x560] sm:$0xff]
        %v479 = vld [vmem:[%s257 + $0x568] sm:$0xff]
        %v480 = vld [vmem:[%s257 + $0x570] sm:$0xff]
        %v481 = vld [vmem:[%s257 + $0x578] sm:$0xff]
        %v482 = vld [vmem:[%s257 + $0x580] sm:$0xff]
        %v483 = vld [vmem:[%s257 + $0x588] sm:$0xff]
        %v484 = vld [vmem:[%s257 + $0x590] sm:$0xff]
        %v485 = vld [vmem:[%s257 + $0x598] sm:$0xff]
        %v486 = vld [vmem:[%s257 + $0x5a0] sm:$0xff]
        %v487 = vld [vmem:[%s257 + $0x5a8] sm:$0xff]
        %v488 = vld [vmem:[%s257 + $0x5b0] sm:$0xff]
        %v489 = vld [vmem:[%s257 + $0x5b8] sm:$0xff]
        %v490 = vld [vmem:[%s257 + $0x5c0] sm:$0xff]
        %v491 = vld [vmem:[%s257 + $0x5c8] sm:$0xff]
        %v492 = vld [vmem:[%s257 + $0x5d0] sm:$0xff]
        %v493 = vld [vmem:[%s257 + $0x5d8] sm:$0xff]
        %v494 = vld [vmem:[%s257 + $0x5e0] sm:$0xff]
        %v495 = vld [vmem:[%s257 + $0x5e8] sm:$0xff]
        %v496 = vld [vmem:[%s257 + $0x5f0] sm:$0xff]
        %v497 = vld [vmem:[%s257 + $0x5f8] sm:$0xff]
        %v498 = vld [vmem:[%s257 + $0x600] sm:$0xff]
        %v499 = vld [vmem:[%s257 + $0x608] sm:$0xff]
        %v500 = vld [vmem:[%s257 + $0x610] sm:$0xff]
        %v501 = vld [vmem:[%s257 + $0x618] sm:$0xff]
        %v502 = vld [vmem:[%s257 + $0x620] sm:$0xff]
        %v503 = vld [vmem:[%s257 + $0x628] sm:$0xff]
        %v504 = vld [vmem:[%s257 + $0x630] sm:$0xff]
        %v505 = vld [vmem:[%s257 + $0x638] sm:$0xff]
        %v506 = vld [vmem:[%s257 + $0x640] sm:$0xff]
        %v507 = vld [vmem:[%s257 + $0x648] sm:$0xff]
        %v508 = vld [vmem:[%s257 + $0x650] sm:$0xff]
        %v509 = vld [vmem:[%s257 + $0x658] sm:$0xff]
        %v510 = vld [vmem:[%s257 + $0x660] sm:$0xff]
        %v511 = vld [vmem:[%s257 + $0x668] sm:$0xff]
        %v512 = vld [vmem:[%s257 + $0x670] sm:$0xff]
        %v513 = vld [vmem:[%s257 + $0x678] sm:$0xff]
        %v514 = vld [vmem:[%s257 + $0x680] sm:$0xff]
        %v515 = vld [vmem:[%s257 + $0x688] sm:$0xff]
        %v516 = vld [vmem:[%s257 + $0x690] sm:$0xff]
        %v517 = vld [vmem:[%s257 + $0x698] sm:$0xff]
        %v518 = vld [vmem:[%s257 + $0x6a0] sm:$0xff]
        %v519 = vld [vmem:[%s257 + $0x6a8] sm:$0xff]
        %v520 = vld [vmem:[%s257 + $0x6b0] sm:$0xff]
        %v521 = vld [vmem:[%s257 + $0x6b8] sm:$0xff]
        %v522 = vld [vmem:[%s257 + $0x6c0] sm:$0xff]
        %v523 = vld [vmem:[%s257 + $0x6c8] sm:$0xff]
        %v524 = vld [vmem:[%s257 + $0x6d0] sm:$0xff]
        %v525 = vld [vmem:[%s257 + $0x6d8] sm:$0xff]
        %v526 = vld [vmem:[%s257 + $0x6e0] sm:$0xff]
        %v527 = vld [vmem:[%s257 + $0x6e8] sm:$0xff]
        %v528 = vld [vmem:[%s257 + $0x6f0] sm:$0xff]
        %v529 = vld [vmem:[%s257 + $0x6f8] sm:$0xff]
        %v530 = vld [vmem:[%s257 + $0x700] sm:$0xff]
        %v531 = vld [vmem:[%s257 + $0x708] sm:$0xff]
        %v532 = vld [vmem:[%s257 + $0x710] sm:$0xff]
        %v533 = vld [vmem:[%s257 + $0x718] sm:$0xff]
        %v534 = vld [vmem:[%s257 + $0x720] sm:$0xff]
        %v535 = vld [vmem:[%s257 + $0x728] sm:$0xff]
        %v536 = vld [vmem:[%s257 + $0x730] sm:$0xff]
        %v537 = vld [vmem:[%s257 + $0x738] sm:$0xff]
        %v538 = vld [vmem:[%s257 + $0x740] sm:$0xff]
        %v539 = vld [vmem:[%s257 + $0x748] sm:$0xff]
        %v540 = vld [vmem:[%s257 + $0x750] sm:$0xff]
        %v541 = vld [vmem:[%s257 + $0x758] sm:$0xff]
        %v542 = vld [vmem:[%s257 + $0x760] sm:$0xff]
        %v543 = vld [vmem:[%s257 + $0x768] sm:$0xff]
        %v544 = vld [vmem:[%s257 + $0x770] sm:$0xff]
        %v545 = vld [vmem:[%s257 + $0x778] sm:$0xff]
        %v546 = vld [vmem:[%s257 + $0x780] sm:$0xff]
        %v547 = vld [vmem:[%s257 + $0x788] sm:$0xff]
        %v548 = vld [vmem:[%s257 + $0x790] sm:$0xff]
        %v549 = vld [vmem:[%s257 + $0x798] sm:$0xff]
        %v550 = vld [vmem:[%s257 + $0x7a0] sm:$0xff]
        %v551 = vld [vmem:[%s257 + $0x7a8] sm:$0xff]
        %v552 = vld [vmem:[%s257 + $0x7b0] sm:$0xff]
        %v553 = vld [vmem:[%s257 + $0x7b8] sm:$0xff]
        %v554 = vld [vmem:[%s257 + $0x7c0] sm:$0xff]
        %v555 = vld [vmem:[%s257 + $0x7c8] sm:$0xff]
        %v556 = vld [vmem:[%s257 + $0x7d0] sm:$0xff]
        %v557 = vld [vmem:[%s257 + $0x7d8] sm:$0xff]
        %v558 = vld [vmem:[%s257 + $0x7e0] sm:$0xff]
        %v559 = vld [vmem:[%s257 + $0x7e8] sm:$0xff]
        %v560 = vld [vmem:[%s257 + $0x7f0] sm:$0xff]
        %v561 = vld [vmem:[%s257 + $0x7f8] sm:$0xff]
        %v562 = vld [vmem:[%s257 + $0x800] sm:$0xff]
        %v563 = vld [vmem:[%s257 + $0x808] sm:$0xff]
        %v564 = vld [vmem:[%s257 + $0x810] sm:$0xff]
        %v565 = vld [vmem:[%s257 + $0x818] sm:$0xff]
        %v566 = vld [vmem:[%s257 + $0x820] sm:$0xff]
        %v567 = vld [vmem:[%s257 + $0x828] sm:$0xff]
        %v568 = vld [vmem:[%s257 + $0x830] sm:$0xff]
        %v569 = vld [vmem:[%s257 + $0x838] sm:$0xff]
        %v570 = vld [vmem:[%s257 + $0x840] sm:$0xff]
        %v571 = vld [vmem:[%s257 + $0x848] sm:$0xff]
        %v572 = vld [vmem:[%s257 + $0x850] sm:$0xff]
        %v573 = vld [vmem:[%s257 + $0x858] sm:$0xff]
        %v574 = vld [vmem:[%s257 + $0x860] sm:$0xff]
        %v575 = vld [vmem:[%s257 + $0x868] sm:$0xff]
        %v576 = vld [vmem:[%s257 + $0x870] sm:$0xff]
        %v577 = vld [vmem:[%s257 + $0x878] sm:$0xff]
        %v578 = vld [vmem:[%s257 + $0x880] sm:$0xff]
        %v579 = vld [vmem:[%s257 + $0x888] sm:$0xff]
        %v580 = vld [vmem:[%s257 + $0x890] sm:$0xff]
        %v581 = vld [vmem:[%s257 + $0x898] sm:$0xff]
        %v582 = vld [vmem:[%s257 + $0x8a0] sm:$0xff]
        %v583 = vld [vmem:[%s257 + $0x8a8] sm:$0xff]
        %v584 = vld [vmem:[%s257 + $0x8b0] sm:$0xff]
        %v585 = vld [vmem:[%s257 + $0x8b8] sm:$0xff]
        %v586 = vld [vmem:[%s257 + $0x8c0] sm:$0xff]
        %v587 = vld [vmem:[%s257 + $0x8c8] sm:$0xff]
        %v588 = vld [vmem:[%s257 + $0x8d0] sm:$0xff]
        %v589 = vld [vmem:[%s257 + $0x8d8] sm:$0xff]
        %v590 = vld [vmem:[%s257 + $0x8e0] sm:$0xff]
        %v591 = vld [vmem:[%s257 + $0x8e8] sm:$0xff]
        %v592 = vld [vmem:[%s257 + $0x8f0] sm:$0xff]
        %v593 = vld [vmem:[%s257 + $0x8f8] sm:$0xff]
        %v594 = vld [vmem:[%s257 + $0x900] sm:$0xff]
        %v595 = vld [vmem:[%s257 + $0x908] sm:$0xff]
        %v596 = vld [vmem:[%s257 + $0x910] sm:$0xff]
        %v597 = vld [vmem:[%s257 + $0x918] sm:$0xff]
        %v598 = vld [vmem:[%s257 + $0x920] sm:$0xff]
        %v599 = vld [vmem:[%s257 + $0x928] sm:$0xff]
        %v600 = vld [vmem:[%s257 + $0x930] sm:$0xff]
        %v601 = vld [vmem:[%s257 + $0x938] sm:$0xff]
        %v602 = vld [vmem:[%s257 + $0x940] sm:$0xff]
        %v603 = vld [vmem:[%s257 + $0x948] sm:$0xff]
        %v604 = vld [vmem:[%s257 + $0x950] sm:$0xff]
        %v605 = vld [vmem:[%s257 + $0x958] sm:$0xff]
        %v606 = vld [vmem:[%s257 + $0x960] sm:$0xff]
        %v607 = vld [vmem:[%s257 + $0x968] sm:$0xff]
        %v608 = vld [vmem:[%s257 + $0x970] sm:$0xff]
        %v609 = vld [vmem:[%s257 + $0x978] sm:$0xff]
        %v610 = vld [vmem:[%s257 + $0x980] sm:$0xff]
        %v611 = vld [vmem:[%s257 + $0x988] sm:$0xff]
        %v612 = vld [vmem:[%s257 + $0x990] sm:$0xff]
        %v613 = vld [vmem:[%s257 + $0x998] sm:$0xff]
        %v614 = vld [vmem:[%s257 + $0x9a0] sm:$0xff]
        %v615 = vld [vmem:[%s257 + $0x9a8] sm:$0xff]
        %v616 = vld [vmem:[%s257 + $0x9b0] sm:$0xff]
        %v617 = vld [vmem:[%s257 + $0x9b8] sm:$0xff]
        %v618 = vld [vmem:[%s257 + $0x9c0] sm:$0xff]
        %v619 = vld [vmem:[%s257 + $0x9c8] sm:$0xff]
        %v620 = vld [vmem:[%s257 + $0x9d0] sm:$0xff]
        %v621 = vld [vmem:[%s257 + $0x9d8] sm:$0xff]
        %v622 = vld [vmem:[%s257 + $0x9e0] sm:$0xff]
        %v623 = vld [vmem:[%s257 + $0x9e8] sm:$0xff]
        %v624 = vld [vmem:[%s257 + $0x9f0] sm:$0xff]
        %v625 = vld [vmem:[%s257 + $0x9f8] sm:$0xff]
        %v626 = vld [vmem:[%s257 + $0xa00] sm:$0xff]
        %v627 = vld [vmem:[%s257 + $0xa08] sm:$0xff]
        %v628 = vld [vmem:[%s257 + $0xa10] sm:$0xff]
        %v629 = vld [vmem:[%s257 + $0xa18] sm:$0xff]
        %v630 = vld [vmem:[%s257 + $0xa20] sm:$0xff]
        %v631 = vld [vmem:[%s257 + $0xa28] sm:$0xff]
        %v632 = vld [vmem:[%s257 + $0xa30] sm:$0xff]
        %v633 = vld [vmem:[%s257 + $0xa38] sm:$0xff]
        %v634 = vld [vmem:[%s257 + $0xa40] sm:$0xff]
        %v635 = vld [vmem:[%s257 + $0xa48] sm:$0xff]
        %v636 = vld [vmem:[%s257 + $0xa50] sm:$0xff]
        %v637 = vld [vmem:[%s257 + $0xa58] sm:$0xff]
        %v638 = vld [vmem:[%s257 + $0xa60] sm:$0xff]
        %v639 = vld [vmem:[%s257 + $0xa68] sm:$0xff]
        %v640 = vld [vmem:[%s257 + $0xa70] sm:$0xff]
        %v641 = vld [vmem:[%s257 + $0xa78] sm:$0xff]
        %v642 = vld [vmem:[%s257 + $0xa80] sm:$0xff]
        %v643 = vld [vmem:[%s257 + $0xa88] sm:$0xff]
        %v644 = vld [vmem:[%s257 + $0xa90] sm:$0xff]
        %v645 = vld [vmem:[%s257 + $0xa98] sm:$0xff]
        %v646 = vld [vmem:[%s257 + $0xaa0] sm:$0xff]
        %v647 = vld [vmem:[%s257 + $0xaa8] sm:$0xff]
        %v648 = vld [vmem:[%s257 + $0xab0] sm:$0xff]
        %v649 = vld [vmem:[%s257 + $0xab8] sm:$0xff]
        %v650 = vld [vmem:[%s257 + $0xac0] sm:$0xff]
        %v651 = vld [vmem:[%s257 + $0xac8] sm:$0xff]
        %v652 = vld [vmem:[%s257 + $0xad0] sm:$0xff]
        %v653 = vld [vmem:[%s257 + $0xad8] sm:$0xff]
        %v654 = vld [vmem:[%s257 + $0xae0] sm:$0xff]
        %v655 = vld [vmem:[%s257 + $0xae8] sm:$0xff]
        %v656 = vld [vmem:[%s257 + $0xaf0] sm:$0xff]
        %v657 = vld [vmem:[%s257 + $0xaf8] sm:$0xff]
        %v658 = vld [vmem:[%s257 + $0xb00] sm:$0xff]
        %v659 = vld [vmem:[%s257 + $0xb08] sm:$0xff]
        %v660 = vld [vmem:[%s257 + $0xb10] sm:$0xff]
        %v661 = vld [vmem:[%s257 + $0xb18] sm:$0xff]
        %v662 = vld [vmem:[%s257 + $0xb20] sm:$0xff]
        %v663 = vld [vmem:[%s257 + $0xb28] sm:$0xff]
        %v664 = vld [vmem:[%s257 + $0xb30] sm:$0xff]
        %v665 = vld [vmem:[%s257 + $0xb38] sm:$0xff]
        %v666 = vld [vmem:[%s257 + $0xb40] sm:$0xff]
        %v667 = vld [vmem:[%s257 + $0xb48] sm:$0xff]
        %v668 = vld [vmem:[%s257 + $0xb50] sm:$0xff]
        %v669 = vld [vmem:[%s257 + $0xb58] sm:$0xff]
        %v670 = vld [vmem:[%s257 + $0xb60] sm:$0xff]
        %v671 = vld [vmem:[%s257 + $0xb68] sm:$0xff]
        %v672 = vld [vmem:[%s257 + $0xb70] sm:$0xff]
        %v673 = vld [vmem:[%s257 + $0xb78] sm:$0xff]
        %v674 = vld [vmem:[%s257 + $0xb80] sm:$0xff]
        %v675 = vld [vmem:[%s257 + $0xb88] sm:$0xff]
        %v676 = vld [vmem:[%s257 + $0xb90] sm:$0xff]
        %v677 = vld [vmem:[%s257 + $0xb98] sm:$0xff]
        %v678 = vld [vmem:[%s257 + $0xba0] sm:$0xff]
        %v679 = vld [vmem:[%s257 + $0xba8] sm:$0xff]
        %v680 = vld [vmem:[%s257 + $0xbb0] sm:$0xff]
        %v681 = vld [vmem:[%s257 + $0xbb8] sm:$0xff]
        %v682 = vld [vmem:[%s257 + $0xbc0] sm:$0xff]
        %v683 = vld [vmem:[%s257 + $0xbc8] sm:$0xff]
        %v684 = vld [vmem:[%s257 + $0xbd0] sm:$0xff]
        %v685 = vld [vmem:[%s257 + $0xbd8] sm:$0xff]
        %v686 = vld [vmem:[%s257 + $0xbe0] sm:$0xff]
        %v687 = vld [vmem:[%s257 + $0xbe8] sm:$0xff]
        %v688 = vld [vmem:[%s257 + $0xbf0] sm:$0xff]
        %v689 = vld [vmem:[%s257 + $0xbf8] sm:$0xff]
        %v690 = vld [vmem:[%s257 + $0xc00] sm:$0xff]
        %v691 = vld [vmem:[%s257 + $0xc08] sm:$0xff]
        %v692 = vld [vmem:[%s257 + $0xc10] sm:$0xff]
        %v693 = vld [vmem:[%s257 + $0xc18] sm:$0xff]
        %v694 = vld [vmem:[%s257 + $0xc20] sm:$0xff]
        %v695 = vld [vmem:[%s257 + $0xc28] sm:$0xff]
        %v696 = vld [vmem:[%s257 + $0xc30] sm:$0xff]
        %v697 = vld [vmem:[%s257 + $0xc38] sm:$0xff]
        %v698 = vld [vmem:[%s257 + $0xc40] sm:$0xff]
        %v699 = vld [vmem:[%s257 + $0xc48] sm:$0xff]
        %v700 = vld [vmem:[%s257 + $0xc50] sm:$0xff]
        %v701 = vld [vmem:[%s257 + $0xc58] sm:$0xff]
        %v702 = vld [vmem:[%s257 + $0xc60] sm:$0xff]
        %v703 = vld [vmem:[%s257 + $0xc68] sm:$0xff]
        %v704 = vld [vmem:[%s257 + $0xc70] sm:$0xff]
        %v705 = vld [vmem:[%s257 + $0xc78] sm:$0xff]
        %v706 = vld [vmem:[%s257 + $0xc80] sm:$0xff]
        %v707 = vld [vmem:[%s257 + $0xc88] sm:$0xff]
        %v708 = vld [vmem:[%s257 + $0xc90] sm:$0xff]
        %v709 = vld [vmem:[%s257 + $0xc98] sm:$0xff]
        %v710 = vld [vmem:[%s257 + $0xca0] sm:$0xff]
        %v711 = vld [vmem:[%s257 + $0xca8] sm:$0xff]
        %v712 = vld [vmem:[%s257 + $0xcb0] sm:$0xff]
        %v713 = vld [vmem:[%s257 + $0xcb8] sm:$0xff]
        %v714 = vld [vmem:[%s257 + $0xcc0] sm:$0xff]
        %v715 = vld [vmem:[%s257 + $0xcc8] sm:$0xff]
        %v716 = vld [vmem:[%s257 + $0xcd0] sm:$0xff]
        %v717 = vld [vmem:[%s257 + $0xcd8] sm:$0xff]
        %v718 = vld [vmem:[%s257 + $0xce0] sm:$0xff]
        %v719 = vld [vmem:[%s257 + $0xce8] sm:$0xff]
        %v720 = vld [vmem:[%s257 + $0xcf0] sm:$0xff]
        %v721 = vld [vmem:[%s257 + $0xcf8] sm:$0xff]
        %v722 = vld [vmem:[%s257 + $0xd00] sm:$0xff]
        %v723 = vld [vmem:[%s257 + $0xd08] sm:$0xff]
        %v724 = vld [vmem:[%s257 + $0xd10] sm:$0xff]
        %v725 = vld [vmem:[%s257 + $0xd18] sm:$0xff]
        %v726 = vld [vmem:[%s257 + $0xd20] sm:$0xff]
        %v727 = vld [vmem:[%s257 + $0xd28] sm:$0xff]
        %v728 = vld [vmem:[%s257 + $0xd30] sm:$0xff]
        %v729 = vld [vmem:[%s257 + $0xd38] sm:$0xff]
        %v730 = vld [vmem:[%s257 + $0xd40] sm:$0xff]
        %v731 = vld [vmem:[%s257 + $0xd48] sm:$0xff]
        %v732 = vld [vmem:[%s257 + $0xd50] sm:$0xff]
        %v733 = vld [vmem:[%s257 + $0xd58] sm:$0xff]
        %v734 = vld [vmem:[%s257 + $0xd60] sm:$0xff]
        %v735 = vld [vmem:[%s257 + $0xd68] sm:$0xff]
        %v736 = vld [vmem:[%s257 + $0xd70] sm:$0xff]
        %v737 = vld [vmem:[%s257 + $0xd78] sm:$0xff]
        %v738 = vld [vmem:[%s257 + $0xd80] sm:$0xff]
        %v739 = vld [vmem:[%s257 + $0xd88] sm:$0xff]
        %v740 = vld [vmem:[%s257 + $0xd90] sm:$0xff]
        %v741 = vld [vmem:[%s257 + $0xd98] sm:$0xff]
        %v742 = vld [vmem:[%s257 + $0xda0] sm:$0xff]
        %v743 = vld [vmem:[%s257 + $0xda8] sm:$0xff]
        %v744 = vld [vmem:[%s257 + $0xdb0] sm:$0xff]
        %v745 = vld [vmem:[%s257 + $0xdb8] sm:$0xff]
        %v746 = vld [vmem:[%s257 + $0xdc0] sm:$0xff]
        %v747 = vld [vmem:[%s257 + $0xdc8] sm:$0xff]
        %v748 = vld [vmem:[%s257 + $0xdd0] sm:$0xff]
        %v749 = vld [vmem:[%s257 + $0xdd8] sm:$0xff]
        %v750 = vld [vmem:[%s257 + $0xde0] sm:$0xff]
        %v751 = vld [vmem:[%s257 + $0xde8] sm:$0xff]
        %v752 = vld [vmem:[%s257 + $0xdf0] sm:$0xff]
        %v753 = vld [vmem:[%s257 + $0xdf8] sm:$0xff]
        %v754 = vld [vmem:[%s257 + $0xe00] sm:$0xff]
        %v755 = vld [vmem:[%s257 + $0xe08] sm:$0xff]
        %v756 = vld [vmem:[%s257 + $0xe10] sm:$0xff]
        %v757 = vld [vmem:[%s257 + $0xe18] sm:$0xff]
        %v758 = vld [vmem:[%s257 + $0xe20] sm:$0xff]
        %v759 = vld [vmem:[%s257 + $0xe28] sm:$0xff]
        %v760 = vld [vmem:[%s257 + $0xe30] sm:$0xff]
        %v761 = vld [vmem:[%s257 + $0xe38] sm:$0xff]
        %v762 = vld [vmem:[%s257 + $0xe40] sm:$0xff]
        %v763 = vld [vmem:[%s257 + $0xe48] sm:$0xff]
        %v764 = vld [vmem:[%s257 + $0xe50] sm:$0xff]
        %v765 = vld [vmem:[%s257 + $0xe58] sm:$0xff]
        %v766 = vld [vmem:[%s257 + $0xe60] sm:$0xff]
        %v767 = vld [vmem:[%s257 + $0xe68] sm:$0xff]
        %v768 = vld [vmem:[%s257 + $0xe70] sm:$0xff]
        %v769 = vld [vmem:[%s257 + $0xe78] sm:$0xff]
        %v770 = vld [vmem:[%s257 + $0xe80] sm:$0xff]
        %v771 = vld [vmem:[%s257 + $0xe88] sm:$0xff]
        %v772 = vld [vmem:[%s257 + $0xe90] sm:$0xff]
        %v773 = vld [vmem:[%s257 + $0xe98] sm:$0xff]
        %v774 = vld [vmem:[%s257 + $0xea0] sm:$0xff]
        %v775 = vld [vmem:[%s257 + $0xea8] sm:$0xff]
        %v776 = vld [vmem:[%s257 + $0xeb0] sm:$0xff]
        %v777 = vld [vmem:[%s257 + $0xeb8] sm:$0xff]
        %v778 = vld [vmem:[%s257 + $0xec0] sm:$0xff]
        %v779 = vld [vmem:[%s257 + $0xec8] sm:$0xff]
        %v780 = vld [vmem:[%s257 + $0xed0] sm:$0xff]
        %v781 = vld [vmem:[%s257 + $0xed8] sm:$0xff]
        %v782 = vld [vmem:[%s257 + $0xee0] sm:$0xff]
        %v783 = vld [vmem:[%s257 + $0xee8] sm:$0xff]
        %v784 = vld [vmem:[%s257 + $0xef0] sm:$0xff]
        %v785 = vld [vmem:[%s257 + $0xef8] sm:$0xff]
        %v786 = vld [vmem:[%s257 + $0xf00] sm:$0xff]
        %v787 = vld [vmem:[%s257 + $0xf08] sm:$0xff]
        %v788 = vld [vmem:[%s257 + $0xf10] sm:$0xff]
        %v789 = vld [vmem:[%s257 + $0xf18] sm:$0xff]
        %v790 = vld [vmem:[%s257 + $0xf20] sm:$0xff]
        %v791 = vld [vmem:[%s257 + $0xf28] sm:$0xff]
        %v792 = vld [vmem:[%s257 + $0xf30] sm:$0xff]
        %v793 = vld [vmem:[%s257 + $0xf38] sm:$0xff]
        %v794 = vld [vmem:[%s257 + $0xf40] sm:$0xff]
        %v795 = vld [vmem:[%s257 + $0xf48] sm:$0xff]
        %v796 = vld [vmem:[%s257 + $0xf50] sm:$0xff]
        %v797 = vld [vmem:[%s257 + $0xf58] sm:$0xff]
        %v798 = vld [vmem:[%s257 + $0xf60] sm:$0xff]
        %v799 = vld [vmem:[%s257 + $0xf68] sm:$0xff]
        %v800 = vld [vmem:[%s257 + $0xf70] sm:$0xff]
        %v801 = vld [vmem:[%s257 + $0xf78] sm:$0xff]
        %v802 = vld [vmem:[%s257 + $0xf80] sm:$0xff]
        %v803 = vld [vmem:[%s257 + $0xf88] sm:$0xff]
        %v804 = vld [vmem:[%s257 + $0xf90] sm:$0xff]
        %v805 = vld [vmem:[%s257 + $0xf98] sm:$0xff]
        %v806 = vld [vmem:[%s257 + $0xfa0] sm:$0xff]
        %v807 = vld [vmem:[%s257 + $0xfa8] sm:$0xff]
        %v808 = vld [vmem:[%s257 + $0xfb0] sm:$0xff]
        %v809 = vld [vmem:[%s257 + $0xfb8] sm:$0xff]
        %v810 = vld [vmem:[%s257 + $0xfc0] sm:$0xff]
        %v811 = vld [vmem:[%s257 + $0xfc8] sm:$0xff]
        %v812 = vld [vmem:[%s257 + $0xfd0] sm:$0xff]
        %v813 = vld [vmem:[%s257 + $0xfd8] sm:$0xff]
        %v814 = vld [vmem:[%s257 + $0xfe0] sm:$0xff]
        %v815 = vld [vmem:[%s257 + $0xfe8] sm:$0xff]
        %v816 = vld [vmem:[%s257 + $0xff0] sm:$0xff]
        %v817 = vld [vmem:[%s257 + $0xff8] sm:$0xff]
        %v834 = vunpack.c.l.b16 %v290
        %v835 = vunpack.c.h.b16 %v290
        %v836 = vunpack.c.l.b16 %v291
        %v837 = vunpack.c.h.b16 %v291
        %v838 = vunpack.c.l.b16 %v292
        %v839 = vunpack.c.h.b16 %v292
        %v840 = vunpack.c.l.b16 %v293
        %v841 = vunpack.c.h.b16 %v293
        %v842 = vunpack.c.l.b16 %v294
        %v843 = vunpack.c.h.b16 %v294
        %v844 = vunpack.c.l.b16 %v295
        %v845 = vunpack.c.h.b16 %v295
        %v846 = vunpack.c.l.b16 %v296
        %v847 = vunpack.c.h.b16 %v296
        %v848 = vunpack.c.l.b16 %v297
        %v849 = vunpack.c.h.b16 %v297
        %v850 = vunpack.c.l.b16 %v298
        %v851 = vunpack.c.h.b16 %v298
        %v852 = vunpack.c.l.b16 %v299
        %v853 = vunpack.c.h.b16 %v299
        %v854 = vunpack.c.l.b16 %v300
        %v855 = vunpack.c.h.b16 %v300
        %v856 = vunpack.c.l.b16 %v301
        %v857 = vunpack.c.h.b16 %v301
        %v858 = vunpack.c.l.b16 %v302
        %v859 = vunpack.c.h.b16 %v302
        %v860 = vunpack.c.l.b16 %v303
        %v861 = vunpack.c.h.b16 %v303
        %v862 = vunpack.c.l.b16 %v304
        %v863 = vunpack.c.h.b16 %v304
        %v864 = vunpack.c.l.b16 %v305
        %v865 = vunpack.c.h.b16 %v305
        %v866 = vpack.c.b16 %v850, %v834
        %v867 = vpack.c.b16 %v851, %v835
        %v868 = vpack.c.b16 %v852, %v836
        %v869 = vpack.c.b16 %v853, %v837
        %v870 = vpack.c.b16 %v854, %v838
        %v871 = vpack.c.b16 %v855, %v839
        %v872 = vpack.c.b16 %v856, %v840
        %v873 = vpack.c.b16 %v857, %v841
        %v874 = vpack.c.b16 %v858, %v842
        %v875 = vpack.c.b16 %v859, %v843
        %v876 = vpack.c.b16 %v860, %v844
        %v877 = vpack.c.b16 %v861, %v845
        %v878 = vpack.c.b16 %v862, %v846
        %v879 = vpack.c.b16 %v863, %v847
        %v880 = vpack.c.b16 %v864, %v848
        %v881 = vpack.c.b16 %v865, %v849
        %v1410 = vunpack.c.l.b16 %v306
        %v1411 = vunpack.c.h.b16 %v306
        %v1412 = vunpack.c.l.b16 %v307
        %v1413 = vunpack.c.h.b16 %v307
        %v1414 = vunpack.c.l.b16 %v308
        %v1415 = vunpack.c.h.b16 %v308
        %v1416 = vunpack.c.l.b16 %v309
        %v1417 = vunpack.c.h.b16 %v309
        %v1418 = vunpack.c.l.b16 %v310
        %v1419 = vunpack.c.h.b16 %v310
        %v1420 = vunpack.c.l.b16 %v311
        %v1421 = vunpack.c.h.b16 %v311
        %v1422 = vunpack.c.l.b16 %v312
        %v1423 = vunpack.c.h.b16 %v312
        %v1424 = vunpack.c.l.b16 %v313
        %v1425 = vunpack.c.h.b16 %v313
        %v1426 = vunpack.c.l.b16 %v314
        %v1427 = vunpack.c.h.b16 %v314
        %v1428 = vunpack.c.l.b16 %v315
        %v1429 = vunpack.c.h.b16 %v315
        %v1430 = vunpack.c.l.b16 %v316
        %v1431 = vunpack.c.h.b16 %v316
        %v1432 = vunpack.c.l.b16 %v317
        %v1433 = vunpack.c.h.b16 %v317
        %v1434 = vunpack.c.l.b16 %v318
        %v1435 = vunpack.c.h.b16 %v318
        %v1436 = vunpack.c.l.b16 %v319
        %v1437 = vunpack.c.h.b16 %v319
        %v1438 = vunpack.c.l.b16 %v320
        %v1439 = vunpack.c.h.b16 %v320
        %v1440 = vunpack.c.l.b16 %v321
        %v1441 = vunpack.c.h.b16 %v321
        %v1442 = vunpack.c.l.b16 %v322
        %v1443 = vunpack.c.h.b16 %v322
        %v1444 = vunpack.c.l.b16 %v323
        %v1445 = vunpack.c.h.b16 %v323
        %v1446 = vunpack.c.l.b16 %v324
        %v1447 = vunpack.c.h.b16 %v324
        %v1448 = vunpack.c.l.b16 %v325
        %v1449 = vunpack.c.h.b16 %v325
        %v1450 = vunpack.c.l.b16 %v326
        %v1451 = vunpack.c.h.b16 %v326
        %v1452 = vunpack.c.l.b16 %v327
        %v1453 = vunpack.c.h.b16 %v327
        %v1454 = vunpack.c.l.b16 %v328
        %v1455 = vunpack.c.h.b16 %v328
        %v1456 = vunpack.c.l.b16 %v329
        %v1457 = vunpack.c.h.b16 %v329
        %v1458 = vunpack.c.l.b16 %v330
        %v1459 = vunpack.c.h.b16 %v330
        %v1460 = vunpack.c.l.b16 %v331
        %v1461 = vunpack.c.h.b16 %v331
        %v1462 = vunpack.c.l.b16 %v332
        %v1463 = vunpack.c.h.b16 %v332
        %v1464 = vunpack.c.l.b16 %v333
        %v1465 = vunpack.c.h.b16 %v333
        %v1466 = vunpack.c.l.b16 %v334
        %v1467 = vunpack.c.h.b16 %v334
        %v1468 = vunpack.c.l.b16 %v335
        %v1469 = vunpack.c.h.b16 %v335
        %v1470 = vunpack.c.l.b16 %v336
        %v1471 = vunpack.c.h.b16 %v336
        %v1472 = vunpack.c.l.b16 %v337
        %v1473 = vunpack.c.h.b16 %v337
        %v1474 = vunpack.c.l.b16 %v338
        %v1475 = vunpack.c.h.b16 %v338
        %v1476 = vunpack.c.l.b16 %v339
        %v1477 = vunpack.c.h.b16 %v339
        %v1478 = vunpack.c.l.b16 %v340
        %v1479 = vunpack.c.h.b16 %v340
        %v1480 = vunpack.c.l.b16 %v341
        %v1481 = vunpack.c.h.b16 %v341
        %v1482 = vunpack.c.l.b16 %v342
        %v1483 = vunpack.c.h.b16 %v342
        %v1484 = vunpack.c.l.b16 %v343
        %v1485 = vunpack.c.h.b16 %v343
        %v1486 = vunpack.c.l.b16 %v344
        %v1487 = vunpack.c.h.b16 %v344
        %v1488 = vunpack.c.l.b16 %v345
        %v1489 = vunpack.c.h.b16 %v345
        %v1490 = vunpack.c.l.b16 %v346
        %v1491 = vunpack.c.h.b16 %v346
        %v1492 = vunpack.c.l.b16 %v347
        %v1493 = vunpack.c.h.b16 %v347
        %v1494 = vunpack.c.l.b16 %v348
        %v1495 = vunpack.c.h.b16 %v348
        %v1496 = vunpack.c.l.b16 %v349
        %v1497 = vunpack.c.h.b16 %v349
        %v1498 = vunpack.c.l.b16 %v350
        %v1499 = vunpack.c.h.b16 %v350
        %v1500 = vunpack.c.l.b16 %v351
        %v1501 = vunpack.c.h.b16 %v351
        %v1502 = vunpack.c.l.b16 %v352
        %v1503 = vunpack.c.h.b16 %v352
        %v1504 = vunpack.c.l.b16 %v353
        %v1505 = vunpack.c.h.b16 %v353
        %v1506 = vunpack.c.l.b16 %v354
        %v1507 = vunpack.c.h.b16 %v354
        %v1508 = vunpack.c.l.b16 %v355
        %v1509 = vunpack.c.h.b16 %v355
        %v1510 = vunpack.c.l.b16 %v356
        %v1511 = vunpack.c.h.b16 %v356
        %v1512 = vunpack.c.l.b16 %v357
        %v1513 = vunpack.c.h.b16 %v357
        %v1514 = vunpack.c.l.b16 %v358
        %v1515 = vunpack.c.h.b16 %v358
        %v1516 = vunpack.c.l.b16 %v359
        %v1517 = vunpack.c.h.b16 %v359
        %v1518 = vunpack.c.l.b16 %v360
        %v1519 = vunpack.c.h.b16 %v360
        %v1520 = vunpack.c.l.b16 %v361
        %v1521 = vunpack.c.h.b16 %v361
        %v1522 = vunpack.c.l.b16 %v362
        %v1523 = vunpack.c.h.b16 %v362
        %v1524 = vunpack.c.l.b16 %v363
        %v1525 = vunpack.c.h.b16 %v363
        %v1526 = vunpack.c.l.b16 %v364
        %v1527 = vunpack.c.h.b16 %v364
        %v1528 = vunpack.c.l.b16 %v365
        %v1529 = vunpack.c.h.b16 %v365
        %v1530 = vunpack.c.l.b16 %v366
        %v1531 = vunpack.c.h.b16 %v366
        %v1532 = vunpack.c.l.b16 %v367
        %v1533 = vunpack.c.h.b16 %v367
        %v1534 = vunpack.c.l.b16 %v368
        %v1535 = vunpack.c.h.b16 %v368
        %v1536 = vunpack.c.l.b16 %v369
        %v1537 = vunpack.c.h.b16 %v369
        %v1538 = vunpack.c.l.b16 %v370
        %v1539 = vunpack.c.h.b16 %v370
        %v1540 = vunpack.c.l.b16 %v371
        %v1541 = vunpack.c.h.b16 %v371
        %v1542 = vunpack.c.l.b16 %v372
        %v1543 = vunpack.c.h.b16 %v372
        %v1544 = vunpack.c.l.b16 %v373
        %v1545 = vunpack.c.h.b16 %v373
        %v1546 = vunpack.c.l.b16 %v374
        %v1547 = vunpack.c.h.b16 %v374
        %v1548 = vunpack.c.l.b16 %v375
        %v1549 = vunpack.c.h.b16 %v375
        %v1550 = vunpack.c.l.b16 %v376
        %v1551 = vunpack.c.h.b16 %v376
        %v1552 = vunpack.c.l.b16 %v377
        %v1553 = vunpack.c.h.b16 %v377
        %v1554 = vunpack.c.l.b16 %v378
        %v1555 = vunpack.c.h.b16 %v378
        %v1556 = vunpack.c.l.b16 %v379
        %v1557 = vunpack.c.h.b16 %v379
        %v1558 = vunpack.c.l.b16 %v380
        %v1559 = vunpack.c.h.b16 %v380
        %v1560 = vunpack.c.l.b16 %v381
        %v1561 = vunpack.c.h.b16 %v381
        %v1562 = vunpack.c.l.b16 %v382
        %v1563 = vunpack.c.h.b16 %v382
        %v1564 = vunpack.c.l.b16 %v383
        %v1565 = vunpack.c.h.b16 %v383
        %v1566 = vunpack.c.l.b16 %v384
        %v1567 = vunpack.c.h.b16 %v384
        %v1568 = vunpack.c.l.b16 %v385
        %v1569 = vunpack.c.h.b16 %v385
        %v1570 = vunpack.c.l.b16 %v386
        %v1571 = vunpack.c.h.b16 %v386
        %v1572 = vunpack.c.l.b16 %v387
        %v1573 = vunpack.c.h.b16 %v387
        %v1574 = vunpack.c.l.b16 %v388
        %v1575 = vunpack.c.h.b16 %v388
        %v1576 = vunpack.c.l.b16 %v389
        %v1577 = vunpack.c.h.b16 %v389
        %v1578 = vunpack.c.l.b16 %v390
        %v1579 = vunpack.c.h.b16 %v390
        %v1580 = vunpack.c.l.b16 %v391
        %v1581 = vunpack.c.h.b16 %v391
        %v1582 = vunpack.c.l.b16 %v392
        %v1583 = vunpack.c.h.b16 %v392
        %v1584 = vunpack.c.l.b16 %v393
        %v1585 = vunpack.c.h.b16 %v393
        %v1586 = vunpack.c.l.b16 %v394
        %v1587 = vunpack.c.h.b16 %v394
        %v1588 = vunpack.c.l.b16 %v395
        %v1589 = vunpack.c.h.b16 %v395
        %v1590 = vunpack.c.l.b16 %v396
        %v1591 = vunpack.c.h.b16 %v396
        %v1592 = vunpack.c.l.b16 %v397
        %v1593 = vunpack.c.h.b16 %v397
        %v1594 = vunpack.c.l.b16 %v398
        %v1595 = vunpack.c.h.b16 %v398
        %v1596 = vunpack.c.l.b16 %v399
        %v1597 = vunpack.c.h.b16 %v399
        %v1598 = vunpack.c.l.b16 %v400
        %v1599 = vunpack.c.h.b16 %v400
        %v1600 = vunpack.c.l.b16 %v401
        %v1601 = vunpack.c.h.b16 %v401
        %v1602 = vunpack.c.l.b16 %v402
        %v1603 = vunpack.c.h.b16 %v402
        %v1604 = vunpack.c.l.b16 %v403
        %v1605 = vunpack.c.h.b16 %v403
        %v1606 = vunpack.c.l.b16 %v404
        %v1607 = vunpack.c.h.b16 %v404
        %v1608 = vunpack.c.l.b16 %v405
        %v1609 = vunpack.c.h.b16 %v405
        %v1610 = vunpack.c.l.b16 %v406
        %v1611 = vunpack.c.h.b16 %v406
        %v1612 = vunpack.c.l.b16 %v407
        %v1613 = vunpack.c.h.b16 %v407
        %v1614 = vunpack.c.l.b16 %v408
        %v1615 = vunpack.c.h.b16 %v408
        %v1616 = vunpack.c.l.b16 %v409
        %v1617 = vunpack.c.h.b16 %v409
        %v1618 = vunpack.c.l.b16 %v410
        %v1619 = vunpack.c.h.b16 %v410
        %v1620 = vunpack.c.l.b16 %v411
        %v1621 = vunpack.c.h.b16 %v411
        %v1622 = vunpack.c.l.b16 %v412
        %v1623 = vunpack.c.h.b16 %v412
        %v1624 = vunpack.c.l.b16 %v413
        %v1625 = vunpack.c.h.b16 %v413
        %v1626 = vunpack.c.l.b16 %v414
        %v1627 = vunpack.c.h.b16 %v414
        %v1628 = vunpack.c.l.b16 %v415
        %v1629 = vunpack.c.h.b16 %v415
        %v1630 = vunpack.c.l.b16 %v416
        %v1631 = vunpack.c.h.b16 %v416
        %v1632 = vunpack.c.l.b16 %v417
        %v1633 = vunpack.c.h.b16 %v417
        %v1634 = vunpack.c.l.b16 %v418
        %v1635 = vunpack.c.h.b16 %v418
        %v1636 = vunpack.c.l.b16 %v419
        %v1637 = vunpack.c.h.b16 %v419
        %v1638 = vunpack.c.l.b16 %v420
        %v1639 = vunpack.c.h.b16 %v420
        %v1640 = vunpack.c.l.b16 %v421
        %v1641 = vunpack.c.h.b16 %v421
        %v1642 = vunpack.c.l.b16 %v422
        %v1643 = vunpack.c.h.b16 %v422
        %v1644 = vunpack.c.l.b16 %v423
        %v1645 = vunpack.c.h.b16 %v423
        %v1646 = vunpack.c.l.b16 %v424
        %v1647 = vunpack.c.h.b16 %v424
        %v1648 = vunpack.c.l.b16 %v425
        %v1649 = vunpack.c.h.b16 %v425
        %v1650 = vunpack.c.l.b16 %v426
        %v1651 = vunpack.c.h.b16 %v426
        %v1652 = vunpack.c.l.b16 %v427
        %v1653 = vunpack.c.h.b16 %v427
        %v1654 = vunpack.c.l.b16 %v428
        %v1655 = vunpack.c.h.b16 %v428
        %v1656 = vunpack.c.l.b16 %v429
        %v1657 = vunpack.c.h.b16 %v429
        %v1658 = vunpack.c.l.b16 %v430
        %v1659 = vunpack.c.h.b16 %v430
        %v1660 = vunpack.c.l.b16 %v431
        %v1661 = vunpack.c.h.b16 %v431
        %v1662 = vunpack.c.l.b16 %v432
        %v1663 = vunpack.c.h.b16 %v432
        %v1664 = vunpack.c.l.b16 %v433
        %v1665 = vunpack.c.h.b16 %v433
        %v1666 = vunpack.c.l.b16 %v434
        %v1667 = vunpack.c.h.b16 %v434
        %v1668 = vunpack.c.l.b16 %v435
        %v1669 = vunpack.c.h.b16 %v435
        %v1670 = vunpack.c.l.b16 %v436
        %v1671 = vunpack.c.h.b16 %v436
        %v1672 = vunpack.c.l.b16 %v437
        %v1673 = vunpack.c.h.b16 %v437
        %v1674 = vunpack.c.l.b16 %v438
        %v1675 = vunpack.c.h.b16 %v438
        %v1676 = vunpack.c.l.b16 %v439
        %v1677 = vunpack.c.h.b16 %v439
        %v1678 = vunpack.c.l.b16 %v440
        %v1679 = vunpack.c.h.b16 %v440
        %v1680 = vunpack.c.l.b16 %v441
        %v1681 = vunpack.c.h.b16 %v441
        %v1682 = vunpack.c.l.b16 %v442
        %v1683 = vunpack.c.h.b16 %v442
        %v1684 = vunpack.c.l.b16 %v443
        %v1685 = vunpack.c.h.b16 %v443
        %v1686 = vunpack.c.l.b16 %v444
        %v1687 = vunpack.c.h.b16 %v444
        %v1688 = vunpack.c.l.b16 %v445
        %v1689 = vunpack.c.h.b16 %v445
        %v1690 = vunpack.c.l.b16 %v446
        %v1691 = vunpack.c.h.b16 %v446
        %v1692 = vunpack.c.l.b16 %v447
        %v1693 = vunpack.c.h.b16 %v447
        %v1694 = vunpack.c.l.b16 %v448
        %v1695 = vunpack.c.h.b16 %v448
        %v1696 = vunpack.c.l.b16 %v449
        %v1697 = vunpack.c.h.b16 %v449
        %v1698 = vunpack.c.l.b16 %v450
        %v1699 = vunpack.c.h.b16 %v450
        %v1700 = vunpack.c.l.b16 %v451
        %v1701 = vunpack.c.h.b16 %v451
        %v1702 = vunpack.c.l.b16 %v452
        %v1703 = vunpack.c.h.b16 %v452
        %v1704 = vunpack.c.l.b16 %v453
        %v1705 = vunpack.c.h.b16 %v453
        %v1706 = vunpack.c.l.b16 %v454
        %v1707 = vunpack.c.h.b16 %v454
        %v1708 = vunpack.c.l.b16 %v455
        %v1709 = vunpack.c.h.b16 %v455
        %v1710 = vunpack.c.l.b16 %v456
        %v1711 = vunpack.c.h.b16 %v456
        %v1712 = vunpack.c.l.b16 %v457
        %v1713 = vunpack.c.h.b16 %v457
        %v1714 = vunpack.c.l.b16 %v458
        %v1715 = vunpack.c.h.b16 %v458
        %v1716 = vunpack.c.l.b16 %v459
        %v1717 = vunpack.c.h.b16 %v459
        %v1718 = vunpack.c.l.b16 %v460
        %v1719 = vunpack.c.h.b16 %v460
        %v1720 = vunpack.c.l.b16 %v461
        %v1721 = vunpack.c.h.b16 %v461
        %v1722 = vunpack.c.l.b16 %v462
        %v1723 = vunpack.c.h.b16 %v462
        %v1724 = vunpack.c.l.b16 %v463
        %v1725 = vunpack.c.h.b16 %v463
        %v1726 = vunpack.c.l.b16 %v464
        %v1727 = vunpack.c.h.b16 %v464
        %v1728 = vunpack.c.l.b16 %v465
        %v1729 = vunpack.c.h.b16 %v465
        %v1730 = vunpack.c.l.b16 %v466
        %v1731 = vunpack.c.h.b16 %v466
        %v1732 = vunpack.c.l.b16 %v467
        %v1733 = vunpack.c.h.b16 %v467
        %v1734 = vunpack.c.l.b16 %v468
        %v1735 = vunpack.c.h.b16 %v468
        %v1736 = vunpack.c.l.b16 %v469
        %v1737 = vunpack.c.h.b16 %v469
        %v1738 = vunpack.c.l.b16 %v470
        %v1739 = vunpack.c.h.b16 %v470
        %v1740 = vunpack.c.l.b16 %v471
        %v1741 = vunpack.c.h.b16 %v471
        %v1742 = vunpack.c.l.b16 %v472
        %v1743 = vunpack.c.h.b16 %v472
        %v1744 = vunpack.c.l.b16 %v473
        %v1745 = vunpack.c.h.b16 %v473
        %v1746 = vunpack.c.l.b16 %v474
        %v1747 = vunpack.c.h.b16 %v474
        %v1748 = vunpack.c.l.b16 %v475
        %v1749 = vunpack.c.h.b16 %v475
        %v1750 = vunpack.c.l.b16 %v476
        %v1751 = vunpack.c.h.b16 %v476
        %v1752 = vunpack.c.l.b16 %v477
        %v1753 = vunpack.c.h.b16 %v477
        %v1754 = vunpack.c.l.b16 %v478
        %v1755 = vunpack.c.h.b16 %v478
        %v1756 = vunpack.c.l.b16 %v479
        %v1757 = vunpack.c.h.b16 %v479
        %v1758 = vunpack.c.l.b16 %v480
        %v1759 = vunpack.c.h.b16 %v480
        %v1760 = vunpack.c.l.b16 %v481
        %v1761 = vunpack.c.h.b16 %v481
        %v1762 = vunpack.c.l.b16 %v482
        %v1763 = vunpack.c.h.b16 %v482
        %v1764 = vunpack.c.l.b16 %v483
        %v1765 = vunpack.c.h.b16 %v483
        %v1766 = vunpack.c.l.b16 %v484
        %v1767 = vunpack.c.h.b16 %v484
        %v1768 = vunpack.c.l.b16 %v485
        %v1769 = vunpack.c.h.b16 %v485
        %v1770 = vunpack.c.l.b16 %v486
        %v1771 = vunpack.c.h.b16 %v486
        %v1772 = vunpack.c.l.b16 %v487
        %v1773 = vunpack.c.h.b16 %v487
        %v1774 = vunpack.c.l.b16 %v488
        %v1775 = vunpack.c.h.b16 %v488
        %v1776 = vunpack.c.l.b16 %v489
        %v1777 = vunpack.c.h.b16 %v489
        %v1778 = vunpack.c.l.b16 %v490
        %v1779 = vunpack.c.h.b16 %v490
        %v1780 = vunpack.c.l.b16 %v491
        %v1781 = vunpack.c.h.b16 %v491
        %v1782 = vunpack.c.l.b16 %v492
        %v1783 = vunpack.c.h.b16 %v492
        %v1784 = vunpack.c.l.b16 %v493
        %v1785 = vunpack.c.h.b16 %v493
        %v1786 = vunpack.c.l.b16 %v494
        %v1787 = vunpack.c.h.b16 %v494
        %v1788 = vunpack.c.l.b16 %v495
        %v1789 = vunpack.c.h.b16 %v495
        %v1790 = vunpack.c.l.b16 %v496
        %v1791 = vunpack.c.h.b16 %v496
        %v1792 = vunpack.c.l.b16 %v497
        %v1793 = vunpack.c.h.b16 %v497
        %v1794 = vunpack.c.l.b16 %v498
        %v1795 = vunpack.c.h.b16 %v498
        %v1796 = vunpack.c.l.b16 %v499
        %v1797 = vunpack.c.h.b16 %v499
        %v1798 = vunpack.c.l.b16 %v500
        %v1799 = vunpack.c.h.b16 %v500
        %v1800 = vunpack.c.l.b16 %v501
        %v1801 = vunpack.c.h.b16 %v501
        %v1802 = vunpack.c.l.b16 %v502
        %v1803 = vunpack.c.h.b16 %v502
        %v1804 = vunpack.c.l.b16 %v503
        %v1805 = vunpack.c.h.b16 %v503
        %v1806 = vunpack.c.l.b16 %v504
        %v1807 = vunpack.c.h.b16 %v504
        %v1808 = vunpack.c.l.b16 %v505
        %v1809 = vunpack.c.h.b16 %v505
        %v1810 = vunpack.c.l.b16 %v506
        %v1811 = vunpack.c.h.b16 %v506
        %v1812 = vunpack.c.l.b16 %v507
        %v1813 = vunpack.c.h.b16 %v507
        %v1814 = vunpack.c.l.b16 %v508
        %v1815 = vunpack.c.h.b16 %v508
        %v1816 = vunpack.c.l.b16 %v509
        %v1817 = vunpack.c.h.b16 %v509
        %v1818 = vunpack.c.l.b16 %v510
        %v1819 = vunpack.c.h.b16 %v510
        %v1820 = vunpack.c.l.b16 %v511
        %v1821 = vunpack.c.h.b16 %v511
        %v1822 = vunpack.c.l.b16 %v512
        %v1823 = vunpack.c.h.b16 %v512
        %v1824 = vunpack.c.l.b16 %v513
        %v1825 = vunpack.c.h.b16 %v513
        %v1826 = vunpack.c.l.b16 %v514
        %v1827 = vunpack.c.h.b16 %v514
        %v1828 = vunpack.c.l.b16 %v515
        %v1829 = vunpack.c.h.b16 %v515
        %v1830 = vunpack.c.l.b16 %v516
        %v1831 = vunpack.c.h.b16 %v516
        %v1832 = vunpack.c.l.b16 %v517
        %v1833 = vunpack.c.h.b16 %v517
        %v1834 = vunpack.c.l.b16 %v518
        %v1835 = vunpack.c.h.b16 %v518
        %v1836 = vunpack.c.l.b16 %v519
        %v1837 = vunpack.c.h.b16 %v519
        %v1838 = vunpack.c.l.b16 %v520
        %v1839 = vunpack.c.h.b16 %v520
        %v1840 = vunpack.c.l.b16 %v521
        %v1841 = vunpack.c.h.b16 %v521
        %v1842 = vunpack.c.l.b16 %v522
        %v1843 = vunpack.c.h.b16 %v522
        %v1844 = vunpack.c.l.b16 %v523
        %v1845 = vunpack.c.h.b16 %v523
        %v1846 = vunpack.c.l.b16 %v524
        %v1847 = vunpack.c.h.b16 %v524
        %v1848 = vunpack.c.l.b16 %v525
        %v1849 = vunpack.c.h.b16 %v525
        %v1850 = vunpack.c.l.b16 %v526
        %v1851 = vunpack.c.h.b16 %v526
        %v1852 = vunpack.c.l.b16 %v527
        %v1853 = vunpack.c.h.b16 %v527
        %v1854 = vunpack.c.l.b16 %v528
        %v1855 = vunpack.c.h.b16 %v528
        %v1856 = vunpack.c.l.b16 %v529
        %v1857 = vunpack.c.h.b16 %v529
        %v1858 = vunpack.c.l.b16 %v530
        %v1859 = vunpack.c.h.b16 %v530
        %v1860 = vunpack.c.l.b16 %v531
        %v1861 = vunpack.c.h.b16 %v531
        %v1862 = vunpack.c.l.b16 %v532
        %v1863 = vunpack.c.h.b16 %v532
        %v1864 = vunpack.c.l.b16 %v533
        %v1865 = vunpack.c.h.b16 %v533
        %v1866 = vunpack.c.l.b16 %v534
        %v1867 = vunpack.c.h.b16 %v534
        %v1868 = vunpack.c.l.b16 %v535
        %v1869 = vunpack.c.h.b16 %v535
        %v1870 = vunpack.c.l.b16 %v536
        %v1871 = vunpack.c.h.b16 %v536
        %v1872 = vunpack.c.l.b16 %v537
        %v1873 = vunpack.c.h.b16 %v537
        %v1874 = vunpack.c.l.b16 %v538
        %v1875 = vunpack.c.h.b16 %v538
        %v1876 = vunpack.c.l.b16 %v539
        %v1877 = vunpack.c.h.b16 %v539
        %v1878 = vunpack.c.l.b16 %v540
        %v1879 = vunpack.c.h.b16 %v540
        %v1880 = vunpack.c.l.b16 %v541
        %v1881 = vunpack.c.h.b16 %v541
        %v1882 = vunpack.c.l.b16 %v542
        %v1883 = vunpack.c.h.b16 %v542
        %v1884 = vunpack.c.l.b16 %v543
        %v1885 = vunpack.c.h.b16 %v543
        %v1886 = vunpack.c.l.b16 %v544
        %v1887 = vunpack.c.h.b16 %v544
        %v1888 = vunpack.c.l.b16 %v545
        %v1889 = vunpack.c.h.b16 %v545
        %v1890 = vunpack.c.l.b16 %v546
        %v1891 = vunpack.c.h.b16 %v546
        %v1892 = vunpack.c.l.b16 %v547
        %v1893 = vunpack.c.h.b16 %v547
        %v1894 = vunpack.c.l.b16 %v548
        %v1895 = vunpack.c.h.b16 %v548
        %v1896 = vunpack.c.l.b16 %v549
        %v1897 = vunpack.c.h.b16 %v549
        %v1898 = vunpack.c.l.b16 %v550
        %v1899 = vunpack.c.h.b16 %v550
        %v1900 = vunpack.c.l.b16 %v551
        %v1901 = vunpack.c.h.b16 %v551
        %v1902 = vunpack.c.l.b16 %v552
        %v1903 = vunpack.c.h.b16 %v552
        %v1904 = vunpack.c.l.b16 %v553
        %v1905 = vunpack.c.h.b16 %v553
        %v1906 = vunpack.c.l.b16 %v554
        %v1907 = vunpack.c.h.b16 %v554
        %v1908 = vunpack.c.l.b16 %v555
        %v1909 = vunpack.c.h.b16 %v555
        %v1910 = vunpack.c.l.b16 %v556
        %v1911 = vunpack.c.h.b16 %v556
        %v1912 = vunpack.c.l.b16 %v557
        %v1913 = vunpack.c.h.b16 %v557
        %v1914 = vunpack.c.l.b16 %v558
        %v1915 = vunpack.c.h.b16 %v558
        %v1916 = vunpack.c.l.b16 %v559
        %v1917 = vunpack.c.h.b16 %v559
        %v1918 = vunpack.c.l.b16 %v560
        %v1919 = vunpack.c.h.b16 %v560
        %v1920 = vunpack.c.l.b16 %v561
        %v1921 = vunpack.c.h.b16 %v561
        %v1922 = vunpack.c.l.b16 %v562
        %v1923 = vunpack.c.h.b16 %v562
        %v1924 = vunpack.c.l.b16 %v563
        %v1925 = vunpack.c.h.b16 %v563
        %v1926 = vunpack.c.l.b16 %v564
        %v1927 = vunpack.c.h.b16 %v564
        %v1928 = vunpack.c.l.b16 %v565
        %v1929 = vunpack.c.h.b16 %v565
        %v1930 = vunpack.c.l.b16 %v566
        %v1931 = vunpack.c.h.b16 %v566
        %v1932 = vunpack.c.l.b16 %v567
        %v1933 = vunpack.c.h.b16 %v567
        %v1934 = vunpack.c.l.b16 %v568
        %v1935 = vunpack.c.h.b16 %v568
        %v1936 = vunpack.c.l.b16 %v569
        %v1937 = vunpack.c.h.b16 %v569
        %v1938 = vunpack.c.l.b16 %v570
        %v1939 = vunpack.c.h.b16 %v570
        %v1940 = vunpack.c.l.b16 %v571
        %v1941 = vunpack.c.h.b16 %v571
        %v1942 = vunpack.c.l.b16 %v572
        %v1943 = vunpack.c.h.b16 %v572
        %v1944 = vunpack.c.l.b16 %v573
        %v1945 = vunpack.c.h.b16 %v573
        %v1946 = vunpack.c.l.b16 %v574
        %v1947 = vunpack.c.h.b16 %v574
        %v1948 = vunpack.c.l.b16 %v575
        %v1949 = vunpack.c.h.b16 %v575
        %v1950 = vunpack.c.l.b16 %v576
        %v1951 = vunpack.c.h.b16 %v576
        %v1952 = vunpack.c.l.b16 %v577
        %v1953 = vunpack.c.h.b16 %v577
        %v1954 = vunpack.c.l.b16 %v578
        %v1955 = vunpack.c.h.b16 %v578
        %v1956 = vunpack.c.l.b16 %v579
        %v1957 = vunpack.c.h.b16 %v579
        %v1958 = vunpack.c.l.b16 %v580
        %v1959 = vunpack.c.h.b16 %v580
        %v1960 = vunpack.c.l.b16 %v581
        %v1961 = vunpack.c.h.b16 %v581
        %v1962 = vunpack.c.l.b16 %v582
        %v1963 = vunpack.c.h.b16 %v582
        %v1964 = vunpack.c.l.b16 %v583
        %v1965 = vunpack.c.h.b16 %v583
        %v1966 = vunpack.c.l.b16 %v584
        %v1967 = vunpack.c.h.b16 %v584
        %v1968 = vunpack.c.l.b16 %v585
        %v1969 = vunpack.c.h.b16 %v585
        %v1970 = vunpack.c.l.b16 %v586
        %v1971 = vunpack.c.h.b16 %v586
        %v1972 = vunpack.c.l.b16 %v587
        %v1973 = vunpack.c.h.b16 %v587
        %v1974 = vunpack.c.l.b16 %v588
        %v1975 = vunpack.c.h.b16 %v588
        %v1976 = vunpack.c.l.b16 %v589
        %v1977 = vunpack.c.h.b16 %v589
        %v1978 = vunpack.c.l.b16 %v590
        %v1979 = vunpack.c.h.b16 %v590
        %v1980 = vunpack.c.l.b16 %v591
        %v1981 = vunpack.c.h.b16 %v591
        %v1982 = vunpack.c.l.b16 %v592
        %v1983 = vunpack.c.h.b16 %v592
        %v1984 = vunpack.c.l.b16 %v593
        %v1985 = vunpack.c.h.b16 %v593
        %v1986 = vunpack.c.l.b16 %v594
        %v1987 = vunpack.c.h.b16 %v594
        %v1988 = vunpack.c.l.b16 %v595
        %v1989 = vunpack.c.h.b16 %v595
        %v1990 = vunpack.c.l.b16 %v596
        %v1991 = vunpack.c.h.b16 %v596
        %v1992 = vunpack.c.l.b16 %v597
        %v1993 = vunpack.c.h.b16 %v597
        %v1994 = vunpack.c.l.b16 %v598
        %v1995 = vunpack.c.h.b16 %v598
        %v1996 = vunpack.c.l.b16 %v599
        %v1997 = vunpack.c.h.b16 %v599
        %v1998 = vunpack.c.l.b16 %v600
        %v1999 = vunpack.c.h.b16 %v600
        %v2000 = vunpack.c.l.b16 %v601
        %v2001 = vunpack.c.h.b16 %v601
        %v2002 = vunpack.c.l.b16 %v602
        %v2003 = vunpack.c.h.b16 %v602
        %v2004 = vunpack.c.l.b16 %v603
        %v2005 = vunpack.c.h.b16 %v603
        %v2006 = vunpack.c.l.b16 %v604
        %v2007 = vunpack.c.h.b16 %v604
        %v2008 = vunpack.c.l.b16 %v605
        %v2009 = vunpack.c.h.b16 %v605
        %v2010 = vunpack.c.l.b16 %v606
        %v2011 = vunpack.c.h.b16 %v606
        %v2012 = vunpack.c.l.b16 %v607
        %v2013 = vunpack.c.h.b16 %v607
        %v2014 = vunpack.c.l.b16 %v608
        %v2015 = vunpack.c.h.b16 %v608
        %v2016 = vunpack.c.l.b16 %v609
        %v2017 = vunpack.c.h.b16 %v609
        %v2018 = vunpack.c.l.b16 %v610
        %v2019 = vunpack.c.h.b16 %v610
        %v2020 = vunpack.c.l.b16 %v611
        %v2021 = vunpack.c.h.b16 %v611
        %v2022 = vunpack.c.l.b16 %v612
        %v2023 = vunpack.c.h.b16 %v612
        %v2024 = vunpack.c.l.b16 %v613
        %v2025 = vunpack.c.h.b16 %v613
        %v2026 = vunpack.c.l.b16 %v614
        %v2027 = vunpack.c.h.b16 %v614
        %v2028 = vunpack.c.l.b16 %v615
        %v2029 = vunpack.c.h.b16 %v615
        %v2030 = vunpack.c.l.b16 %v616
        %v2031 = vunpack.c.h.b16 %v616
        %v2032 = vunpack.c.l.b16 %v617
        %v2033 = vunpack.c.h.b16 %v617
        %v2034 = vunpack.c.l.b16 %v618
        %v2035 = vunpack.c.h.b16 %v618
        %v2036 = vunpack.c.l.b16 %v619
        %v2037 = vunpack.c.h.b16 %v619
        %v2038 = vunpack.c.l.b16 %v620
        %v2039 = vunpack.c.h.b16 %v620
        %v2040 = vunpack.c.l.b16 %v621
        %v2041 = vunpack.c.h.b16 %v621
        %v2042 = vunpack.c.l.b16 %v622
        %v2043 = vunpack.c.h.b16 %v622
        %v2044 = vunpack.c.l.b16 %v623
        %v2045 = vunpack.c.h.b16 %v623
        %v2046 = vunpack.c.l.b16 %v624
        %v2047 = vunpack.c.h.b16 %v624
        %v2048 = vunpack.c.l.b16 %v625
        %v2049 = vunpack.c.h.b16 %v625
        %v2050 = vunpack.c.l.b16 %v626
        %v2051 = vunpack.c.h.b16 %v626
        %v2052 = vunpack.c.l.b16 %v627
        %v2053 = vunpack.c.h.b16 %v627
        %v2054 = vunpack.c.l.b16 %v628
        %v2055 = vunpack.c.h.b16 %v628
        %v2056 = vunpack.c.l.b16 %v629
        %v2057 = vunpack.c.h.b16 %v629
        %v2058 = vunpack.c.l.b16 %v630
        %v2059 = vunpack.c.h.b16 %v630
        %v2060 = vunpack.c.l.b16 %v631
        %v2061 = vunpack.c.h.b16 %v631
        %v2062 = vunpack.c.l.b16 %v632
        %v2063 = vunpack.c.h.b16 %v632
        %v2064 = vunpack.c.l.b16 %v633
        %v2065 = vunpack.c.h.b16 %v633
        %v2066 = vunpack.c.l.b16 %v634
        %v2067 = vunpack.c.h.b16 %v634
        %v2068 = vunpack.c.l.b16 %v635
        %v2069 = vunpack.c.h.b16 %v635
        %v2070 = vunpack.c.l.b16 %v636
        %v2071 = vunpack.c.h.b16 %v636
        %v2072 = vunpack.c.l.b16 %v637
        %v2073 = vunpack.c.h.b16 %v637
        %v2074 = vunpack.c.l.b16 %v638
        %v2075 = vunpack.c.h.b16 %v638
        %v2076 = vunpack.c.l.b16 %v639
        %v2077 = vunpack.c.h.b16 %v639
        %v2078 = vunpack.c.l.b16 %v640
        %v2079 = vunpack.c.h.b16 %v640
        %v2080 = vunpack.c.l.b16 %v641
        %v2081 = vunpack.c.h.b16 %v641
        %v2082 = vunpack.c.l.b16 %v642
        %v2083 = vunpack.c.h.b16 %v642
        %v2084 = vunpack.c.l.b16 %v643
        %v2085 = vunpack.c.h.b16 %v643
        %v2086 = vunpack.c.l.b16 %v644
        %v2087 = vunpack.c.h.b16 %v644
        %v2088 = vunpack.c.l.b16 %v645
        %v2089 = vunpack.c.h.b16 %v645
        %v2090 = vunpack.c.l.b16 %v646
        %v2091 = vunpack.c.h.b16 %v646
        %v2092 = vunpack.c.l.b16 %v647
        %v2093 = vunpack.c.h.b16 %v647
        %v2094 = vunpack.c.l.b16 %v648
        %v2095 = vunpack.c.h.b16 %v648
        %v2096 = vunpack.c.l.b16 %v649
        %v2097 = vunpack.c.h.b16 %v649
        %v2098 = vunpack.c.l.b16 %v650
        %v2099 = vunpack.c.h.b16 %v650
        %v2100 = vunpack.c.l.b16 %v651
        %v2101 = vunpack.c.h.b16 %v651
        %v2102 = vunpack.c.l.b16 %v652
        %v2103 = vunpack.c.h.b16 %v652
        %v2104 = vunpack.c.l.b16 %v653
        %v2105 = vunpack.c.h.b16 %v653
        %v2106 = vunpack.c.l.b16 %v654
        %v2107 = vunpack.c.h.b16 %v654
        %v2108 = vunpack.c.l.b16 %v655
        %v2109 = vunpack.c.h.b16 %v655
        %v2110 = vunpack.c.l.b16 %v656
        %v2111 = vunpack.c.h.b16 %v656
        %v2112 = vunpack.c.l.b16 %v657
        %v2113 = vunpack.c.h.b16 %v657
        %v2114 = vunpack.c.l.b16 %v658
        %v2115 = vunpack.c.h.b16 %v658
        %v2116 = vunpack.c.l.b16 %v659
        %v2117 = vunpack.c.h.b16 %v659
        %v2118 = vunpack.c.l.b16 %v660
        %v2119 = vunpack.c.h.b16 %v660
        %v2120 = vunpack.c.l.b16 %v661
        %v2121 = vunpack.c.h.b16 %v661
        %v2122 = vunpack.c.l.b16 %v662
        %v2123 = vunpack.c.h.b16 %v662
        %v2124 = vunpack.c.l.b16 %v663
        %v2125 = vunpack.c.h.b16 %v663
        %v2126 = vunpack.c.l.b16 %v664
        %v2127 = vunpack.c.h.b16 %v664
        %v2128 = vunpack.c.l.b16 %v665
        %v2129 = vunpack.c.h.b16 %v665
        %v2130 = vunpack.c.l.b16 %v666
        %v2131 = vunpack.c.h.b16 %v666
        %v2132 = vunpack.c.l.b16 %v667
        %v2133 = vunpack.c.h.b16 %v667
        %v2134 = vunpack.c.l.b16 %v668
        %v2135 = vunpack.c.h.b16 %v668
        %v2136 = vunpack.c.l.b16 %v669
        %v2137 = vunpack.c.h.b16 %v669
        %v2138 = vunpack.c.l.b16 %v670
        %v2139 = vunpack.c.h.b16 %v670
        %v2140 = vunpack.c.l.b16 %v671
        %v2141 = vunpack.c.h.b16 %v671
        %v2142 = vunpack.c.l.b16 %v672
        %v2143 = vunpack.c.h.b16 %v672
        %v2144 = vunpack.c.l.b16 %v673
        %v2145 = vunpack.c.h.b16 %v673
        %v2146 = vunpack.c.l.b16 %v674
        %v2147 = vunpack.c.h.b16 %v674
        %v2148 = vunpack.c.l.b16 %v675
        %v2149 = vunpack.c.h.b16 %v675
        %v2150 = vunpack.c.l.b16 %v676
        %v2151 = vunpack.c.h.b16 %v676
        %v2152 = vunpack.c.l.b16 %v677
        %v2153 = vunpack.c.h.b16 %v677
        %v2154 = vunpack.c.l.b16 %v678
        %v2155 = vunpack.c.h.b16 %v678
        %v2156 = vunpack.c.l.b16 %v679
        %v2157 = vunpack.c.h.b16 %v679
        %v2158 = vunpack.c.l.b16 %v680
        %v2159 = vunpack.c.h.b16 %v680
        %v2160 = vunpack.c.l.b16 %v681
        %v2161 = vunpack.c.h.b16 %v681
        %v2162 = vunpack.c.l.b16 %v682
        %v2163 = vunpack.c.h.b16 %v682
        %v2164 = vunpack.c.l.b16 %v683
        %v2165 = vunpack.c.h.b16 %v683
        %v2166 = vunpack.c.l.b16 %v684
        %v2167 = vunpack.c.h.b16 %v684
        %v2168 = vunpack.c.l.b16 %v685
        %v2169 = vunpack.c.h.b16 %v685
        %v2170 = vunpack.c.l.b16 %v686
        %v2171 = vunpack.c.h.b16 %v686
        %v2172 = vunpack.c.l.b16 %v687
        %v2173 = vunpack.c.h.b16 %v687
        %v2174 = vunpack.c.l.b16 %v688
        %v2175 = vunpack.c.h.b16 %v688
        %v2176 = vunpack.c.l.b16 %v689
        %v2177 = vunpack.c.h.b16 %v689
        %v2178 = vunpack.c.l.b16 %v690
        %v2179 = vunpack.c.h.b16 %v690
        %v2180 = vunpack.c.l.b16 %v691
        %v2181 = vunpack.c.h.b16 %v691
        %v2182 = vunpack.c.l.b16 %v692
        %v2183 = vunpack.c.h.b16 %v692
        %v2184 = vunpack.c.l.b16 %v693
        %v2185 = vunpack.c.h.b16 %v693
        %v2186 = vunpack.c.l.b16 %v694
        %v2187 = vunpack.c.h.b16 %v694
        %v2188 = vunpack.c.l.b16 %v695
        %v2189 = vunpack.c.h.b16 %v695
        %v2190 = vunpack.c.l.b16 %v696
        %v2191 = vunpack.c.h.b16 %v696
        %v2192 = vunpack.c.l.b16 %v697
        %v2193 = vunpack.c.h.b16 %v697
        %v2194 = vunpack.c.l.b16 %v698
        %v2195 = vunpack.c.h.b16 %v698
        %v2196 = vunpack.c.l.b16 %v699
        %v2197 = vunpack.c.h.b16 %v699
        %v2198 = vunpack.c.l.b16 %v700
        %v2199 = vunpack.c.h.b16 %v700
        %v2200 = vunpack.c.l.b16 %v701
        %v2201 = vunpack.c.h.b16 %v701
        %v2202 = vunpack.c.l.b16 %v702
        %v2203 = vunpack.c.h.b16 %v702
        %v2204 = vunpack.c.l.b16 %v703
        %v2205 = vunpack.c.h.b16 %v703
        %v2206 = vunpack.c.l.b16 %v704
        %v2207 = vunpack.c.h.b16 %v704
        %v2208 = vunpack.c.l.b16 %v705
        %v2209 = vunpack.c.h.b16 %v705
        %v2210 = vunpack.c.l.b16 %v706
        %v2211 = vunpack.c.h.b16 %v706
        %v2212 = vunpack.c.l.b16 %v707
        %v2213 = vunpack.c.h.b16 %v707
        %v2214 = vunpack.c.l.b16 %v708
        %v2215 = vunpack.c.h.b16 %v708
        %v2216 = vunpack.c.l.b16 %v709
        %v2217 = vunpack.c.h.b16 %v709
        %v2218 = vunpack.c.l.b16 %v710
        %v2219 = vunpack.c.h.b16 %v710
        %v2220 = vunpack.c.l.b16 %v711
        %v2221 = vunpack.c.h.b16 %v711
        %v2222 = vunpack.c.l.b16 %v712
        %v2223 = vunpack.c.h.b16 %v712
        %v2224 = vunpack.c.l.b16 %v713
        %v2225 = vunpack.c.h.b16 %v713
        %v2226 = vunpack.c.l.b16 %v714
        %v2227 = vunpack.c.h.b16 %v714
        %v2228 = vunpack.c.l.b16 %v715
        %v2229 = vunpack.c.h.b16 %v715
        %v2230 = vunpack.c.l.b16 %v716
        %v2231 = vunpack.c.h.b16 %v716
        %v2232 = vunpack.c.l.b16 %v717
        %v2233 = vunpack.c.h.b16 %v717
        %v2234 = vunpack.c.l.b16 %v718
        %v2235 = vunpack.c.h.b16 %v718
        %v2236 = vunpack.c.l.b16 %v719
        %v2237 = vunpack.c.h.b16 %v719
        %v2238 = vunpack.c.l.b16 %v720
        %v2239 = vunpack.c.h.b16 %v720
        %v2240 = vunpack.c.l.b16 %v721
        %v2241 = vunpack.c.h.b16 %v721
        %v2242 = vunpack.c.l.b16 %v722
        %v2243 = vunpack.c.h.b16 %v722
        %v2244 = vunpack.c.l.b16 %v723
        %v2245 = vunpack.c.h.b16 %v723
        %v2246 = vunpack.c.l.b16 %v724
        %v2247 = vunpack.c.h.b16 %v724
        %v2248 = vunpack.c.l.b16 %v725
        %v2249 = vunpack.c.h.b16 %v725
        %v2250 = vunpack.c.l.b16 %v726
        %v2251 = vunpack.c.h.b16 %v726
        %v2252 = vunpack.c.l.b16 %v727
        %v2253 = vunpack.c.h.b16 %v727
        %v2254 = vunpack.c.l.b16 %v728
        %v2255 = vunpack.c.h.b16 %v728
        %v2256 = vunpack.c.l.b16 %v729
        %v2257 = vunpack.c.h.b16 %v729
        %v2258 = vunpack.c.l.b16 %v730
        %v2259 = vunpack.c.h.b16 %v730
        %v2260 = vunpack.c.l.b16 %v731
        %v2261 = vunpack.c.h.b16 %v731
        %v2262 = vunpack.c.l.b16 %v732
        %v2263 = vunpack.c.h.b16 %v732
        %v2264 = vunpack.c.l.b16 %v733
        %v2265 = vunpack.c.h.b16 %v733
        %v2266 = vunpack.c.l.b16 %v734
        %v2267 = vunpack.c.h.b16 %v734
        %v2268 = vunpack.c.l.b16 %v735
        %v2269 = vunpack.c.h.b16 %v735
        %v2270 = vunpack.c.l.b16 %v736
        %v2271 = vunpack.c.h.b16 %v736
        %v2272 = vunpack.c.l.b16 %v737
        %v2273 = vunpack.c.h.b16 %v737
        %v2274 = vunpack.c.l.b16 %v738
        %v2275 = vunpack.c.h.b16 %v738
        %v2276 = vunpack.c.l.b16 %v739
        %v2277 = vunpack.c.h.b16 %v739
        %v2278 = vunpack.c.l.b16 %v740
        %v2279 = vunpack.c.h.b16 %v740
        %v2280 = vunpack.c.l.b16 %v741
        %v2281 = vunpack.c.h.b16 %v741
        %v2282 = vunpack.c.l.b16 %v742
        %v2283 = vunpack.c.h.b16 %v742
        %v2284 = vunpack.c.l.b16 %v743
        %v2285 = vunpack.c.h.b16 %v743
        %v2286 = vunpack.c.l.b16 %v744
        %v2287 = vunpack.c.h.b16 %v744
        %v2288 = vunpack.c.l.b16 %v745
        %v2289 = vunpack.c.h.b16 %v745
        %v2290 = vunpack.c.l.b16 %v746
        %v2291 = vunpack.c.h.b16 %v746
        %v2292 = vunpack.c.l.b16 %v747
        %v2293 = vunpack.c.h.b16 %v747
        %v2294 = vunpack.c.l.b16 %v748
        %v2295 = vunpack.c.h.b16 %v748
        %v2296 = vunpack.c.l.b16 %v749
        %v2297 = vunpack.c.h.b16 %v749
        %v2298 = vunpack.c.l.b16 %v750
        %v2299 = vunpack.c.h.b16 %v750
        %v2300 = vunpack.c.l.b16 %v751
        %v2301 = vunpack.c.h.b16 %v751
        %v2302 = vunpack.c.l.b16 %v752
        %v2303 = vunpack.c.h.b16 %v752
        %v2304 = vunpack.c.l.b16 %v753
        %v2305 = vunpack.c.h.b16 %v753
        %v2306 = vunpack.c.l.b16 %v754
        %v2307 = vunpack.c.h.b16 %v754
        %v2308 = vunpack.c.l.b16 %v755
        %v2309 = vunpack.c.h.b16 %v755
        %v2310 = vunpack.c.l.b16 %v756
        %v2311 = vunpack.c.h.b16 %v756
        %v2312 = vunpack.c.l.b16 %v757
        %v2313 = vunpack.c.h.b16 %v757
        %v2314 = vunpack.c.l.b16 %v758
        %v2315 = vunpack.c.h.b16 %v758
        %v2316 = vunpack.c.l.b16 %v759
        %v2317 = vunpack.c.h.b16 %v759
        %v2318 = vunpack.c.l.b16 %v760
        %v2319 = vunpack.c.h.b16 %v760
        %v2320 = vunpack.c.l.b16 %v761
        %v2321 = vunpack.c.h.b16 %v761
        %v2322 = vunpack.c.l.b16 %v762
        %v2323 = vunpack.c.h.b16 %v762
        %v2324 = vunpack.c.l.b16 %v763
        %v2325 = vunpack.c.h.b16 %v763
        %v2326 = vunpack.c.l.b16 %v764
        %v2327 = vunpack.c.h.b16 %v764
        %v2328 = vunpack.c.l.b16 %v765
        %v2329 = vunpack.c.h.b16 %v765
        %v2330 = vunpack.c.l.b16 %v766
        %v2331 = vunpack.c.h.b16 %v766
        %v2332 = vunpack.c.l.b16 %v767
        %v2333 = vunpack.c.h.b16 %v767
        %v2334 = vunpack.c.l.b16 %v768
        %v2335 = vunpack.c.h.b16 %v768
        %v2336 = vunpack.c.l.b16 %v769
        %v2337 = vunpack.c.h.b16 %v769
        %v2338 = vunpack.c.l.b16 %v770
        %v2339 = vunpack.c.h.b16 %v770
        %v2340 = vunpack.c.l.b16 %v771
        %v2341 = vunpack.c.h.b16 %v771
        %v2342 = vunpack.c.l.b16 %v772
        %v2343 = vunpack.c.h.b16 %v772
        %v2344 = vunpack.c.l.b16 %v773
        %v2345 = vunpack.c.h.b16 %v773
        %v2346 = vunpack.c.l.b16 %v774
        %v2347 = vunpack.c.h.b16 %v774
        %v2348 = vunpack.c.l.b16 %v775
        %v2349 = vunpack.c.h.b16 %v775
        %v2350 = vunpack.c.l.b16 %v776
        %v2351 = vunpack.c.h.b16 %v776
        %v2352 = vunpack.c.l.b16 %v777
        %v2353 = vunpack.c.h.b16 %v777
        %v2354 = vunpack.c.l.b16 %v778
        %v2355 = vunpack.c.h.b16 %v778
        %v2356 = vunpack.c.l.b16 %v779
        %v2357 = vunpack.c.h.b16 %v779
        %v2358 = vunpack.c.l.b16 %v780
        %v2359 = vunpack.c.h.b16 %v780
        %v2360 = vunpack.c.l.b16 %v781
        %v2361 = vunpack.c.h.b16 %v781
        %v2362 = vunpack.c.l.b16 %v782
        %v2363 = vunpack.c.h.b16 %v782
        %v2364 = vunpack.c.l.b16 %v783
        %v2365 = vunpack.c.h.b16 %v783
        %v2366 = vunpack.c.l.b16 %v784
        %v2367 = vunpack.c.h.b16 %v784
        %v2368 = vunpack.c.l.b16 %v785
        %v2369 = vunpack.c.h.b16 %v785
        %v2370 = vunpack.c.l.b16 %v786
        %v2371 = vunpack.c.h.b16 %v786
        %v2372 = vunpack.c.l.b16 %v787
        %v2373 = vunpack.c.h.b16 %v787
        %v2374 = vunpack.c.l.b16 %v788
        %v2375 = vunpack.c.h.b16 %v788
        %v2376 = vunpack.c.l.b16 %v789
        %v2377 = vunpack.c.h.b16 %v789
        %v2378 = vunpack.c.l.b16 %v790
        %v2379 = vunpack.c.h.b16 %v790
        %v2380 = vunpack.c.l.b16 %v791
        %v2381 = vunpack.c.h.b16 %v791
        %v2382 = vunpack.c.l.b16 %v792
        %v2383 = vunpack.c.h.b16 %v792
        %v2384 = vunpack.c.l.b16 %v793
        %v2385 = vunpack.c.h.b16 %v793
        %v2386 = vunpack.c.l.b16 %v794
        %v2387 = vunpack.c.h.b16 %v794
        %v2388 = vunpack.c.l.b16 %v795
        %v2389 = vunpack.c.h.b16 %v795
        %v2390 = vunpack.c.l.b16 %v796
        %v2391 = vunpack.c.h.b16 %v796
        %v2392 = vunpack.c.l.b16 %v797
        %v2393 = vunpack.c.h.b16 %v797
        %v2394 = vunpack.c.l.b16 %v798
        %v2395 = vunpack.c.h.b16 %v798
        %v2396 = vunpack.c.l.b16 %v799
        %v2397 = vunpack.c.h.b16 %v799
        %v2398 = vunpack.c.l.b16 %v800
        %v2399 = vunpack.c.h.b16 %v800
        %v2400 = vunpack.c.l.b16 %v801
        %v2401 = vunpack.c.h.b16 %v801
        %v2402 = vunpack.c.l.b16 %v802
        %v2403 = vunpack.c.h.b16 %v802
        %v2404 = vunpack.c.l.b16 %v803
        %v2405 = vunpack.c.h.b16 %v803
        %v2406 = vunpack.c.l.b16 %v804
        %v2407 = vunpack.c.h.b16 %v804
        %v2408 = vunpack.c.l.b16 %v805
        %v2409 = vunpack.c.h.b16 %v805
        %v2410 = vunpack.c.l.b16 %v806
        %v2411 = vunpack.c.h.b16 %v806
        %v2412 = vunpack.c.l.b16 %v807
        %v2413 = vunpack.c.h.b16 %v807
        %v2414 = vunpack.c.l.b16 %v808
        %v2415 = vunpack.c.h.b16 %v808
        %v2416 = vunpack.c.l.b16 %v809
        %v2417 = vunpack.c.h.b16 %v809
        %v2418 = vunpack.c.l.b16 %v810
        %v2419 = vunpack.c.h.b16 %v810
        %v2420 = vunpack.c.l.b16 %v811
        %v2421 = vunpack.c.h.b16 %v811
        %v2422 = vunpack.c.l.b16 %v812
        %v2423 = vunpack.c.h.b16 %v812
        %v2424 = vunpack.c.l.b16 %v813
        %v2425 = vunpack.c.h.b16 %v813
        %v2426 = vunpack.c.l.b16 %v814
        %v2427 = vunpack.c.h.b16 %v814
        %v2428 = vunpack.c.l.b16 %v815
        %v2429 = vunpack.c.h.b16 %v815
        %v2430 = vunpack.c.l.b16 %v816
        %v2431 = vunpack.c.h.b16 %v816
        %v2432 = vunpack.c.l.b16 %v817
        %v2433 = vunpack.c.h.b16 %v817
        %v2434 = vpack.c.b16 %v1414, %v1410
        %v2435 = vpack.c.b16 %v1415, %v1411
        %v2436 = vpack.c.b16 %v1416, %v1412
        %v2437 = vpack.c.b16 %v1417, %v1413
        %v2438 = vpack.c.b16 %v1422, %v1418
        %v2439 = vpack.c.b16 %v1423, %v1419
        %v2440 = vpack.c.b16 %v1424, %v1420
        %v2441 = vpack.c.b16 %v1425, %v1421
        %v2442 = vpack.c.b16 %v1430, %v1426
        %v2443 = vpack.c.b16 %v1431, %v1427
        %v2444 = vpack.c.b16 %v1432, %v1428
        %v2445 = vpack.c.b16 %v1433, %v1429
        %v2446 = vpack.c.b16 %v1438, %v1434
        %v2447 = vpack.c.b16 %v1439, %v1435
        %v2448 = vpack.c.b16 %v1440, %v1436
        %v2449 = vpack.c.b16 %v1441, %v1437
        %v2450 = vpack.c.b16 %v1446, %v1442
        %v2451 = vpack.c.b16 %v1447, %v1443
        %v2452 = vpack.c.b16 %v1448, %v1444
        %v2453 = vpack.c.b16 %v1449, %v1445
        %v2454 = vpack.c.b16 %v1454, %v1450
        %v2455 = vpack.c.b16 %v1455, %v1451
        %v2456 = vpack.c.b16 %v1456, %v1452
        %v2457 = vpack.c.b16 %v1457, %v1453
        %v2458 = vpack.c.b16 %v1462, %v1458
        %v2459 = vpack.c.b16 %v1463, %v1459
        %v2460 = vpack.c.b16 %v1464, %v1460
        %v2461 = vpack.c.b16 %v1465, %v1461
        %v2462 = vpack.c.b16 %v1470, %v1466
        %v2463 = vpack.c.b16 %v1471, %v1467
        %v2464 = vpack.c.b16 %v1472, %v1468
        %v2465 = vpack.c.b16 %v1473, %v1469
        %v2466 = vpack.c.b16 %v1478, %v1474
        %v2467 = vpack.c.b16 %v1479, %v1475
        %v2468 = vpack.c.b16 %v1480, %v1476
        %v2469 = vpack.c.b16 %v1481, %v1477
        %v2470 = vpack.c.b16 %v1486, %v1482
        %v2471 = vpack.c.b16 %v1487, %v1483
        %v2472 = vpack.c.b16 %v1488, %v1484
        %v2473 = vpack.c.b16 %v1489, %v1485
        %v2474 = vpack.c.b16 %v1494, %v1490
        %v2475 = vpack.c.b16 %v1495, %v1491
        %v2476 = vpack.c.b16 %v1496, %v1492
        %v2477 = vpack.c.b16 %v1497, %v1493
        %v2478 = vpack.c.b16 %v1502, %v1498
        %v2479 = vpack.c.b16 %v1503, %v1499
        %v2480 = vpack.c.b16 %v1504, %v1500
        %v2481 = vpack.c.b16 %v1505, %v1501
        %v2482 = vpack.c.b16 %v1510, %v1506
        %v2483 = vpack.c.b16 %v1511, %v1507
        %v2484 = vpack.c.b16 %v1512, %v1508
        %v2485 = vpack.c.b16 %v1513, %v1509
        %v2486 = vpack.c.b16 %v1518, %v1514
        %v2487 = vpack.c.b16 %v1519, %v1515
        %v2488 = vpack.c.b16 %v1520, %v1516
        %v2489 = vpack.c.b16 %v1521, %v1517
        %v2490 = vpack.c.b16 %v1526, %v1522
        %v2491 = vpack.c.b16 %v1527, %v1523
        %v2492 = vpack.c.b16 %v1528, %v1524
        %v2493 = vpack.c.b16 %v1529, %v1525
        %v2494 = vpack.c.b16 %v1534, %v1530
        %v2495 = vpack.c.b16 %v1535, %v1531
        %v2496 = vpack.c.b16 %v1536, %v1532
        %v2497 = vpack.c.b16 %v1537, %v1533
        %v2498 = vpack.c.b16 %v1542, %v1538
        %v2499 = vpack.c.b16 %v1543, %v1539
        %v2500 = vpack.c.b16 %v1544, %v1540
        %v2501 = vpack.c.b16 %v1545, %v1541
        %v2502 = vpack.c.b16 %v1550, %v1546
        %v2503 = vpack.c.b16 %v1551, %v1547
        %v2504 = vpack.c.b16 %v1552, %v1548
        %v2505 = vpack.c.b16 %v1553, %v1549
        %v2506 = vpack.c.b16 %v1558, %v1554
        %v2507 = vpack.c.b16 %v1559, %v1555
        %v2508 = vpack.c.b16 %v1560, %v1556
        %v2509 = vpack.c.b16 %v1561, %v1557
        %v2510 = vpack.c.b16 %v1566, %v1562
        %v2511 = vpack.c.b16 %v1567, %v1563
        %v2512 = vpack.c.b16 %v1568, %v1564
        %v2513 = vpack.c.b16 %v1569, %v1565
        %v2514 = vpack.c.b16 %v1574, %v1570
        %v2515 = vpack.c.b16 %v1575, %v1571
        %v2516 = vpack.c.b16 %v1576, %v1572
        %v2517 = vpack.c.b16 %v1577, %v1573
        %v2518 = vpack.c.b16 %v1582, %v1578
        %v2519 = vpack.c.b16 %v1583, %v1579
        %v2520 = vpack.c.b16 %v1584, %v1580
        %v2521 = vpack.c.b16 %v1585, %v1581
        %v2522 = vpack.c.b16 %v1590, %v1586
        %v2523 = vpack.c.b16 %v1591, %v1587
        %v2524 = vpack.c.b16 %v1592, %v1588
        %v2525 = vpack.c.b16 %v1593, %v1589
        %v2526 = vpack.c.b16 %v1598, %v1594
        %v2527 = vpack.c.b16 %v1599, %v1595
        %v2528 = vpack.c.b16 %v1600, %v1596
        %v2529 = vpack.c.b16 %v1601, %v1597
        %v2530 = vpack.c.b16 %v1606, %v1602
        %v2531 = vpack.c.b16 %v1607, %v1603
        %v2532 = vpack.c.b16 %v1608, %v1604
        %v2533 = vpack.c.b16 %v1609, %v1605
        %v2534 = vpack.c.b16 %v1614, %v1610
        %v2535 = vpack.c.b16 %v1615, %v1611
        %v2536 = vpack.c.b16 %v1616, %v1612
        %v2537 = vpack.c.b16 %v1617, %v1613
        %v2538 = vpack.c.b16 %v1622, %v1618
        %v2539 = vpack.c.b16 %v1623, %v1619
        %v2540 = vpack.c.b16 %v1624, %v1620
        %v2541 = vpack.c.b16 %v1625, %v1621
        %v2542 = vpack.c.b16 %v1630, %v1626
        %v2543 = vpack.c.b16 %v1631, %v1627
        %v2544 = vpack.c.b16 %v1632, %v1628
        %v2545 = vpack.c.b16 %v1633, %v1629
        %v2546 = vpack.c.b16 %v1638, %v1634
        %v2547 = vpack.c.b16 %v1639, %v1635
        %v2548 = vpack.c.b16 %v1640, %v1636
        %v2549 = vpack.c.b16 %v1641, %v1637
        %v2550 = vpack.c.b16 %v1646, %v1642
        %v2551 = vpack.c.b16 %v1647, %v1643
        %v2552 = vpack.c.b16 %v1648, %v1644
        %v2553 = vpack.c.b16 %v1649, %v1645
        %v2554 = vpack.c.b16 %v1654, %v1650
        %v2555 = vpack.c.b16 %v1655, %v1651
        %v2556 = vpack.c.b16 %v1656, %v1652
        %v2557 = vpack.c.b16 %v1657, %v1653
        %v2558 = vpack.c.b16 %v1662, %v1658
        %v2559 = vpack.c.b16 %v1663, %v1659
        %v2560 = vpack.c.b16 %v1664, %v1660
        %v2561 = vpack.c.b16 %v1665, %v1661
        %v2562 = vpack.c.b16 %v1670, %v1666
        %v2563 = vpack.c.b16 %v1671, %v1667
        %v2564 = vpack.c.b16 %v1672, %v1668
        %v2565 = vpack.c.b16 %v1673, %v1669
        %v2566 = vpack.c.b16 %v1678, %v1674
        %v2567 = vpack.c.b16 %v1679, %v1675
        %v2568 = vpack.c.b16 %v1680, %v1676
        %v2569 = vpack.c.b16 %v1681, %v1677
        %v2570 = vpack.c.b16 %v1686, %v1682
        %v2571 = vpack.c.b16 %v1687, %v1683
        %v2572 = vpack.c.b16 %v1688, %v1684
        %v2573 = vpack.c.b16 %v1689, %v1685
        %v2574 = vpack.c.b16 %v1694, %v1690
        %v2575 = vpack.c.b16 %v1695, %v1691
        %v2576 = vpack.c.b16 %v1696, %v1692
        %v2577 = vpack.c.b16 %v1697, %v1693
        %v2578 = vpack.c.b16 %v1702, %v1698
        %v2579 = vpack.c.b16 %v1703, %v1699
        %v2580 = vpack.c.b16 %v1704, %v1700
        %v2581 = vpack.c.b16 %v1705, %v1701
        %v2582 = vpack.c.b16 %v1710, %v1706
        %v2583 = vpack.c.b16 %v1711, %v1707
        %v2584 = vpack.c.b16 %v1712, %v1708
        %v2585 = vpack.c.b16 %v1713, %v1709
        %v2586 = vpack.c.b16 %v1718, %v1714
        %v2587 = vpack.c.b16 %v1719, %v1715
        %v2588 = vpack.c.b16 %v1720, %v1716
        %v2589 = vpack.c.b16 %v1721, %v1717
        %v2590 = vpack.c.b16 %v1726, %v1722
        %v2591 = vpack.c.b16 %v1727, %v1723
        %v2592 = vpack.c.b16 %v1728, %v1724
        %v2593 = vpack.c.b16 %v1729, %v1725
        %v2594 = vpack.c.b16 %v1734, %v1730
        %v2595 = vpack.c.b16 %v1735, %v1731
        %v2596 = vpack.c.b16 %v1736, %v1732
        %v2597 = vpack.c.b16 %v1737, %v1733
        %v2598 = vpack.c.b16 %v1742, %v1738
        %v2599 = vpack.c.b16 %v1743, %v1739
        %v2600 = vpack.c.b16 %v1744, %v1740
        %v2601 = vpack.c.b16 %v1745, %v1741
        %v2602 = vpack.c.b16 %v1750, %v1746
        %v2603 = vpack.c.b16 %v1751, %v1747
        %v2604 = vpack.c.b16 %v1752, %v1748
        %v2605 = vpack.c.b16 %v1753, %v1749
        %v2606 = vpack.c.b16 %v1758, %v1754
        %v2607 = vpack.c.b16 %v1759, %v1755
        %v2608 = vpack.c.b16 %v1760, %v1756
        %v2609 = vpack.c.b16 %v1761, %v1757
        %v2610 = vpack.c.b16 %v1766, %v1762
        %v2611 = vpack.c.b16 %v1767, %v1763
        %v2612 = vpack.c.b16 %v1768, %v1764
        %v2613 = vpack.c.b16 %v1769, %v1765
        %v2614 = vpack.c.b16 %v1774, %v1770
        %v2615 = vpack.c.b16 %v1775, %v1771
        %v2616 = vpack.c.b16 %v1776, %v1772
        %v2617 = vpack.c.b16 %v1777, %v1773
        %v2618 = vpack.c.b16 %v1782, %v1778
        %v2619 = vpack.c.b16 %v1783, %v1779
        %v2620 = vpack.c.b16 %v1784, %v1780
        %v2621 = vpack.c.b16 %v1785, %v1781
        %v2622 = vpack.c.b16 %v1790, %v1786
        %v2623 = vpack.c.b16 %v1791, %v1787
        %v2624 = vpack.c.b16 %v1792, %v1788
        %v2625 = vpack.c.b16 %v1793, %v1789
        %v2626 = vpack.c.b16 %v1798, %v1794
        %v2627 = vpack.c.b16 %v1799, %v1795
        %v2628 = vpack.c.b16 %v1800, %v1796
        %v2629 = vpack.c.b16 %v1801, %v1797
        %v2630 = vpack.c.b16 %v1806, %v1802
        %v2631 = vpack.c.b16 %v1807, %v1803
        %v2632 = vpack.c.b16 %v1808, %v1804
        %v2633 = vpack.c.b16 %v1809, %v1805
        %v2634 = vpack.c.b16 %v1814, %v1810
        %v2635 = vpack.c.b16 %v1815, %v1811
        %v2636 = vpack.c.b16 %v1816, %v1812
        %v2637 = vpack.c.b16 %v1817, %v1813
        %v2638 = vpack.c.b16 %v1822, %v1818
        %v2639 = vpack.c.b16 %v1823, %v1819
        %v2640 = vpack.c.b16 %v1824, %v1820
        %v2641 = vpack.c.b16 %v1825, %v1821
        %v2642 = vpack.c.b16 %v1830, %v1826
        %v2643 = vpack.c.b16 %v1831, %v1827
        %v2644 = vpack.c.b16 %v1832, %v1828
        %v2645 = vpack.c.b16 %v1833, %v1829
        %v2646 = vpack.c.b16 %v1838, %v1834
        %v2647 = vpack.c.b16 %v1839, %v1835
        %v2648 = vpack.c.b16 %v1840, %v1836
        %v2649 = vpack.c.b16 %v1841, %v1837
        %v2650 = vpack.c.b16 %v1846, %v1842
        %v2651 = vpack.c.b16 %v1847, %v1843
        %v2652 = vpack.c.b16 %v1848, %v1844
        %v2653 = vpack.c.b16 %v1849, %v1845
        %v2654 = vpack.c.b16 %v1854, %v1850
        %v2655 = vpack.c.b16 %v1855, %v1851
        %v2656 = vpack.c.b16 %v1856, %v1852
        %v2657 = vpack.c.b16 %v1857, %v1853
        %v2658 = vpack.c.b16 %v1862, %v1858
        %v2659 = vpack.c.b16 %v1863, %v1859
        %v2660 = vpack.c.b16 %v1864, %v1860
        %v2661 = vpack.c.b16 %v1865, %v1861
        %v2662 = vpack.c.b16 %v1870, %v1866
        %v2663 = vpack.c.b16 %v1871, %v1867
        %v2664 = vpack.c.b16 %v1872, %v1868
        %v2665 = vpack.c.b16 %v1873, %v1869
        %v2666 = vpack.c.b16 %v1878, %v1874
        %v2667 = vpack.c.b16 %v1879, %v1875
        %v2668 = vpack.c.b16 %v1880, %v1876
        %v2669 = vpack.c.b16 %v1881, %v1877
        %v2670 = vpack.c.b16 %v1886, %v1882
        %v2671 = vpack.c.b16 %v1887, %v1883
        %v2672 = vpack.c.b16 %v1888, %v1884
        %v2673 = vpack.c.b16 %v1889, %v1885
        %v2674 = vpack.c.b16 %v1894, %v1890
        %v2675 = vpack.c.b16 %v1895, %v1891
        %v2676 = vpack.c.b16 %v1896, %v1892
        %v2677 = vpack.c.b16 %v1897, %v1893
        %v2678 = vpack.c.b16 %v1902, %v1898
        %v2679 = vpack.c.b16 %v1903, %v1899
        %v2680 = vpack.c.b16 %v1904, %v1900
        %v2681 = vpack.c.b16 %v1905, %v1901
        %v2682 = vpack.c.b16 %v1910, %v1906
        %v2683 = vpack.c.b16 %v1911, %v1907
        %v2684 = vpack.c.b16 %v1912, %v1908
        %v2685 = vpack.c.b16 %v1913, %v1909
        %v2686 = vpack.c.b16 %v1918, %v1914
        %v2687 = vpack.c.b16 %v1919, %v1915
        %v2688 = vpack.c.b16 %v1920, %v1916
        %v2689 = vpack.c.b16 %v1921, %v1917
        %v2690 = vpack.c.b16 %v1926, %v1922
        %v2691 = vpack.c.b16 %v1927, %v1923
        %v2692 = vpack.c.b16 %v1928, %v1924
        %v2693 = vpack.c.b16 %v1929, %v1925
        %v2694 = vpack.c.b16 %v1934, %v1930
        %v2695 = vpack.c.b16 %v1935, %v1931
        %v2696 = vpack.c.b16 %v1936, %v1932
        %v2697 = vpack.c.b16 %v1937, %v1933
        %v2698 = vpack.c.b16 %v1942, %v1938
        %v2699 = vpack.c.b16 %v1943, %v1939
        %v2700 = vpack.c.b16 %v1944, %v1940
        %v2701 = vpack.c.b16 %v1945, %v1941
        %v2702 = vpack.c.b16 %v1950, %v1946
        %v2703 = vpack.c.b16 %v1951, %v1947
        %v2704 = vpack.c.b16 %v1952, %v1948
        %v2705 = vpack.c.b16 %v1953, %v1949
        %v2706 = vpack.c.b16 %v1958, %v1954
        %v2707 = vpack.c.b16 %v1959, %v1955
        %v2708 = vpack.c.b16 %v1960, %v1956
        %v2709 = vpack.c.b16 %v1961, %v1957
        %v2710 = vpack.c.b16 %v1966, %v1962
        %v2711 = vpack.c.b16 %v1967, %v1963
        %v2712 = vpack.c.b16 %v1968, %v1964
        %v2713 = vpack.c.b16 %v1969, %v1965
        %v2714 = vpack.c.b16 %v1974, %v1970
        %v2715 = vpack.c.b16 %v1975, %v1971
        %v2716 = vpack.c.b16 %v1976, %v1972
        %v2717 = vpack.c.b16 %v1977, %v1973
        %v2718 = vpack.c.b16 %v1982, %v1978
        %v2719 = vpack.c.b16 %v1983, %v1979
        %v2720 = vpack.c.b16 %v1984, %v1980
        %v2721 = vpack.c.b16 %v1985, %v1981
        %v2722 = vpack.c.b16 %v1990, %v1986
        %v2723 = vpack.c.b16 %v1991, %v1987
        %v2724 = vpack.c.b16 %v1992, %v1988
        %v2725 = vpack.c.b16 %v1993, %v1989
        %v2726 = vpack.c.b16 %v1998, %v1994
        %v2727 = vpack.c.b16 %v1999, %v1995
        %v2728 = vpack.c.b16 %v2000, %v1996
        %v2729 = vpack.c.b16 %v2001, %v1997
        %v2730 = vpack.c.b16 %v2006, %v2002
        %v2731 = vpack.c.b16 %v2007, %v2003
        %v2732 = vpack.c.b16 %v2008, %v2004
        %v2733 = vpack.c.b16 %v2009, %v2005
        %v2734 = vpack.c.b16 %v2014, %v2010
        %v2735 = vpack.c.b16 %v2015, %v2011
        %v2736 = vpack.c.b16 %v2016, %v2012
        %v2737 = vpack.c.b16 %v2017, %v2013
        %v2738 = vpack.c.b16 %v2022, %v2018
        %v2739 = vpack.c.b16 %v2023, %v2019
        %v2740 = vpack.c.b16 %v2024, %v2020
        %v2741 = vpack.c.b16 %v2025, %v2021
        %v2742 = vpack.c.b16 %v2030, %v2026
        %v2743 = vpack.c.b16 %v2031, %v2027
        %v2744 = vpack.c.b16 %v2032, %v2028
        %v2745 = vpack.c.b16 %v2033, %v2029
        %v2746 = vpack.c.b16 %v2038, %v2034
        %v2747 = vpack.c.b16 %v2039, %v2035
        %v2748 = vpack.c.b16 %v2040, %v2036
        %v2749 = vpack.c.b16 %v2041, %v2037
        %v2750 = vpack.c.b16 %v2046, %v2042
        %v2751 = vpack.c.b16 %v2047, %v2043
        %v2752 = vpack.c.b16 %v2048, %v2044
        %v2753 = vpack.c.b16 %v2049, %v2045
        %v2754 = vpack.c.b16 %v2054, %v2050
        %v2755 = vpack.c.b16 %v2055, %v2051
        %v2756 = vpack.c.b16 %v2056, %v2052
        %v2757 = vpack.c.b16 %v2057, %v2053
        %v2758 = vpack.c.b16 %v2062, %v2058
        %v2759 = vpack.c.b16 %v2063, %v2059
        %v2760 = vpack.c.b16 %v2064, %v2060
        %v2761 = vpack.c.b16 %v2065, %v2061
        %v2762 = vpack.c.b16 %v2070, %v2066
        %v2763 = vpack.c.b16 %v2071, %v2067
        %v2764 = vpack.c.b16 %v2072, %v2068
        %v2765 = vpack.c.b16 %v2073, %v2069
        %v2766 = vpack.c.b16 %v2078, %v2074
        %v2767 = vpack.c.b16 %v2079, %v2075
        %v2768 = vpack.c.b16 %v2080, %v2076
        %v2769 = vpack.c.b16 %v2081, %v2077
        %v2770 = vpack.c.b16 %v2086, %v2082
        %v2771 = vpack.c.b16 %v2087, %v2083
        %v2772 = vpack.c.b16 %v2088, %v2084
        %v2773 = vpack.c.b16 %v2089, %v2085
        %v2774 = vpack.c.b16 %v2094, %v2090
        %v2775 = vpack.c.b16 %v2095, %v2091
        %v2776 = vpack.c.b16 %v2096, %v2092
        %v2777 = vpack.c.b16 %v2097, %v2093
        %v2778 = vpack.c.b16 %v2102, %v2098
        %v2779 = vpack.c.b16 %v2103, %v2099
        %v2780 = vpack.c.b16 %v2104, %v2100
        %v2781 = vpack.c.b16 %v2105, %v2101
        %v2782 = vpack.c.b16 %v2110, %v2106
        %v2783 = vpack.c.b16 %v2111, %v2107
        %v2784 = vpack.c.b16 %v2112, %v2108
        %v2785 = vpack.c.b16 %v2113, %v2109
        %v2786 = vpack.c.b16 %v2118, %v2114
        %v2787 = vpack.c.b16 %v2119, %v2115
        %v2788 = vpack.c.b16 %v2120, %v2116
        %v2789 = vpack.c.b16 %v2121, %v2117
        %v2790 = vpack.c.b16 %v2126, %v2122
        %v2791 = vpack.c.b16 %v2127, %v2123
        %v2792 = vpack.c.b16 %v2128, %v2124
        %v2793 = vpack.c.b16 %v2129, %v2125
        %v2794 = vpack.c.b16 %v2134, %v2130
        %v2795 = vpack.c.b16 %v2135, %v2131
        %v2796 = vpack.c.b16 %v2136, %v2132
        %v2797 = vpack.c.b16 %v2137, %v2133
        %v2798 = vpack.c.b16 %v2142, %v2138
        %v2799 = vpack.c.b16 %v2143, %v2139
        %v2800 = vpack.c.b16 %v2144, %v2140
        %v2801 = vpack.c.b16 %v2145, %v2141
        %v2802 = vpack.c.b16 %v2150, %v2146
        %v2803 = vpack.c.b16 %v2151, %v2147
        %v2804 = vpack.c.b16 %v2152, %v2148
        %v2805 = vpack.c.b16 %v2153, %v2149
        %v2806 = vpack.c.b16 %v2158, %v2154
        %v2807 = vpack.c.b16 %v2159, %v2155
        %v2808 = vpack.c.b16 %v2160, %v2156
        %v2809 = vpack.c.b16 %v2161, %v2157
        %v2810 = vpack.c.b16 %v2166, %v2162
        %v2811 = vpack.c.b16 %v2167, %v2163
        %v2812 = vpack.c.b16 %v2168, %v2164
        %v2813 = vpack.c.b16 %v2169, %v2165
        %v2814 = vpack.c.b16 %v2174, %v2170
        %v2815 = vpack.c.b16 %v2175, %v2171
        %v2816 = vpack.c.b16 %v2176, %v2172
        %v2817 = vpack.c.b16 %v2177, %v2173
        %v2818 = vpack.c.b16 %v2182, %v2178
        %v2819 = vpack.c.b16 %v2183, %v2179
        %v2820 = vpack.c.b16 %v2184, %v2180
        %v2821 = vpack.c.b16 %v2185, %v2181
        %v2822 = vpack.c.b16 %v2190, %v2186
        %v2823 = vpack.c.b16 %v2191, %v2187
        %v2824 = vpack.c.b16 %v2192, %v2188
        %v2825 = vpack.c.b16 %v2193, %v2189
        %v2826 = vpack.c.b16 %v2198, %v2194
        %v2827 = vpack.c.b16 %v2199, %v2195
        %v2828 = vpack.c.b16 %v2200, %v2196
        %v2829 = vpack.c.b16 %v2201, %v2197
        %v2830 = vpack.c.b16 %v2206, %v2202
        %v2831 = vpack.c.b16 %v2207, %v2203
        %v2832 = vpack.c.b16 %v2208, %v2204
        %v2833 = vpack.c.b16 %v2209, %v2205
        %v2834 = vpack.c.b16 %v2214, %v2210
        %v2835 = vpack.c.b16 %v2215, %v2211
        %v2836 = vpack.c.b16 %v2216, %v2212
        %v2837 = vpack.c.b16 %v2217, %v2213
        %v2838 = vpack.c.b16 %v2222, %v2218
        %v2839 = vpack.c.b16 %v2223, %v2219
        %v2840 = vpack.c.b16 %v2224, %v2220
        %v2841 = vpack.c.b16 %v2225, %v2221
        %v2842 = vpack.c.b16 %v2230, %v2226
        %v2843 = vpack.c.b16 %v2231, %v2227
        %v2844 = vpack.c.b16 %v2232, %v2228
        %v2845 = vpack.c.b16 %v2233, %v2229
        %v2846 = vpack.c.b16 %v2238, %v2234
        %v2847 = vpack.c.b16 %v2239, %v2235
        %v2848 = vpack.c.b16 %v2240, %v2236
        %v2849 = vpack.c.b16 %v2241, %v2237
        %v2850 = vpack.c.b16 %v2246, %v2242
        %v2851 = vpack.c.b16 %v2247, %v2243
        %v2852 = vpack.c.b16 %v2248, %v2244
        %v2853 = vpack.c.b16 %v2249, %v2245
        %v2854 = vpack.c.b16 %v2254, %v2250
        %v2855 = vpack.c.b16 %v2255, %v2251
        %v2856 = vpack.c.b16 %v2256, %v2252
        %v2857 = vpack.c.b16 %v2257, %v2253
        %v2858 = vpack.c.b16 %v2262, %v2258
        %v2859 = vpack.c.b16 %v2263, %v2259
        %v2860 = vpack.c.b16 %v2264, %v2260
        %v2861 = vpack.c.b16 %v2265, %v2261
        %v2862 = vpack.c.b16 %v2270, %v2266
        %v2863 = vpack.c.b16 %v2271, %v2267
        %v2864 = vpack.c.b16 %v2272, %v2268
        %v2865 = vpack.c.b16 %v2273, %v2269
        %v2866 = vpack.c.b16 %v2278, %v2274
        %v2867 = vpack.c.b16 %v2279, %v2275
        %v2868 = vpack.c.b16 %v2280, %v2276
        %v2869 = vpack.c.b16 %v2281, %v2277
        %v2870 = vpack.c.b16 %v2286, %v2282
        %v2871 = vpack.c.b16 %v2287, %v2283
        %v2872 = vpack.c.b16 %v2288, %v2284
        %v2873 = vpack.c.b16 %v2289, %v2285
        %v2874 = vpack.c.b16 %v2294, %v2290
        %v2875 = vpack.c.b16 %v2295, %v2291
        %v2876 = vpack.c.b16 %v2296, %v2292
        %v2877 = vpack.c.b16 %v2297, %v2293
        %v2878 = vpack.c.b16 %v2302, %v2298
        %v2879 = vpack.c.b16 %v2303, %v2299
        %v2880 = vpack.c.b16 %v2304, %v2300
        %v2881 = vpack.c.b16 %v2305, %v2301
        %v2882 = vpack.c.b16 %v2310, %v2306
        %v2883 = vpack.c.b16 %v2311, %v2307
        %v2884 = vpack.c.b16 %v2312, %v2308
        %v2885 = vpack.c.b16 %v2313, %v2309
        %v2886 = vpack.c.b16 %v2318, %v2314
        %v2887 = vpack.c.b16 %v2319, %v2315
        %v2888 = vpack.c.b16 %v2320, %v2316
        %v2889 = vpack.c.b16 %v2321, %v2317
        %v2890 = vpack.c.b16 %v2326, %v2322
        %v2891 = vpack.c.b16 %v2327, %v2323
        %v2892 = vpack.c.b16 %v2328, %v2324
        %v2893 = vpack.c.b16 %v2329, %v2325
        %v2894 = vpack.c.b16 %v2334, %v2330
        %v2895 = vpack.c.b16 %v2335, %v2331
        %v2896 = vpack.c.b16 %v2336, %v2332
        %v2897 = vpack.c.b16 %v2337, %v2333
        %v2898 = vpack.c.b16 %v2342, %v2338
        %v2899 = vpack.c.b16 %v2343, %v2339
        %v2900 = vpack.c.b16 %v2344, %v2340
        %v2901 = vpack.c.b16 %v2345, %v2341
        %v2902 = vpack.c.b16 %v2350, %v2346
        %v2903 = vpack.c.b16 %v2351, %v2347
        %v2904 = vpack.c.b16 %v2352, %v2348
        %v2905 = vpack.c.b16 %v2353, %v2349
        %v2906 = vpack.c.b16 %v2358, %v2354
        %v2907 = vpack.c.b16 %v2359, %v2355
        %v2908 = vpack.c.b16 %v2360, %v2356
        %v2909 = vpack.c.b16 %v2361, %v2357
        %v2910 = vpack.c.b16 %v2366, %v2362
        %v2911 = vpack.c.b16 %v2367, %v2363
        %v2912 = vpack.c.b16 %v2368, %v2364
        %v2913 = vpack.c.b16 %v2369, %v2365
        %v2914 = vpack.c.b16 %v2374, %v2370
        %v2915 = vpack.c.b16 %v2375, %v2371
        %v2916 = vpack.c.b16 %v2376, %v2372
        %v2917 = vpack.c.b16 %v2377, %v2373
        %v2918 = vpack.c.b16 %v2382, %v2378
        %v2919 = vpack.c.b16 %v2383, %v2379
        %v2920 = vpack.c.b16 %v2384, %v2380
        %v2921 = vpack.c.b16 %v2385, %v2381
        %v2922 = vpack.c.b16 %v2390, %v2386
        %v2923 = vpack.c.b16 %v2391, %v2387
        %v2924 = vpack.c.b16 %v2392, %v2388
        %v2925 = vpack.c.b16 %v2393, %v2389
        %v2926 = vpack.c.b16 %v2398, %v2394
        %v2927 = vpack.c.b16 %v2399, %v2395
        %v2928 = vpack.c.b16 %v2400, %v2396
        %v2929 = vpack.c.b16 %v2401, %v2397
        %v2930 = vpack.c.b16 %v2406, %v2402
        %v2931 = vpack.c.b16 %v2407, %v2403
        %v2932 = vpack.c.b16 %v2408, %v2404
        %v2933 = vpack.c.b16 %v2409, %v2405
        %v2934 = vpack.c.b16 %v2414, %v2410
        %v2935 = vpack.c.b16 %v2415, %v2411
        %v2936 = vpack.c.b16 %v2416, %v2412
        %v2937 = vpack.c.b16 %v2417, %v2413
        %v2938 = vpack.c.b16 %v2422, %v2418
        %v2939 = vpack.c.b16 %v2423, %v2419
        %v2940 = vpack.c.b16 %v2424, %v2420
        %v2941 = vpack.c.b16 %v2425, %v2421
        %v2942 = vpack.c.b16 %v2430, %v2426
        %v2943 = vpack.c.b16 %v2431, %v2427
        %v2944 = vpack.c.b16 %v2432, %v2428
        %v2945 = vpack.c.b16 %v2433, %v2429
        %3458 = vmatpush.bf16.msra.mxu0 %v2462
        %3459 = vmatpush.bf16.msra.mxu0 %v2458
        %3460 = vmatpush.bf16.msra.mxu0 %v2454
        %3461 = vmatpush.bf16.msra.mxu0 %v2450
        %3462 = vmatpush.bf16.msra.mxu0 %v2446
        %3463 = vmatpush.bf16.msra.mxu0 %v2442
        %3464 = vmatpush.bf16.msra.mxu0 %v2438
        %3465 = vmatpush.bf16.msra.mxu0 %v2434
        %3466 = vmatmul.bf16.gmra.mxu0 %v866
        %v3467 = vpop.f32.mrf.mxu0
        %v3468 = vadd.f32 0.0, %v3467
        %v3469 = vpop.f32.mrf.mxu0
        %v3470 = vadd.f32 0.0, %v3469
        %3471 = vdwg.mxu0
        %3472 = vmatpush.bf16.msra.mxu0 %v2494
        %3473 = vmatpush.bf16.msra.mxu0 %v2490
        %3474 = vmatpush.bf16.msra.mxu0 %v2486
        %3475 = vmatpush.bf16.msra.mxu0 %v2482
        %3476 = vmatpush.bf16.msra.mxu0 %v2478
        %3477 = vmatpush.bf16.msra.mxu0 %v2474
        %3478 = vmatpush.bf16.msra.mxu0 %v2470
        %3479 = vmatpush.bf16.msra.mxu0 %v2466
        %3480 = vmatmul.bf16.gmra.mxu0 %v867
        %v3481 = vpop.f32.mrf.mxu0
        %v3482 = vadd.f32 %v3468, %v3481
        %v3483 = vpop.f32.mrf.mxu0
        %v3484 = vadd.f32 %v3470, %v3483
        %3485 = vdwg.mxu0
        %3486 = vmatpush.bf16.msra.mxu0 %v2526
        %3487 = vmatpush.bf16.msra.mxu0 %v2522
        %3488 = vmatpush.bf16.msra.mxu0 %v2518
        %3489 = vmatpush.bf16.msra.mxu0 %v2514
        %3490 = vmatpush.bf16.msra.mxu0 %v2510
        %3491 = vmatpush.bf16.msra.mxu0 %v2506
        %3492 = vmatpush.bf16.msra.mxu0 %v2502
        %3493 = vmatpush.bf16.msra.mxu0 %v2498
        %3494 = vmatmul.bf16.gmra.mxu0 %v868
        %v3495 = vpop.f32.mrf.mxu0
        %v3496 = vadd.f32 %v3482, %v3495
        %v3497 = vpop.f32.mrf.mxu0
        %v3498 = vadd.f32 %v3484, %v3497
        %3499 = vdwg.mxu0
        %3500 = vmatpush.bf16.msra.mxu0 %v2558
        %3501 = vmatpush.bf16.msra.mxu0 %v2554
        %3502 = vmatpush.bf16.msra.mxu0 %v2550
        %3503 = vmatpush.bf16.msra.mxu0 %v2546
        %3504 = vmatpush.bf16.msra.mxu0 %v2542
        %3505 = vmatpush.bf16.msra.mxu0 %v2538
        %3506 = vmatpush.bf16.msra.mxu0 %v2534
        %3507 = vmatpush.bf16.msra.mxu0 %v2530
        %3508 = vmatmul.bf16.gmra.mxu0 %v869
        %v3509 = vpop.f32.mrf.mxu0
        %v3510 = vadd.f32 %v3496, %v3509
        %v3511 = vpop.f32.mrf.mxu0
        %v3512 = vadd.f32 %v3498, %v3511
        %3513 = vdwg.mxu0
        %3514 = vmatpush.bf16.msra.mxu0 %v2590
        %3515 = vmatpush.bf16.msra.mxu0 %v2586
        %3516 = vmatpush.bf16.msra.mxu0 %v2582
        %3517 = vmatpush.bf16.msra.mxu0 %v2578
        %3518 = vmatpush.bf16.msra.mxu0 %v2574
        %3519 = vmatpush.bf16.msra.mxu0 %v2570
        %3520 = vmatpush.bf16.msra.mxu0 %v2566
        %3521 = vmatpush.bf16.msra.mxu0 %v2562
        %3522 = vmatmul.bf16.gmra.mxu0 %v870
        %v3523 = vpop.f32.mrf.mxu0
        %v3524 = vadd.f32 %v3510, %v3523
        %v3525 = vpop.f32.mrf.mxu0
        %v3526 = vadd.f32 %v3512, %v3525
        %3527 = vdwg.mxu0
        %3528 = vmatpush.bf16.msra.mxu0 %v2622
        %3529 = vmatpush.bf16.msra.mxu0 %v2618
        %3530 = vmatpush.bf16.msra.mxu0 %v2614
        %3531 = vmatpush.bf16.msra.mxu0 %v2610
        %3532 = vmatpush.bf16.msra.mxu0 %v2606
        %3533 = vmatpush.bf16.msra.mxu0 %v2602
        %3534 = vmatpush.bf16.msra.mxu0 %v2598
        %3535 = vmatpush.bf16.msra.mxu0 %v2594
        %3536 = vmatmul.bf16.gmra.mxu0 %v871
        %v3537 = vpop.f32.mrf.mxu0
        %v3538 = vadd.f32 %v3524, %v3537
        %v3539 = vpop.f32.mrf.mxu0
        %v3540 = vadd.f32 %v3526, %v3539
        %3541 = vdwg.mxu0
        %3542 = vmatpush.bf16.msra.mxu0 %v2654
        %3543 = vmatpush.bf16.msra.mxu0 %v2650
        %3544 = vmatpush.bf16.msra.mxu0 %v2646
        %3545 = vmatpush.bf16.msra.mxu0 %v2642
        %3546 = vmatpush.bf16.msra.mxu0 %v2638
        %3547 = vmatpush.bf16.msra.mxu0 %v2634
        %3548 = vmatpush.bf16.msra.mxu0 %v2630
        %3549 = vmatpush.bf16.msra.mxu0 %v2626
        %3550 = vmatmul.bf16.gmra.mxu0 %v872
        %v3551 = vpop.f32.mrf.mxu0
        %v3552 = vadd.f32 %v3538, %v3551
        %v3553 = vpop.f32.mrf.mxu0
        %v3554 = vadd.f32 %v3540, %v3553
        %3555 = vdwg.mxu0
        %3556 = vmatpush.bf16.msra.mxu0 %v2686
        %3557 = vmatpush.bf16.msra.mxu0 %v2682
        %3558 = vmatpush.bf16.msra.mxu0 %v2678
        %3559 = vmatpush.bf16.msra.mxu0 %v2674
        %3560 = vmatpush.bf16.msra.mxu0 %v2670
        %3561 = vmatpush.bf16.msra.mxu0 %v2666
        %3562 = vmatpush.bf16.msra.mxu0 %v2662
        %3563 = vmatpush.bf16.msra.mxu0 %v2658
        %3564 = vmatmul.bf16.gmra.mxu0 %v873
        %v3565 = vpop.f32.mrf.mxu0
        %v3566 = vadd.f32 %v3552, %v3565
        %v3567 = vpop.f32.mrf.mxu0
        %v3568 = vadd.f32 %v3554, %v3567
        %3569 = vdwg.mxu0
        %3570 = vmatpush.bf16.msra.mxu0 %v2718
        %3571 = vmatpush.bf16.msra.mxu0 %v2714
        %3572 = vmatpush.bf16.msra.mxu0 %v2710
        %3573 = vmatpush.bf16.msra.mxu0 %v2706
        %3574 = vmatpush.bf16.msra.mxu0 %v2702
        %3575 = vmatpush.bf16.msra.mxu0 %v2698
        %3576 = vmatpush.bf16.msra.mxu0 %v2694
        %3577 = vmatpush.bf16.msra.mxu0 %v2690
        %3578 = vmatmul.bf16.gmra.mxu0 %v874
        %v3579 = vpop.f32.mrf.mxu0
        %v3580 = vadd.f32 %v3566, %v3579
        %v3581 = vpop.f32.mrf.mxu0
        %v3582 = vadd.f32 %v3568, %v3581
        %3583 = vdwg.mxu0
        %3584 = vmatpush.bf16.msra.mxu0 %v2750
        %3585 = vmatpush.bf16.msra.mxu0 %v2746
        %3586 = vmatpush.bf16.msra.mxu0 %v2742
        %3587 = vmatpush.bf16.msra.mxu0 %v2738
        %3588 = vmatpush.bf16.msra.mxu0 %v2734
        %3589 = vmatpush.bf16.msra.mxu0 %v2730
        %3590 = vmatpush.bf16.msra.mxu0 %v2726
        %3591 = vmatpush.bf16.msra.mxu0 %v2722
        %3592 = vmatmul.bf16.gmra.mxu0 %v875
        %v3593 = vpop.f32.mrf.mxu0
        %v3594 = vadd.f32 %v3580, %v3593
        %v3595 = vpop.f32.mrf.mxu0
        %v3596 = vadd.f32 %v3582, %v3595
        %3597 = vdwg.mxu0
        %3598 = vmatpush.bf16.msra.mxu0 %v2782
        %3599 = vmatpush.bf16.msra.mxu0 %v2778
        %3600 = vmatpush.bf16.msra.mxu0 %v2774
        %3601 = vmatpush.bf16.msra.mxu0 %v2770
        %3602 = vmatpush.bf16.msra.mxu0 %v2766
        %3603 = vmatpush.bf16.msra.mxu0 %v2762
        %3604 = vmatpush.bf16.msra.mxu0 %v2758
        %3605 = vmatpush.bf16.msra.mxu0 %v2754
        %3606 = vmatmul.bf16.gmra.mxu0 %v876
        %v3607 = vpop.f32.mrf.mxu0
        %v3608 = vadd.f32 %v3594, %v3607
        %v3609 = vpop.f32.mrf.mxu0
        %v3610 = vadd.f32 %v3596, %v3609
        %3611 = vdwg.mxu0
        %3612 = vmatpush.bf16.msra.mxu0 %v2814
        %3613 = vmatpush.bf16.msra.mxu0 %v2810
        %3614 = vmatpush.bf16.msra.mxu0 %v2806
        %3615 = vmatpush.bf16.msra.mxu0 %v2802
        %3616 = vmatpush.bf16.msra.mxu0 %v2798
        %3617 = vmatpush.bf16.msra.mxu0 %v2794
        %3618 = vmatpush.bf16.msra.mxu0 %v2790
        %3619 = vmatpush.bf16.msra.mxu0 %v2786
        %3620 = vmatmul.bf16.gmra.mxu0 %v877
        %v3621 = vpop.f32.mrf.mxu0
        %v3622 = vadd.f32 %v3608, %v3621
        %v3623 = vpop.f32.mrf.mxu0
        %v3624 = vadd.f32 %v3610, %v3623
        %3625 = vdwg.mxu0
        %3626 = vmatpush.bf16.msra.mxu0 %v2846
        %3627 = vmatpush.bf16.msra.mxu0 %v2842
        %3628 = vmatpush.bf16.msra.mxu0 %v2838
        %3629 = vmatpush.bf16.msra.mxu0 %v2834
        %3630 = vmatpush.bf16.msra.mxu0 %v2830
        %3631 = vmatpush.bf16.msra.mxu0 %v2826
        %3632 = vmatpush.bf16.msra.mxu0 %v2822
        %3633 = vmatpush.bf16.msra.mxu0 %v2818
        %3634 = vmatmul.bf16.gmra.mxu0 %v878
        %v3635 = vpop.f32.mrf.mxu0
        %v3636 = vadd.f32 %v3622, %v3635
        %v3637 = vpop.f32.mrf.mxu0
        %v3638 = vadd.f32 %v3624, %v3637
        %3639 = vdwg.mxu0
        %3640 = vmatpush.bf16.msra.mxu0 %v2878
        %3641 = vmatpush.bf16.msra.mxu0 %v2874
        %3642 = vmatpush.bf16.msra.mxu0 %v2870
        %3643 = vmatpush.bf16.msra.mxu0 %v2866
        %3644 = vmatpush.bf16.msra.mxu0 %v2862
        %3645 = vmatpush.bf16.msra.mxu0 %v2858
        %3646 = vmatpush.bf16.msra.mxu0 %v2854
        %3647 = vmatpush.bf16.msra.mxu0 %v2850
        %3648 = vmatmul.bf16.gmra.mxu0 %v879
        %v3649 = vpop.f32.mrf.mxu0
        %v3650 = vadd.f32 %v3636, %v3649
        %v3651 = vpop.f32.mrf.mxu0
        %v3652 = vadd.f32 %v3638, %v3651
        %3653 = vdwg.mxu0
        %3654 = vmatpush.bf16.msra.mxu0 %v2910
        %3655 = vmatpush.bf16.msra.mxu0 %v2906
        %3656 = vmatpush.bf16.msra.mxu0 %v2902
        %3657 = vmatpush.bf16.msra.mxu0 %v2898
        %3658 = vmatpush.bf16.msra.mxu0 %v2894
        %3659 = vmatpush.bf16.msra.mxu0 %v2890
        %3660 = vmatpush.bf16.msra.mxu0 %v2886
        %3661 = vmatpush.bf16.msra.mxu0 %v2882
        %3662 = vmatmul.bf16.gmra.mxu0 %v880
        %v3663 = vpop.f32.mrf.mxu0
        %v3664 = vadd.f32 %v3650, %v3663
        %v3665 = vpop.f32.mrf.mxu0
        %v3666 = vadd.f32 %v3652, %v3665
        %3667 = vdwg.mxu0
        %3668 = vmatpush.bf16.msra.mxu0 %v2942
        %3669 = vmatpush.bf16.msra.mxu0 %v2938
        %3670 = vmatpush.bf16.msra.mxu0 %v2934
        %3671 = vmatpush.bf16.msra.mxu0 %v2930
        %3672 = vmatpush.bf16.msra.mxu0 %v2926
        %3673 = vmatpush.bf16.msra.mxu0 %v2922
        %3674 = vmatpush.bf16.msra.mxu0 %v2918
        %3675 = vmatpush.bf16.msra.mxu0 %v2914
        %3676 = vmatmul.bf16.gmra.mxu0 %v881
        %v3677 = vpop.f32.mrf.mxu0
        %v3678 = vadd.f32 %v3664, %v3677
        %v3679 = vpop.f32.mrf.mxu0
        %v3680 = vadd.f32 %v3666, %v3679
        %3681 = vdwg.mxu0
        %3682 = vmatpush.bf16.msra.mxu0 %v2463
        %3683 = vmatpush.bf16.msra.mxu0 %v2459
        %3684 = vmatpush.bf16.msra.mxu0 %v2455
        %3685 = vmatpush.bf16.msra.mxu0 %v2451
        %3686 = vmatpush.bf16.msra.mxu0 %v2447
        %3687 = vmatpush.bf16.msra.mxu0 %v2443
        %3688 = vmatpush.bf16.msra.mxu0 %v2439
        %3689 = vmatpush.bf16.msra.mxu0 %v2435
        %3690 = vmatmul.bf16.gmra.mxu0 %v866
        %v3691 = vpop.f32.mrf.mxu0
        %v3692 = vadd.f32 0.0, %v3691
        %v3693 = vpop.f32.mrf.mxu0
        %v3694 = vadd.f32 0.0, %v3693
        %3695 = vdwg.mxu0
        %3696 = vmatpush.bf16.msra.mxu0 %v2495
        %3697 = vmatpush.bf16.msra.mxu0 %v2491
        %3698 = vmatpush.bf16.msra.mxu0 %v2487
        %3699 = vmatpush.bf16.msra.mxu0 %v2483
        %3700 = vmatpush.bf16.msra.mxu0 %v2479
        %3701 = vmatpush.bf16.msra.mxu0 %v2475
        %3702 = vmatpush.bf16.msra.mxu0 %v2471
        %3703 = vmatpush.bf16.msra.mxu0 %v2467
        %3704 = vmatmul.bf16.gmra.mxu0 %v867
        %v3705 = vpop.f32.mrf.mxu0
        %v3706 = vadd.f32 %v3692, %v3705
        %v3707 = vpop.f32.mrf.mxu0
        %v3708 = vadd.f32 %v3694, %v3707
        %3709 = vdwg.mxu0
        %3710 = vmatpush.bf16.msra.mxu0 %v2527
        %3711 = vmatpush.bf16.msra.mxu0 %v2523
        %3712 = vmatpush.bf16.msra.mxu0 %v2519
        %3713 = vmatpush.bf16.msra.mxu0 %v2515
        %3714 = vmatpush.bf16.msra.mxu0 %v2511
        %3715 = vmatpush.bf16.msra.mxu0 %v2507
        %3716 = vmatpush.bf16.msra.mxu0 %v2503
        %3717 = vmatpush.bf16.msra.mxu0 %v2499
        %3718 = vmatmul.bf16.gmra.mxu0 %v868
        %v3719 = vpop.f32.mrf.mxu0
        %v3720 = vadd.f32 %v3706, %v3719
        %v3721 = vpop.f32.mrf.mxu0
        %v3722 = vadd.f32 %v3708, %v3721
        %3723 = vdwg.mxu0
        %3724 = vmatpush.bf16.msra.mxu0 %v2559
        %3725 = vmatpush.bf16.msra.mxu0 %v2555
        %3726 = vmatpush.bf16.msra.mxu0 %v2551
        %3727 = vmatpush.bf16.msra.mxu0 %v2547
        %3728 = vmatpush.bf16.msra.mxu0 %v2543
        %3729 = vmatpush.bf16.msra.mxu0 %v2539
        %3730 = vmatpush.bf16.msra.mxu0 %v2535
        %3731 = vmatpush.bf16.msra.mxu0 %v2531
        %3732 = vmatmul.bf16.gmra.mxu0 %v869
        %v3733 = vpop.f32.mrf.mxu0
        %v3734 = vadd.f32 %v3720, %v3733
        %v3735 = vpop.f32.mrf.mxu0
        %v3736 = vadd.f32 %v3722, %v3735
        %3737 = vdwg.mxu0
        %3738 = vmatpush.bf16.msra.mxu0 %v2591
        %3739 = vmatpush.bf16.msra.mxu0 %v2587
        %3740 = vmatpush.bf16.msra.mxu0 %v2583
        %3741 = vmatpush.bf16.msra.mxu0 %v2579
        %3742 = vmatpush.bf16.msra.mxu0 %v2575
        %3743 = vmatpush.bf16.msra.mxu0 %v2571
        %3744 = vmatpush.bf16.msra.mxu0 %v2567
        %3745 = vmatpush.bf16.msra.mxu0 %v2563
        %3746 = vmatmul.bf16.gmra.mxu0 %v870
        %v3747 = vpop.f32.mrf.mxu0
        %v3748 = vadd.f32 %v3734, %v3747
        %v3749 = vpop.f32.mrf.mxu0
        %v3750 = vadd.f32 %v3736, %v3749
        %3751 = vdwg.mxu0
        %3752 = vmatpush.bf16.msra.mxu0 %v2623
        %3753 = vmatpush.bf16.msra.mxu0 %v2619
        %3754 = vmatpush.bf16.msra.mxu0 %v2615
        %3755 = vmatpush.bf16.msra.mxu0 %v2611
        %3756 = vmatpush.bf16.msra.mxu0 %v2607
        %3757 = vmatpush.bf16.msra.mxu0 %v2603
        %3758 = vmatpush.bf16.msra.mxu0 %v2599
        %3759 = vmatpush.bf16.msra.mxu0 %v2595
        %3760 = vmatmul.bf16.gmra.mxu0 %v871
        %v3761 = vpop.f32.mrf.mxu0
        %v3762 = vadd.f32 %v3748, %v3761
        %v3763 = vpop.f32.mrf.mxu0
        %v3764 = vadd.f32 %v3750, %v3763
        %3765 = vdwg.mxu0
        %3766 = vmatpush.bf16.msra.mxu0 %v2655
        %3767 = vmatpush.bf16.msra.mxu0 %v2651
        %3768 = vmatpush.bf16.msra.mxu0 %v2647
        %3769 = vmatpush.bf16.msra.mxu0 %v2643
        %3770 = vmatpush.bf16.msra.mxu0 %v2639
        %3771 = vmatpush.bf16.msra.mxu0 %v2635
        %3772 = vmatpush.bf16.msra.mxu0 %v2631
        %3773 = vmatpush.bf16.msra.mxu0 %v2627
        %3774 = vmatmul.bf16.gmra.mxu0 %v872
        %v3775 = vpop.f32.mrf.mxu0
        %v3776 = vadd.f32 %v3762, %v3775
        %v3777 = vpop.f32.mrf.mxu0
        %v3778 = vadd.f32 %v3764, %v3777
        %3779 = vdwg.mxu0
        %3780 = vmatpush.bf16.msra.mxu0 %v2687
        %3781 = vmatpush.bf16.msra.mxu0 %v2683
        %3782 = vmatpush.bf16.msra.mxu0 %v2679
        %3783 = vmatpush.bf16.msra.mxu0 %v2675
        %3784 = vmatpush.bf16.msra.mxu0 %v2671
        %3785 = vmatpush.bf16.msra.mxu0 %v2667
        %3786 = vmatpush.bf16.msra.mxu0 %v2663
        %3787 = vmatpush.bf16.msra.mxu0 %v2659
        %3788 = vmatmul.bf16.gmra.mxu0 %v873
        %v3789 = vpop.f32.mrf.mxu0
        %v3790 = vadd.f32 %v3776, %v3789
        %v3791 = vpop.f32.mrf.mxu0
        %v3792 = vadd.f32 %v3778, %v3791
        %3793 = vdwg.mxu0
        %3794 = vmatpush.bf16.msra.mxu0 %v2719
        %3795 = vmatpush.bf16.msra.mxu0 %v2715
        %3796 = vmatpush.bf16.msra.mxu0 %v2711
        %3797 = vmatpush.bf16.msra.mxu0 %v2707
        %3798 = vmatpush.bf16.msra.mxu0 %v2703
        %3799 = vmatpush.bf16.msra.mxu0 %v2699
        %3800 = vmatpush.bf16.msra.mxu0 %v2695
        %3801 = vmatpush.bf16.msra.mxu0 %v2691
        %3802 = vmatmul.bf16.gmra.mxu0 %v874
        %v3803 = vpop.f32.mrf.mxu0
        %v3804 = vadd.f32 %v3790, %v3803
        %v3805 = vpop.f32.mrf.mxu0
        %v3806 = vadd.f32 %v3792, %v3805
        %3807 = vdwg.mxu0
        %3808 = vmatpush.bf16.msra.mxu0 %v2751
        %3809 = vmatpush.bf16.msra.mxu0 %v2747
        %3810 = vmatpush.bf16.msra.mxu0 %v2743
        %3811 = vmatpush.bf16.msra.mxu0 %v2739
        %3812 = vmatpush.bf16.msra.mxu0 %v2735
        %3813 = vmatpush.bf16.msra.mxu0 %v2731
        %3814 = vmatpush.bf16.msra.mxu0 %v2727
        %3815 = vmatpush.bf16.msra.mxu0 %v2723
        %3816 = vmatmul.bf16.gmra.mxu0 %v875
        %v3817 = vpop.f32.mrf.mxu0
        %v3818 = vadd.f32 %v3804, %v3817
        %v3819 = vpop.f32.mrf.mxu0
        %v3820 = vadd.f32 %v3806, %v3819
        %3821 = vdwg.mxu0
        %3822 = vmatpush.bf16.msra.mxu0 %v2783
        %3823 = vmatpush.bf16.msra.mxu0 %v2779
        %3824 = vmatpush.bf16.msra.mxu0 %v2775
        %3825 = vmatpush.bf16.msra.mxu0 %v2771
        %3826 = vmatpush.bf16.msra.mxu0 %v2767
        %3827 = vmatpush.bf16.msra.mxu0 %v2763
        %3828 = vmatpush.bf16.msra.mxu0 %v2759
        %3829 = vmatpush.bf16.msra.mxu0 %v2755
        %3830 = vmatmul.bf16.gmra.mxu0 %v876
        %v3831 = vpop.f32.mrf.mxu0
        %v3832 = vadd.f32 %v3818, %v3831
        %v3833 = vpop.f32.mrf.mxu0
        %v3834 = vadd.f32 %v3820, %v3833
        %3835 = vdwg.mxu0
        %3836 = vmatpush.bf16.msra.mxu0 %v2815
        %3837 = vmatpush.bf16.msra.mxu0 %v2811
        %3838 = vmatpush.bf16.msra.mxu0 %v2807
        %3839 = vmatpush.bf16.msra.mxu0 %v2803
        %3840 = vmatpush.bf16.msra.mxu0 %v2799
        %3841 = vmatpush.bf16.msra.mxu0 %v2795
        %3842 = vmatpush.bf16.msra.mxu0 %v2791
        %3843 = vmatpush.bf16.msra.mxu0 %v2787
        %3844 = vmatmul.bf16.gmra.mxu0 %v877
        %v3845 = vpop.f32.mrf.mxu0
        %v3846 = vadd.f32 %v3832, %v3845
        %v3847 = vpop.f32.mrf.mxu0
        %v3848 = vadd.f32 %v3834, %v3847
        %3849 = vdwg.mxu0
        %3850 = vmatpush.bf16.msra.mxu0 %v2847
        %3851 = vmatpush.bf16.msra.mxu0 %v2843
        %3852 = vmatpush.bf16.msra.mxu0 %v2839
        %3853 = vmatpush.bf16.msra.mxu0 %v2835
        %3854 = vmatpush.bf16.msra.mxu0 %v2831
        %3855 = vmatpush.bf16.msra.mxu0 %v2827
        %3856 = vmatpush.bf16.msra.mxu0 %v2823
        %3857 = vmatpush.bf16.msra.mxu0 %v2819
        %3858 = vmatmul.bf16.gmra.mxu0 %v878
        %v3859 = vpop.f32.mrf.mxu0
        %v3860 = vadd.f32 %v3846, %v3859
        %v3861 = vpop.f32.mrf.mxu0
        %v3862 = vadd.f32 %v3848, %v3861
        %3863 = vdwg.mxu0
        %3864 = vmatpush.bf16.msra.mxu0 %v2879
        %3865 = vmatpush.bf16.msra.mxu0 %v2875
        %3866 = vmatpush.bf16.msra.mxu0 %v2871
        %3867 = vmatpush.bf16.msra.mxu0 %v2867
        %3868 = vmatpush.bf16.msra.mxu0 %v2863
        %3869 = vmatpush.bf16.msra.mxu0 %v2859
        %3870 = vmatpush.bf16.msra.mxu0 %v2855
        %3871 = vmatpush.bf16.msra.mxu0 %v2851
        %3872 = vmatmul.bf16.gmra.mxu0 %v879
        %v3873 = vpop.f32.mrf.mxu0
        %v3874 = vadd.f32 %v3860, %v3873
        %v3875 = vpop.f32.mrf.mxu0
        %v3876 = vadd.f32 %v3862, %v3875
        %3877 = vdwg.mxu0
        %3878 = vmatpush.bf16.msra.mxu0 %v2911
        %3879 = vmatpush.bf16.msra.mxu0 %v2907
        %3880 = vmatpush.bf16.msra.mxu0 %v2903
        %3881 = vmatpush.bf16.msra.mxu0 %v2899
        %3882 = vmatpush.bf16.msra.mxu0 %v2895
        %3883 = vmatpush.bf16.msra.mxu0 %v2891
        %3884 = vmatpush.bf16.msra.mxu0 %v2887
        %3885 = vmatpush.bf16.msra.mxu0 %v2883
        %3886 = vmatmul.bf16.gmra.mxu0 %v880
        %v3887 = vpop.f32.mrf.mxu0
        %v3888 = vadd.f32 %v3874, %v3887
        %v3889 = vpop.f32.mrf.mxu0
        %v3890 = vadd.f32 %v3876, %v3889
        %3891 = vdwg.mxu0
        %3892 = vmatpush.bf16.msra.mxu0 %v2943
        %3893 = vmatpush.bf16.msra.mxu0 %v2939
        %3894 = vmatpush.bf16.msra.mxu0 %v2935
        %3895 = vmatpush.bf16.msra.mxu0 %v2931
        %3896 = vmatpush.bf16.msra.mxu0 %v2927
        %3897 = vmatpush.bf16.msra.mxu0 %v2923
        %3898 = vmatpush.bf16.msra.mxu0 %v2919
        %3899 = vmatpush.bf16.msra.mxu0 %v2915
        %3900 = vmatmul.bf16.gmra.mxu0 %v881
        %v3901 = vpop.f32.mrf.mxu0
        %v3902 = vadd.f32 %v3888, %v3901
        %v3903 = vpop.f32.mrf.mxu0
        %v3904 = vadd.f32 %v3890, %v3903
        %3905 = vdwg.mxu0
        %3906 = vmatpush.bf16.msra.mxu0 %v2464
        %3907 = vmatpush.bf16.msra.mxu0 %v2460
        %3908 = vmatpush.bf16.msra.mxu0 %v2456
        %3909 = vmatpush.bf16.msra.mxu0 %v2452
        %3910 = vmatpush.bf16.msra.mxu0 %v2448
        %3911 = vmatpush.bf16.msra.mxu0 %v2444
        %3912 = vmatpush.bf16.msra.mxu0 %v2440
        %3913 = vmatpush.bf16.msra.mxu0 %v2436
        %3914 = vmatmul.bf16.gmra.mxu0 %v866
        %v3915 = vpop.f32.mrf.mxu0
        %v3916 = vadd.f32 0.0, %v3915
        %v3917 = vpop.f32.mrf.mxu0
        %v3918 = vadd.f32 0.0, %v3917
        %3919 = vdwg.mxu0
        %3920 = vmatpush.bf16.msra.mxu0 %v2496
        %3921 = vmatpush.bf16.msra.mxu0 %v2492
        %3922 = vmatpush.bf16.msra.mxu0 %v2488
        %3923 = vmatpush.bf16.msra.mxu0 %v2484
        %3924 = vmatpush.bf16.msra.mxu0 %v2480
        %3925 = vmatpush.bf16.msra.mxu0 %v2476
        %3926 = vmatpush.bf16.msra.mxu0 %v2472
        %3927 = vmatpush.bf16.msra.mxu0 %v2468
        %3928 = vmatmul.bf16.gmra.mxu0 %v867
        %v3929 = vpop.f32.mrf.mxu0
        %v3930 = vadd.f32 %v3916, %v3929
        %v3931 = vpop.f32.mrf.mxu0
        %v3932 = vadd.f32 %v3918, %v3931
        %3933 = vdwg.mxu0
        %3934 = vmatpush.bf16.msra.mxu0 %v2528
        %3935 = vmatpush.bf16.msra.mxu0 %v2524
        %3936 = vmatpush.bf16.msra.mxu0 %v2520
        %3937 = vmatpush.bf16.msra.mxu0 %v2516
        %3938 = vmatpush.bf16.msra.mxu0 %v2512
        %3939 = vmatpush.bf16.msra.mxu0 %v2508
        %3940 = vmatpush.bf16.msra.mxu0 %v2504
        %3941 = vmatpush.bf16.msra.mxu0 %v2500
        %3942 = vmatmul.bf16.gmra.mxu0 %v868
        %v3943 = vpop.f32.mrf.mxu0
        %v3944 = vadd.f32 %v3930, %v3943
        %v3945 = vpop.f32.mrf.mxu0
        %v3946 = vadd.f32 %v3932, %v3945
        %3947 = vdwg.mxu0
        %3948 = vmatpush.bf16.msra.mxu0 %v2560
        %3949 = vmatpush.bf16.msra.mxu0 %v2556
        %3950 = vmatpush.bf16.msra.mxu0 %v2552
        %3951 = vmatpush.bf16.msra.mxu0 %v2548
        %3952 = vmatpush.bf16.msra.mxu0 %v2544
        %3953 = vmatpush.bf16.msra.mxu0 %v2540
        %3954 = vmatpush.bf16.msra.mxu0 %v2536
        %3955 = vmatpush.bf16.msra.mxu0 %v2532
        %3956 = vmatmul.bf16.gmra.mxu0 %v869
        %v3957 = vpop.f32.mrf.mxu0
        %v3958 = vadd.f32 %v3944, %v3957
        %v3959 = vpop.f32.mrf.mxu0
        %v3960 = vadd.f32 %v3946, %v3959
        %3961 = vdwg.mxu0
        %3962 = vmatpush.bf16.msra.mxu0 %v2592
        %3963 = vmatpush.bf16.msra.mxu0 %v2588
        %3964 = vmatpush.bf16.msra.mxu0 %v2584
        %3965 = vmatpush.bf16.msra.mxu0 %v2580
        %3966 = vmatpush.bf16.msra.mxu0 %v2576
        %3967 = vmatpush.bf16.msra.mxu0 %v2572
        %3968 = vmatpush.bf16.msra.mxu0 %v2568
        %3969 = vmatpush.bf16.msra.mxu0 %v2564
        %3970 = vmatmul.bf16.gmra.mxu0 %v870
        %v3971 = vpop.f32.mrf.mxu0
        %v3972 = vadd.f32 %v3958, %v3971
        %v3973 = vpop.f32.mrf.mxu0
        %v3974 = vadd.f32 %v3960, %v3973
        %3975 = vdwg.mxu0
        %3976 = vmatpush.bf16.msra.mxu0 %v2624
        %3977 = vmatpush.bf16.msra.mxu0 %v2620
        %3978 = vmatpush.bf16.msra.mxu0 %v2616
        %3979 = vmatpush.bf16.msra.mxu0 %v2612
        %3980 = vmatpush.bf16.msra.mxu0 %v2608
        %3981 = vmatpush.bf16.msra.mxu0 %v2604
        %3982 = vmatpush.bf16.msra.mxu0 %v2600
        %3983 = vmatpush.bf16.msra.mxu0 %v2596
        %3984 = vmatmul.bf16.gmra.mxu0 %v871
        %v3985 = vpop.f32.mrf.mxu0
        %v3986 = vadd.f32 %v3972, %v3985
        %v3987 = vpop.f32.mrf.mxu0
        %v3988 = vadd.f32 %v3974, %v3987
        %3989 = vdwg.mxu0
        %3990 = vmatpush.bf16.msra.mxu0 %v2656
        %3991 = vmatpush.bf16.msra.mxu0 %v2652
        %3992 = vmatpush.bf16.msra.mxu0 %v2648
        %3993 = vmatpush.bf16.msra.mxu0 %v2644
        %3994 = vmatpush.bf16.msra.mxu0 %v2640
        %3995 = vmatpush.bf16.msra.mxu0 %v2636
        %3996 = vmatpush.bf16.msra.mxu0 %v2632
        %3997 = vmatpush.bf16.msra.mxu0 %v2628
        %3998 = vmatmul.bf16.gmra.mxu0 %v872
        %v3999 = vpop.f32.mrf.mxu0
        %v4000 = vadd.f32 %v3986, %v3999
        %v4001 = vpop.f32.mrf.mxu0
        %v4002 = vadd.f32 %v3988, %v4001
        %4003 = vdwg.mxu0
        %4004 = vmatpush.bf16.msra.mxu0 %v2688
        %4005 = vmatpush.bf16.msra.mxu0 %v2684
        %4006 = vmatpush.bf16.msra.mxu0 %v2680
        %4007 = vmatpush.bf16.msra.mxu0 %v2676
        %4008 = vmatpush.bf16.msra.mxu0 %v2672
        %4009 = vmatpush.bf16.msra.mxu0 %v2668
        %4010 = vmatpush.bf16.msra.mxu0 %v2664
        %4011 = vmatpush.bf16.msra.mxu0 %v2660
        %4012 = vmatmul.bf16.gmra.mxu0 %v873
        %v4013 = vpop.f32.mrf.mxu0
        %v4014 = vadd.f32 %v4000, %v4013
        %v4015 = vpop.f32.mrf.mxu0
        %v4016 = vadd.f32 %v4002, %v4015
        %4017 = vdwg.mxu0
        %4018 = vmatpush.bf16.msra.mxu0 %v2720
        %4019 = vmatpush.bf16.msra.mxu0 %v2716
        %4020 = vmatpush.bf16.msra.mxu0 %v2712
        %4021 = vmatpush.bf16.msra.mxu0 %v2708
        %4022 = vmatpush.bf16.msra.mxu0 %v2704
        %4023 = vmatpush.bf16.msra.mxu0 %v2700
        %4024 = vmatpush.bf16.msra.mxu0 %v2696
        %4025 = vmatpush.bf16.msra.mxu0 %v2692
        %4026 = vmatmul.bf16.gmra.mxu0 %v874
        %v4027 = vpop.f32.mrf.mxu0
        %v4028 = vadd.f32 %v4014, %v4027
        %v4029 = vpop.f32.mrf.mxu0
        %v4030 = vadd.f32 %v4016, %v4029
        %4031 = vdwg.mxu0
        %4032 = vmatpush.bf16.msra.mxu0 %v2752
        %4033 = vmatpush.bf16.msra.mxu0 %v2748
        %4034 = vmatpush.bf16.msra.mxu0 %v2744
        %4035 = vmatpush.bf16.msra.mxu0 %v2740
        %4036 = vmatpush.bf16.msra.mxu0 %v2736
        %4037 = vmatpush.bf16.msra.mxu0 %v2732
        %4038 = vmatpush.bf16.msra.mxu0 %v2728
        %4039 = vmatpush.bf16.msra.mxu0 %v2724
        %4040 = vmatmul.bf16.gmra.mxu0 %v875
        %v4041 = vpop.f32.mrf.mxu0
        %v4042 = vadd.f32 %v4028, %v4041
        %v4043 = vpop.f32.mrf.mxu0
        %v4044 = vadd.f32 %v4030, %v4043
        %4045 = vdwg.mxu0
        %4046 = vmatpush.bf16.msra.mxu0 %v2784
        %4047 = vmatpush.bf16.msra.mxu0 %v2780
        %4048 = vmatpush.bf16.msra.mxu0 %v2776
        %4049 = vmatpush.bf16.msra.mxu0 %v2772
        %4050 = vmatpush.bf16.msra.mxu0 %v2768
        %4051 = vmatpush.bf16.msra.mxu0 %v2764
        %4052 = vmatpush.bf16.msra.mxu0 %v2760
        %4053 = vmatpush.bf16.msra.mxu0 %v2756
        %4054 = vmatmul.bf16.gmra.mxu0 %v876
        %v4055 = vpop.f32.mrf.mxu0
        %v4056 = vadd.f32 %v4042, %v4055
        %v4057 = vpop.f32.mrf.mxu0
        %v4058 = vadd.f32 %v4044, %v4057
        %4059 = vdwg.mxu0
        %4060 = vmatpush.bf16.msra.mxu0 %v2816
        %4061 = vmatpush.bf16.msra.mxu0 %v2812
        %4062 = vmatpush.bf16.msra.mxu0 %v2808
        %4063 = vmatpush.bf16.msra.mxu0 %v2804
        %4064 = vmatpush.bf16.msra.mxu0 %v2800
        %4065 = vmatpush.bf16.msra.mxu0 %v2796
        %4066 = vmatpush.bf16.msra.mxu0 %v2792
        %4067 = vmatpush.bf16.msra.mxu0 %v2788
        %4068 = vmatmul.bf16.gmra.mxu0 %v877
        %v4069 = vpop.f32.mrf.mxu0
        %v4070 = vadd.f32 %v4056, %v4069
        %v4071 = vpop.f32.mrf.mxu0
        %v4072 = vadd.f32 %v4058, %v4071
        %4073 = vdwg.mxu0
        %4074 = vmatpush.bf16.msra.mxu0 %v2848
        %4075 = vmatpush.bf16.msra.mxu0 %v2844
        %4076 = vmatpush.bf16.msra.mxu0 %v2840
        %4077 = vmatpush.bf16.msra.mxu0 %v2836
        %4078 = vmatpush.bf16.msra.mxu0 %v2832
        %4079 = vmatpush.bf16.msra.mxu0 %v2828
        %4080 = vmatpush.bf16.msra.mxu0 %v2824
        %4081 = vmatpush.bf16.msra.mxu0 %v2820
        %4082 = vmatmul.bf16.gmra.mxu0 %v878
        %v4083 = vpop.f32.mrf.mxu0
        %v4084 = vadd.f32 %v4070, %v4083
        %v4085 = vpop.f32.mrf.mxu0
        %v4086 = vadd.f32 %v4072, %v4085
        %4087 = vdwg.mxu0
        %4088 = vmatpush.bf16.msra.mxu0 %v2880
        %4089 = vmatpush.bf16.msra.mxu0 %v2876
        %4090 = vmatpush.bf16.msra.mxu0 %v2872
        %4091 = vmatpush.bf16.msra.mxu0 %v2868
        %4092 = vmatpush.bf16.msra.mxu0 %v2864
        %4093 = vmatpush.bf16.msra.mxu0 %v2860
        %4094 = vmatpush.bf16.msra.mxu0 %v2856
        %4095 = vmatpush.bf16.msra.mxu0 %v2852
        %4096 = vmatmul.bf16.gmra.mxu0 %v879
        %v4097 = vpop.f32.mrf.mxu0
        %v4098 = vadd.f32 %v4084, %v4097
        %v4099 = vpop.f32.mrf.mxu0
        %v4100 = vadd.f32 %v4086, %v4099
        %4101 = vdwg.mxu0
        %4102 = vmatpush.bf16.msra.mxu0 %v2912
        %4103 = vmatpush.bf16.msra.mxu0 %v2908
        %4104 = vmatpush.bf16.msra.mxu0 %v2904
        %4105 = vmatpush.bf16.msra.mxu0 %v2900
        %4106 = vmatpush.bf16.msra.mxu0 %v2896
        %4107 = vmatpush.bf16.msra.mxu0 %v2892
        %4108 = vmatpush.bf16.msra.mxu0 %v2888
        %4109 = vmatpush.bf16.msra.mxu0 %v2884
        %4110 = vmatmul.bf16.gmra.mxu0 %v880
        %v4111 = vpop.f32.mrf.mxu0
        %v4112 = vadd.f32 %v4098, %v4111
        %v4113 = vpop.f32.mrf.mxu0
        %v4114 = vadd.f32 %v4100, %v4113
        %4115 = vdwg.mxu0
        %4116 = vmatpush.bf16.msra.mxu0 %v2944
        %4117 = vmatpush.bf16.msra.mxu0 %v2940
        %4118 = vmatpush.bf16.msra.mxu0 %v2936
        %4119 = vmatpush.bf16.msra.mxu0 %v2932
        %4120 = vmatpush.bf16.msra.mxu0 %v2928
        %4121 = vmatpush.bf16.msra.mxu0 %v2924
        %4122 = vmatpush.bf16.msra.mxu0 %v2920
        %4123 = vmatpush.bf16.msra.mxu0 %v2916
        %4124 = vmatmul.bf16.gmra.mxu0 %v881
        %v4125 = vpop.f32.mrf.mxu0
        %v4126 = vadd.f32 %v4112, %v4125
        %v4127 = vpop.f32.mrf.mxu0
        %v4128 = vadd.f32 %v4114, %v4127
        %4129 = vdwg.mxu0
        %4130 = vmatpush.bf16.msra.mxu0 %v2465
        %4131 = vmatpush.bf16.msra.mxu0 %v2461
        %4132 = vmatpush.bf16.msra.mxu0 %v2457
        %4133 = vmatpush.bf16.msra.mxu0 %v2453
        %4134 = vmatpush.bf16.msra.mxu0 %v2449
        %4135 = vmatpush.bf16.msra.mxu0 %v2445
        %4136 = vmatpush.bf16.msra.mxu0 %v2441
        %4137 = vmatpush.bf16.msra.mxu0 %v2437
        %4138 = vmatmul.bf16.gmra.mxu0 %v866
        %v4139 = vpop.f32.mrf.mxu0
        %v4140 = vadd.f32 0.0, %v4139
        %v4141 = vpop.f32.mrf.mxu0
        %v4142 = vadd.f32 0.0, %v4141
        %4143 = vdwg.mxu0
        %4144 = vmatpush.bf16.msra.mxu0 %v2497
        %4145 = vmatpush.bf16.msra.mxu0 %v2493
        %4146 = vmatpush.bf16.msra.mxu0 %v2489
        %4147 = vmatpush.bf16.msra.mxu0 %v2485
        %4148 = vmatpush.bf16.msra.mxu0 %v2481
        %4149 = vmatpush.bf16.msra.mxu0 %v2477
        %4150 = vmatpush.bf16.msra.mxu0 %v2473
        %4151 = vmatpush.bf16.msra.mxu0 %v2469
        %4152 = vmatmul.bf16.gmra.mxu0 %v867
        %v4153 = vpop.f32.mrf.mxu0
        %v4154 = vadd.f32 %v4140, %v4153
        %v4155 = vpop.f32.mrf.mxu0
        %v4156 = vadd.f32 %v4142, %v4155
        %4157 = vdwg.mxu0
        %4158 = vmatpush.bf16.msra.mxu0 %v2529
        %4159 = vmatpush.bf16.msra.mxu0 %v2525
        %4160 = vmatpush.bf16.msra.mxu0 %v2521
        %4161 = vmatpush.bf16.msra.mxu0 %v2517
        %4162 = vmatpush.bf16.msra.mxu0 %v2513
        %4163 = vmatpush.bf16.msra.mxu0 %v2509
        %4164 = vmatpush.bf16.msra.mxu0 %v2505
        %4165 = vmatpush.bf16.msra.mxu0 %v2501
        %4166 = vmatmul.bf16.gmra.mxu0 %v868
        %v4167 = vpop.f32.mrf.mxu0
        %v4168 = vadd.f32 %v4154, %v4167
        %v4169 = vpop.f32.mrf.mxu0
        %v4170 = vadd.f32 %v4156, %v4169
        %4171 = vdwg.mxu0
        %4172 = vmatpush.bf16.msra.mxu0 %v2561
        %4173 = vmatpush.bf16.msra.mxu0 %v2557
        %4174 = vmatpush.bf16.msra.mxu0 %v2553
        %4175 = vmatpush.bf16.msra.mxu0 %v2549
        %4176 = vmatpush.bf16.msra.mxu0 %v2545
        %4177 = vmatpush.bf16.msra.mxu0 %v2541
        %4178 = vmatpush.bf16.msra.mxu0 %v2537
        %4179 = vmatpush.bf16.msra.mxu0 %v2533
        %4180 = vmatmul.bf16.gmra.mxu0 %v869
        %v4181 = vpop.f32.mrf.mxu0
        %v4182 = vadd.f32 %v4168, %v4181
        %v4183 = vpop.f32.mrf.mxu0
        %v4184 = vadd.f32 %v4170, %v4183
        %4185 = vdwg.mxu0
        %4186 = vmatpush.bf16.msra.mxu0 %v2593
        %4187 = vmatpush.bf16.msra.mxu0 %v2589
        %4188 = vmatpush.bf16.msra.mxu0 %v2585
        %4189 = vmatpush.bf16.msra.mxu0 %v2581
        %4190 = vmatpush.bf16.msra.mxu0 %v2577
        %4191 = vmatpush.bf16.msra.mxu0 %v2573
        %4192 = vmatpush.bf16.msra.mxu0 %v2569
        %4193 = vmatpush.bf16.msra.mxu0 %v2565
        %4194 = vmatmul.bf16.gmra.mxu0 %v870
        %v4195 = vpop.f32.mrf.mxu0
        %v4196 = vadd.f32 %v4182, %v4195
        %v4197 = vpop.f32.mrf.mxu0
        %v4198 = vadd.f32 %v4184, %v4197
        %4199 = vdwg.mxu0
        %4200 = vmatpush.bf16.msra.mxu0 %v2625
        %4201 = vmatpush.bf16.msra.mxu0 %v2621
        %4202 = vmatpush.bf16.msra.mxu0 %v2617
        %4203 = vmatpush.bf16.msra.mxu0 %v2613
        %4204 = vmatpush.bf16.msra.mxu0 %v2609
        %4205 = vmatpush.bf16.msra.mxu0 %v2605
        %4206 = vmatpush.bf16.msra.mxu0 %v2601
        %4207 = vmatpush.bf16.msra.mxu0 %v2597
        %4208 = vmatmul.bf16.gmra.mxu0 %v871
        %v4209 = vpop.f32.mrf.mxu0
        %v4210 = vadd.f32 %v4196, %v4209
        %v4211 = vpop.f32.mrf.mxu0
        %v4212 = vadd.f32 %v4198, %v4211
        %4213 = vdwg.mxu0
        %4214 = vmatpush.bf16.msra.mxu0 %v2657
        %4215 = vmatpush.bf16.msra.mxu0 %v2653
        %4216 = vmatpush.bf16.msra.mxu0 %v2649
        %4217 = vmatpush.bf16.msra.mxu0 %v2645
        %4218 = vmatpush.bf16.msra.mxu0 %v2641
        %4219 = vmatpush.bf16.msra.mxu0 %v2637
        %4220 = vmatpush.bf16.msra.mxu0 %v2633
        %4221 = vmatpush.bf16.msra.mxu0 %v2629
        %4222 = vmatmul.bf16.gmra.mxu0 %v872
        %v4223 = vpop.f32.mrf.mxu0
        %v4224 = vadd.f32 %v4210, %v4223
        %v4225 = vpop.f32.mrf.mxu0
        %v4226 = vadd.f32 %v4212, %v4225
        %4227 = vdwg.mxu0
        %4228 = vmatpush.bf16.msra.mxu0 %v2689
        %4229 = vmatpush.bf16.msra.mxu0 %v2685
        %4230 = vmatpush.bf16.msra.mxu0 %v2681
        %4231 = vmatpush.bf16.msra.mxu0 %v2677
        %4232 = vmatpush.bf16.msra.mxu0 %v2673
        %4233 = vmatpush.bf16.msra.mxu0 %v2669
        %4234 = vmatpush.bf16.msra.mxu0 %v2665
        %4235 = vmatpush.bf16.msra.mxu0 %v2661
        %4236 = vmatmul.bf16.gmra.mxu0 %v873
        %v4237 = vpop.f32.mrf.mxu0
        %v4238 = vadd.f32 %v4224, %v4237
        %v4239 = vpop.f32.mrf.mxu0
        %v4240 = vadd.f32 %v4226, %v4239
        %4241 = vdwg.mxu0
        %4242 = vmatpush.bf16.msra.mxu0 %v2721
        %4243 = vmatpush.bf16.msra.mxu0 %v2717
        %4244 = vmatpush.bf16.msra.mxu0 %v2713
        %4245 = vmatpush.bf16.msra.mxu0 %v2709
        %4246 = vmatpush.bf16.msra.mxu0 %v2705
        %4247 = vmatpush.bf16.msra.mxu0 %v2701
        %4248 = vmatpush.bf16.msra.mxu0 %v2697
        %4249 = vmatpush.bf16.msra.mxu0 %v2693
        %4250 = vmatmul.bf16.gmra.mxu0 %v874
        %v4251 = vpop.f32.mrf.mxu0
        %v4252 = vadd.f32 %v4238, %v4251
        %v4253 = vpop.f32.mrf.mxu0
        %v4254 = vadd.f32 %v4240, %v4253
        %4255 = vdwg.mxu0
        %4256 = vmatpush.bf16.msra.mxu0 %v2753
        %4257 = vmatpush.bf16.msra.mxu0 %v2749
        %4258 = vmatpush.bf16.msra.mxu0 %v2745
        %4259 = vmatpush.bf16.msra.mxu0 %v2741
        %4260 = vmatpush.bf16.msra.mxu0 %v2737
        %4261 = vmatpush.bf16.msra.mxu0 %v2733
        %4262 = vmatpush.bf16.msra.mxu0 %v2729
        %4263 = vmatpush.bf16.msra.mxu0 %v2725
        %4264 = vmatmul.bf16.gmra.mxu0 %v875
        %v4265 = vpop.f32.mrf.mxu0
        %v4266 = vadd.f32 %v4252, %v4265
        %v4267 = vpop.f32.mrf.mxu0
        %v4268 = vadd.f32 %v4254, %v4267
        %4269 = vdwg.mxu0
        %4270 = vmatpush.bf16.msra.mxu0 %v2785
        %4271 = vmatpush.bf16.msra.mxu0 %v2781
        %4272 = vmatpush.bf16.msra.mxu0 %v2777
        %4273 = vmatpush.bf16.msra.mxu0 %v2773
        %4274 = vmatpush.bf16.msra.mxu0 %v2769
        %4275 = vmatpush.bf16.msra.mxu0 %v2765
        %4276 = vmatpush.bf16.msra.mxu0 %v2761
        %4277 = vmatpush.bf16.msra.mxu0 %v2757
        %4278 = vmatmul.bf16.gmra.mxu0 %v876
        %v4279 = vpop.f32.mrf.mxu0
        %v4280 = vadd.f32 %v4266, %v4279
        %v4281 = vpop.f32.mrf.mxu0
        %v4282 = vadd.f32 %v4268, %v4281
        %4283 = vdwg.mxu0
        %4284 = vmatpush.bf16.msra.mxu0 %v2817
        %4285 = vmatpush.bf16.msra.mxu0 %v2813
        %4286 = vmatpush.bf16.msra.mxu0 %v2809
        %4287 = vmatpush.bf16.msra.mxu0 %v2805
        %4288 = vmatpush.bf16.msra.mxu0 %v2801
        %4289 = vmatpush.bf16.msra.mxu0 %v2797
        %4290 = vmatpush.bf16.msra.mxu0 %v2793
        %4291 = vmatpush.bf16.msra.mxu0 %v2789
        %4292 = vmatmul.bf16.gmra.mxu0 %v877
        %v4293 = vpop.f32.mrf.mxu0
        %v4294 = vadd.f32 %v4280, %v4293
        %v4295 = vpop.f32.mrf.mxu0
        %v4296 = vadd.f32 %v4282, %v4295
        %4297 = vdwg.mxu0
        %4298 = vmatpush.bf16.msra.mxu0 %v2849
        %4299 = vmatpush.bf16.msra.mxu0 %v2845
        %4300 = vmatpush.bf16.msra.mxu0 %v2841
        %4301 = vmatpush.bf16.msra.mxu0 %v2837
        %4302 = vmatpush.bf16.msra.mxu0 %v2833
        %4303 = vmatpush.bf16.msra.mxu0 %v2829
        %4304 = vmatpush.bf16.msra.mxu0 %v2825
        %4305 = vmatpush.bf16.msra.mxu0 %v2821
        %4306 = vmatmul.bf16.gmra.mxu0 %v878
        %v4307 = vpop.f32.mrf.mxu0
        %v4308 = vadd.f32 %v4294, %v4307
        %v4309 = vpop.f32.mrf.mxu0
        %v4310 = vadd.f32 %v4296, %v4309
        %4311 = vdwg.mxu0
        %4312 = vmatpush.bf16.msra.mxu0 %v2881
        %4313 = vmatpush.bf16.msra.mxu0 %v2877
        %4314 = vmatpush.bf16.msra.mxu0 %v2873
        %4315 = vmatpush.bf16.msra.mxu0 %v2869
        %4316 = vmatpush.bf16.msra.mxu0 %v2865
        %4317 = vmatpush.bf16.msra.mxu0 %v2861
        %4318 = vmatpush.bf16.msra.mxu0 %v2857
        %4319 = vmatpush.bf16.msra.mxu0 %v2853
        %4320 = vmatmul.bf16.gmra.mxu0 %v879
        %v4321 = vpop.f32.mrf.mxu0
        %v4322 = vadd.f32 %v4308, %v4321
        %v4323 = vpop.f32.mrf.mxu0
        %v4324 = vadd.f32 %v4310, %v4323
        %4325 = vdwg.mxu0
        %4326 = vmatpush.bf16.msra.mxu0 %v2913
        %4327 = vmatpush.bf16.msra.mxu0 %v2909
        %4328 = vmatpush.bf16.msra.mxu0 %v2905
        %4329 = vmatpush.bf16.msra.mxu0 %v2901
        %4330 = vmatpush.bf16.msra.mxu0 %v2897
        %4331 = vmatpush.bf16.msra.mxu0 %v2893
        %4332 = vmatpush.bf16.msra.mxu0 %v2889
        %4333 = vmatpush.bf16.msra.mxu0 %v2885
        %4334 = vmatmul.bf16.gmra.mxu0 %v880
        %v4335 = vpop.f32.mrf.mxu0
        %v4336 = vadd.f32 %v4322, %v4335
        %v4337 = vpop.f32.mrf.mxu0
        %v4338 = vadd.f32 %v4324, %v4337
        %4339 = vdwg.mxu0
        %4340 = vmatpush.bf16.msra.mxu0 %v2945
        %4341 = vmatpush.bf16.msra.mxu0 %v2941
        %4342 = vmatpush.bf16.msra.mxu0 %v2937
        %4343 = vmatpush.bf16.msra.mxu0 %v2933
        %4344 = vmatpush.bf16.msra.mxu0 %v2929
        %4345 = vmatpush.bf16.msra.mxu0 %v2925
        %4346 = vmatpush.bf16.msra.mxu0 %v2921
        %4347 = vmatpush.bf16.msra.mxu0 %v2917
        %4348 = vmatmul.bf16.gmra.mxu0 %v881
        %v4349 = vpop.f32.mrf.mxu0
        %v4350 = vadd.f32 %v4336, %v4349
        %v4351 = vpop.f32.mrf.mxu0
        %v4352 = vadd.f32 %v4338, %v4351
        %4353 = vdwg.mxu0
        %v4354 = vadd.f32 %v282, %v3678
        %v4355 = vadd.f32 %v283, %v3902
        %v4356 = vadd.f32 %v284, %v4126
        %v4357 = vadd.f32 %v285, %v4350
        %v4358 = vadd.f32 %v286, %v3680
        %v4359 = vadd.f32 %v287, %v3904
        %v4360 = vadd.f32 %v288, %v4128
        %v4361 = vadd.f32 %v289, %v4352
        %4362 = vst [vmem:[#allocation2] sm:$0xff] %v4354
        %4363 = vst [vmem:[#allocation2 + $0x8] sm:$0xff] %v4355
        %4364 = vst [vmem:[#allocation2 + $0x10] sm:$0xff] %v4356
        %4365 = vst [vmem:[#allocation2 + $0x18] sm:$0xff] %v4357
        %4366 = vst [vmem:[#allocation2 + $0x20] sm:$0xff] %v4358
        %4367 = vst [vmem:[#allocation2 + $0x28] sm:$0xff] %v4359
        %4368 = vst [vmem:[#allocation2 + $0x30] sm:$0xff] %v4360
        %4369 = vst [vmem:[#allocation2 + $0x38] sm:$0xff] %v4361
        %p4370 = scmp.eq.s32.totalorder %s20, 1
        // Predicated region
        $region56: #{fwd.8} parent=46 // pred_check
          %p4371 = pneg %p4370
        $region57: #{fwd.8} parent=46 // pred_check_branch
          %4373 = sbr.rel (%p4371) target = $region59
        $region58: #{fwd.8} parent=46 // pred_region
          %v4374 = vld [vmem:[#allocation2] sm:$0xff]
          %v4375 = vld [vmem:[#allocation2 + $0x8] sm:$0xff]
          %v4376 = vld [vmem:[#allocation2 + $0x10] sm:$0xff]
          %v4377 = vld [vmem:[#allocation2 + $0x18] sm:$0xff]
          %v4378 = vld [vmem:[#allocation2 + $0x20] sm:$0xff]
          %v4379 = vld [vmem:[#allocation2 + $0x28] sm:$0xff]
          %v4380 = vld [vmem:[#allocation2 + $0x30] sm:$0xff]
          %v4381 = vld [vmem:[#allocation2 + $0x38] sm:$0xff]
          %v4382 = vlaneseq
          %v4383 = vshrl.u32 %v4382, 7
          %v4384 = vadd.s32 %v4383, 8
          %vm4385 = vcmp.lt.s32.totalorder %v4383, 9
          %vm4386 = vcmp.lt.s32.totalorder %v4384, 9
          %v4387 = vsel %vm4385, 1, 0
          %v4388 = vsel %vm4386, 1, 0
          %v4389 = vcvt.s32.f32 %v4387
          %v4390 = vcvt.s32.f32 %v4388
          %v4391 = vmul.f32 %v4374, %v4389
          %v4392 = vmul.f32 %v4375, %v4389
          %v4393 = vmul.f32 %v4376, %v4389
          %v4394 = vmul.f32 %v4377, %v4389
          %v4395 = vmul.f32 %v4378, %v4390
          %v4396 = vmul.f32 %v4379, %v4390
          %v4397 = vmul.f32 %v4380, %v4390
          %v4398 = vmul.f32 %v4381, %v4390
          %v4399 = vadd.f32 %v4391, %v4395
          %v4400 = vrot.slane %v4399, 4
          %v4401 = vadd.f32 %v4399, %v4400
          %v4402 = vrot.slane %v4401, 2
          %v4403 = vadd.f32 %v4401, %v4402
          %v4404 = vrot.slane %v4403, 1
          %v4405 = vadd.f32 %v4403, %v4404
          %v4406 = vadd.f32 %v4392, %v4396
          %v4407 = vrot.slane %v4406, 4
          %v4408 = vadd.f32 %v4406, %v4407
          %v4409 = vrot.slane %v4408, 2
          %v4410 = vadd.f32 %v4408, %v4409
          %v4411 = vrot.slane %v4410, 1
          %v4412 = vadd.f32 %v4410, %v4411
          %v4413 = vadd.f32 %v4393, %v4397
          %v4414 = vrot.slane %v4413, 4
          %v4415 = vadd.f32 %v4413, %v4414
          %v4416 = vrot.slane %v4415, 2
          %v4417 = vadd.f32 %v4415, %v4416
          %v4418 = vrot.slane %v4417, 1
          %v4419 = vadd.f32 %v4417, %v4418
          %v4420 = vadd.f32 %v4394, %v4398
          %v4421 = vrot.slane %v4420, 4
          %v4422 = vadd.f32 %v4420, %v4421
          %v4423 = vrot.slane %v4422, 2
          %v4424 = vadd.f32 %v4422, %v4423
          %v4425 = vrot.slane %v4424, 1
          %v4426 = vadd.f32 %v4424, %v4425
          %v4427 = vmul.f32 %v4405, 0.11111111
          %v4428 = vmul.f32 %v4412, 0.11111111
          %v4429 = vmul.f32 %v4419, 0.11111111
          %v4430 = vmul.f32 %v4426, 0.11111111
          %v4431 = vsub.f32 %v4374, %v4427
          %v4432 = vsub.f32 %v4375, %v4428
          %v4433 = vsub.f32 %v4376, %v4429
          %v4434 = vsub.f32 %v4377, %v4430
          %v4435 = vsub.f32 %v4378, %v4427
          %v4436 = vsub.f32 %v4379, %v4428
          %v4437 = vsub.f32 %v4380, %v4429
          %v4438 = vsub.f32 %v4381, %v4430
          %v4439 = vmul.f32 %v4431, %v4389
          %v4440 = vmul.f32 %v4432, %v4389
          %v4441 = vmul.f32 %v4433, %v4389
          %v4442 = vmul.f32 %v4434, %v4389
          %v4443 = vmul.f32 %v4435, %v4390
          %v4444 = vmul.f32 %v4436, %v4390
          %v4445 = vmul.f32 %v4437, %v4390
          %v4446 = vmul.f32 %v4438, %v4390
          %v4447 = vmul.f32 %v4439, %v4439
          %v4448 = vmul.f32 %v4440, %v4440
          %v4449 = vmul.f32 %v4441, %v4441
          %v4450 = vmul.f32 %v4442, %v4442
          %v4451 = vmul.f32 %v4443, %v4443
          %v4452 = vmul.f32 %v4444, %v4444
          %v4453 = vmul.f32 %v4445, %v4445
          %v4454 = vmul.f32 %v4446, %v4446
          %v4455 = vadd.f32 %v4447, %v4451
          %v4456 = vrot.slane %v4455, 4
          %v4457 = vadd.f32 %v4455, %v4456
          %v4458 = vrot.slane %v4457, 2
          %v4459 = vadd.f32 %v4457, %v4458
          %v4460 = vrot.slane %v4459, 1
          %v4461 = vadd.f32 %v4459, %v4460
          %v4462 = vadd.f32 %v4448, %v4452
          %v4463 = vrot.slane %v4462, 4
          %v4464 = vadd.f32 %v4462, %v4463
          %v4465 = vrot.slane %v4464, 2
          %v4466 = vadd.f32 %v4464, %v4465
          %v4467 = vrot.slane %v4466, 1
          %v4468 = vadd.f32 %v4466, %v4467
          %v4469 = vadd.f32 %v4449, %v4453
          %v4470 = vrot.slane %v4469, 4
          %v4471 = vadd.f32 %v4469, %v4470
          %v4472 = vrot.slane %v4471, 2
          %v4473 = vadd.f32 %v4471, %v4472
          %v4474 = vrot.slane %v4473, 1
          %v4475 = vadd.f32 %v4473, %v4474
          %v4476 = vadd.f32 %v4450, %v4454
          %v4477 = vrot.slane %v4476, 4
          %v4478 = vadd.f32 %v4476, %v4477
          %v4479 = vrot.slane %v4478, 2
          %v4480 = vadd.f32 %v4478, %v4479
          %v4481 = vrot.slane %v4480, 1
          %v4482 = vadd.f32 %v4480, %v4481
          %v4483 = vmul.f32 %v4461, 0.11111111
          %v4484 = vmul.f32 %v4468, 0.11111111
          %v4485 = vmul.f32 %v4475, 0.11111111
          %v4486 = vmul.f32 %v4482, 0.11111111
          %v4487 = vadd.f32 %v4483, 1e-05
          %v4488 = vadd.f32 %v4484, 1e-05
          %v4489 = vadd.f32 %v4485, 1e-05
          %v4490 = vadd.f32 %v4486, 1e-05
          %v4491 = vrsqrt.pop %v4487
          %v4492 = vmul.f32 %v4491, %v4487
          %v4493 = vmul.f32 %v4492, %v4491
          %v4494 = vmul.f32 0.5, %v4493
          %v4495 = vsub.f32 1.5, %v4494
          %v4496 = vmul.f32 %v4491, %v4495
          %vm4497 = vweird.f32 %v4487
          %vm4498 = vweird.f32 %v4491
          %vm4499 = vmor %vm4497, %vm4498
          %v4500 = vsel %vm4499, %v4491, %v4496
          %v4501 = vrsqrt.pop %v4488
          %v4502 = vmul.f32 %v4501, %v4488
          %v4503 = vmul.f32 %v4502, %v4501
          %v4504 = vmul.f32 0.5, %v4503
          %v4505 = vsub.f32 1.5, %v4504
          %v4506 = vmul.f32 %v4501, %v4505
          %vm4507 = vweird.f32 %v4488
          %vm4508 = vweird.f32 %v4501
          %vm4509 = vmor %vm4507, %vm4508
          %v4510 = vsel %vm4509, %v4501, %v4506
          %v4511 = vrsqrt.pop %v4489
          %v4512 = vmul.f32 %v4511, %v4489
          %v4513 = vmul.f32 %v4512, %v4511
          %v4514 = vmul.f32 0.5, %v4513
          %v4515 = vsub.f32 1.5, %v4514
          %v4516 = vmul.f32 %v4511, %v4515
          %vm4517 = vweird.f32 %v4489
          %vm4518 = vweird.f32 %v4511
          %vm4519 = vmor %vm4517, %vm4518
          %v4520 = vsel %vm4519, %v4511, %v4516
          %v4521 = vrsqrt.pop %v4490
          %v4522 = vmul.f32 %v4521, %v4490
          %v4523 = vmul.f32 %v4522, %v4521
          %v4524 = vmul.f32 0.5, %v4523
          %v4525 = vsub.f32 1.5, %v4524
          %v4526 = vmul.f32 %v4521, %v4525
          %vm4527 = vweird.f32 %v4490
          %vm4528 = vweird.f32 %v4521
          %vm4529 = vmor %vm4527, %vm4528
          %v4530 = vsel %vm4529, %v4521, %v4526
          %v4531 = vmul.f32 %v4431, %v4500
          %v4532 = vmul.f32 %v4432, %v4510
          %v4533 = vmul.f32 %v4433, %v4520
          %v4534 = vmul.f32 %v4434, %v4530
          %v4535 = vmul.f32 %v4435, %v4500
          %v4536 = vmul.f32 %v4436, %v4510
          %v4537 = vmul.f32 %v4437, %v4520
          %v4538 = vmul.f32 %v4438, %v4530
          %v4539 = vmul.f32 %v4531, 0.2
          %v4540 = vmul.f32 %v4532, 0.2
          %v4541 = vmul.f32 %v4533, 0.2
          %v4542 = vmul.f32 %v4534, 0.2
          %v4543 = vmul.f32 %v4535, 0.2
          %v4544 = vmul.f32 %v4536, 0.2
          %v4545 = vmul.f32 %v4537, 0.2
          %v4546 = vmul.f32 %v4538, 0.2
          %v4547 = vmax.f32 %v4531, %v4539
          %v4548 = vmax.f32 %v4532, %v4540
          %v4549 = vmax.f32 %v4533, %v4541
          %v4550 = vmax.f32 %v4534, %v4542
          %v4551 = vmax.f32 %v4535, %v4543
          %v4552 = vmax.f32 %v4536, %v4544
          %v4553 = vmax.f32 %v4537, %v4545
          %v4554 = vmax.f32 %v4538, %v4546
          %v4555 = vpack.c.bf16 %v4548, %v4547
          %v4556 = vpack.c.bf16 %v4550, %v4549
          %v4557 = vpack.c.bf16 %v4552, %v4551
          %v4558 = vpack.c.bf16 %v4554, %v4553
          %4559 = vst [vmem:[%s268] sm:$0xff] %v4555
          %4560 = vst [vmem:[%s268 + $0x8] sm:$0xff] %v4556
          %4561 = vst [vmem:[%s268 + $0x10] sm:$0xff] %v4557
          %4562 = vst [vmem:[%s268 + $0x18] sm:$0xff] %v4558
        $region59: #{fwd.8} parent=46 // pred_fallthru
          _
        %s4563 = smul.u32 4, %s19
        %p4564 = scmp.lt.s32.totalorder %s18, 1
        %s4565 = scalar_select %p4564, %s18, 1
        %p4566 = scmp.lt.s32.totalorder %s4563, 3
        %s4567 = scalar_select %p4566, %s4563, 3
        %s4568 = smul.addr %s4565, 8
        %s4569 = sadd.s32 %s4567, %s4568
        %s4570 = smul.addr %s4569, 4
        %s4571 = scalar_lea.vmem %s2, %s4570
        // Predicated region
        $region60: #{fwd.8} parent=46 // pred_check
          %p4572 = pneg %p108
        $region61: #{fwd.8} parent=46 // pred_check_branch
          %4574 = sbr.rel (%p4572) target = $region63
        $region62: #{fwd.8} parent=46 // pred_region
          %s4575 = smul.u32 4, %s19
        $region63: #{fwd.8} parent=46 // pred_fallthru
          _
      $region47: #{fwd.8} parent=5 // pred_fallthru
        _
      %p4576 = scmp.le.s32.totalorder 2, %s8
      // Predicated region
      $region64: #{fwd.8} parent=5 // pred_check
        %p4577 = pneg %p4576
      $region65: #{fwd.8} parent=5 // pred_check_branch
        %4579 = sbr.rel (%p4577) target = $region67
      $region66: #{fwd.8} parent=5 // pred_region
        %s4580 = ssub.s32 %s8, 2
        // Predicated region
        $region68: #{fwd.8} parent=66 // pred_check
          %p4581 = pneg %p114
        $region69: #{fwd.8} parent=66 // pred_check_branch
          %4583 = sbr.rel (%p4581) target = $region71
        $region70: #{fwd.8} parent=66 // pred_region
          %s4584 = smul.u32 4, %s22
          %p4585 = scmp.lt.s32.totalorder %s21, 1
          %s4586 = scalar_select %p4585, %s21, 1
          %p4587 = scmp.lt.s32.totalorder %s4584, 3
          %s4588 = scalar_select %p4587, %s4584, 3
          %s4589 = smul.addr %s4586, 8
          %s4590 = sadd.s32 %s4588, %s4589
          %s4591 = smul.addr %s4590, 4
          %s4592 = scalar_lea.vmem %s2, %s4591
        $region71: #{fwd.8} parent=66 // pred_fallthru
          _
      $region67: #{fwd.8} parent=5 // pred_fallthru
        _
    $region6: #{fwd.8} parent=1 // loop_footer
      %s12 = sadd.s32 1, %s8
    $region7: #{fwd.8} parent=1 // loop_footer_branch
      %7 = sbr.rel target = $region3
    $region8: #{fwd.8} parent=1 // loop_exit
      _

</llo_original>
